<compile_context>
chip_gen: v7x
topology: tpu7x:2x2x1
jax: 0.10.0
libtpu: 0.0.40
codegen_flags: <defaults>
</compile_context>

<pallas_src>
import functools

import jax
import jax.numpy as jnp
from jax import lax
from jax.experimental import pallas as pl
from jax.experimental.pallas import tpu as pltpu

SEQ_CHLOV = 12
SEQ_HIST = 20
RAW_FEAT = 5


def _rup(x, m):
    return ((x + m - 1) // m) * m


def _pick_block(batch):
    """Batch rows per grid block: big (<=128) and sublane-aligned; >=2 blocks
    for large batches so a v7x megacore can split the parallel axis."""
    b8 = _rup(batch, 8)
    if b8 <= 128:
        return b8
    return min(128, _rup((b8 + 1) // 2, 8))


# ------------------------------- kernel -------------------------------------
def lstm_kernel(x_ref, w_in_ref, w_ih_ref, w_hh_ref, w_attn_ref, w_u_ref,
                w_out_ref, bias_ref, out_ref, gx_ref, hs_ref, *, B, D, H, F):
    L = SEQ_HIST
    GW = max(128, _rup(2 * H, 128))          # lane-aligned gate group width
    A1 = _rup(2 * D, 128)                    # bias-table segment offsets
    A2 = _rup(A1 + 2 * H, 128)
    A3 = _rup(A2 + F, 128)
    f32, bf16 = jnp.float32, jnp.bfloat16

    # ---- Stage 1: time-invariant matmuls for the whole (zero-padded) seq ----
    # proj    = relu(x @ W_in + b_in)          (L*B, 2D)  both branches at once
    # gates_x = proj @ W_ih + b_lstm           (L*B, 4*GW) -> VMEM scratch
    b_in = bias_ref[0:1, 0:2 * D]
    proj = jnp.maximum(
        jnp.dot(x_ref[...].astype(bf16), w_in_ref[...],
                preferred_element_type=f32) + b_in, 0.0)
    gx_ref[...] = (jnp.dot(proj.astype(bf16), w_ih_ref[...],
                           preferred_element_type=f32)
                   + bias_ref[1:2, 0:4 * GW])

    # ---- Stage 2: fused recurrence (block-diagonal W_hh, both branches) -----
    # Per-gate (2H, 2H) weight slices are hoisted (aligned slices of the
    # 128-lane gate groups), so each step runs 4 small bf16 MXU matmuls and
    # 2H-wide activations with a bounded live vreg set.
    w_hh_g = [w_hh_ref[:, gi * GW:gi * GW + 2 * H] for gi in range(4)]
    h = jnp.zeros((B, 2 * H), f32)            # [h_chlov | h_hist]
    c = jnp.zeros((B, 2 * H), f32)
    for t in range(L):                        # static unroll (LLO visibility)
        r0 = t * B
        hb = h.astype(bf16)

        def gate(gi):
            return (gx_ref[r0:r0 + B, gi * GW:gi * GW + 2 * H]
                    + jnp.dot(hb, w_hh_g[gi], preferred_element_type=f32))

        i_g = jnp.tanh(gate(0) * 0.5) * 0.5 + 0.5     # sigmoid via EUP tanh
        f_g = jnp.tanh(gate(1) * 0.5) * 0.5 + 0.5
        g_g = jnp.tanh(gate(2))
        o_g = jnp.tanh(gate(3) * 0.5) * 0.5 + 0.5
        c = f_g * c + i_g * g_g
        h = o_g * jnp.tanh(c)
        hs_ref[r0:r0 + B, :] = h                      # stream out h_t

    # ---- Stage 3: attentive pooling, fused masked softmax over both cols ----
    mem = hs_ref[...]                                  # (L*B, 2H) f32
    b_attn = bias_ref[0:1, A1:A1 + 2 * H]
    ht = jnp.tanh(jnp.dot(mem.astype(bf16), w_attn_ref[...],
                          preferred_element_type=f32) + b_attn)
    score = jnp.dot(ht.astype(bf16), w_u_ref[...],
                    preferred_element_type=f32)        # (L*B, 2)

    sc = score.reshape(L, B, 2)                        # rows are time-major
    t_idx = lax.broadcasted_iota(jnp.int32, (L, B, 2), 0)
    c_idx = lax.broadcasted_iota(jnp.int32, (L, B, 2), 2)
    valid = (c_idx == 1) | (t_idx < SEQ_CHLOV)         # chlov only has 12 steps
    sc = jnp.where(valid, sc, -1e9)
    m = jnp.max(sc, axis=0, keepdims=True)
    e = jnp.exp(sc - m)
    alpha = e * pl.reciprocal(jnp.sum(e, axis=0, keepdims=True), approx=True)

    memr = mem.reshape(L, B, 2 * H)
    s_c = jnp.sum(alpha[:, :, 0:1] * memr[:, :, 0:H], axis=0)        # (B, H)
    s_h = jnp.sum(alpha[:, :, 1:2] * memr[:, :, H:2 * H], axis=0)    # (B, H)
    feat = jnp.concatenate([s_c, s_h], axis=1)                       # (B, 2H)

    # ---- Stage 4: MLP head (tiny; f32), lane-dense (1, B) output ------------
    b_o1 = bias_ref[0:1, A2:A2 + F]
    b_o2 = bias_ref[0:1, A3:A3 + 1]
    z = jnp.maximum(
        jnp.dot(feat, w_out_ref[0:2 * H, :],
                preferred_element_type=f32) + b_o1, 0.0)             # (B, F)
    y = jnp.dot(w_out_ref[2 * H:2 * H + 1, :], z.T,
                preferred_element_type=f32) + b_o2                   # (1, B)
    out_ref[...] = y


# ------------------------------- wrapper -------------------------------------
def lstm_forward(x, packed, *, input_size, hidden_size, feature_size):
    D, H, F = input_size, hidden_size, feature_size
    B = x.shape[0]
    B_blk = _pick_block(B)
    Bp = _rup(B, B_blk)
    G = Bp // B_blk
    GW = max(128, _rup(2 * H, 128))
    L = SEQ_HIST

    # Layout plumbing (wrapper side): split x, zero-pad chlov to 20 steps,
    # pad batch to a multiple of B_blk, go time-major inside each batch block.
    chlov = x[:, :SEQ_CHLOV * RAW_FEAT].reshape(B, SEQ_CHLOV, RAW_FEAT)
    history = x[:, SEQ_CHLOV * RAW_FEAT:].reshape(B, SEQ_HIST, RAW_FEAT)
    chlov = jnp.pad(chlov, ((0, Bp - B), (0, SEQ_HIST - SEQ_CHLOV), (0, 0)))
    history = jnp.pad(history, ((0, Bp - B), (0, 0), (0, 0)))
    feats = jnp.concatenate([chlov, history], axis=-1)        # (Bp, L, 10)
    x_tm = feats.reshape(G, B_blk, L, 2 * RAW_FEAT)
    x_tm = x_tm.transpose(0, 2, 1, 3).reshape(G, L * B_blk, 2 * RAW_FEAT)

    kern = functools.partial(lstm_kernel, B=B_blk, D=D, H=H, F=F)
    w_keys = ("w_in", "w_ih", "w_hh", "w_attn", "w_u", "w_out", "bias")
    w_specs = [pl.BlockSpec(packed[k].shape, lambda g: (0, 0)) for k in w_keys]

    out = pl.pallas_call(
        kern,
        out_shape=jax.ShapeDtypeStruct((G, 1, B_blk), jnp.float32),
        grid=(G,),
        in_specs=[pl.BlockSpec((None, L * B_blk, 2 * RAW_FEAT),
                               lambda g: (g, 0, 0))] + w_specs,
        out_specs=pl.BlockSpec((None, 1, B_blk), lambda g: (g, 0, 0)),
        scratch_shapes=[
            pltpu.VMEM((L * B_blk, 4 * GW), jnp.float32),     # gates_x
            pltpu.VMEM((L * B_blk, 2 * H), jnp.float32),      # h history
        ],
        compiler_params=pltpu.CompilerParams(
            dimension_semantics=("parallel",),
            # ~6-13 MB of scratch at B_blk=128; raise v5e's 16 MiB scoped
            # default to the v6e/v7x default (32 MiB) so tiling is uniform.
            vmem_limit_bytes=32 * 1024 * 1024),
    )(x_tm, *[packed[k] for k in w_keys])
    return out.reshape(Bp)[:B]


# --------------------------- parameter handling ------------------------------
def init_params(key, input_size, hidden_size, feature_size):
    """PyTorch-layout parameters (used by the reference and by pack_params)."""
    D, H, F = input_size, hidden_size, feature_size
    ks = iter(jax.random.split(key, 40))

    def uniform(shape, bound):
        return jax.random.uniform(next(ks), shape, jnp.float32, -bound, bound)

    def linear(out_f, in_f):
        b = 1.0 / (in_f ** 0.5)
        return uniform((out_f, in_f), b), uniform((out_f,), b)

    p = {}
    p["lc_w"], p["lc_b"] = linear(D, RAW_FEAT)
    p["lh_w"], p["lh_b"] = linear(D, RAW_FEAT)
    for nm in ("c", "h"):
        bound = 1.0 / (H ** 0.5)
        p[nm + "_wih"] = uniform((4 * H, D), bound)
        p[nm + "_whh"] = uniform((4 * H, H), bound)
        p[nm + "_bih"] = uniform((4 * H,), bound)
        p[nm + "_bhh"] = uniform((4 * H,), bound)
    for nm in ("ac", "ah"):
        p[nm + "_w1"], p[nm + "_b1"] = linear(H, H)
        p[nm + "_u"] = uniform((1, H), 1.0 / (H ** 0.5))
    p["o1_w"], p["o1_b"] = linear(F, 2 * H)
    p["o2_w"], p["o2_b"] = linear(1, F)
    return p


def pack_params(p, input_size, hidden_size, feature_size):
    """Pack the 22 torch-layout tensors into 7 kernel operands (one-time).

    Gate columns are gate-major in 128-lane-aligned groups (chlov branch at
    lane 0..H-1, history at H..2H-1 of each group); matmul weights are bf16,
    biases/head f32.
    """
    D, H, F = input_size, hidden_size, feature_size
    f32, bf16 = jnp.float32, jnp.bfloat16
    GW = max(128, _rup(2 * H, 128))
    A1 = _rup(2 * D, 128)
    A2 = _rup(A1 + 2 * H, 128)
    A3 = _rup(A2 + F, 128)
    BW = max(4 * GW, A3 + 128)

    w_in = jnp.zeros((2 * RAW_FEAT, 2 * D), f32)
    w_in = w_in.at[0:RAW_FEAT, 0:D].set(p["lc_w"].T)
    w_in = w_in.at[RAW_FEAT:, D:].set(p["lh_w"].T)

    w_ih = jnp.zeros((2 * D, 4 * GW), f32)
    w_hh = jnp.zeros((2 * H, 4 * GW), f32)
    b_lstm = jnp.zeros((4 * GW,), f32)
    for br, nm in enumerate(("c", "h")):
        wih, whh = p[nm + "_wih"], p[nm + "_whh"]
        b = p[nm + "_bih"] + p[nm + "_bhh"]
        for gi in range(4):                       # PyTorch gate order i, f, g, o
            c0 = gi * GW + br * H
            w_ih = w_ih.at[br * D:(br + 1) * D, c0:c0 + H].set(
                wih[gi * H:(gi + 1) * H, :].T)
            w_hh = w_hh.at[br * H:(br + 1) * H, c0:c0 + H].set(
                whh[gi * H:(gi + 1) * H, :].T)
            b_lstm = b_lstm.at[c0:c0 + H].set(b[gi * H:(gi + 1) * H])

    w_attn = jnp.zeros((2 * H, 2 * H), f32)
    w_attn = w_attn.at[0:H, 0:H].set(p["ac_w1"].T)
    w_attn = w_attn.at[H:, H:].set(p["ah_w1"].T)
    w_u = jnp.zeros((2 * H, 2), f32)
    w_u = w_u.at[0:H, 0].set(p["ac_u"][0, :])
    w_u = w_u.at[H:, 1].set(p["ah_u"][0, :])

    w_out = jnp.zeros((2 * H + 1, F), f32)
    w_out = w_out.at[0:2 * H, :].set(p["o1_w"].T)
    w_out = w_out.at[2 * H, :].set(p["o2_w"][0, :])   # o2 weights as a row

    bias = jnp.zeros((2, BW), f32)
    bias = bias.at[0, 0:2 * D].set(jnp.concatenate([p["lc_b"], p["lh_b"]]))
    bias = bias.at[0, A1:A1 + 2 * H].set(
        jnp.concatenate([p["ac_b1"], p["ah_b1"]]))
    bias = bias.at[0, A2:A2 + F].set(p["o1_b"])
    bias = bias.at[0, A3].set(p["o2_b"][0])
    bias = bias.at[1, 0:4 * GW].set(b_lstm)

    return dict(w_in=w_in.astype(bf16), w_ih=w_ih.astype(bf16),
                w_hh=w_hh.astype(bf16), w_attn=w_attn.astype(bf16),
                w_u=w_u.astype(bf16), w_out=w_out, bias=bias)


# --------------------------- pure-JAX reference ------------------------------
def _ref_branch(seq, H, lin_w, lin_b, wih, whh, bih, bhh, w1, b1, u):
    B, L, _ = seq.shape
    proj = jax.nn.relu(jnp.einsum("blf,df->bld", seq, lin_w) + lin_b)
    h = jnp.zeros((B, H), jnp.float32)
    c = jnp.zeros((B, H), jnp.float32)
    bias = bih + bhh
    outs = []
    for t in range(L):
        gates = proj[:, t, :] @ wih.T + h @ whh.T + bias
        i = jax.nn.sigmoid(gates[:, 0:H])
        f = jax.nn.sigmoid(gates[:, H:2 * H])
        g = jnp.tanh(gates[:, 2 * H:3 * H])
        o = jax.nn.sigmoid(gates[:, 3 * H:4 * H])
        c = f * c + i * g
        h = o * jnp.tanh(c)
        outs.append(h)
    mem = jnp.stack(outs, axis=1)
    hh = jnp.tanh(jnp.einsum("blh,kh->blk", mem, w1) + b1)
    score = jnp.einsum("blh,oh->blo", hh, u)[..., 0]
    alpha = jax.nn.softmax(score, axis=-1)
    return jnp.sum(alpha[..., None] * mem, axis=1)


def reference_forward(x, p, *, hidden_size):
    H = hidden_size
    B = x.shape[0]
    chlov = x[:, :SEQ_CHLOV * RAW_FEAT].reshape(B, SEQ_CHLOV, RAW_FEAT)
    history = x[:, SEQ_CHLOV * RAW_FEAT:].reshape(B, SEQ_HIST, RAW_FEAT)
    s_c = _ref_branch(chlov, H, p["lc_w"], p["lc_b"], p["c_wih"], p["c_whh"],
                      p["c_bih"], p["c_bhh"], p["ac_w1"], p["ac_b1"], p["ac_u"])
    s_h = _ref_branch(history, H, p["lh_w"], p["lh_b"], p["h_wih"], p["h_whh"],
                      p["h_bih"], p["h_bhh"], p["ah_w1"], p["ah_b1"], p["ah_u"])
    feat = jnp.concatenate([s_c, s_h], axis=1)
    z = jax.nn.relu(feat @ p["o1_w"].T + p["o1_b"])
    y = z @ p["o2_w"].T + p["o2_b"]
    return y.reshape(-1)


if __name__ == "__main__":
    B = 13                     # deliberately non-multiple-of-8 (tests padding)
    INPUT_SIZE = 32
    HIDDEN_SIZE = 32
    FEATURE_SIZE = 8

    key = jax.random.PRNGKey(0)
    k_x, k_p = jax.random.split(key)
    x = jax.random.normal(
        k_x, (B, SEQ_CHLOV * RAW_FEAT + SEQ_HIST * RAW_FEAT), jnp.float32)
    params = init_params(k_p, INPUT_SIZE, HIDDEN_SIZE, FEATURE_SIZE)
    packed = pack_params(params, INPUT_SIZE, HIDDEN_SIZE, FEATURE_SIZE)

    out = jax.block_until_ready(
        lstm_forward(x, packed, input_size=INPUT_SIZE,
                     hidden_size=HIDDEN_SIZE, feature_size=FEATURE_SIZE))
    ref = jax.block_until_ready(
        reference_forward(x, params, hidden_size=HIDDEN_SIZE))

    assert out.shape == (B,)
    assert bool(jnp.all(jnp.isfinite(out)))
    # bf16 MXU operands, tanh-based sigmoid and approx reciprocal in the
    # softmax shift low-order bits vs the pure-f32 reference.
    assert jnp.allclose(out, ref, rtol=2e-2, atol=2e-2), (out, ref)

    print("KERNEL_OK")
</pallas_src>

<mosaic_0001>
module attributes {stable_mosaic.version = 11 : i64} {
  func.func @lstm_kernel(%arg0: i32, %arg1: memref<1x320x10xf32, #tpu.memory_space<vmem>>, %arg2: memref<10x64xbf16, #tpu.memory_space<vmem>>, %arg3: memref<64x512xbf16, #tpu.memory_space<vmem>>, %arg4: memref<64x512xbf16, #tpu.memory_space<vmem>>, %arg5: memref<64x64xbf16, #tpu.memory_space<vmem>>, %arg6: memref<64x2xbf16, #tpu.memory_space<vmem>>, %arg7: memref<65x8xf32, #tpu.memory_space<vmem>>, %arg8: memref<2x512xf32, #tpu.memory_space<vmem>>, %arg9: memref<1x1x16xf32, #tpu.memory_space<vmem>>, %arg10: memref<320x512xf32, #tpu.memory_space<vmem>>, %arg11: memref<320x64xf32, #tpu.memory_space<vmem>>) attributes {dimension_semantics = [#tpu.dimension_semantics<parallel>], iteration_bounds = array<i64: 1>, scalar_prefetch = 0 : i64, scratch_operands = 2 : i64, tpu.core_type = #tpu.core_type<tc>, window_params = [{transform_indices = @transform_0, window_bounds = array<i64: 1, 320, 10>}, {pipeline_mode = #tpu.pipeline_mode<synchronous>, transform_indices = @transform_1, window_bounds = array<i64: 10, 64>}, {pipeline_mode = #tpu.pipeline_mode<synchronous>, transform_indices = @transform_2, window_bounds = array<i64: 64, 512>}, {pipeline_mode = #tpu.pipeline_mode<synchronous>, transform_indices = @transform_3, window_bounds = array<i64: 64, 512>}, {pipeline_mode = #tpu.pipeline_mode<synchronous>, transform_indices = @transform_4, window_bounds = array<i64: 64, 64>}, {pipeline_mode = #tpu.pipeline_mode<synchronous>, transform_indices = @transform_5, window_bounds = array<i64: 64, 2>}, {pipeline_mode = #tpu.pipeline_mode<synchronous>, transform_indices = @transform_6, window_bounds = array<i64: 65, 8>}, {pipeline_mode = #tpu.pipeline_mode<synchronous>, transform_indices = @transform_7, window_bounds = array<i64: 2, 512>}, {transform_indices = @transform_8, window_bounds = array<i64: 1, 1, 16>}]} {
    %c0 = arith.constant 0 : index
    %c0_0 = arith.constant 0 : index
    %0 = vector.load %arg8[%c0, %c0_0] : memref<2x512xf32, #tpu.memory_space<vmem>>, vector<1x64xf32>
    %c0_1 = arith.constant 0 : index
    %c0_2 = arith.constant 0 : index
    %c0_3 = arith.constant 0 : index
    %1 = vector.load %arg1[%c0_1, %c0_2, %c0_3] : memref<1x320x10xf32, #tpu.memory_space<vmem>>, vector<1x320x10xf32>
    %2 = vector.shape_cast %1 : vector<1x320x10xf32> to vector<320x10xf32>
    %3 = arith.truncf %2 : vector<320x10xf32> to vector<320x10xbf16>
    %c0_4 = arith.constant 0 : index
    %c0_5 = arith.constant 0 : index
    %4 = vector.load %arg2[%c0_4, %c0_5] : memref<10x64xbf16, #tpu.memory_space<vmem>>, vector<10x64xbf16>
    %cst = arith.constant dense<0.000000e+00> : vector<320x64xf32>
    %5 = tpu.matmul %3, %4, %cst {dimension_numbers = #tpu.dot_dimension_numbers<[1], [0], [0], [1], [0, 0, 1, 1], [], []>} : vector<320x10xbf16>, vector<10x64xbf16>, vector<320x64xf32> -> vector<320x64xf32>
    %6 = vector.broadcast %0 : vector<1x64xf32> to vector<320x64xf32>
    %7 = arith.addf %5, %6 : vector<320x64xf32>
    %cst_6 = arith.constant 0.000000e+00 : f32
    %8 = vector.broadcast %cst_6 : f32 to vector<320x64xf32>
    %9 = arith.maximumf %7, %8 : vector<320x64xf32>
    %10 = arith.truncf %9 : vector<320x64xf32> to vector<320x64xbf16>
    %c0_7 = arith.constant 0 : index
    %c0_8 = arith.constant 0 : index
    %11 = vector.load %arg3[%c0_7, %c0_8] : memref<64x512xbf16, #tpu.memory_space<vmem>>, vector<64x512xbf16>
    %cst_9 = arith.constant dense<0.000000e+00> : vector<320x512xf32>
    %12 = tpu.matmul %10, %11, %cst_9 {dimension_numbers = #tpu.dot_dimension_numbers<[1], [0], [0], [1], [0, 0, 1, 1], [], []>} : vector<320x64xbf16>, vector<64x512xbf16>, vector<320x512xf32> -> vector<320x512xf32>
    %c1 = arith.constant 1 : index
    %c0_10 = arith.constant 0 : index
    %13 = vector.load %arg8[%c1, %c0_10] : memref<2x512xf32, #tpu.memory_space<vmem>>, vector<1x512xf32>
    %14 = vector.broadcast %13 : vector<1x512xf32> to vector<320x512xf32>
    %15 = arith.addf %12, %14 : vector<320x512xf32>
    %c0_11 = arith.constant 0 : index
    %c0_12 = arith.constant 0 : index
    %16 = vector.load %arg10[%c0_11, %c0_12] : memref<320x512xf32, #tpu.memory_space<vmem>>, vector<320x512xf32>
    tpu.vector_store %arg10[%c0_11, %c0_12], %15 {strides = array<i32>} : memref<320x512xf32, #tpu.memory_space<vmem>>, vector<320x512xf32>,
    %c0_13 = arith.constant 0 : index
    %c0_14 = arith.constant 0 : index
    %17 = vector.load %arg4[%c0_13, %c0_14] : memref<64x512xbf16, #tpu.memory_space<vmem>>, vector<64x64xbf16>
    %c0_15 = arith.constant 0 : index
    %c128 = arith.constant 128 : index
    %18 = vector.load %arg4[%c0_15, %c128] : memref<64x512xbf16, #tpu.memory_space<vmem>>, vector<64x64xbf16>
    %c0_16 = arith.constant 0 : index
    %c256 = arith.constant 256 : index
    %19 = vector.load %arg4[%c0_16, %c256] : memref<64x512xbf16, #tpu.memory_space<vmem>>, vector<64x64xbf16>
    %c0_17 = arith.constant 0 : index
    %c384 = arith.constant 384 : index
    %20 = vector.load %arg4[%c0_17, %c384] : memref<64x512xbf16, #tpu.memory_space<vmem>>, vector<64x64xbf16>
    %cst_18 = arith.constant 0.000000e+00 : f32
    %21 = vector.broadcast %cst_18 : f32 to vector<16x64xf32>
    %cst_19 = arith.constant 0.000000e+00 : f32
    %22 = vector.broadcast %cst_19 : f32 to vector<16x64xf32>
    %23 = arith.truncf %21 : vector<16x64xf32> to vector<16x64xbf16>
    %c0_20 = arith.constant 0 : index
    %c0_21 = arith.constant 0 : index
    %24 = vector.load %arg10[%c0_20, %c0_21] : memref<320x512xf32, #tpu.memory_space<vmem>>, vector<16x64xf32>
    %cst_22 = arith.constant dense<0.000000e+00> : vector<16x64xf32>
    %25 = tpu.matmul %23, %17, %cst_22 {dimension_numbers = #tpu.dot_dimension_numbers<[1], [0], [0], [1], [0, 0, 1, 1], [], []>} : vector<16x64xbf16>, vector<64x64xbf16>, vector<16x64xf32> -> vector<16x64xf32>
    %26 = arith.addf %24, %25 : vector<16x64xf32>
    %cst_23 = arith.constant 5.000000e-01 : f32
    %27 = vector.broadcast %cst_23 : f32 to vector<16x64xf32>
    %28 = arith.mulf %26, %27 : vector<16x64xf32>
    %29 = math.tanh %28 : vector<16x64xf32>
    %cst_24 = arith.constant 5.000000e-01 : f32
    %30 = vector.broadcast %cst_24 : f32 to vector<16x64xf32>
    %31 = arith.mulf %29, %30 : vector<16x64xf32>
    %cst_25 = arith.constant 5.000000e-01 : f32
    %32 = vector.broadcast %cst_25 : f32 to vector<16x64xf32>
    %33 = arith.addf %31, %32 : vector<16x64xf32>
    %c0_26 = arith.constant 0 : index
    %c128_27 = arith.constant 128 : index
    %34 = vector.load %arg10[%c0_26, %c128_27] : memref<320x512xf32, #tpu.memory_space<vmem>>, vector<16x64xf32>
    %cst_28 = arith.constant dense<0.000000e+00> : vector<16x64xf32>
    %35 = tpu.matmul %23, %18, %cst_28 {dimension_numbers = #tpu.dot_dimension_numbers<[1], [0], [0], [1], [0, 0, 1, 1], [], []>} : vector<16x64xbf16>, vector<64x64xbf16>, vector<16x64xf32> -> vector<16x64xf32>
    %36 = arith.addf %34, %35 : vector<16x64xf32>
    %cst_29 = arith.constant 5.000000e-01 : f32
    %37 = vector.broadcast %cst_29 : f32 to vector<16x64xf32>
    %38 = arith.mulf %36, %37 : vector<16x64xf32>
    %39 = math.tanh %38 : vector<16x64xf32>
    %cst_30 = arith.constant 5.000000e-01 : f32
    %40 = vector.broadcast %cst_30 : f32 to vector<16x64xf32>
    %41 = arith.mulf %39, %40 : vector<16x64xf32>
    %cst_31 = arith.constant 5.000000e-01 : f32
    %42 = vector.broadcast %cst_31 : f32 to vector<16x64xf32>
    %43 = arith.addf %41, %42 : vector<16x64xf32>
    %c0_32 = arith.constant 0 : index
    %c256_33 = arith.constant 256 : index
    %44 = vector.load %arg10[%c0_32, %c256_33] : memref<320x512xf32, #tpu.memory_space<vmem>>, vector<16x64xf32>
    %cst_34 = arith.constant dense<0.000000e+00> : vector<16x64xf32>
    %45 = tpu.matmul %23, %19, %cst_34 {dimension_numbers = #tpu.dot_dimension_numbers<[1], [0], [0], [1], [0, 0, 1, 1], [], []>} : vector<16x64xbf16>, vector<64x64xbf16>, vector<16x64xf32> -> vector<16x64xf32>
    %46 = arith.addf %44, %45 : vector<16x64xf32>
    %47 = math.tanh %46 : vector<16x64xf32>
    %c0_35 = arith.constant 0 : index
    %c384_36 = arith.constant 384 : index
    %48 = vector.load %arg10[%c0_35, %c384_36] : memref<320x512xf32, #tpu.memory_space<vmem>>, vector<16x64xf32>
    %cst_37 = arith.constant dense<0.000000e+00> : vector<16x64xf32>
    %49 = tpu.matmul %23, %20, %cst_37 {dimension_numbers = #tpu.dot_dimension_numbers<[1], [0], [0], [1], [0, 0, 1, 1], [], []>} : vector<16x64xbf16>, vector<64x64xbf16>, vector<16x64xf32> -> vector<16x64xf32>
    %50 = arith.addf %48, %49 : vector<16x64xf32>
    %cst_38 = arith.constant 5.000000e-01 : f32
    %51 = vector.broadcast %cst_38 : f32 to vector<16x64xf32>
    %52 = arith.mulf %50, %51 : vector<16x64xf32>
    %53 = math.tanh %52 : vector<16x64xf32>
    %cst_39 = arith.constant 5.000000e-01 : f32
    %54 = vector.broadcast %cst_39 : f32 to vector<16x64xf32>
    %55 = arith.mulf %53, %54 : vector<16x64xf32>
    %cst_40 = arith.constant 5.000000e-01 : f32
    %56 = vector.broadcast %cst_40 : f32 to vector<16x64xf32>
    %57 = arith.addf %55, %56 : vector<16x64xf32>
    %58 = arith.mulf %43, %22 : vector<16x64xf32>
    %59 = arith.mulf %33, %47 : vector<16x64xf32>
    %60 = arith.addf %58, %59 : vector<16x64xf32>
    %61 = math.tanh %60 : vector<16x64xf32>
    %62 = arith.mulf %57, %61 : vector<16x64xf32>
    %c0_41 = arith.constant 0 : index
    %c0_42 = arith.constant 0 : index
    %63 = vector.load %arg11[%c0_41, %c0_42] : memref<320x64xf32, #tpu.memory_space<vmem>>, vector<16x64xf32>
    tpu.vector_store %arg11[%c0_41, %c0_42], %62 {strides = array<i32>} : memref<320x64xf32, #tpu.memory_space<vmem>>, vector<16x64xf32>,
    %64 = arith.truncf %62 : vector<16x64xf32> to vector<16x64xbf16>
    %c16 = arith.constant 16 : index
    %c0_43 = arith.constant 0 : index
    %65 = vector.load %arg10[%c16, %c0_43] : memref<320x512xf32, #tpu.memory_space<vmem>>, vector<16x64xf32>
    %cst_44 = arith.constant dense<0.000000e+00> : vector<16x64xf32>
    %66 = tpu.matmul %64, %17, %cst_44 {dimension_numbers = #tpu.dot_dimension_numbers<[1], [0], [0], [1], [0, 0, 1, 1], [], []>} : vector<16x64xbf16>, vector<64x64xbf16>, vector<16x64xf32> -> vector<16x64xf32>
    %67 = arith.addf %65, %66 : vector<16x64xf32>
    %cst_45 = arith.constant 5.000000e-01 : f32
    %68 = vector.broadcast %cst_45 : f32 to vector<16x64xf32>
    %69 = arith.mulf %67, %68 : vector<16x64xf32>
    %70 = math.tanh %69 : vector<16x64xf32>
    %cst_46 = arith.constant 5.000000e-01 : f32
    %71 = vector.broadcast %cst_46 : f32 to vector<16x64xf32>
    %72 = arith.mulf %70, %71 : vector<16x64xf32>
    %cst_47 = arith.constant 5.000000e-01 : f32
    %73 = vector.broadcast %cst_47 : f32 to vector<16x64xf32>
    %74 = arith.addf %72, %73 : vector<16x64xf32>
    %c16_48 = arith.constant 16 : index
    %c128_49 = arith.constant 128 : index
    %75 = vector.load %arg10[%c16_48, %c128_49] : memref<320x512xf32, #tpu.memory_space<vmem>>, vector<16x64xf32>
    %cst_50 = arith.constant dense<0.000000e+00> : vector<16x64xf32>
    %76 = tpu.matmul %64, %18, %cst_50 {dimension_numbers = #tpu.dot_dimension_numbers<[1], [0], [0], [1], [0, 0, 1, 1], [], []>} : vector<16x64xbf16>, vector<64x64xbf16>, vector<16x64xf32> -> vector<16x64xf32>
    %77 = arith.addf %75, %76 : vector<16x64xf32>
    %cst_51 = arith.constant 5.000000e-01 : f32
    %78 = vector.broadcast %cst_51 : f32 to vector<16x64xf32>
    %79 = arith.mulf %77, %78 : vector<16x64xf32>
    %80 = math.tanh %79 : vector<16x64xf32>
    %cst_52 = arith.constant 5.000000e-01 : f32
    %81 = vector.broadcast %cst_52 : f32 to vector<16x64xf32>
    %82 = arith.mulf %80, %81 : vector<16x64xf32>
    %cst_53 = arith.constant 5.000000e-01 : f32
    %83 = vector.broadcast %cst_53 : f32 to vector<16x64xf32>
    %84 = arith.addf %82, %83 : vector<16x64xf32>
    %c16_54 = arith.constant 16 : index
    %c256_55 = arith.constant 256 : index
    %85 = vector.load %arg10[%c16_54, %c256_55] : memref<320x512xf32, #tpu.memory_space<vmem>>, vector<16x64xf32>
    %cst_56 = arith.constant dense<0.000000e+00> : vector<16x64xf32>
    %86 = tpu.matmul %64, %19, %cst_56 {dimension_numbers = #tpu.dot_dimension_numbers<[1], [0], [0], [1], [0, 0, 1, 1], [], []>} : vector<16x64xbf16>, vector<64x64xbf16>, vector<16x64xf32> -> vector<16x64xf32>
    %87 = arith.addf %85, %86 : vector<16x64xf32>
    %88 = math.tanh %87 : vector<16x64xf32>
    %c16_57 = arith.constant 16 : index
    %c384_58 = arith.constant 384 : index
    %89 = vector.load %arg10[%c16_57, %c384_58] : memref<320x512xf32, #tpu.memory_space<vmem>>, vector<16x64xf32>
    %cst_59 = arith.constant dense<0.000000e+00> : vector<16x64xf32>
    %90 = tpu.matmul %64, %20, %cst_59 {dimension_numbers = #tpu.dot_dimension_numbers<[1], [0], [0], [1], [0, 0, 1, 1], [], []>} : vector<16x64xbf16>, vector<64x64xbf16>, vector<16x64xf32> -> vector<16x64xf32>
    %91 = arith.addf %89, %90 : vector<16x64xf32>
    %cst_60 = arith.constant 5.000000e-01 : f32
    %92 = vector.broadcast %cst_60 : f32 to vector<16x64xf32>
    %93 = arith.mulf %91, %92 : vector<16x64xf32>
    %94 = math.tanh %93 : vector<16x64xf32>
    %cst_61 = arith.constant 5.000000e-01 : f32
    %95 = vector.broadcast %cst_61 : f32 to vector<16x64xf32>
    %96 = arith.mulf %94, %95 : vector<16x64xf32>
    %cst_62 = arith.constant 5.000000e-01 : f32
    %97 = vector.broadcast %cst_62 : f32 to vector<16x64xf32>
    %98 = arith.addf %96, %97 : vector<16x64xf32>
    %99 = arith.mulf %84, %60 : vector<16x64xf32>
    %100 = arith.mulf %74, %88 : vector<16x64xf32>
    %101 = arith.addf %99, %100 : vector<16x64xf32>
    %102 = math.tanh %101 : vector<16x64xf32>
    %103 = arith.mulf %98, %102 : vector<16x64xf32>
    %c16_63 = arith.constant 16 : index
    %c0_64 = arith.constant 0 : index
    %104 = vector.load %arg11[%c16_63, %c0_64] : memref<320x64xf32, #tpu.memory_space<vmem>>, vector<16x64xf32>
    tpu.vector_store %arg11[%c16_63, %c0_64], %103 {strides = array<i32>} : memref<320x64xf32, #tpu.memory_space<vmem>>, vector<16x64xf32>,
    %105 = arith.truncf %103 : vector<16x64xf32> to vector<16x64xbf16>
    %c32 = arith.constant 32 : index
    %c0_65 = arith.constant 0 : index
    %106 = vector.load %arg10[%c32, %c0_65] : memref<320x512xf32, #tpu.memory_space<vmem>>, vector<16x64xf32>
    %cst_66 = arith.constant dense<0.000000e+00> : vector<16x64xf32>
    %107 = tpu.matmul %105, %17, %cst_66 {dimension_numbers = #tpu.dot_dimension_numbers<[1], [0], [0], [1], [0, 0, 1, 1], [], []>} : vector<16x64xbf16>, vector<64x64xbf16>, vector<16x64xf32> -> vector<16x64xf32>
    %108 = arith.addf %106, %107 : vector<16x64xf32>
    %cst_67 = arith.constant 5.000000e-01 : f32
    %109 = vector.broadcast %cst_67 : f32 to vector<16x64xf32>
    %110 = arith.mulf %108, %109 : vector<16x64xf32>
    %111 = math.tanh %110 : vector<16x64xf32>
    %cst_68 = arith.constant 5.000000e-01 : f32
    %112 = vector.broadcast %cst_68 : f32 to vector<16x64xf32>
    %113 = arith.mulf %111, %112 : vector<16x64xf32>
    %cst_69 = arith.constant 5.000000e-01 : f32
    %114 = vector.broadcast %cst_69 : f32 to vector<16x64xf32>
    %115 = arith.addf %113, %114 : vector<16x64xf32>
    %c32_70 = arith.constant 32 : index
    %c128_71 = arith.constant 128 : index
    %116 = vector.load %arg10[%c32_70, %c128_71] : memref<320x512xf32, #tpu.memory_space<vmem>>, vector<16x64xf32>
    %cst_72 = arith.constant dense<0.000000e+00> : vector<16x64xf32>
    %117 = tpu.matmul %105, %18, %cst_72 {dimension_numbers = #tpu.dot_dimension_numbers<[1], [0], [0], [1], [0, 0, 1, 1], [], []>} : vector<16x64xbf16>, vector<64x64xbf16>, vector<16x64xf32> -> vector<16x64xf32>
    %118 = arith.addf %116, %117 : vector<16x64xf32>
    %cst_73 = arith.constant 5.000000e-01 : f32
    %119 = vector.broadcast %cst_73 : f32 to vector<16x64xf32>
    %120 = arith.mulf %118, %119 : vector<16x64xf32>
    %121 = math.tanh %120 : vector<16x64xf32>
    %cst_74 = arith.constant 5.000000e-01 : f32
    %122 = vector.broadcast %cst_74 : f32 to vector<16x64xf32>
    %123 = arith.mulf %121, %122 : vector<16x64xf32>
    %cst_75 = arith.constant 5.000000e-01 : f32
    %124 = vector.broadcast %cst_75 : f32 to vector<16x64xf32>
    %125 = arith.addf %123, %124 : vector<16x64xf32>
    %c32_76 = arith.constant 32 : index
    %c256_77 = arith.constant 256 : index
    %126 = vector.load %arg10[%c32_76, %c256_77] : memref<320x512xf32, #tpu.memory_space<vmem>>, vector<16x64xf32>
    %cst_78 = arith.constant dense<0.000000e+00> : vector<16x64xf32>
    %127 = tpu.matmul %105, %19, %cst_78 {dimension_numbers = #tpu.dot_dimension_numbers<[1], [0], [0], [1], [0, 0, 1, 1], [], []>} : vector<16x64xbf16>, vector<64x64xbf16>, vector<16x64xf32> -> vector<16x64xf32>
    %128 = arith.addf %126, %127 : vector<16x64xf32>
    %129 = math.tanh %128 : vector<16x64xf32>
    %c32_79 = arith.constant 32 : index
    %c384_80 = arith.constant 384 : index
    %130 = vector.load %arg10[%c32_79, %c384_80] : memref<320x512xf32, #tpu.memory_space<vmem>>, vector<16x64xf32>
    %cst_81 = arith.constant dense<0.000000e+00> : vector<16x64xf32>
    %131 = tpu.matmul %105, %20, %cst_81 {dimension_numbers = #tpu.dot_dimension_numbers<[1], [0], [0], [1], [0, 0, 1, 1], [], []>} : vector<16x64xbf16>, vector<64x64xbf16>, vector<16x64xf32> -> vector<16x64xf32>
    %132 = arith.addf %130, %131 : vector<16x64xf32>
    %cst_82 = arith.constant 5.000000e-01 : f32
    %133 = vector.broadcast %cst_82 : f32 to vector<16x64xf32>
    %134 = arith.mulf %132, %133 : vector<16x64xf32>
    %135 = math.tanh %134 : vector<16x64xf32>
    %cst_83 = arith.constant 5.000000e-01 : f32
    %136 = vector.broadcast %cst_83 : f32 to vector<16x64xf32>
    %137 = arith.mulf %135, %136 : vector<16x64xf32>
    %cst_84 = arith.constant 5.000000e-01 : f32
    %138 = vector.broadcast %cst_84 : f32 to vector<16x64xf32>
    %139 = arith.addf %137, %138 : vector<16x64xf32>
    %140 = arith.mulf %125, %101 : vector<16x64xf32>
    %141 = arith.mulf %115, %129 : vector<16x64xf32>
    %142 = arith.addf %140, %141 : vector<16x64xf32>
    %143 = math.tanh %142 : vector<16x64xf32>
    %144 = arith.mulf %139, %143 : vector<16x64xf32>
    %c32_85 = arith.constant 32 : index
    %c0_86 = arith.constant 0 : index
    %145 = vector.load %arg11[%c32_85, %c0_86] : memref<320x64xf32, #tpu.memory_space<vmem>>, vector<16x64xf32>
    tpu.vector_store %arg11[%c32_85, %c0_86], %144 {strides = array<i32>} : memref<320x64xf32, #tpu.memory_space<vmem>>, vector<16x64xf32>,
    %146 = arith.truncf %144 : vector<16x64xf32> to vector<16x64xbf16>
    %c48 = arith.constant 48 : index
    %c0_87 = arith.constant 0 : index
    %147 = vector.load %arg10[%c48, %c0_87] : memref<320x512xf32, #tpu.memory_space<vmem>>, vector<16x64xf32>
    %cst_88 = arith.constant dense<0.000000e+00> : vector<16x64xf32>
    %148 = tpu.matmul %146, %17, %cst_88 {dimension_numbers = #tpu.dot_dimension_numbers<[1], [0], [0], [1], [0, 0, 1, 1], [], []>} : vector<16x64xbf16>, vector<64x64xbf16>, vector<16x64xf32> -> vector<16x64xf32>
    %149 = arith.addf %147, %148 : vector<16x64xf32>
    %cst_89 = arith.constant 5.000000e-01 : f32
    %150 = vector.broadcast %cst_89 : f32 to vector<16x64xf32>
    %151 = arith.mulf %149, %150 : vector<16x64xf32>
    %152 = math.tanh %151 : vector<16x64xf32>
    %cst_90 = arith.constant 5.000000e-01 : f32
    %153 = vector.broadcast %cst_90 : f32 to vector<16x64xf32>
    %154 = arith.mulf %152, %153 : vector<16x64xf32>
    %cst_91 = arith.constant 5.000000e-01 : f32
    %155 = vector.broadcast %cst_91 : f32 to vector<16x64xf32>
    %156 = arith.addf %154, %155 : vector<16x64xf32>
    %c48_92 = arith.constant 48 : index
    %c128_93 = arith.constant 128 : index
    %157 = vector.load %arg10[%c48_92, %c128_93] : memref<320x512xf32, #tpu.memory_space<vmem>>, vector<16x64xf32>
    %cst_94 = arith.constant dense<0.000000e+00> : vector<16x64xf32>
    %158 = tpu.matmul %146, %18, %cst_94 {dimension_numbers = #tpu.dot_dimension_numbers<[1], [0], [0], [1], [0, 0, 1, 1], [], []>} : vector<16x64xbf16>, vector<64x64xbf16>, vector<16x64xf32> -> vector<16x64xf32>
    %159 = arith.addf %157, %158 : vector<16x64xf32>
    %cst_95 = arith.constant 5.000000e-01 : f32
    %160 = vector.broadcast %cst_95 : f32 to vector<16x64xf32>
    %161 = arith.mulf %159, %160 : vector<16x64xf32>
    %162 = math.tanh %161 : vector<16x64xf32>
    %cst_96 = arith.constant 5.000000e-01 : f32
    %163 = vector.broadcast %cst_96 : f32 to vector<16x64xf32>
    %164 = arith.mulf %162, %163 : vector<16x64xf32>
    %cst_97 = arith.constant 5.000000e-01 : f32
    %165 = vector.broadcast %cst_97 : f32 to vector<16x64xf32>
    %166 = arith.addf %164, %165 : vector<16x64xf32>
    %c48_98 = arith.constant 48 : index
    %c256_99 = arith.constant 256 : index
    %167 = vector.load %arg10[%c48_98, %c256_99] : memref<320x512xf32, #tpu.memory_space<vmem>>, vector<16x64xf32>
    %cst_100 = arith.constant dense<0.000000e+00> : vector<16x64xf32>
    %168 = tpu.matmul %146, %19, %cst_100 {dimension_numbers = #tpu.dot_dimension_numbers<[1], [0], [0], [1], [0, 0, 1, 1], [], []>} : vector<16x64xbf16>, vector<64x64xbf16>, vector<16x64xf32> -> vector<16x64xf32>
    %169 = arith.addf %167, %168 : vector<16x64xf32>
    %170 = math.tanh %169 : vector<16x64xf32>
    %c48_101 = arith.constant 48 : index
    %c384_102 = arith.constant 384 : index
    %171 = vector.load %arg10[%c48_101, %c384_102] : memref<320x512xf32, #tpu.memory_space<vmem>>, vector<16x64xf32>
    %cst_103 = arith.constant dense<0.000000e+00> : vector<16x64xf32>
    %172 = tpu.matmul %146, %20, %cst_103 {dimension_numbers = #tpu.dot_dimension_numbers<[1], [0], [0], [1], [0, 0, 1, 1], [], []>} : vector<16x64xbf16>, vector<64x64xbf16>, vector<16x64xf32> -> vector<16x64xf32>
    %173 = arith.addf %171, %172 : vector<16x64xf32>
    %cst_104 = arith.constant 5.000000e-01 : f32
    %174 = vector.broadcast %cst_104 : f32 to vector<16x64xf32>
    %175 = arith.mulf %173, %174 : vector<16x64xf32>
    %176 = math.tanh %175 : vector<16x64xf32>
    %cst_105 = arith.constant 5.000000e-01 : f32
    %177 = vector.broadcast %cst_105 : f32 to vector<16x64xf32>
    %178 = arith.mulf %176, %177 : vector<16x64xf32>
    %cst_106 = arith.constant 5.000000e-01 : f32
    %179 = vector.broadcast %cst_106 : f32 to vector<16x64xf32>
    %180 = arith.addf %178, %179 : vector<16x64xf32>
    %181 = arith.mulf %166, %142 : vector<16x64xf32>
    %182 = arith.mulf %156, %170 : vector<16x64xf32>
    %183 = arith.addf %181, %182 : vector<16x64xf32>
    %184 = math.tanh %183 : vector<16x64xf32>
    %185 = arith.mulf %180, %184 : vector<16x64xf32>
    %c48_107 = arith.constant 48 : index
    %c0_108 = arith.constant 0 : index
    %186 = vector.load %arg11[%c48_107, %c0_108] : memref<320x64xf32, #tpu.memory_space<vmem>>, vector<16x64xf32>
    tpu.vector_store %arg11[%c48_107, %c0_108], %185 {strides = array<i32>} : memref<320x64xf32, #tpu.memory_space<vmem>>, vector<16x64xf32>,
    %187 = arith.truncf %185 : vector<16x64xf32> to vector<16x64xbf16>
    %c64 = arith.constant 64 : index
    %c0_109 = arith.constant 0 : index
    %188 = vector.load %arg10[%c64, %c0_109] : memref<320x512xf32, #tpu.memory_space<vmem>>, vector<16x64xf32>
    %cst_110 = arith.constant dense<0.000000e+00> : vector<16x64xf32>
    %189 = tpu.matmul %187, %17, %cst_110 {dimension_numbers = #tpu.dot_dimension_numbers<[1], [0], [0], [1], [0, 0, 1, 1], [], []>} : vector<16x64xbf16>, vector<64x64xbf16>, vector<16x64xf32> -> vector<16x64xf32>
    %190 = arith.addf %188, %189 : vector<16x64xf32>
    %cst_111 = arith.constant 5.000000e-01 : f32
    %191 = vector.broadcast %cst_111 : f32 to vector<16x64xf32>
    %192 = arith.mulf %190, %191 : vector<16x64xf32>
    %193 = math.tanh %192 : vector<16x64xf32>
    %cst_112 = arith.constant 5.000000e-01 : f32
    %194 = vector.broadcast %cst_112 : f32 to vector<16x64xf32>
    %195 = arith.mulf %193, %194 : vector<16x64xf32>
    %cst_113 = arith.constant 5.000000e-01 : f32
    %196 = vector.broadcast %cst_113 : f32 to vector<16x64xf32>
    %197 = arith.addf %195, %196 : vector<16x64xf32>
    %c64_114 = arith.constant 64 : index
    %c128_115 = arith.constant 128 : index
    %198 = vector.load %arg10[%c64_114, %c128_115] : memref<320x512xf32, #tpu.memory_space<vmem>>, vector<16x64xf32>
    %cst_116 = arith.constant dense<0.000000e+00> : vector<16x64xf32>
    %199 = tpu.matmul %187, %18, %cst_116 {dimension_numbers = #tpu.dot_dimension_numbers<[1], [0], [0], [1], [0, 0, 1, 1], [], []>} : vector<16x64xbf16>, vector<64x64xbf16>, vector<16x64xf32> -> vector<16x64xf32>
    %200 = arith.addf %198, %199 : vector<16x64xf32>
    %cst_117 = arith.constant 5.000000e-01 : f32
    %201 = vector.broadcast %cst_117 : f32 to vector<16x64xf32>
    %202 = arith.mulf %200, %201 : vector<16x64xf32>
    %203 = math.tanh %202 : vector<16x64xf32>
    %cst_118 = arith.constant 5.000000e-01 : f32
    %204 = vector.broadcast %cst_118 : f32 to vector<16x64xf32>
    %205 = arith.mulf %203, %204 : vector<16x64xf32>
    %cst_119 = arith.constant 5.000000e-01 : f32
    %206 = vector.broadcast %cst_119 : f32 to vector<16x64xf32>
    %207 = arith.addf %205, %206 : vector<16x64xf32>
    %c64_120 = arith.constant 64 : index
    %c256_121 = arith.constant 256 : index
    %208 = vector.load %arg10[%c64_120, %c256_121] : memref<320x512xf32, #tpu.memory_space<vmem>>, vector<16x64xf32>
    %cst_122 = arith.constant dense<0.000000e+00> : vector<16x64xf32>
    %209 = tpu.matmul %187, %19, %cst_122 {dimension_numbers = #tpu.dot_dimension_numbers<[1], [0], [0], [1], [0, 0, 1, 1], [], []>} : vector<16x64xbf16>, vector<64x64xbf16>, vector<16x64xf32> -> vector<16x64xf32>
    %210 = arith.addf %208, %209 : vector<16x64xf32>
    %211 = math.tanh %210 : vector<16x64xf32>
    %c64_123 = arith.constant 64 : index
    %c384_124 = arith.constant 384 : index
    %212 = vector.load %arg10[%c64_123, %c384_124] : memref<320x512xf32, #tpu.memory_space<vmem>>, vector<16x64xf32>
    %cst_125 = arith.constant dense<0.000000e+00> : vector<16x64xf32>
    %213 = tpu.matmul %187, %20, %cst_125 {dimension_numbers = #tpu.dot_dimension_numbers<[1], [0], [0], [1], [0, 0, 1, 1], [], []>} : vector<16x64xbf16>, vector<64x64xbf16>, vector<16x64xf32> -> vector<16x64xf32>
    %214 = arith.addf %212, %213 : vector<16x64xf32>
    %cst_126 = arith.constant 5.000000e-01 : f32
    %215 = vector.broadcast %cst_126 : f32 to vector<16x64xf32>
    %216 = arith.mulf %214, %215 : vector<16x64xf32>
    %217 = math.tanh %216 : vector<16x64xf32>
    %cst_127 = arith.constant 5.000000e-01 : f32
    %218 = vector.broadcast %cst_127 : f32 to vector<16x64xf32>
    %219 = arith.mulf %217, %218 : vector<16x64xf32>
    %cst_128 = arith.constant 5.000000e-01 : f32
    %220 = vector.broadcast %cst_128 : f32 to vector<16x64xf32>
    %221 = arith.addf %219, %220 : vector<16x64xf32>
    %222 = arith.mulf %207, %183 : vector<16x64xf32>
    %223 = arith.mulf %197, %211 : vector<16x64xf32>
    %224 = arith.addf %222, %223 : vector<16x64xf32>
    %225 = math.tanh %224 : vector<16x64xf32>
    %226 = arith.mulf %221, %225 : vector<16x64xf32>
    %c64_129 = arith.constant 64 : index
    %c0_130 = arith.constant 0 : index
    %227 = vector.load %arg11[%c64_129, %c0_130] : memref<320x64xf32, #tpu.memory_space<vmem>>, vector<16x64xf32>
    tpu.vector_store %arg11[%c64_129, %c0_130], %226 {strides = array<i32>} : memref<320x64xf32, #tpu.memory_space<vmem>>, vector<16x64xf32>,
    %228 = arith.truncf %226 : vector<16x64xf32> to vector<16x64xbf16>
    %c80 = arith.constant 80 : index
    %c0_131 = arith.constant 0 : index
    %229 = vector.load %arg10[%c80, %c0_131] : memref<320x512xf32, #tpu.memory_space<vmem>>, vector<16x64xf32>
    %cst_132 = arith.constant dense<0.000000e+00> : vector<16x64xf32>
    %230 = tpu.matmul %228, %17, %cst_132 {dimension_numbers = #tpu.dot_dimension_numbers<[1], [0], [0], [1], [0, 0, 1, 1], [], []>} : vector<16x64xbf16>, vector<64x64xbf16>, vector<16x64xf32> -> vector<16x64xf32>
    %231 = arith.addf %229, %230 : vector<16x64xf32>
    %cst_133 = arith.constant 5.000000e-01 : f32
    %232 = vector.broadcast %cst_133 : f32 to vector<16x64xf32>
    %233 = arith.mulf %231, %232 : vector<16x64xf32>
    %234 = math.tanh %233 : vector<16x64xf32>
    %cst_134 = arith.constant 5.000000e-01 : f32
    %235 = vector.broadcast %cst_134 : f32 to vector<16x64xf32>
    %236 = arith.mulf %234, %235 : vector<16x64xf32>
    %cst_135 = arith.constant 5.000000e-01 : f32
    %237 = vector.broadcast %cst_135 : f32 to vector<16x64xf32>
    %238 = arith.addf %236, %237 : vector<16x64xf32>
    %c80_136 = arith.constant 80 : index
    %c128_137 = arith.constant 128 : index
    %239 = vector.load %arg10[%c80_136, %c128_137] : memref<320x512xf32, #tpu.memory_space<vmem>>, vector<16x64xf32>
    %cst_138 = arith.constant dense<0.000000e+00> : vector<16x64xf32>
    %240 = tpu.matmul %228, %18, %cst_138 {dimension_numbers = #tpu.dot_dimension_numbers<[1], [0], [0], [1], [0, 0, 1, 1], [], []>} : vector<16x64xbf16>, vector<64x64xbf16>, vector<16x64xf32> -> vector<16x64xf32>
    %241 = arith.addf %239, %240 : vector<16x64xf32>
    %cst_139 = arith.constant 5.000000e-01 : f32
    %242 = vector.broadcast %cst_139 : f32 to vector<16x64xf32>
    %243 = arith.mulf %241, %242 : vector<16x64xf32>
    %244 = math.tanh %243 : vector<16x64xf32>
    %cst_140 = arith.constant 5.000000e-01 : f32
    %245 = vector.broadcast %cst_140 : f32 to vector<16x64xf32>
    %246 = arith.mulf %244, %245 : vector<16x64xf32>
    %cst_141 = arith.constant 5.000000e-01 : f32
    %247 = vector.broadcast %cst_141 : f32 to vector<16x64xf32>
    %248 = arith.addf %246, %247 : vector<16x64xf32>
    %c80_142 = arith.constant 80 : index
    %c256_143 = arith.constant 256 : index
    %249 = vector.load %arg10[%c80_142, %c256_143] : memref<320x512xf32, #tpu.memory_space<vmem>>, vector<16x64xf32>
    %cst_144 = arith.constant dense<0.000000e+00> : vector<16x64xf32>
    %250 = tpu.matmul %228, %19, %cst_144 {dimension_numbers = #tpu.dot_dimension_numbers<[1], [0], [0], [1], [0, 0, 1, 1], [], []>} : vector<16x64xbf16>, vector<64x64xbf16>, vector<16x64xf32> -> vector<16x64xf32>
    %251 = arith.addf %249, %250 : vector<16x64xf32>
    %252 = math.tanh %251 : vector<16x64xf32>
    %c80_145 = arith.constant 80 : index
    %c384_146 = arith.constant 384 : index
    %253 = vector.load %arg10[%c80_145, %c384_146] : memref<320x512xf32, #tpu.memory_space<vmem>>, vector<16x64xf32>
    %cst_147 = arith.constant dense<0.000000e+00> : vector<16x64xf32>
    %254 = tpu.matmul %228, %20, %cst_147 {dimension_numbers = #tpu.dot_dimension_numbers<[1], [0], [0], [1], [0, 0, 1, 1], [], []>} : vector<16x64xbf16>, vector<64x64xbf16>, vector<16x64xf32> -> vector<16x64xf32>
    %255 = arith.addf %253, %254 : vector<16x64xf32>
    %cst_148 = arith.constant 5.000000e-01 : f32
    %256 = vector.broadcast %cst_148 : f32 to vector<16x64xf32>
    %257 = arith.mulf %255, %256 : vector<16x64xf32>
    %258 = math.tanh %257 : vector<16x64xf32>
    %cst_149 = arith.constant 5.000000e-01 : f32
    %259 = vector.broadcast %cst_149 : f32 to vector<16x64xf32>
    %260 = arith.mulf %258, %259 : vector<16x64xf32>
    %cst_150 = arith.constant 5.000000e-01 : f32
    %261 = vector.broadcast %cst_150 : f32 to vector<16x64xf32>
    %262 = arith.addf %260, %261 : vector<16x64xf32>
    %263 = arith.mulf %248, %224 : vector<16x64xf32>
    %264 = arith.mulf %238, %252 : vector<16x64xf32>
    %265 = arith.addf %263, %264 : vector<16x64xf32>
    %266 = math.tanh %265 : vector<16x64xf32>
    %267 = arith.mulf %262, %266 : vector<16x64xf32>
    %c80_151 = arith.constant 80 : index
    %c0_152 = arith.constant 0 : index
    %268 = vector.load %arg11[%c80_151, %c0_152] : memref<320x64xf32, #tpu.memory_space<vmem>>, vector<16x64xf32>
    tpu.vector_store %arg11[%c80_151, %c0_152], %267 {strides = array<i32>} : memref<320x64xf32, #tpu.memory_space<vmem>>, vector<16x64xf32>,
    %269 = arith.truncf %267 : vector<16x64xf32> to vector<16x64xbf16>
    %c96 = arith.constant 96 : index
    %c0_153 = arith.constant 0 : index
    %270 = vector.load %arg10[%c96, %c0_153] : memref<320x512xf32, #tpu.memory_space<vmem>>, vector<16x64xf32>
    %cst_154 = arith.constant dense<0.000000e+00> : vector<16x64xf32>
    %271 = tpu.matmul %269, %17, %cst_154 {dimension_numbers = #tpu.dot_dimension_numbers<[1], [0], [0], [1], [0, 0, 1, 1], [], []>} : vector<16x64xbf16>, vector<64x64xbf16>, vector<16x64xf32> -> vector<16x64xf32>
    %272 = arith.addf %270, %271 : vector<16x64xf32>
    %cst_155 = arith.constant 5.000000e-01 : f32
    %273 = vector.broadcast %cst_155 : f32 to vector<16x64xf32>
    %274 = arith.mulf %272, %273 : vector<16x64xf32>
    %275 = math.tanh %274 : vector<16x64xf32>
    %cst_156 = arith.constant 5.000000e-01 : f32
    %276 = vector.broadcast %cst_156 : f32 to vector<16x64xf32>
    %277 = arith.mulf %275, %276 : vector<16x64xf32>
    %cst_157 = arith.constant 5.000000e-01 : f32
    %278 = vector.broadcast %cst_157 : f32 to vector<16x64xf32>
    %279 = arith.addf %277, %278 : vector<16x64xf32>
    %c96_158 = arith.constant 96 : index
    %c128_159 = arith.constant 128 : index
    %280 = vector.load %arg10[%c96_158, %c128_159] : memref<320x512xf32, #tpu.memory_space<vmem>>, vector<16x64xf32>
    %cst_160 = arith.constant dense<0.000000e+00> : vector<16x64xf32>
    %281 = tpu.matmul %269, %18, %cst_160 {dimension_numbers = #tpu.dot_dimension_numbers<[1], [0], [0], [1], [0, 0, 1, 1], [], []>} : vector<16x64xbf16>, vector<64x64xbf16>, vector<16x64xf32> -> vector<16x64xf32>
    %282 = arith.addf %280, %281 : vector<16x64xf32>
    %cst_161 = arith.constant 5.000000e-01 : f32
    %283 = vector.broadcast %cst_161 : f32 to vector<16x64xf32>
    %284 = arith.mulf %282, %283 : vector<16x64xf32>
    %285 = math.tanh %284 : vector<16x64xf32>
    %cst_162 = arith.constant 5.000000e-01 : f32
    %286 = vector.broadcast %cst_162 : f32 to vector<16x64xf32>
    %287 = arith.mulf %285, %286 : vector<16x64xf32>
    %cst_163 = arith.constant 5.000000e-01 : f32
    %288 = vector.broadcast %cst_163 : f32 to vector<16x64xf32>
    %289 = arith.addf %287, %288 : vector<16x64xf32>
    %c96_164 = arith.constant 96 : index
    %c256_165 = arith.constant 256 : index
    %290 = vector.load %arg10[%c96_164, %c256_165] : memref<320x512xf32, #tpu.memory_space<vmem>>, vector<16x64xf32>
    %cst_166 = arith.constant dense<0.000000e+00> : vector<16x64xf32>
    %291 = tpu.matmul %269, %19, %cst_166 {dimension_numbers = #tpu.dot_dimension_numbers<[1], [0], [0], [1], [0, 0, 1, 1], [], []>} : vector<16x64xbf16>, vector<64x64xbf16>, vector<16x64xf32> -> vector<16x64xf32>
    %292 = arith.addf %290, %291 : vector<16x64xf32>
    %293 = math.tanh %292 : vector<16x64xf32>
    %c96_167 = arith.constant 96 : index
    %c384_168 = arith.constant 384 : index
    %294 = vector.load %arg10[%c96_167, %c384_168] : memref<320x512xf32, #tpu.memory_space<vmem>>, vector<16x64xf32>
    %cst_169 = arith.constant dense<0.000000e+00> : vector<16x64xf32>
    %295 = tpu.matmul %269, %20, %cst_169 {dimension_numbers = #tpu.dot_dimension_numbers<[1], [0], [0], [1], [0, 0, 1, 1], [], []>} : vector<16x64xbf16>, vector<64x64xbf16>, vector<16x64xf32> -> vector<16x64xf32>
    %296 = arith.addf %294, %295 : vector<16x64xf32>
    %cst_170 = arith.constant 5.000000e-01 : f32
    %297 = vector.broadcast %cst_170 : f32 to vector<16x64xf32>
    %298 = arith.mulf %296, %297 : vector<16x64xf32>
    %299 = math.tanh %298 : vector<16x64xf32>
    %cst_171 = arith.constant 5.000000e-01 : f32
    %300 = vector.broadcast %cst_171 : f32 to vector<16x64xf32>
    %301 = arith.mulf %299, %300 : vector<16x64xf32>
    %cst_172 = arith.constant 5.000000e-01 : f32
    %302 = vector.broadcast %cst_172 : f32 to vector<16x64xf32>
    %303 = arith.addf %301, %302 : vector<16x64xf32>
    %304 = arith.mulf %289, %265 : vector<16x64xf32>
    %305 = arith.mulf %279, %293 : vector<16x64xf32>
    %306 = arith.addf %304, %305 : vector<16x64xf32>
    %307 = math.tanh %306 : vector<16x64xf32>
    %308 = arith.mulf %303, %307 : vector<16x64xf32>
    %c96_173 = arith.constant 96 : index
    %c0_174 = arith.constant 0 : index
    %309 = vector.load %arg11[%c96_173, %c0_174] : memref<320x64xf32, #tpu.memory_space<vmem>>, vector<16x64xf32>
    tpu.vector_store %arg11[%c96_173, %c0_174], %308 {strides = array<i32>} : memref<320x64xf32, #tpu.memory_space<vmem>>, vector<16x64xf32>,
    %310 = arith.truncf %308 : vector<16x64xf32> to vector<16x64xbf16>
    %c112 = arith.constant 112 : index
    %c0_175 = arith.constant 0 : index
    %311 = vector.load %arg10[%c112, %c0_175] : memref<320x512xf32, #tpu.memory_space<vmem>>, vector<16x64xf32>
    %cst_176 = arith.constant dense<0.000000e+00> : vector<16x64xf32>
    %312 = tpu.matmul %310, %17, %cst_176 {dimension_numbers = #tpu.dot_dimension_numbers<[1], [0], [0], [1], [0, 0, 1, 1], [], []>} : vector<16x64xbf16>, vector<64x64xbf16>, vector<16x64xf32> -> vector<16x64xf32>
    %313 = arith.addf %311, %312 : vector<16x64xf32>
    %cst_177 = arith.constant 5.000000e-01 : f32
    %314 = vector.broadcast %cst_177 : f32 to vector<16x64xf32>
    %315 = arith.mulf %313, %314 : vector<16x64xf32>
    %316 = math.tanh %315 : vector<16x64xf32>
    %cst_178 = arith.constant 5.000000e-01 : f32
    %317 = vector.broadcast %cst_178 : f32 to vector<16x64xf32>
    %318 = arith.mulf %316, %317 : vector<16x64xf32>
    %cst_179 = arith.constant 5.000000e-01 : f32
    %319 = vector.broadcast %cst_179 : f32 to vector<16x64xf32>
    %320 = arith.addf %318, %319 : vector<16x64xf32>
    %c112_180 = arith.constant 112 : index
    %c128_181 = arith.constant 128 : index
    %321 = vector.load %arg10[%c112_180, %c128_181] : memref<320x512xf32, #tpu.memory_space<vmem>>, vector<16x64xf32>
    %cst_182 = arith.constant dense<0.000000e+00> : vector<16x64xf32>
    %322 = tpu.matmul %310, %18, %cst_182 {dimension_numbers = #tpu.dot_dimension_numbers<[1], [0], [0], [1], [0, 0, 1, 1], [], []>} : vector<16x64xbf16>, vector<64x64xbf16>, vector<16x64xf32> -> vector<16x64xf32>
    %323 = arith.addf %321, %322 : vector<16x64xf32>
    %cst_183 = arith.constant 5.000000e-01 : f32
    %324 = vector.broadcast %cst_183 : f32 to vector<16x64xf32>
    %325 = arith.mulf %323, %324 : vector<16x64xf32>
    %326 = math.tanh %325 : vector<16x64xf32>
    %cst_184 = arith.constant 5.000000e-01 : f32
    %327 = vector.broadcast %cst_184 : f32 to vector<16x64xf32>
    %328 = arith.mulf %326, %327 : vector<16x64xf32>
    %cst_185 = arith.constant 5.000000e-01 : f32
    %329 = vector.broadcast %cst_185 : f32 to vector<16x64xf32>
    %330 = arith.addf %328, %329 : vector<16x64xf32>
    %c112_186 = arith.constant 112 : index
    %c256_187 = arith.constant 256 : index
    %331 = vector.load %arg10[%c112_186, %c256_187] : memref<320x512xf32, #tpu.memory_space<vmem>>, vector<16x64xf32>
    %cst_188 = arith.constant dense<0.000000e+00> : vector<16x64xf32>
    %332 = tpu.matmul %310, %19, %cst_188 {dimension_numbers = #tpu.dot_dimension_numbers<[1], [0], [0], [1], [0, 0, 1, 1], [], []>} : vector<16x64xbf16>, vector<64x64xbf16>, vector<16x64xf32> -> vector<16x64xf32>
    %333 = arith.addf %331, %332 : vector<16x64xf32>
    %334 = math.tanh %333 : vector<16x64xf32>
    %c112_189 = arith.constant 112 : index
    %c384_190 = arith.constant 384 : index
    %335 = vector.load %arg10[%c112_189, %c384_190] : memref<320x512xf32, #tpu.memory_space<vmem>>, vector<16x64xf32>
    %cst_191 = arith.constant dense<0.000000e+00> : vector<16x64xf32>
    %336 = tpu.matmul %310, %20, %cst_191 {dimension_numbers = #tpu.dot_dimension_numbers<[1], [0], [0], [1], [0, 0, 1, 1], [], []>} : vector<16x64xbf16>, vector<64x64xbf16>, vector<16x64xf32> -> vector<16x64xf32>
    %337 = arith.addf %335, %336 : vector<16x64xf32>
    %cst_192 = arith.constant 5.000000e-01 : f32
    %338 = vector.broadcast %cst_192 : f32 to vector<16x64xf32>
    %339 = arith.mulf %337, %338 : vector<16x64xf32>
    %340 = math.tanh %339 : vector<16x64xf32>
    %cst_193 = arith.constant 5.000000e-01 : f32
    %341 = vector.broadcast %cst_193 : f32 to vector<16x64xf32>
    %342 = arith.mulf %340, %341 : vector<16x64xf32>
    %cst_194 = arith.constant 5.000000e-01 : f32
    %343 = vector.broadcast %cst_194 : f32 to vector<16x64xf32>
    %344 = arith.addf %342, %343 : vector<16x64xf32>
    %345 = arith.mulf %330, %306 : vector<16x64xf32>
    %346 = arith.mulf %320, %334 : vector<16x64xf32>
    %347 = arith.addf %345, %346 : vector<16x64xf32>
    %348 = math.tanh %347 : vector<16x64xf32>
    %349 = arith.mulf %344, %348 : vector<16x64xf32>
    %c112_195 = arith.constant 112 : index
    %c0_196 = arith.constant 0 : index
    %350 = vector.load %arg11[%c112_195, %c0_196] : memref<320x64xf32, #tpu.memory_space<vmem>>, vector<16x64xf32>
    tpu.vector_store %arg11[%c112_195, %c0_196], %349 {strides = array<i32>} : memref<320x64xf32, #tpu.memory_space<vmem>>, vector<16x64xf32>,
    %351 = arith.truncf %349 : vector<16x64xf32> to vector<16x64xbf16>
    %c128_197 = arith.constant 128 : index
    %c0_198 = arith.constant 0 : index
    %352 = vector.load %arg10[%c128_197, %c0_198] : memref<320x512xf32, #tpu.memory_space<vmem>>, vector<16x64xf32>
    %cst_199 = arith.constant dense<0.000000e+00> : vector<16x64xf32>
    %353 = tpu.matmul %351, %17, %cst_199 {dimension_numbers = #tpu.dot_dimension_numbers<[1], [0], [0], [1], [0, 0, 1, 1], [], []>} : vector<16x64xbf16>, vector<64x64xbf16>, vector<16x64xf32> -> vector<16x64xf32>
    %354 = arith.addf %352, %353 : vector<16x64xf32>
    %cst_200 = arith.constant 5.000000e-01 : f32
    %355 = vector.broadcast %cst_200 : f32 to vector<16x64xf32>
    %356 = arith.mulf %354, %355 : vector<16x64xf32>
    %357 = math.tanh %356 : vector<16x64xf32>
    %cst_201 = arith.constant 5.000000e-01 : f32
    %358 = vector.broadcast %cst_201 : f32 to vector<16x64xf32>
    %359 = arith.mulf %357, %358 : vector<16x64xf32>
    %cst_202 = arith.constant 5.000000e-01 : f32
    %360 = vector.broadcast %cst_202 : f32 to vector<16x64xf32>
    %361 = arith.addf %359, %360 : vector<16x64xf32>
    %c128_203 = arith.constant 128 : index
    %c128_204 = arith.constant 128 : index
    %362 = vector.load %arg10[%c128_203, %c128_204] : memref<320x512xf32, #tpu.memory_space<vmem>>, vector<16x64xf32>
    %cst_205 = arith.constant dense<0.000000e+00> : vector<16x64xf32>
    %363 = tpu.matmul %351, %18, %cst_205 {dimension_numbers = #tpu.dot_dimension_numbers<[1], [0], [0], [1], [0, 0, 1, 1], [], []>} : vector<16x64xbf16>, vector<64x64xbf16>, vector<16x64xf32> -> vector<16x64xf32>
    %364 = arith.addf %362, %363 : vector<16x64xf32>
    %cst_206 = arith.constant 5.000000e-01 : f32
    %365 = vector.broadcast %cst_206 : f32 to vector<16x64xf32>
    %366 = arith.mulf %364, %365 : vector<16x64xf32>
    %367 = math.tanh %366 : vector<16x64xf32>
    %cst_207 = arith.constant 5.000000e-01 : f32
    %368 = vector.broadcast %cst_207 : f32 to vector<16x64xf32>
    %369 = arith.mulf %367, %368 : vector<16x64xf32>
    %cst_208 = arith.constant 5.000000e-01 : f32
    %370 = vector.broadcast %cst_208 : f32 to vector<16x64xf32>
    %371 = arith.addf %369, %370 : vector<16x64xf32>
    %c128_209 = arith.constant 128 : index
    %c256_210 = arith.constant 256 : index
    %372 = vector.load %arg10[%c128_209, %c256_210] : memref<320x512xf32, #tpu.memory_space<vmem>>, vector<16x64xf32>
    %cst_211 = arith.constant dense<0.000000e+00> : vector<16x64xf32>
    %373 = tpu.matmul %351, %19, %cst_211 {dimension_numbers = #tpu.dot_dimension_numbers<[1], [0], [0], [1], [0, 0, 1, 1], [], []>} : vector<16x64xbf16>, vector<64x64xbf16>, vector<16x64xf32> -> vector<16x64xf32>
    %374 = arith.addf %372, %373 : vector<16x64xf32>
    %375 = math.tanh %374 : vector<16x64xf32>
    %c128_212 = arith.constant 128 : index
    %c384_213 = arith.constant 384 : index
    %376 = vector.load %arg10[%c128_212, %c384_213] : memref<320x512xf32, #tpu.memory_space<vmem>>, vector<16x64xf32>
    %cst_214 = arith.constant dense<0.000000e+00> : vector<16x64xf32>
    %377 = tpu.matmul %351, %20, %cst_214 {dimension_numbers = #tpu.dot_dimension_numbers<[1], [0], [0], [1], [0, 0, 1, 1], [], []>} : vector<16x64xbf16>, vector<64x64xbf16>, vector<16x64xf32> -> vector<16x64xf32>
    %378 = arith.addf %376, %377 : vector<16x64xf32>
    %cst_215 = arith.constant 5.000000e-01 : f32
    %379 = vector.broadcast %cst_215 : f32 to vector<16x64xf32>
    %380 = arith.mulf %378, %379 : vector<16x64xf32>
    %381 = math.tanh %380 : vector<16x64xf32>
    %cst_216 = arith.constant 5.000000e-01 : f32
    %382 = vector.broadcast %cst_216 : f32 to vector<16x64xf32>
    %383 = arith.mulf %381, %382 : vector<16x64xf32>
    %cst_217 = arith.constant 5.000000e-01 : f32
    %384 = vector.broadcast %cst_217 : f32 to vector<16x64xf32>
    %385 = arith.addf %383, %384 : vector<16x64xf32>
    %386 = arith.mulf %371, %347 : vector<16x64xf32>
    %387 = arith.mulf %361, %375 : vector<16x64xf32>
    %388 = arith.addf %386, %387 : vector<16x64xf32>
    %389 = math.tanh %388 : vector<16x64xf32>
    %390 = arith.mulf %385, %389 : vector<16x64xf32>
    %c128_218 = arith.constant 128 : index
    %c0_219 = arith.constant 0 : index
    %391 = vector.load %arg11[%c128_218, %c0_219] : memref<320x64xf32, #tpu.memory_space<vmem>>, vector<16x64xf32>
    tpu.vector_store %arg11[%c128_218, %c0_219], %390 {strides = array<i32>} : memref<320x64xf32, #tpu.memory_space<vmem>>, vector<16x64xf32>,
    %392 = arith.truncf %390 : vector<16x64xf32> to vector<16x64xbf16>
    %c144 = arith.constant 144 : index
    %c0_220 = arith.constant 0 : index
    %393 = vector.load %arg10[%c144, %c0_220] : memref<320x512xf32, #tpu.memory_space<vmem>>, vector<16x64xf32>
    %cst_221 = arith.constant dense<0.000000e+00> : vector<16x64xf32>
    %394 = tpu.matmul %392, %17, %cst_221 {dimension_numbers = #tpu.dot_dimension_numbers<[1], [0], [0], [1], [0, 0, 1, 1], [], []>} : vector<16x64xbf16>, vector<64x64xbf16>, vector<16x64xf32> -> vector<16x64xf32>
    %395 = arith.addf %393, %394 : vector<16x64xf32>
    %cst_222 = arith.constant 5.000000e-01 : f32
    %396 = vector.broadcast %cst_222 : f32 to vector<16x64xf32>
    %397 = arith.mulf %395, %396 : vector<16x64xf32>
    %398 = math.tanh %397 : vector<16x64xf32>
    %cst_223 = arith.constant 5.000000e-01 : f32
    %399 = vector.broadcast %cst_223 : f32 to vector<16x64xf32>
    %400 = arith.mulf %398, %399 : vector<16x64xf32>
    %cst_224 = arith.constant 5.000000e-01 : f32
    %401 = vector.broadcast %cst_224 : f32 to vector<16x64xf32>
    %402 = arith.addf %400, %401 : vector<16x64xf32>
    %c144_225 = arith.constant 144 : index
    %c128_226 = arith.constant 128 : index
    %403 = vector.load %arg10[%c144_225, %c128_226] : memref<320x512xf32, #tpu.memory_space<vmem>>, vector<16x64xf32>
    %cst_227 = arith.constant dense<0.000000e+00> : vector<16x64xf32>
    %404 = tpu.matmul %392, %18, %cst_227 {dimension_numbers = #tpu.dot_dimension_numbers<[1], [0], [0], [1], [0, 0, 1, 1], [], []>} : vector<16x64xbf16>, vector<64x64xbf16>, vector<16x64xf32> -> vector<16x64xf32>
    %405 = arith.addf %403, %404 : vector<16x64xf32>
    %cst_228 = arith.constant 5.000000e-01 : f32
    %406 = vector.broadcast %cst_228 : f32 to vector<16x64xf32>
    %407 = arith.mulf %405, %406 : vector<16x64xf32>
    %408 = math.tanh %407 : vector<16x64xf32>
    %cst_229 = arith.constant 5.000000e-01 : f32
    %409 = vector.broadcast %cst_229 : f32 to vector<16x64xf32>
    %410 = arith.mulf %408, %409 : vector<16x64xf32>
    %cst_230 = arith.constant 5.000000e-01 : f32
    %411 = vector.broadcast %cst_230 : f32 to vector<16x64xf32>
    %412 = arith.addf %410, %411 : vector<16x64xf32>
    %c144_231 = arith.constant 144 : index
    %c256_232 = arith.constant 256 : index
    %413 = vector.load %arg10[%c144_231, %c256_232] : memref<320x512xf32, #tpu.memory_space<vmem>>, vector<16x64xf32>
    %cst_233 = arith.constant dense<0.000000e+00> : vector<16x64xf32>
    %414 = tpu.matmul %392, %19, %cst_233 {dimension_numbers = #tpu.dot_dimension_numbers<[1], [0], [0], [1], [0, 0, 1, 1], [], []>} : vector<16x64xbf16>, vector<64x64xbf16>, vector<16x64xf32> -> vector<16x64xf32>
    %415 = arith.addf %413, %414 : vector<16x64xf32>
    %416 = math.tanh %415 : vector<16x64xf32>
    %c144_234 = arith.constant 144 : index
    %c384_235 = arith.constant 384 : index
    %417 = vector.load %arg10[%c144_234, %c384_235] : memref<320x512xf32, #tpu.memory_space<vmem>>, vector<16x64xf32>
    %cst_236 = arith.constant dense<0.000000e+00> : vector<16x64xf32>
    %418 = tpu.matmul %392, %20, %cst_236 {dimension_numbers = #tpu.dot_dimension_numbers<[1], [0], [0], [1], [0, 0, 1, 1], [], []>} : vector<16x64xbf16>, vector<64x64xbf16>, vector<16x64xf32> -> vector<16x64xf32>
    %419 = arith.addf %417, %418 : vector<16x64xf32>
    %cst_237 = arith.constant 5.000000e-01 : f32
    %420 = vector.broadcast %cst_237 : f32 to vector<16x64xf32>
    %421 = arith.mulf %419, %420 : vector<16x64xf32>
    %422 = math.tanh %421 : vector<16x64xf32>
    %cst_238 = arith.constant 5.000000e-01 : f32
    %423 = vector.broadcast %cst_238 : f32 to vector<16x64xf32>
    %424 = arith.mulf %422, %423 : vector<16x64xf32>
    %cst_239 = arith.constant 5.000000e-01 : f32
    %425 = vector.broadcast %cst_239 : f32 to vector<16x64xf32>
    %426 = arith.addf %424, %425 : vector<16x64xf32>
    %427 = arith.mulf %412, %388 : vector<16x64xf32>
    %428 = arith.mulf %402, %416 : vector<16x64xf32>
    %429 = arith.addf %427, %428 : vector<16x64xf32>
    %430 = math.tanh %429 : vector<16x64xf32>
    %431 = arith.mulf %426, %430 : vector<16x64xf32>
    %c144_240 = arith.constant 144 : index
    %c0_241 = arith.constant 0 : index
    %432 = vector.load %arg11[%c144_240, %c0_241] : memref<320x64xf32, #tpu.memory_space<vmem>>, vector<16x64xf32>
    tpu.vector_store %arg11[%c144_240, %c0_241], %431 {strides = array<i32>} : memref<320x64xf32, #tpu.memory_space<vmem>>, vector<16x64xf32>,
    %433 = arith.truncf %431 : vector<16x64xf32> to vector<16x64xbf16>
    %c160 = arith.constant 160 : index
    %c0_242 = arith.constant 0 : index
    %434 = vector.load %arg10[%c160, %c0_242] : memref<320x512xf32, #tpu.memory_space<vmem>>, vector<16x64xf32>
    %cst_243 = arith.constant dense<0.000000e+00> : vector<16x64xf32>
    %435 = tpu.matmul %433, %17, %cst_243 {dimension_numbers = #tpu.dot_dimension_numbers<[1], [0], [0], [1], [0, 0, 1, 1], [], []>} : vector<16x64xbf16>, vector<64x64xbf16>, vector<16x64xf32> -> vector<16x64xf32>
    %436 = arith.addf %434, %435 : vector<16x64xf32>
    %cst_244 = arith.constant 5.000000e-01 : f32
    %437 = vector.broadcast %cst_244 : f32 to vector<16x64xf32>
    %438 = arith.mulf %436, %437 : vector<16x64xf32>
    %439 = math.tanh %438 : vector<16x64xf32>
    %cst_245 = arith.constant 5.000000e-01 : f32
    %440 = vector.broadcast %cst_245 : f32 to vector<16x64xf32>
    %441 = arith.mulf %439, %440 : vector<16x64xf32>
    %cst_246 = arith.constant 5.000000e-01 : f32
    %442 = vector.broadcast %cst_246 : f32 to vector<16x64xf32>
    %443 = arith.addf %441, %442 : vector<16x64xf32>
    %c160_247 = arith.constant 160 : index
    %c128_248 = arith.constant 128 : index
    %444 = vector.load %arg10[%c160_247, %c128_248] : memref<320x512xf32, #tpu.memory_space<vmem>>, vector<16x64xf32>
    %cst_249 = arith.constant dense<0.000000e+00> : vector<16x64xf32>
    %445 = tpu.matmul %433, %18, %cst_249 {dimension_numbers = #tpu.dot_dimension_numbers<[1], [0], [0], [1], [0, 0, 1, 1], [], []>} : vector<16x64xbf16>, vector<64x64xbf16>, vector<16x64xf32> -> vector<16x64xf32>
    %446 = arith.addf %444, %445 : vector<16x64xf32>
    %cst_250 = arith.constant 5.000000e-01 : f32
    %447 = vector.broadcast %cst_250 : f32 to vector<16x64xf32>
    %448 = arith.mulf %446, %447 : vector<16x64xf32>
    %449 = math.tanh %448 : vector<16x64xf32>
    %cst_251 = arith.constant 5.000000e-01 : f32
    %450 = vector.broadcast %cst_251 : f32 to vector<16x64xf32>
    %451 = arith.mulf %449, %450 : vector<16x64xf32>
    %cst_252 = arith.constant 5.000000e-01 : f32
    %452 = vector.broadcast %cst_252 : f32 to vector<16x64xf32>
    %453 = arith.addf %451, %452 : vector<16x64xf32>
    %c160_253 = arith.constant 160 : index
    %c256_254 = arith.constant 256 : index
    %454 = vector.load %arg10[%c160_253, %c256_254] : memref<320x512xf32, #tpu.memory_space<vmem>>, vector<16x64xf32>
    %cst_255 = arith.constant dense<0.000000e+00> : vector<16x64xf32>
    %455 = tpu.matmul %433, %19, %cst_255 {dimension_numbers = #tpu.dot_dimension_numbers<[1], [0], [0], [1], [0, 0, 1, 1], [], []>} : vector<16x64xbf16>, vector<64x64xbf16>, vector<16x64xf32> -> vector<16x64xf32>
    %456 = arith.addf %454, %455 : vector<16x64xf32>
    %457 = math.tanh %456 : vector<16x64xf32>
    %c160_256 = arith.constant 160 : index
    %c384_257 = arith.constant 384 : index
    %458 = vector.load %arg10[%c160_256, %c384_257] : memref<320x512xf32, #tpu.memory_space<vmem>>, vector<16x64xf32>
    %cst_258 = arith.constant dense<0.000000e+00> : vector<16x64xf32>
    %459 = tpu.matmul %433, %20, %cst_258 {dimension_numbers = #tpu.dot_dimension_numbers<[1], [0], [0], [1], [0, 0, 1, 1], [], []>} : vector<16x64xbf16>, vector<64x64xbf16>, vector<16x64xf32> -> vector<16x64xf32>
    %460 = arith.addf %458, %459 : vector<16x64xf32>
    %cst_259 = arith.constant 5.000000e-01 : f32
    %461 = vector.broadcast %cst_259 : f32 to vector<16x64xf32>
    %462 = arith.mulf %460, %461 : vector<16x64xf32>
    %463 = math.tanh %462 : vector<16x64xf32>
    %cst_260 = arith.constant 5.000000e-01 : f32
    %464 = vector.broadcast %cst_260 : f32 to vector<16x64xf32>
    %465 = arith.mulf %463, %464 : vector<16x64xf32>
    %cst_261 = arith.constant 5.000000e-01 : f32
    %466 = vector.broadcast %cst_261 : f32 to vector<16x64xf32>
    %467 = arith.addf %465, %466 : vector<16x64xf32>
    %468 = arith.mulf %453, %429 : vector<16x64xf32>
    %469 = arith.mulf %443, %457 : vector<16x64xf32>
    %470 = arith.addf %468, %469 : vector<16x64xf32>
    %471 = math.tanh %470 : vector<16x64xf32>
    %472 = arith.mulf %467, %471 : vector<16x64xf32>
    %c160_262 = arith.constant 160 : index
    %c0_263 = arith.constant 0 : index
    %473 = vector.load %arg11[%c160_262, %c0_263] : memref<320x64xf32, #tpu.memory_space<vmem>>, vector<16x64xf32>
    tpu.vector_store %arg11[%c160_262, %c0_263], %472 {strides = array<i32>} : memref<320x64xf32, #tpu.memory_space<vmem>>, vector<16x64xf32>,
    %474 = arith.truncf %472 : vector<16x64xf32> to vector<16x64xbf16>
    %c176 = arith.constant 176 : index
    %c0_264 = arith.constant 0 : index
    %475 = vector.load %arg10[%c176, %c0_264] : memref<320x512xf32, #tpu.memory_space<vmem>>, vector<16x64xf32>
    %cst_265 = arith.constant dense<0.000000e+00> : vector<16x64xf32>
    %476 = tpu.matmul %474, %17, %cst_265 {dimension_numbers = #tpu.dot_dimension_numbers<[1], [0], [0], [1], [0, 0, 1, 1], [], []>} : vector<16x64xbf16>, vector<64x64xbf16>, vector<16x64xf32> -> vector<16x64xf32>
    %477 = arith.addf %475, %476 : vector<16x64xf32>
    %cst_266 = arith.constant 5.000000e-01 : f32
    %478 = vector.broadcast %cst_266 : f32 to vector<16x64xf32>
    %479 = arith.mulf %477, %478 : vector<16x64xf32>
    %480 = math.tanh %479 : vector<16x64xf32>
    %cst_267 = arith.constant 5.000000e-01 : f32
    %481 = vector.broadcast %cst_267 : f32 to vector<16x64xf32>
    %482 = arith.mulf %480, %481 : vector<16x64xf32>
    %cst_268 = arith.constant 5.000000e-01 : f32
    %483 = vector.broadcast %cst_268 : f32 to vector<16x64xf32>
    %484 = arith.addf %482, %483 : vector<16x64xf32>
    %c176_269 = arith.constant 176 : index
    %c128_270 = arith.constant 128 : index
    %485 = vector.load %arg10[%c176_269, %c128_270] : memref<320x512xf32, #tpu.memory_space<vmem>>, vector<16x64xf32>
    %cst_271 = arith.constant dense<0.000000e+00> : vector<16x64xf32>
    %486 = tpu.matmul %474, %18, %cst_271 {dimension_numbers = #tpu.dot_dimension_numbers<[1], [0], [0], [1], [0, 0, 1, 1], [], []>} : vector<16x64xbf16>, vector<64x64xbf16>, vector<16x64xf32> -> vector<16x64xf32>
    %487 = arith.addf %485, %486 : vector<16x64xf32>
    %cst_272 = arith.constant 5.000000e-01 : f32
    %488 = vector.broadcast %cst_272 : f32 to vector<16x64xf32>
    %489 = arith.mulf %487, %488 : vector<16x64xf32>
    %490 = math.tanh %489 : vector<16x64xf32>
    %cst_273 = arith.constant 5.000000e-01 : f32
    %491 = vector.broadcast %cst_273 : f32 to vector<16x64xf32>
    %492 = arith.mulf %490, %491 : vector<16x64xf32>
    %cst_274 = arith.constant 5.000000e-01 : f32
    %493 = vector.broadcast %cst_274 : f32 to vector<16x64xf32>
    %494 = arith.addf %492, %493 : vector<16x64xf32>
    %c176_275 = arith.constant 176 : index
    %c256_276 = arith.constant 256 : index
    %495 = vector.load %arg10[%c176_275, %c256_276] : memref<320x512xf32, #tpu.memory_space<vmem>>, vector<16x64xf32>
    %cst_277 = arith.constant dense<0.000000e+00> : vector<16x64xf32>
    %496 = tpu.matmul %474, %19, %cst_277 {dimension_numbers = #tpu.dot_dimension_numbers<[1], [0], [0], [1], [0, 0, 1, 1], [], []>} : vector<16x64xbf16>, vector<64x64xbf16>, vector<16x64xf32> -> vector<16x64xf32>
    %497 = arith.addf %495, %496 : vector<16x64xf32>
    %498 = math.tanh %497 : vector<16x64xf32>
    %c176_278 = arith.constant 176 : index
    %c384_279 = arith.constant 384 : index
    %499 = vector.load %arg10[%c176_278, %c384_279] : memref<320x512xf32, #tpu.memory_space<vmem>>, vector<16x64xf32>
    %cst_280 = arith.constant dense<0.000000e+00> : vector<16x64xf32>
    %500 = tpu.matmul %474, %20, %cst_280 {dimension_numbers = #tpu.dot_dimension_numbers<[1], [0], [0], [1], [0, 0, 1, 1], [], []>} : vector<16x64xbf16>, vector<64x64xbf16>, vector<16x64xf32> -> vector<16x64xf32>
    %501 = arith.addf %499, %500 : vector<16x64xf32>
    %cst_281 = arith.constant 5.000000e-01 : f32
    %502 = vector.broadcast %cst_281 : f32 to vector<16x64xf32>
    %503 = arith.mulf %501, %502 : vector<16x64xf32>
    %504 = math.tanh %503 : vector<16x64xf32>
    %cst_282 = arith.constant 5.000000e-01 : f32
    %505 = vector.broadcast %cst_282 : f32 to vector<16x64xf32>
    %506 = arith.mulf %504, %505 : vector<16x64xf32>
    %cst_283 = arith.constant 5.000000e-01 : f32
    %507 = vector.broadcast %cst_283 : f32 to vector<16x64xf32>
    %508 = arith.addf %506, %507 : vector<16x64xf32>
    %509 = arith.mulf %494, %470 : vector<16x64xf32>
    %510 = arith.mulf %484, %498 : vector<16x64xf32>
    %511 = arith.addf %509, %510 : vector<16x64xf32>
    %512 = math.tanh %511 : vector<16x64xf32>
    %513 = arith.mulf %508, %512 : vector<16x64xf32>
    %c176_284 = arith.constant 176 : index
    %c0_285 = arith.constant 0 : index
    %514 = vector.load %arg11[%c176_284, %c0_285] : memref<320x64xf32, #tpu.memory_space<vmem>>, vector<16x64xf32>
    tpu.vector_store %arg11[%c176_284, %c0_285], %513 {strides = array<i32>} : memref<320x64xf32, #tpu.memory_space<vmem>>, vector<16x64xf32>,
    %515 = arith.truncf %513 : vector<16x64xf32> to vector<16x64xbf16>
    %c192 = arith.constant 192 : index
    %c0_286 = arith.constant 0 : index
    %516 = vector.load %arg10[%c192, %c0_286] : memref<320x512xf32, #tpu.memory_space<vmem>>, vector<16x64xf32>
    %cst_287 = arith.constant dense<0.000000e+00> : vector<16x64xf32>
    %517 = tpu.matmul %515, %17, %cst_287 {dimension_numbers = #tpu.dot_dimension_numbers<[1], [0], [0], [1], [0, 0, 1, 1], [], []>} : vector<16x64xbf16>, vector<64x64xbf16>, vector<16x64xf32> -> vector<16x64xf32>
    %518 = arith.addf %516, %517 : vector<16x64xf32>
    %cst_288 = arith.constant 5.000000e-01 : f32
    %519 = vector.broadcast %cst_288 : f32 to vector<16x64xf32>
    %520 = arith.mulf %518, %519 : vector<16x64xf32>
    %521 = math.tanh %520 : vector<16x64xf32>
    %cst_289 = arith.constant 5.000000e-01 : f32
    %522 = vector.broadcast %cst_289 : f32 to vector<16x64xf32>
    %523 = arith.mulf %521, %522 : vector<16x64xf32>
    %cst_290 = arith.constant 5.000000e-01 : f32
    %524 = vector.broadcast %cst_290 : f32 to vector<16x64xf32>
    %525 = arith.addf %523, %524 : vector<16x64xf32>
    %c192_291 = arith.constant 192 : index
    %c128_292 = arith.constant 128 : index
    %526 = vector.load %arg10[%c192_291, %c128_292] : memref<320x512xf32, #tpu.memory_space<vmem>>, vector<16x64xf32>
    %cst_293 = arith.constant dense<0.000000e+00> : vector<16x64xf32>
    %527 = tpu.matmul %515, %18, %cst_293 {dimension_numbers = #tpu.dot_dimension_numbers<[1], [0], [0], [1], [0, 0, 1, 1], [], []>} : vector<16x64xbf16>, vector<64x64xbf16>, vector<16x64xf32> -> vector<16x64xf32>
    %528 = arith.addf %526, %527 : vector<16x64xf32>
    %cst_294 = arith.constant 5.000000e-01 : f32
    %529 = vector.broadcast %cst_294 : f32 to vector<16x64xf32>
    %530 = arith.mulf %528, %529 : vector<16x64xf32>
    %531 = math.tanh %530 : vector<16x64xf32>
    %cst_295 = arith.constant 5.000000e-01 : f32
    %532 = vector.broadcast %cst_295 : f32 to vector<16x64xf32>
    %533 = arith.mulf %531, %532 : vector<16x64xf32>
    %cst_296 = arith.constant 5.000000e-01 : f32
    %534 = vector.broadcast %cst_296 : f32 to vector<16x64xf32>
    %535 = arith.addf %533, %534 : vector<16x64xf32>
    %c192_297 = arith.constant 192 : index
    %c256_298 = arith.constant 256 : index
    %536 = vector.load %arg10[%c192_297, %c256_298] : memref<320x512xf32, #tpu.memory_space<vmem>>, vector<16x64xf32>
    %cst_299 = arith.constant dense<0.000000e+00> : vector<16x64xf32>
    %537 = tpu.matmul %515, %19, %cst_299 {dimension_numbers = #tpu.dot_dimension_numbers<[1], [0], [0], [1], [0, 0, 1, 1], [], []>} : vector<16x64xbf16>, vector<64x64xbf16>, vector<16x64xf32> -> vector<16x64xf32>
    %538 = arith.addf %536, %537 : vector<16x64xf32>
    %539 = math.tanh %538 : vector<16x64xf32>
    %c192_300 = arith.constant 192 : index
    %c384_301 = arith.constant 384 : index
    %540 = vector.load %arg10[%c192_300, %c384_301] : memref<320x512xf32, #tpu.memory_space<vmem>>, vector<16x64xf32>
    %cst_302 = arith.constant dense<0.000000e+00> : vector<16x64xf32>
    %541 = tpu.matmul %515, %20, %cst_302 {dimension_numbers = #tpu.dot_dimension_numbers<[1], [0], [0], [1], [0, 0, 1, 1], [], []>} : vector<16x64xbf16>, vector<64x64xbf16>, vector<16x64xf32> -> vector<16x64xf32>
    %542 = arith.addf %540, %541 : vector<16x64xf32>
    %cst_303 = arith.constant 5.000000e-01 : f32
    %543 = vector.broadcast %cst_303 : f32 to vector<16x64xf32>
    %544 = arith.mulf %542, %543 : vector<16x64xf32>
    %545 = math.tanh %544 : vector<16x64xf32>
    %cst_304 = arith.constant 5.000000e-01 : f32
    %546 = vector.broadcast %cst_304 : f32 to vector<16x64xf32>
    %547 = arith.mulf %545, %546 : vector<16x64xf32>
    %cst_305 = arith.constant 5.000000e-01 : f32
    %548 = vector.broadcast %cst_305 : f32 to vector<16x64xf32>
    %549 = arith.addf %547, %548 : vector<16x64xf32>
    %550 = arith.mulf %535, %511 : vector<16x64xf32>
    %551 = arith.mulf %525, %539 : vector<16x64xf32>
    %552 = arith.addf %550, %551 : vector<16x64xf32>
    %553 = math.tanh %552 : vector<16x64xf32>
    %554 = arith.mulf %549, %553 : vector<16x64xf32>
    %c192_306 = arith.constant 192 : index
    %c0_307 = arith.constant 0 : index
    %555 = vector.load %arg11[%c192_306, %c0_307] : memref<320x64xf32, #tpu.memory_space<vmem>>, vector<16x64xf32>
    tpu.vector_store %arg11[%c192_306, %c0_307], %554 {strides = array<i32>} : memref<320x64xf32, #tpu.memory_space<vmem>>, vector<16x64xf32>,
    %556 = arith.truncf %554 : vector<16x64xf32> to vector<16x64xbf16>
    %c208 = arith.constant 208 : index
    %c0_308 = arith.constant 0 : index
    %557 = vector.load %arg10[%c208, %c0_308] : memref<320x512xf32, #tpu.memory_space<vmem>>, vector<16x64xf32>
    %cst_309 = arith.constant dense<0.000000e+00> : vector<16x64xf32>
    %558 = tpu.matmul %556, %17, %cst_309 {dimension_numbers = #tpu.dot_dimension_numbers<[1], [0], [0], [1], [0, 0, 1, 1], [], []>} : vector<16x64xbf16>, vector<64x64xbf16>, vector<16x64xf32> -> vector<16x64xf32>
    %559 = arith.addf %557, %558 : vector<16x64xf32>
    %cst_310 = arith.constant 5.000000e-01 : f32
    %560 = vector.broadcast %cst_310 : f32 to vector<16x64xf32>
    %561 = arith.mulf %559, %560 : vector<16x64xf32>
    %562 = math.tanh %561 : vector<16x64xf32>
    %cst_311 = arith.constant 5.000000e-01 : f32
    %563 = vector.broadcast %cst_311 : f32 to vector<16x64xf32>
    %564 = arith.mulf %562, %563 : vector<16x64xf32>
    %cst_312 = arith.constant 5.000000e-01 : f32
    %565 = vector.broadcast %cst_312 : f32 to vector<16x64xf32>
    %566 = arith.addf %564, %565 : vector<16x64xf32>
    %c208_313 = arith.constant 208 : index
    %c128_314 = arith.constant 128 : index
    %567 = vector.load %arg10[%c208_313, %c128_314] : memref<320x512xf32, #tpu.memory_space<vmem>>, vector<16x64xf32>
    %cst_315 = arith.constant dense<0.000000e+00> : vector<16x64xf32>
    %568 = tpu.matmul %556, %18, %cst_315 {dimension_numbers = #tpu.dot_dimension_numbers<[1], [0], [0], [1], [0, 0, 1, 1], [], []>} : vector<16x64xbf16>, vector<64x64xbf16>, vector<16x64xf32> -> vector<16x64xf32>
    %569 = arith.addf %567, %568 : vector<16x64xf32>
    %cst_316 = arith.constant 5.000000e-01 : f32
    %570 = vector.broadcast %cst_316 : f32 to vector<16x64xf32>
    %571 = arith.mulf %569, %570 : vector<16x64xf32>
    %572 = math.tanh %571 : vector<16x64xf32>
    %cst_317 = arith.constant 5.000000e-01 : f32
    %573 = vector.broadcast %cst_317 : f32 to vector<16x64xf32>
    %574 = arith.mulf %572, %573 : vector<16x64xf32>
    %cst_318 = arith.constant 5.000000e-01 : f32
    %575 = vector.broadcast %cst_318 : f32 to vector<16x64xf32>
    %576 = arith.addf %574, %575 : vector<16x64xf32>
    %c208_319 = arith.constant 208 : index
    %c256_320 = arith.constant 256 : index
    %577 = vector.load %arg10[%c208_319, %c256_320] : memref<320x512xf32, #tpu.memory_space<vmem>>, vector<16x64xf32>
    %cst_321 = arith.constant dense<0.000000e+00> : vector<16x64xf32>
    %578 = tpu.matmul %556, %19, %cst_321 {dimension_numbers = #tpu.dot_dimension_numbers<[1], [0], [0], [1], [0, 0, 1, 1], [], []>} : vector<16x64xbf16>, vector<64x64xbf16>, vector<16x64xf32> -> vector<16x64xf32>
    %579 = arith.addf %577, %578 : vector<16x64xf32>
    %580 = math.tanh %579 : vector<16x64xf32>
    %c208_322 = arith.constant 208 : index
    %c384_323 = arith.constant 384 : index
    %581 = vector.load %arg10[%c208_322, %c384_323] : memref<320x512xf32, #tpu.memory_space<vmem>>, vector<16x64xf32>
    %cst_324 = arith.constant dense<0.000000e+00> : vector<16x64xf32>
    %582 = tpu.matmul %556, %20, %cst_324 {dimension_numbers = #tpu.dot_dimension_numbers<[1], [0], [0], [1], [0, 0, 1, 1], [], []>} : vector<16x64xbf16>, vector<64x64xbf16>, vector<16x64xf32> -> vector<16x64xf32>
    %583 = arith.addf %581, %582 : vector<16x64xf32>
    %cst_325 = arith.constant 5.000000e-01 : f32
    %584 = vector.broadcast %cst_325 : f32 to vector<16x64xf32>
    %585 = arith.mulf %583, %584 : vector<16x64xf32>
    %586 = math.tanh %585 : vector<16x64xf32>
    %cst_326 = arith.constant 5.000000e-01 : f32
    %587 = vector.broadcast %cst_326 : f32 to vector<16x64xf32>
    %588 = arith.mulf %586, %587 : vector<16x64xf32>
    %cst_327 = arith.constant 5.000000e-01 : f32
    %589 = vector.broadcast %cst_327 : f32 to vector<16x64xf32>
    %590 = arith.addf %588, %589 : vector<16x64xf32>
    %591 = arith.mulf %576, %552 : vector<16x64xf32>
    %592 = arith.mulf %566, %580 : vector<16x64xf32>
    %593 = arith.addf %591, %592 : vector<16x64xf32>
    %594 = math.tanh %593 : vector<16x64xf32>
    %595 = arith.mulf %590, %594 : vector<16x64xf32>
    %c208_328 = arith.constant 208 : index
    %c0_329 = arith.constant 0 : index
    %596 = vector.load %arg11[%c208_328, %c0_329] : memref<320x64xf32, #tpu.memory_space<vmem>>, vector<16x64xf32>
    tpu.vector_store %arg11[%c208_328, %c0_329], %595 {strides = array<i32>} : memref<320x64xf32, #tpu.memory_space<vmem>>, vector<16x64xf32>,
    %597 = arith.truncf %595 : vector<16x64xf32> to vector<16x64xbf16>
    %c224 = arith.constant 224 : index
    %c0_330 = arith.constant 0 : index
    %598 = vector.load %arg10[%c224, %c0_330] : memref<320x512xf32, #tpu.memory_space<vmem>>, vector<16x64xf32>
    %cst_331 = arith.constant dense<0.000000e+00> : vector<16x64xf32>
    %599 = tpu.matmul %597, %17, %cst_331 {dimension_numbers = #tpu.dot_dimension_numbers<[1], [0], [0], [1], [0, 0, 1, 1], [], []>} : vector<16x64xbf16>, vector<64x64xbf16>, vector<16x64xf32> -> vector<16x64xf32>
    %600 = arith.addf %598, %599 : vector<16x64xf32>
    %cst_332 = arith.constant 5.000000e-01 : f32
    %601 = vector.broadcast %cst_332 : f32 to vector<16x64xf32>
    %602 = arith.mulf %600, %601 : vector<16x64xf32>
    %603 = math.tanh %602 : vector<16x64xf32>
    %cst_333 = arith.constant 5.000000e-01 : f32
    %604 = vector.broadcast %cst_333 : f32 to vector<16x64xf32>
    %605 = arith.mulf %603, %604 : vector<16x64xf32>
    %cst_334 = arith.constant 5.000000e-01 : f32
    %606 = vector.broadcast %cst_334 : f32 to vector<16x64xf32>
    %607 = arith.addf %605, %606 : vector<16x64xf32>
    %c224_335 = arith.constant 224 : index
    %c128_336 = arith.constant 128 : index
    %608 = vector.load %arg10[%c224_335, %c128_336] : memref<320x512xf32, #tpu.memory_space<vmem>>, vector<16x64xf32>
    %cst_337 = arith.constant dense<0.000000e+00> : vector<16x64xf32>
    %609 = tpu.matmul %597, %18, %cst_337 {dimension_numbers = #tpu.dot_dimension_numbers<[1], [0], [0], [1], [0, 0, 1, 1], [], []>} : vector<16x64xbf16>, vector<64x64xbf16>, vector<16x64xf32> -> vector<16x64xf32>
    %610 = arith.addf %608, %609 : vector<16x64xf32>
    %cst_338 = arith.constant 5.000000e-01 : f32
    %611 = vector.broadcast %cst_338 : f32 to vector<16x64xf32>
    %612 = arith.mulf %610, %611 : vector<16x64xf32>
    %613 = math.tanh %612 : vector<16x64xf32>
    %cst_339 = arith.constant 5.000000e-01 : f32
    %614 = vector.broadcast %cst_339 : f32 to vector<16x64xf32>
    %615 = arith.mulf %613, %614 : vector<16x64xf32>
    %cst_340 = arith.constant 5.000000e-01 : f32
    %616 = vector.broadcast %cst_340 : f32 to vector<16x64xf32>
    %617 = arith.addf %615, %616 : vector<16x64xf32>
    %c224_341 = arith.constant 224 : index
    %c256_342 = arith.constant 256 : index
    %618 = vector.load %arg10[%c224_341, %c256_342] : memref<320x512xf32, #tpu.memory_space<vmem>>, vector<16x64xf32>
    %cst_343 = arith.constant dense<0.000000e+00> : vector<16x64xf32>
    %619 = tpu.matmul %597, %19, %cst_343 {dimension_numbers = #tpu.dot_dimension_numbers<[1], [0], [0], [1], [0, 0, 1, 1], [], []>} : vector<16x64xbf16>, vector<64x64xbf16>, vector<16x64xf32> -> vector<16x64xf32>
    %620 = arith.addf %618, %619 : vector<16x64xf32>
    %621 = math.tanh %620 : vector<16x64xf32>
    %c224_344 = arith.constant 224 : index
    %c384_345 = arith.constant 384 : index
    %622 = vector.load %arg10[%c224_344, %c384_345] : memref<320x512xf32, #tpu.memory_space<vmem>>, vector<16x64xf32>
    %cst_346 = arith.constant dense<0.000000e+00> : vector<16x64xf32>
    %623 = tpu.matmul %597, %20, %cst_346 {dimension_numbers = #tpu.dot_dimension_numbers<[1], [0], [0], [1], [0, 0, 1, 1], [], []>} : vector<16x64xbf16>, vector<64x64xbf16>, vector<16x64xf32> -> vector<16x64xf32>
    %624 = arith.addf %622, %623 : vector<16x64xf32>
    %cst_347 = arith.constant 5.000000e-01 : f32
    %625 = vector.broadcast %cst_347 : f32 to vector<16x64xf32>
    %626 = arith.mulf %624, %625 : vector<16x64xf32>
    %627 = math.tanh %626 : vector<16x64xf32>
    %cst_348 = arith.constant 5.000000e-01 : f32
    %628 = vector.broadcast %cst_348 : f32 to vector<16x64xf32>
    %629 = arith.mulf %627, %628 : vector<16x64xf32>
    %cst_349 = arith.constant 5.000000e-01 : f32
    %630 = vector.broadcast %cst_349 : f32 to vector<16x64xf32>
    %631 = arith.addf %629, %630 : vector<16x64xf32>
    %632 = arith.mulf %617, %593 : vector<16x64xf32>
    %633 = arith.mulf %607, %621 : vector<16x64xf32>
    %634 = arith.addf %632, %633 : vector<16x64xf32>
    %635 = math.tanh %634 : vector<16x64xf32>
    %636 = arith.mulf %631, %635 : vector<16x64xf32>
    %c224_350 = arith.constant 224 : index
    %c0_351 = arith.constant 0 : index
    %637 = vector.load %arg11[%c224_350, %c0_351] : memref<320x64xf32, #tpu.memory_space<vmem>>, vector<16x64xf32>
    tpu.vector_store %arg11[%c224_350, %c0_351], %636 {strides = array<i32>} : memref<320x64xf32, #tpu.memory_space<vmem>>, vector<16x64xf32>,
    %638 = arith.truncf %636 : vector<16x64xf32> to vector<16x64xbf16>
    %c240 = arith.constant 240 : index
    %c0_352 = arith.constant 0 : index
    %639 = vector.load %arg10[%c240, %c0_352] : memref<320x512xf32, #tpu.memory_space<vmem>>, vector<16x64xf32>
    %cst_353 = arith.constant dense<0.000000e+00> : vector<16x64xf32>
    %640 = tpu.matmul %638, %17, %cst_353 {dimension_numbers = #tpu.dot_dimension_numbers<[1], [0], [0], [1], [0, 0, 1, 1], [], []>} : vector<16x64xbf16>, vector<64x64xbf16>, vector<16x64xf32> -> vector<16x64xf32>
    %641 = arith.addf %639, %640 : vector<16x64xf32>
    %cst_354 = arith.constant 5.000000e-01 : f32
    %642 = vector.broadcast %cst_354 : f32 to vector<16x64xf32>
    %643 = arith.mulf %641, %642 : vector<16x64xf32>
    %644 = math.tanh %643 : vector<16x64xf32>
    %cst_355 = arith.constant 5.000000e-01 : f32
    %645 = vector.broadcast %cst_355 : f32 to vector<16x64xf32>
    %646 = arith.mulf %644, %645 : vector<16x64xf32>
    %cst_356 = arith.constant 5.000000e-01 : f32
    %647 = vector.broadcast %cst_356 : f32 to vector<16x64xf32>
    %648 = arith.addf %646, %647 : vector<16x64xf32>
    %c240_357 = arith.constant 240 : index
    %c128_358 = arith.constant 128 : index
    %649 = vector.load %arg10[%c240_357, %c128_358] : memref<320x512xf32, #tpu.memory_space<vmem>>, vector<16x64xf32>
    %cst_359 = arith.constant dense<0.000000e+00> : vector<16x64xf32>
    %650 = tpu.matmul %638, %18, %cst_359 {dimension_numbers = #tpu.dot_dimension_numbers<[1], [0], [0], [1], [0, 0, 1, 1], [], []>} : vector<16x64xbf16>, vector<64x64xbf16>, vector<16x64xf32> -> vector<16x64xf32>
    %651 = arith.addf %649, %650 : vector<16x64xf32>
    %cst_360 = arith.constant 5.000000e-01 : f32
    %652 = vector.broadcast %cst_360 : f32 to vector<16x64xf32>
    %653 = arith.mulf %651, %652 : vector<16x64xf32>
    %654 = math.tanh %653 : vector<16x64xf32>
    %cst_361 = arith.constant 5.000000e-01 : f32
    %655 = vector.broadcast %cst_361 : f32 to vector<16x64xf32>
    %656 = arith.mulf %654, %655 : vector<16x64xf32>
    %cst_362 = arith.constant 5.000000e-01 : f32
    %657 = vector.broadcast %cst_362 : f32 to vector<16x64xf32>
    %658 = arith.addf %656, %657 : vector<16x64xf32>
    %c240_363 = arith.constant 240 : index
    %c256_364 = arith.constant 256 : index
    %659 = vector.load %arg10[%c240_363, %c256_364] : memref<320x512xf32, #tpu.memory_space<vmem>>, vector<16x64xf32>
    %cst_365 = arith.constant dense<0.000000e+00> : vector<16x64xf32>
    %660 = tpu.matmul %638, %19, %cst_365 {dimension_numbers = #tpu.dot_dimension_numbers<[1], [0], [0], [1], [0, 0, 1, 1], [], []>} : vector<16x64xbf16>, vector<64x64xbf16>, vector<16x64xf32> -> vector<16x64xf32>
    %661 = arith.addf %659, %660 : vector<16x64xf32>
    %662 = math.tanh %661 : vector<16x64xf32>
    %c240_366 = arith.constant 240 : index
    %c384_367 = arith.constant 384 : index
    %663 = vector.load %arg10[%c240_366, %c384_367] : memref<320x512xf32, #tpu.memory_space<vmem>>, vector<16x64xf32>
    %cst_368 = arith.constant dense<0.000000e+00> : vector<16x64xf32>
    %664 = tpu.matmul %638, %20, %cst_368 {dimension_numbers = #tpu.dot_dimension_numbers<[1], [0], [0], [1], [0, 0, 1, 1], [], []>} : vector<16x64xbf16>, vector<64x64xbf16>, vector<16x64xf32> -> vector<16x64xf32>
    %665 = arith.addf %663, %664 : vector<16x64xf32>
    %cst_369 = arith.constant 5.000000e-01 : f32
    %666 = vector.broadcast %cst_369 : f32 to vector<16x64xf32>
    %667 = arith.mulf %665, %666 : vector<16x64xf32>
    %668 = math.tanh %667 : vector<16x64xf32>
    %cst_370 = arith.constant 5.000000e-01 : f32
    %669 = vector.broadcast %cst_370 : f32 to vector<16x64xf32>
    %670 = arith.mulf %668, %669 : vector<16x64xf32>
    %cst_371 = arith.constant 5.000000e-01 : f32
    %671 = vector.broadcast %cst_371 : f32 to vector<16x64xf32>
    %672 = arith.addf %670, %671 : vector<16x64xf32>
    %673 = arith.mulf %658, %634 : vector<16x64xf32>
    %674 = arith.mulf %648, %662 : vector<16x64xf32>
    %675 = arith.addf %673, %674 : vector<16x64xf32>
    %676 = math.tanh %675 : vector<16x64xf32>
    %677 = arith.mulf %672, %676 : vector<16x64xf32>
    %c240_372 = arith.constant 240 : index
    %c0_373 = arith.constant 0 : index
    %678 = vector.load %arg11[%c240_372, %c0_373] : memref<320x64xf32, #tpu.memory_space<vmem>>, vector<16x64xf32>
    tpu.vector_store %arg11[%c240_372, %c0_373], %677 {strides = array<i32>} : memref<320x64xf32, #tpu.memory_space<vmem>>, vector<16x64xf32>,
    %679 = arith.truncf %677 : vector<16x64xf32> to vector<16x64xbf16>
    %c256_374 = arith.constant 256 : index
    %c0_375 = arith.constant 0 : index
    %680 = vector.load %arg10[%c256_374, %c0_375] : memref<320x512xf32, #tpu.memory_space<vmem>>, vector<16x64xf32>
    %cst_376 = arith.constant dense<0.000000e+00> : vector<16x64xf32>
    %681 = tpu.matmul %679, %17, %cst_376 {dimension_numbers = #tpu.dot_dimension_numbers<[1], [0], [0], [1], [0, 0, 1, 1], [], []>} : vector<16x64xbf16>, vector<64x64xbf16>, vector<16x64xf32> -> vector<16x64xf32>
    %682 = arith.addf %680, %681 : vector<16x64xf32>
    %cst_377 = arith.constant 5.000000e-01 : f32
    %683 = vector.broadcast %cst_377 : f32 to vector<16x64xf32>
    %684 = arith.mulf %682, %683 : vector<16x64xf32>
    %685 = math.tanh %684 : vector<16x64xf32>
    %cst_378 = arith.constant 5.000000e-01 : f32
    %686 = vector.broadcast %cst_378 : f32 to vector<16x64xf32>
    %687 = arith.mulf %685, %686 : vector<16x64xf32>
    %cst_379 = arith.constant 5.000000e-01 : f32
    %688 = vector.broadcast %cst_379 : f32 to vector<16x64xf32>
    %689 = arith.addf %687, %688 : vector<16x64xf32>
    %c256_380 = arith.constant 256 : index
    %c128_381 = arith.constant 128 : index
    %690 = vector.load %arg10[%c256_380, %c128_381] : memref<320x512xf32, #tpu.memory_space<vmem>>, vector<16x64xf32>
    %cst_382 = arith.constant dense<0.000000e+00> : vector<16x64xf32>
    %691 = tpu.matmul %679, %18, %cst_382 {dimension_numbers = #tpu.dot_dimension_numbers<[1], [0], [0], [1], [0, 0, 1, 1], [], []>} : vector<16x64xbf16>, vector<64x64xbf16>, vector<16x64xf32> -> vector<16x64xf32>
    %692 = arith.addf %690, %691 : vector<16x64xf32>
    %cst_383 = arith.constant 5.000000e-01 : f32
    %693 = vector.broadcast %cst_383 : f32 to vector<16x64xf32>
    %694 = arith.mulf %692, %693 : vector<16x64xf32>
    %695 = math.tanh %694 : vector<16x64xf32>
    %cst_384 = arith.constant 5.000000e-01 : f32
    %696 = vector.broadcast %cst_384 : f32 to vector<16x64xf32>
    %697 = arith.mulf %695, %696 : vector<16x64xf32>
    %cst_385 = arith.constant 5.000000e-01 : f32
    %698 = vector.broadcast %cst_385 : f32 to vector<16x64xf32>
    %699 = arith.addf %697, %698 : vector<16x64xf32>
    %c256_386 = arith.constant 256 : index
    %c256_387 = arith.constant 256 : index
    %700 = vector.load %arg10[%c256_386, %c256_387] : memref<320x512xf32, #tpu.memory_space<vmem>>, vector<16x64xf32>
    %cst_388 = arith.constant dense<0.000000e+00> : vector<16x64xf32>
    %701 = tpu.matmul %679, %19, %cst_388 {dimension_numbers = #tpu.dot_dimension_numbers<[1], [0], [0], [1], [0, 0, 1, 1], [], []>} : vector<16x64xbf16>, vector<64x64xbf16>, vector<16x64xf32> -> vector<16x64xf32>
    %702 = arith.addf %700, %701 : vector<16x64xf32>
    %703 = math.tanh %702 : vector<16x64xf32>
    %c256_389 = arith.constant 256 : index
    %c384_390 = arith.constant 384 : index
    %704 = vector.load %arg10[%c256_389, %c384_390] : memref<320x512xf32, #tpu.memory_space<vmem>>, vector<16x64xf32>
    %cst_391 = arith.constant dense<0.000000e+00> : vector<16x64xf32>
    %705 = tpu.matmul %679, %20, %cst_391 {dimension_numbers = #tpu.dot_dimension_numbers<[1], [0], [0], [1], [0, 0, 1, 1], [], []>} : vector<16x64xbf16>, vector<64x64xbf16>, vector<16x64xf32> -> vector<16x64xf32>
    %706 = arith.addf %704, %705 : vector<16x64xf32>
    %cst_392 = arith.constant 5.000000e-01 : f32
    %707 = vector.broadcast %cst_392 : f32 to vector<16x64xf32>
    %708 = arith.mulf %706, %707 : vector<16x64xf32>
    %709 = math.tanh %708 : vector<16x64xf32>
    %cst_393 = arith.constant 5.000000e-01 : f32
    %710 = vector.broadcast %cst_393 : f32 to vector<16x64xf32>
    %711 = arith.mulf %709, %710 : vector<16x64xf32>
    %cst_394 = arith.constant 5.000000e-01 : f32
    %712 = vector.broadcast %cst_394 : f32 to vector<16x64xf32>
    %713 = arith.addf %711, %712 : vector<16x64xf32>
    %714 = arith.mulf %699, %675 : vector<16x64xf32>
    %715 = arith.mulf %689, %703 : vector<16x64xf32>
    %716 = arith.addf %714, %715 : vector<16x64xf32>
    %717 = math.tanh %716 : vector<16x64xf32>
    %718 = arith.mulf %713, %717 : vector<16x64xf32>
    %c256_395 = arith.constant 256 : index
    %c0_396 = arith.constant 0 : index
    %719 = vector.load %arg11[%c256_395, %c0_396] : memref<320x64xf32, #tpu.memory_space<vmem>>, vector<16x64xf32>
    tpu.vector_store %arg11[%c256_395, %c0_396], %718 {strides = array<i32>} : memref<320x64xf32, #tpu.memory_space<vmem>>, vector<16x64xf32>,
    %720 = arith.truncf %718 : vector<16x64xf32> to vector<16x64xbf16>
    %c272 = arith.constant 272 : index
    %c0_397 = arith.constant 0 : index
    %721 = vector.load %arg10[%c272, %c0_397] : memref<320x512xf32, #tpu.memory_space<vmem>>, vector<16x64xf32>
    %cst_398 = arith.constant dense<0.000000e+00> : vector<16x64xf32>
    %722 = tpu.matmul %720, %17, %cst_398 {dimension_numbers = #tpu.dot_dimension_numbers<[1], [0], [0], [1], [0, 0, 1, 1], [], []>} : vector<16x64xbf16>, vector<64x64xbf16>, vector<16x64xf32> -> vector<16x64xf32>
    %723 = arith.addf %721, %722 : vector<16x64xf32>
    %cst_399 = arith.constant 5.000000e-01 : f32
    %724 = vector.broadcast %cst_399 : f32 to vector<16x64xf32>
    %725 = arith.mulf %723, %724 : vector<16x64xf32>
    %726 = math.tanh %725 : vector<16x64xf32>
    %cst_400 = arith.constant 5.000000e-01 : f32
    %727 = vector.broadcast %cst_400 : f32 to vector<16x64xf32>
    %728 = arith.mulf %726, %727 : vector<16x64xf32>
    %cst_401 = arith.constant 5.000000e-01 : f32
    %729 = vector.broadcast %cst_401 : f32 to vector<16x64xf32>
    %730 = arith.addf %728, %729 : vector<16x64xf32>
    %c272_402 = arith.constant 272 : index
    %c128_403 = arith.constant 128 : index
    %731 = vector.load %arg10[%c272_402, %c128_403] : memref<320x512xf32, #tpu.memory_space<vmem>>, vector<16x64xf32>
    %cst_404 = arith.constant dense<0.000000e+00> : vector<16x64xf32>
    %732 = tpu.matmul %720, %18, %cst_404 {dimension_numbers = #tpu.dot_dimension_numbers<[1], [0], [0], [1], [0, 0, 1, 1], [], []>} : vector<16x64xbf16>, vector<64x64xbf16>, vector<16x64xf32> -> vector<16x64xf32>
    %733 = arith.addf %731, %732 : vector<16x64xf32>
    %cst_405 = arith.constant 5.000000e-01 : f32
    %734 = vector.broadcast %cst_405 : f32 to vector<16x64xf32>
    %735 = arith.mulf %733, %734 : vector<16x64xf32>
    %736 = math.tanh %735 : vector<16x64xf32>
    %cst_406 = arith.constant 5.000000e-01 : f32
    %737 = vector.broadcast %cst_406 : f32 to vector<16x64xf32>
    %738 = arith.mulf %736, %737 : vector<16x64xf32>
    %cst_407 = arith.constant 5.000000e-01 : f32
    %739 = vector.broadcast %cst_407 : f32 to vector<16x64xf32>
    %740 = arith.addf %738, %739 : vector<16x64xf32>
    %c272_408 = arith.constant 272 : index
    %c256_409 = arith.constant 256 : index
    %741 = vector.load %arg10[%c272_408, %c256_409] : memref<320x512xf32, #tpu.memory_space<vmem>>, vector<16x64xf32>
    %cst_410 = arith.constant dense<0.000000e+00> : vector<16x64xf32>
    %742 = tpu.matmul %720, %19, %cst_410 {dimension_numbers = #tpu.dot_dimension_numbers<[1], [0], [0], [1], [0, 0, 1, 1], [], []>} : vector<16x64xbf16>, vector<64x64xbf16>, vector<16x64xf32> -> vector<16x64xf32>
    %743 = arith.addf %741, %742 : vector<16x64xf32>
    %744 = math.tanh %743 : vector<16x64xf32>
    %c272_411 = arith.constant 272 : index
    %c384_412 = arith.constant 384 : index
    %745 = vector.load %arg10[%c272_411, %c384_412] : memref<320x512xf32, #tpu.memory_space<vmem>>, vector<16x64xf32>
    %cst_413 = arith.constant dense<0.000000e+00> : vector<16x64xf32>
    %746 = tpu.matmul %720, %20, %cst_413 {dimension_numbers = #tpu.dot_dimension_numbers<[1], [0], [0], [1], [0, 0, 1, 1], [], []>} : vector<16x64xbf16>, vector<64x64xbf16>, vector<16x64xf32> -> vector<16x64xf32>
    %747 = arith.addf %745, %746 : vector<16x64xf32>
    %cst_414 = arith.constant 5.000000e-01 : f32
    %748 = vector.broadcast %cst_414 : f32 to vector<16x64xf32>
    %749 = arith.mulf %747, %748 : vector<16x64xf32>
    %750 = math.tanh %749 : vector<16x64xf32>
    %cst_415 = arith.constant 5.000000e-01 : f32
    %751 = vector.broadcast %cst_415 : f32 to vector<16x64xf32>
    %752 = arith.mulf %750, %751 : vector<16x64xf32>
    %cst_416 = arith.constant 5.000000e-01 : f32
    %753 = vector.broadcast %cst_416 : f32 to vector<16x64xf32>
    %754 = arith.addf %752, %753 : vector<16x64xf32>
    %755 = arith.mulf %740, %716 : vector<16x64xf32>
    %756 = arith.mulf %730, %744 : vector<16x64xf32>
    %757 = arith.addf %755, %756 : vector<16x64xf32>
    %758 = math.tanh %757 : vector<16x64xf32>
    %759 = arith.mulf %754, %758 : vector<16x64xf32>
    %c272_417 = arith.constant 272 : index
    %c0_418 = arith.constant 0 : index
    %760 = vector.load %arg11[%c272_417, %c0_418] : memref<320x64xf32, #tpu.memory_space<vmem>>, vector<16x64xf32>
    tpu.vector_store %arg11[%c272_417, %c0_418], %759 {strides = array<i32>} : memref<320x64xf32, #tpu.memory_space<vmem>>, vector<16x64xf32>,
    %761 = arith.truncf %759 : vector<16x64xf32> to vector<16x64xbf16>
    %c288 = arith.constant 288 : index
    %c0_419 = arith.constant 0 : index
    %762 = vector.load %arg10[%c288, %c0_419] : memref<320x512xf32, #tpu.memory_space<vmem>>, vector<16x64xf32>
    %cst_420 = arith.constant dense<0.000000e+00> : vector<16x64xf32>
    %763 = tpu.matmul %761, %17, %cst_420 {dimension_numbers = #tpu.dot_dimension_numbers<[1], [0], [0], [1], [0, 0, 1, 1], [], []>} : vector<16x64xbf16>, vector<64x64xbf16>, vector<16x64xf32> -> vector<16x64xf32>
    %764 = arith.addf %762, %763 : vector<16x64xf32>
    %cst_421 = arith.constant 5.000000e-01 : f32
    %765 = vector.broadcast %cst_421 : f32 to vector<16x64xf32>
    %766 = arith.mulf %764, %765 : vector<16x64xf32>
    %767 = math.tanh %766 : vector<16x64xf32>
    %cst_422 = arith.constant 5.000000e-01 : f32
    %768 = vector.broadcast %cst_422 : f32 to vector<16x64xf32>
    %769 = arith.mulf %767, %768 : vector<16x64xf32>
    %cst_423 = arith.constant 5.000000e-01 : f32
    %770 = vector.broadcast %cst_423 : f32 to vector<16x64xf32>
    %771 = arith.addf %769, %770 : vector<16x64xf32>
    %c288_424 = arith.constant 288 : index
    %c128_425 = arith.constant 128 : index
    %772 = vector.load %arg10[%c288_424, %c128_425] : memref<320x512xf32, #tpu.memory_space<vmem>>, vector<16x64xf32>
    %cst_426 = arith.constant dense<0.000000e+00> : vector<16x64xf32>
    %773 = tpu.matmul %761, %18, %cst_426 {dimension_numbers = #tpu.dot_dimension_numbers<[1], [0], [0], [1], [0, 0, 1, 1], [], []>} : vector<16x64xbf16>, vector<64x64xbf16>, vector<16x64xf32> -> vector<16x64xf32>
    %774 = arith.addf %772, %773 : vector<16x64xf32>
    %cst_427 = arith.constant 5.000000e-01 : f32
    %775 = vector.broadcast %cst_427 : f32 to vector<16x64xf32>
    %776 = arith.mulf %774, %775 : vector<16x64xf32>
    %777 = math.tanh %776 : vector<16x64xf32>
    %cst_428 = arith.constant 5.000000e-01 : f32
    %778 = vector.broadcast %cst_428 : f32 to vector<16x64xf32>
    %779 = arith.mulf %777, %778 : vector<16x64xf32>
    %cst_429 = arith.constant 5.000000e-01 : f32
    %780 = vector.broadcast %cst_429 : f32 to vector<16x64xf32>
    %781 = arith.addf %779, %780 : vector<16x64xf32>
    %c288_430 = arith.constant 288 : index
    %c256_431 = arith.constant 256 : index
    %782 = vector.load %arg10[%c288_430, %c256_431] : memref<320x512xf32, #tpu.memory_space<vmem>>, vector<16x64xf32>
    %cst_432 = arith.constant dense<0.000000e+00> : vector<16x64xf32>
    %783 = tpu.matmul %761, %19, %cst_432 {dimension_numbers = #tpu.dot_dimension_numbers<[1], [0], [0], [1], [0, 0, 1, 1], [], []>} : vector<16x64xbf16>, vector<64x64xbf16>, vector<16x64xf32> -> vector<16x64xf32>
    %784 = arith.addf %782, %783 : vector<16x64xf32>
    %785 = math.tanh %784 : vector<16x64xf32>
    %c288_433 = arith.constant 288 : index
    %c384_434 = arith.constant 384 : index
    %786 = vector.load %arg10[%c288_433, %c384_434] : memref<320x512xf32, #tpu.memory_space<vmem>>, vector<16x64xf32>
    %cst_435 = arith.constant dense<0.000000e+00> : vector<16x64xf32>
    %787 = tpu.matmul %761, %20, %cst_435 {dimension_numbers = #tpu.dot_dimension_numbers<[1], [0], [0], [1], [0, 0, 1, 1], [], []>} : vector<16x64xbf16>, vector<64x64xbf16>, vector<16x64xf32> -> vector<16x64xf32>
    %788 = arith.addf %786, %787 : vector<16x64xf32>
    %cst_436 = arith.constant 5.000000e-01 : f32
    %789 = vector.broadcast %cst_436 : f32 to vector<16x64xf32>
    %790 = arith.mulf %788, %789 : vector<16x64xf32>
    %791 = math.tanh %790 : vector<16x64xf32>
    %cst_437 = arith.constant 5.000000e-01 : f32
    %792 = vector.broadcast %cst_437 : f32 to vector<16x64xf32>
    %793 = arith.mulf %791, %792 : vector<16x64xf32>
    %cst_438 = arith.constant 5.000000e-01 : f32
    %794 = vector.broadcast %cst_438 : f32 to vector<16x64xf32>
    %795 = arith.addf %793, %794 : vector<16x64xf32>
    %796 = arith.mulf %781, %757 : vector<16x64xf32>
    %797 = arith.mulf %771, %785 : vector<16x64xf32>
    %798 = arith.addf %796, %797 : vector<16x64xf32>
    %799 = math.tanh %798 : vector<16x64xf32>
    %800 = arith.mulf %795, %799 : vector<16x64xf32>
    %c288_439 = arith.constant 288 : index
    %c0_440 = arith.constant 0 : index
    %801 = vector.load %arg11[%c288_439, %c0_440] : memref<320x64xf32, #tpu.memory_space<vmem>>, vector<16x64xf32>
    tpu.vector_store %arg11[%c288_439, %c0_440], %800 {strides = array<i32>} : memref<320x64xf32, #tpu.memory_space<vmem>>, vector<16x64xf32>,
    %802 = arith.truncf %800 : vector<16x64xf32> to vector<16x64xbf16>
    %c304 = arith.constant 304 : index
    %c0_441 = arith.constant 0 : index
    %803 = vector.load %arg10[%c304, %c0_441] : memref<320x512xf32, #tpu.memory_space<vmem>>, vector<16x64xf32>
    %cst_442 = arith.constant dense<0.000000e+00> : vector<16x64xf32>
    %804 = tpu.matmul %802, %17, %cst_442 {dimension_numbers = #tpu.dot_dimension_numbers<[1], [0], [0], [1], [0, 0, 1, 1], [], []>} : vector<16x64xbf16>, vector<64x64xbf16>, vector<16x64xf32> -> vector<16x64xf32>
    %805 = arith.addf %803, %804 : vector<16x64xf32>
    %cst_443 = arith.constant 5.000000e-01 : f32
    %806 = vector.broadcast %cst_443 : f32 to vector<16x64xf32>
    %807 = arith.mulf %805, %806 : vector<16x64xf32>
    %808 = math.tanh %807 : vector<16x64xf32>
    %cst_444 = arith.constant 5.000000e-01 : f32
    %809 = vector.broadcast %cst_444 : f32 to vector<16x64xf32>
    %810 = arith.mulf %808, %809 : vector<16x64xf32>
    %cst_445 = arith.constant 5.000000e-01 : f32
    %811 = vector.broadcast %cst_445 : f32 to vector<16x64xf32>
    %812 = arith.addf %810, %811 : vector<16x64xf32>
    %c304_446 = arith.constant 304 : index
    %c128_447 = arith.constant 128 : index
    %813 = vector.load %arg10[%c304_446, %c128_447] : memref<320x512xf32, #tpu.memory_space<vmem>>, vector<16x64xf32>
    %cst_448 = arith.constant dense<0.000000e+00> : vector<16x64xf32>
    %814 = tpu.matmul %802, %18, %cst_448 {dimension_numbers = #tpu.dot_dimension_numbers<[1], [0], [0], [1], [0, 0, 1, 1], [], []>} : vector<16x64xbf16>, vector<64x64xbf16>, vector<16x64xf32> -> vector<16x64xf32>
    %815 = arith.addf %813, %814 : vector<16x64xf32>
    %cst_449 = arith.constant 5.000000e-01 : f32
    %816 = vector.broadcast %cst_449 : f32 to vector<16x64xf32>
    %817 = arith.mulf %815, %816 : vector<16x64xf32>
    %818 = math.tanh %817 : vector<16x64xf32>
    %cst_450 = arith.constant 5.000000e-01 : f32
    %819 = vector.broadcast %cst_450 : f32 to vector<16x64xf32>
    %820 = arith.mulf %818, %819 : vector<16x64xf32>
    %cst_451 = arith.constant 5.000000e-01 : f32
    %821 = vector.broadcast %cst_451 : f32 to vector<16x64xf32>
    %822 = arith.addf %820, %821 : vector<16x64xf32>
    %c304_452 = arith.constant 304 : index
    %c256_453 = arith.constant 256 : index
    %823 = vector.load %arg10[%c304_452, %c256_453] : memref<320x512xf32, #tpu.memory_space<vmem>>, vector<16x64xf32>
    %cst_454 = arith.constant dense<0.000000e+00> : vector<16x64xf32>
    %824 = tpu.matmul %802, %19, %cst_454 {dimension_numbers = #tpu.dot_dimension_numbers<[1], [0], [0], [1], [0, 0, 1, 1], [], []>} : vector<16x64xbf16>, vector<64x64xbf16>, vector<16x64xf32> -> vector<16x64xf32>
    %825 = arith.addf %823, %824 : vector<16x64xf32>
    %826 = math.tanh %825 : vector<16x64xf32>
    %c304_455 = arith.constant 304 : index
    %c384_456 = arith.constant 384 : index
    %827 = vector.load %arg10[%c304_455, %c384_456] : memref<320x512xf32, #tpu.memory_space<vmem>>, vector<16x64xf32>
    %cst_457 = arith.constant dense<0.000000e+00> : vector<16x64xf32>
    %828 = tpu.matmul %802, %20, %cst_457 {dimension_numbers = #tpu.dot_dimension_numbers<[1], [0], [0], [1], [0, 0, 1, 1], [], []>} : vector<16x64xbf16>, vector<64x64xbf16>, vector<16x64xf32> -> vector<16x64xf32>
    %829 = arith.addf %827, %828 : vector<16x64xf32>
    %cst_458 = arith.constant 5.000000e-01 : f32
    %830 = vector.broadcast %cst_458 : f32 to vector<16x64xf32>
    %831 = arith.mulf %829, %830 : vector<16x64xf32>
    %832 = math.tanh %831 : vector<16x64xf32>
    %cst_459 = arith.constant 5.000000e-01 : f32
    %833 = vector.broadcast %cst_459 : f32 to vector<16x64xf32>
    %834 = arith.mulf %832, %833 : vector<16x64xf32>
    %cst_460 = arith.constant 5.000000e-01 : f32
    %835 = vector.broadcast %cst_460 : f32 to vector<16x64xf32>
    %836 = arith.addf %834, %835 : vector<16x64xf32>
    %837 = arith.mulf %822, %798 : vector<16x64xf32>
    %838 = arith.mulf %812, %826 : vector<16x64xf32>
    %839 = arith.addf %837, %838 : vector<16x64xf32>
    %840 = math.tanh %839 : vector<16x64xf32>
    %841 = arith.mulf %836, %840 : vector<16x64xf32>
    %c304_461 = arith.constant 304 : index
    %c0_462 = arith.constant 0 : index
    %842 = vector.load %arg11[%c304_461, %c0_462] : memref<320x64xf32, #tpu.memory_space<vmem>>, vector<16x64xf32>
    tpu.vector_store %arg11[%c304_461, %c0_462], %841 {strides = array<i32>} : memref<320x64xf32, #tpu.memory_space<vmem>>, vector<16x64xf32>,
    %c0_463 = arith.constant 0 : index
    %c0_464 = arith.constant 0 : index
    %843 = vector.load %arg11[%c0_463, %c0_464] : memref<320x64xf32, #tpu.memory_space<vmem>>, vector<320x64xf32>
    %c0_465 = arith.constant 0 : index
    %c128_466 = arith.constant 128 : index
    %844 = vector.load %arg8[%c0_465, %c128_466] : memref<2x512xf32, #tpu.memory_space<vmem>>, vector<1x64xf32>
    %845 = arith.truncf %843 : vector<320x64xf32> to vector<320x64xbf16>
    %c0_467 = arith.constant 0 : index
    %c0_468 = arith.constant 0 : index
    %846 = vector.load %arg5[%c0_467, %c0_468] : memref<64x64xbf16, #tpu.memory_space<vmem>>, vector<64x64xbf16>
    %cst_469 = arith.constant dense<0.000000e+00> : vector<320x64xf32>
    %847 = tpu.matmul %845, %846, %cst_469 {dimension_numbers = #tpu.dot_dimension_numbers<[1], [0], [0], [1], [0, 0, 1, 1], [], []>} : vector<320x64xbf16>, vector<64x64xbf16>, vector<320x64xf32> -> vector<320x64xf32>
    %848 = vector.broadcast %844 : vector<1x64xf32> to vector<320x64xf32>
    %849 = arith.addf %847, %848 : vector<320x64xf32>
    %850 = math.tanh %849 : vector<320x64xf32>
    %851 = arith.truncf %850 : vector<320x64xf32> to vector<320x64xbf16>
    %c0_470 = arith.constant 0 : index
    %c0_471 = arith.constant 0 : index
    %852 = vector.load %arg6[%c0_470, %c0_471] : memref<64x2xbf16, #tpu.memory_space<vmem>>, vector<64x2xbf16>
    %cst_472 = arith.constant dense<0.000000e+00> : vector<320x2xf32>
    %853 = tpu.matmul %851, %852, %cst_472 {dimension_numbers = #tpu.dot_dimension_numbers<[1], [0], [0], [1], [0, 0, 1, 1], [], []>} : vector<320x64xbf16>, vector<64x2xbf16>, vector<320x2xf32> -> vector<320x2xf32>
    %854 = vector.shape_cast %853 : vector<320x2xf32> to vector<20x16x2xf32>
    %855 = tpu.iota {dimensions = array<i32: 0>} : vector<20x16x2xi32>
    %856 = tpu.iota {dimensions = array<i32: 2>} : vector<20x16x2xi32>
    %c1_i32 = arith.constant 1 : i32
    %857 = vector.broadcast %c1_i32 : i32 to vector<20x16x2xi32>
    %858 = arith.cmpi eq, %856, %857 : vector<20x16x2xi32>
    %c12_i32 = arith.constant 12 : i32
    %859 = vector.broadcast %c12_i32 : i32 to vector<20x16x2xi32>
    %860 = arith.cmpi slt, %855, %859 : vector<20x16x2xi32>
    %861 = arith.ori %858, %860 : vector<20x16x2xi1>
    %cst_473 = arith.constant -1.000000e+09 : f32
    %862 = vector.broadcast %cst_473 : f32 to vector<20x16x2xf32>
    %863 = arith.select %861, %854, %862 : vector<20x16x2xi1>, vector<20x16x2xf32>
    %cst_474 = arith.constant dense<0xFF800000> : vector<16x2xf32>
    %864 = vector.multi_reduction <maximumf>, %863, %cst_474 [0] : vector<20x16x2xf32> to vector<16x2xf32>
    %865 = vector.shape_cast %864 : vector<16x2xf32> to vector<1x16x2xf32>
    %866 = vector.broadcast %865 : vector<1x16x2xf32> to vector<20x16x2xf32>
    %867 = arith.subf %863, %866 : vector<20x16x2xf32>
    %868 = math.exp %867 : vector<20x16x2xf32>
    %cst_475 = arith.constant dense<0.000000e+00> : vector<16x2xf32>
    %869 = vector.multi_reduction <add>, %868, %cst_475 [0] : vector<20x16x2xf32> to vector<16x2xf32>
    %870 = vector.shape_cast %869 : vector<16x2xf32> to vector<1x16x2xf32>
    %871 = tpu.reciprocal %870 {approx = true} : vector<1x16x2xf32> -> vector<1x16x2xf32>
    %872 = vector.broadcast %871 : vector<1x16x2xf32> to vector<20x16x2xf32>
    %873 = arith.mulf %868, %872 : vector<20x16x2xf32>
    %874 = vector.shape_cast %843 : vector<320x64xf32> to vector<20x16x64xf32>
    %875 = vector.extract_strided_slice %873 {offsets = [0, 0, 0], sizes = [20, 16, 1], strides = [1, 1, 1]} : vector<20x16x2xf32> to vector<20x16x1xf32>
    %876 = vector.extract_strided_slice %874 {offsets = [0, 0, 0], sizes = [20, 16, 32], strides = [1, 1, 1]} : vector<20x16x64xf32> to vector<20x16x32xf32>
    %877 = vector.broadcast %875 : vector<20x16x1xf32> to vector<20x16x32xf32>
    %878 = arith.mulf %877, %876 : vector<20x16x32xf32>
    %cst_476 = arith.constant dense<0.000000e+00> : vector<16x32xf32>
    %879 = vector.multi_reduction <add>, %878, %cst_476 [0] : vector<20x16x32xf32> to vector<16x32xf32>
    %880 = vector.extract_strided_slice %873 {offsets = [0, 0, 1], sizes = [20, 16, 1], strides = [1, 1, 1]} : vector<20x16x2xf32> to vector<20x16x1xf32>
    %881 = vector.extract_strided_slice %874 {offsets = [0, 0, 32], sizes = [20, 16, 32], strides = [1, 1, 1]} : vector<20x16x64xf32> to vector<20x16x32xf32>
    %882 = vector.broadcast %880 : vector<20x16x1xf32> to vector<20x16x32xf32>
    %883 = arith.mulf %882, %881 : vector<20x16x32xf32>
    %cst_477 = arith.constant dense<0.000000e+00> : vector<16x32xf32>
    %884 = vector.multi_reduction <add>, %883, %cst_477 [0] : vector<20x16x32xf32> to vector<16x32xf32>
    %885 = tpu.concatenate %879, %884 in 1 : vector<16x32xf32>, vector<16x32xf32> -> vector<16x64xf32>
    %c0_478 = arith.constant 0 : index
    %c256_479 = arith.constant 256 : index
    %886 = vector.load %arg8[%c0_478, %c256_479] : memref<2x512xf32, #tpu.memory_space<vmem>>, vector<1x8xf32>
    %c0_480 = arith.constant 0 : index
    %c384_481 = arith.constant 384 : index
    %887 = vector.load %arg8[%c0_480, %c384_481] : memref<2x512xf32, #tpu.memory_space<vmem>>, vector<1x1xf32>
    %c0_482 = arith.constant 0 : index
    %c0_483 = arith.constant 0 : index
    %888 = vector.load %arg7[%c0_482, %c0_483] : memref<65x8xf32, #tpu.memory_space<vmem>>, vector<64x8xf32>
    %cst_484 = arith.constant dense<0.000000e+00> : vector<16x8xf32>
    %889 = tpu.matmul %885, %888, %cst_484 {dimension_numbers = #tpu.dot_dimension_numbers<[1], [0], [0], [1], [0, 0, 1, 1], [], []>} : vector<16x64xf32>, vector<64x8xf32>, vector<16x8xf32> -> vector<16x8xf32>
    %890 = vector.broadcast %886 : vector<1x8xf32> to vector<16x8xf32>
    %891 = arith.addf %889, %890 : vector<16x8xf32>
    %cst_485 = arith.constant 0.000000e+00 : f32
    %892 = vector.broadcast %cst_485 : f32 to vector<16x8xf32>
    %893 = arith.maximumf %891, %892 : vector<16x8xf32>
    %c64_486 = arith.constant 64 : index
    %c0_487 = arith.constant 0 : index
    %894 = vector.load %arg7[%c64_486, %c0_487] : memref<65x8xf32, #tpu.memory_space<vmem>>, vector<1x8xf32>
    %895 = tpu.transpose %893, [1, 0] : vector<16x8xf32> -> vector<8x16xf32>
    %cst_488 = arith.constant dense<0.000000e+00> : vector<1x16xf32>
    %896 = tpu.matmul %894, %895, %cst_488 {dimension_numbers = #tpu.dot_dimension_numbers<[1], [0], [0], [1], [0, 0, 1, 1], [], []>} : vector<1x8xf32>, vector<8x16xf32>, vector<1x16xf32> -> vector<1x16xf32>
    %897 = vector.broadcast %887 : vector<1x1xf32> to vector<1x16xf32>
    %898 = arith.addf %896, %897 : vector<1x16xf32>
    %c0_489 = arith.constant 0 : index
    %c0_490 = arith.constant 0 : index
    %c0_491 = arith.constant 0 : index
    %899 = vector.load %arg9[%c0_489, %c0_490, %c0_491] : memref<1x1x16xf32, #tpu.memory_space<vmem>>, vector<1x1x16xf32>
    %900 = vector.shape_cast %899 : vector<1x1x16xf32> to vector<1x16xf32>
    %901 = vector.shape_cast %898 : vector<1x16xf32> to vector<1x1x16xf32>
    tpu.vector_store %arg9[%c0_489, %c0_490, %c0_491], %901 {strides = array<i32>} : memref<1x1x16xf32, #tpu.memory_space<vmem>>, vector<1x1x16xf32>,
    return
  }
  func.func @transform_0(%arg0: i32) -> (i32, i32, i32) {
    %c0_i32 = arith.constant 0 : i32
    %c0_i32_0 = arith.constant 0 : i32
    %c0_i32_1 = arith.constant 0 : i32
    return %arg0, %c0_i32, %c0_i32_0 : i32, i32, i32
  }
  func.func @transform_1(%arg0: i32) -> (i32, i32) {
    %c0_i32 = arith.constant 0 : i32
    %c0_i32_0 = arith.constant 0 : i32
    %c0_i32_1 = arith.constant 0 : i32
    return %c0_i32, %c0_i32_0 : i32, i32
  }
  func.func @transform_2(%arg0: i32) -> (i32, i32) {
    %c0_i32 = arith.constant 0 : i32
    %c0_i32_0 = arith.constant 0 : i32
    %c0_i32_1 = arith.constant 0 : i32
    return %c0_i32, %c0_i32_0 : i32, i32
  }
  func.func @transform_3(%arg0: i32) -> (i32, i32) {
    %c0_i32 = arith.constant 0 : i32
    %c0_i32_0 = arith.constant 0 : i32
    %c0_i32_1 = arith.constant 0 : i32
    return %c0_i32, %c0_i32_0 : i32, i32
  }
  func.func @transform_4(%arg0: i32) -> (i32, i32) {
    %c0_i32 = arith.constant 0 : i32
    %c0_i32_0 = arith.constant 0 : i32
    %c0_i32_1 = arith.constant 0 : i32
    return %c0_i32, %c0_i32_0 : i32, i32
  }
  func.func @transform_5(%arg0: i32) -> (i32, i32) {
    %c0_i32 = arith.constant 0 : i32
    %c0_i32_0 = arith.constant 0 : i32
    %c0_i32_1 = arith.constant 0 : i32
    return %c0_i32, %c0_i32_0 : i32, i32
  }
  func.func @transform_6(%arg0: i32) -> (i32, i32) {
    %c0_i32 = arith.constant 0 : i32
    %c0_i32_0 = arith.constant 0 : i32
    %c0_i32_1 = arith.constant 0 : i32
    return %c0_i32, %c0_i32_0 : i32, i32
  }
  func.func @transform_7(%arg0: i32) -> (i32, i32) {
    %c0_i32 = arith.constant 0 : i32
    %c0_i32_0 = arith.constant 0 : i32
    %c0_i32_1 = arith.constant 0 : i32
    return %c0_i32, %c0_i32_0 : i32, i32
  }
  func.func @transform_8(%arg0: i32) -> (i32, i32, i32) {
    %c0_i32 = arith.constant 0 : i32
    %c0_i32_0 = arith.constant 0 : i32
    %c0_i32_1 = arith.constant 0 : i32
    return %arg0, %c0_i32, %c0_i32_0 : i32, i32, i32
  }
}

</mosaic_0001>

<llo_original>
// kernel: tpu_custom_call.1
$region0: #{tpu_custom_call.1}
  #allocation0 [shape = 'u32[]', space=smem, size = 0x4, offset = 0x4, fixed_abs, tag = 'smem constant byte address 0x4 - core index']
  #allocation1 [shape = 'u32[144,128]{1,0:T(1,128)}', space=vmem, size = 0x12000, scoped, tag = 'internal scratch']
  #allocation2 [shape = 'f32[320,512]{1,0:T(8,128)}', space=vmem, size = 0xa0000, scoped, tag = 'scratch operand']
  #allocation3 [shape = 'f32[320,64]{1,0:T(8,128)}', space=vmem, size = 0x28000, scoped, tag = 'scratch operand']
  %s0 = inlined_call_operand.vmem [shape: f32[1,320,10], index: 0, kind: input, shape index: {}]
  %s1 = inlined_call_operand.vmem [shape: bf16[10,64], index: 1, kind: input, shape index: {}]
  %s2 = inlined_call_operand.vmem [shape: bf16[64,512], index: 2, kind: input, shape index: {}]
  %s3 = inlined_call_operand.vmem [shape: bf16[64,512], index: 3, kind: input, shape index: {}]
  %s4 = inlined_call_operand.vmem [shape: bf16[64,64], index: 4, kind: input, shape index: {}]
  %s5 = inlined_call_operand.vmem [shape: bf16[64,2], index: 5, kind: input, shape index: {}]
  %s6 = inlined_call_operand.vmem [shape: f32[65,8], index: 6, kind: input, shape index: {}]
  %s7 = inlined_call_operand.vmem [shape: f32[2,512], index: 7, kind: input, shape index: {}]
  %s8 = inlined_call_operand.hbm [shape: f32[1,1,16], index: 8, kind: output, shape index: {}]
  %s9 = sld [smem:[#allocation0]]
  $region42: #{tpu_custom_call.1} parent=0
    _
  %s11 = ssub.s32 1, %s9
  %s12 = scalar_select 0, %s11, %s9
  $region1: #{tpu_custom_call.1} parent=0
    #allocation4 [shape = 'u8[512]{0}', space=vmem, size = 0x400, scoped, tag = 'output window, operand 0, single buffered']
    #allocation5 [shape = 's32[1]{0}', space=sflag, size = 0x4, scoped, tag = 'scoped memory for tpu_custom_call.1']
    %13 = vsyncpa [#allocation5], 0
    // Predicated region
    $region2: #{tpu_custom_call.1} parent=1 // pred_check
      _
    $region3: #{tpu_custom_call.1} parent=1 // pred_check_branch
      %15 = sbr.rel (0) target = $region5
    $region4: #{tpu_custom_call.1} parent=1 // pred_region
      _
    $region5: #{tpu_custom_call.1} parent=1 // pred_fallthru
      _
    // Predicated region
    $region6: #{tpu_custom_call.1} parent=1 // pred_check
      _
    $region7: #{tpu_custom_call.1} parent=1 // pred_check_branch
      %17 = sbr.rel (0) target = $region9
    $region8: #{tpu_custom_call.1} parent=1 // pred_region
      _
    $region9: #{tpu_custom_call.1} parent=1 // pred_fallthru
      _
    // Predicated region
    $region10: #{tpu_custom_call.1} parent=1 // pred_check
      _
    $region11: #{tpu_custom_call.1} parent=1 // pred_check_branch
      %19 = sbr.rel (0) target = $region13
    $region12: #{tpu_custom_call.1} parent=1 // pred_region
      _
    $region13: #{tpu_custom_call.1} parent=1 // pred_fallthru
      _
    // Predicated region
    $region14: #{tpu_custom_call.1} parent=1 // pred_check
      _
    $region15: #{tpu_custom_call.1} parent=1 // pred_check_branch
      %21 = sbr.rel (0) target = $region17
    $region16: #{tpu_custom_call.1} parent=1 // pred_region
      _
    $region17: #{tpu_custom_call.1} parent=1 // pred_fallthru
      _
    // Predicated region
    $region18: #{tpu_custom_call.1} parent=1 // pred_check
      _
    $region19: #{tpu_custom_call.1} parent=1 // pred_check_branch
      %23 = sbr.rel (0) target = $region21
    $region20: #{tpu_custom_call.1} parent=1 // pred_region
      _
    $region21: #{tpu_custom_call.1} parent=1 // pred_fallthru
      _
    // Predicated region
    $region22: #{tpu_custom_call.1} parent=1 // pred_check
      _
    $region23: #{tpu_custom_call.1} parent=1 // pred_check_branch
      %25 = sbr.rel (0) target = $region25
    $region24: #{tpu_custom_call.1} parent=1 // pred_region
      _
    $region25: #{tpu_custom_call.1} parent=1 // pred_fallthru
      _
    // Predicated region
    $region26: #{tpu_custom_call.1} parent=1 // pred_check
      _
    $region27: #{tpu_custom_call.1} parent=1 // pred_check_branch
      %27 = sbr.rel (0) target = $region29
    $region28: #{tpu_custom_call.1} parent=1 // pred_region
      _
    $region29: #{tpu_custom_call.1} parent=1 // pred_fallthru
      _
    // Predicated region
    $region30: #{tpu_custom_call.1} parent=1 // pred_check
      _
    $region31: #{tpu_custom_call.1} parent=1 // pred_check_branch
      %29 = sbr.rel (0) target = $region33
    $region32: #{tpu_custom_call.1} parent=1 // pred_region
      _
    $region33: #{tpu_custom_call.1} parent=1 // pred_fallthru
      _
    %v31 = vld [vmem:[%s7] sm:$0x1]
    %v32 = vld [vmem:[%s0] sm:$0xff]
    %v33 = vld [vmem:[%s0 + $0x8] sm:$0xff]
    %v34 = vld [vmem:[%s0 + $0x10] sm:$0xff]
    %v35 = vld [vmem:[%s0 + $0x18] sm:$0xff]
    %v36 = vld [vmem:[%s0 + $0x20] sm:$0xff]
    %v37 = vld [vmem:[%s0 + $0x28] sm:$0xff]
    %v38 = vld [vmem:[%s0 + $0x30] sm:$0xff]
    %v39 = vld [vmem:[%s0 + $0x38] sm:$0xff]
    %v40 = vld [vmem:[%s0 + $0x40] sm:$0xff]
    %v41 = vld [vmem:[%s0 + $0x48] sm:$0xff]
    %v42 = vld [vmem:[%s0 + $0x50] sm:$0xff]
    %v43 = vld [vmem:[%s0 + $0x58] sm:$0xff]
    %v44 = vld [vmem:[%s0 + $0x60] sm:$0xff]
    %v45 = vld [vmem:[%s0 + $0x68] sm:$0xff]
    %v46 = vld [vmem:[%s0 + $0x70] sm:$0xff]
    %v47 = vld [vmem:[%s0 + $0x78] sm:$0xff]
    %v48 = vld [vmem:[%s0 + $0x80] sm:$0xff]
    %v49 = vld [vmem:[%s0 + $0x88] sm:$0xff]
    %v50 = vld [vmem:[%s0 + $0x90] sm:$0xff]
    %v51 = vld [vmem:[%s0 + $0x98] sm:$0xff]
    %v52 = vld [vmem:[%s0 + $0xa0] sm:$0xff]
    %v53 = vld [vmem:[%s0 + $0xa8] sm:$0xff]
    %v54 = vld [vmem:[%s0 + $0xb0] sm:$0xff]
    %v55 = vld [vmem:[%s0 + $0xb8] sm:$0xff]
    %v56 = vld [vmem:[%s0 + $0xc0] sm:$0xff]
    %v57 = vld [vmem:[%s0 + $0xc8] sm:$0xff]
    %v58 = vld [vmem:[%s0 + $0xd0] sm:$0xff]
    %v59 = vld [vmem:[%s0 + $0xd8] sm:$0xff]
    %v60 = vld [vmem:[%s0 + $0xe0] sm:$0xff]
    %v61 = vld [vmem:[%s0 + $0xe8] sm:$0xff]
    %v62 = vld [vmem:[%s0 + $0xf0] sm:$0xff]
    %v63 = vld [vmem:[%s0 + $0xf8] sm:$0xff]
    %v64 = vld [vmem:[%s0 + $0x100] sm:$0xff]
    %v65 = vld [vmem:[%s0 + $0x108] sm:$0xff]
    %v66 = vld [vmem:[%s0 + $0x110] sm:$0xff]
    %v67 = vld [vmem:[%s0 + $0x118] sm:$0xff]
    %v68 = vld [vmem:[%s0 + $0x120] sm:$0xff]
    %v69 = vld [vmem:[%s0 + $0x128] sm:$0xff]
    %v70 = vld [vmem:[%s0 + $0x130] sm:$0xff]
    %v71 = vld [vmem:[%s0 + $0x138] sm:$0xff]
    %v72 = vpack.c.bf16 %v33, %v32
    %v73 = vpack.c.bf16 %v35, %v34
    %v74 = vpack.c.bf16 %v37, %v36
    %v75 = vpack.c.bf16 %v39, %v38
    %v76 = vpack.c.bf16 %v41, %v40
    %v77 = vpack.c.bf16 %v43, %v42
    %v78 = vpack.c.bf16 %v45, %v44
    %v79 = vpack.c.bf16 %v47, %v46
    %v80 = vpack.c.bf16 %v49, %v48
    %v81 = vpack.c.bf16 %v51, %v50
    %v82 = vpack.c.bf16 %v53, %v52
    %v83 = vpack.c.bf16 %v55, %v54
    %v84 = vpack.c.bf16 %v57, %v56
    %v85 = vpack.c.bf16 %v59, %v58
    %v86 = vpack.c.bf16 %v61, %v60
    %v87 = vpack.c.bf16 %v63, %v62
    %v88 = vpack.c.bf16 %v65, %v64
    %v89 = vpack.c.bf16 %v67, %v66
    %v90 = vpack.c.bf16 %v69, %v68
    %v91 = vpack.c.bf16 %v71, %v70
    %v92 = vld [vmem:[%s1] sm:$0xf]
    %v93 = vld [vmem:[%s1 + $0x4] sm:$0x1]
    %v94 = vlaneseq
    %v95 = vshrl.u32 %v94, 7
    %v96 = vsub.s32 0, %v95
    %v97 = vrot.slane %v31, %v96
    %v100 = vunpack.c.l.b16 %v92
    %v101 = vunpack.c.l.b16 %v93
    %v102 = vpack.c.b16 %v101, %v100
    %vm103 = vcmask 80896
    %v105 = vsel %vm103, %v72, 0
    %v108 = vsel %vm103, %v73, 0
    %v111 = vsel %vm103, %v74, 0
    %v114 = vsel %vm103, %v75, 0
    %v117 = vsel %vm103, %v76, 0
    %v120 = vsel %vm103, %v77, 0
    %v123 = vsel %vm103, %v78, 0
    %v126 = vsel %vm103, %v79, 0
    %v129 = vsel %vm103, %v80, 0
    %v132 = vsel %vm103, %v81, 0
    %v135 = vsel %vm103, %v82, 0
    %v138 = vsel %vm103, %v83, 0
    %v141 = vsel %vm103, %v84, 0
    %v144 = vsel %vm103, %v85, 0
    %v147 = vsel %vm103, %v86, 0
    %v150 = vsel %vm103, %v87, 0
    %v153 = vsel %vm103, %v88, 0
    %v156 = vsel %vm103, %v89, 0
    %v159 = vsel %vm103, %v90, 0
    %v162 = vsel %vm103, %v91, 0
    %vm164 = vcmask 1044480
    %v166 = vsel %vm164, %v102, 0
    %168 = vmatprep.subr.bf16.mxu0 0
    %169 = vmatpush1.bf16.msra.mxu0 %v166
    %170 = vmatprep.subr.bf16.mxu0 0
    %171 = vmatpush1.bf16.msra.mxu0 0
    %172 = vmatprep.subr.bf16.mxu0 0
    %173 = vmatpush1.bf16.msra.mxu0 0
    %174 = vmatprep.subr.bf16.mxu0 0
    %175 = vmatpush1.bf16.msra.mxu0 0
    %176 = vmatprep.subr.bf16.mxu0 0
    %177 = vmatpush1.bf16.msra.mxu0 0
    %178 = vmatprep.subr.bf16.mxu0 0
    %179 = vmatpush1.bf16.msra.mxu0 0
    %180 = vmatprep.subr.bf16.mxu0 0
    %181 = vmatpush1.bf16.msra.mxu0 0
    %182 = vmatprep.subr.bf16.mxu0 0
    %183 = vmatpush1.bf16.msra.mxu0 0
    %184 = vmatprep.subr.bf16.mxu0 0
    %185 = vmatpush1.bf16.msra.mxu0 0
    %186 = vmatprep.subr.bf16.mxu0 0
    %187 = vmatpush1.bf16.msra.mxu0 0
    %188 = vmatprep.subr.bf16.mxu0 0
    %189 = vmatpush1.bf16.msra.mxu0 0
    %190 = vmatprep.subr.bf16.mxu0 0
    %191 = vmatpush1.bf16.msra.mxu0 0
    %192 = vmatprep.subr.bf16.mxu0 0
    %193 = vmatpush1.bf16.msra.mxu0 0
    %194 = vmatprep.subr.bf16.mxu0 0
    %195 = vmatpush1.bf16.msra.mxu0 0
    %196 = vmatprep.subr.bf16.mxu0 0
    %197 = vmatpush1.bf16.msra.mxu0 0
    %198 = vmatprep.subr.bf16.mxu0 0
    %199 = vmatpush1.bf16.msra.mxu0 0
    %200 = vmatprep.mubr.bf16.mxu0 0
    %201 = vmatmul.mubr.bf16.gmra.mrb[0].mxu0 %v105
    %v202 = vpop.f32.mrb[0].mxu0
    %v203 = vadd.f32 %v97, %v202
    %v204 = vpop.f32.mrb[0].mxu0
    %v205 = vpop.f32.mrb[0].mxu0
    %v206 = vadd.f32 %v97, %v205
    %v207 = vpop.f32.mrb[0].mxu0
    %208 = vmatprep.mubr.bf16.mxu0 0
    %209 = vmatmul.mubr.bf16.gmra.mrb[0].mxu0 %v108
    %v210 = vpop.f32.mrb[0].mxu0
    %v211 = vadd.f32 %v97, %v210
    %v212 = vpop.f32.mrb[0].mxu0
    %v213 = vpop.f32.mrb[0].mxu0
    %v214 = vadd.f32 %v97, %v213
    %v215 = vpop.f32.mrb[0].mxu0
    %216 = vmatprep.mubr.bf16.mxu0 0
    %217 = vmatmul.mubr.bf16.gmra.mrb[0].mxu0 %v111
    %v218 = vpop.f32.mrb[0].mxu0
    %v219 = vadd.f32 %v97, %v218
    %v220 = vpop.f32.mrb[0].mxu0
    %v221 = vpop.f32.mrb[0].mxu0
    %v222 = vadd.f32 %v97, %v221
    %v223 = vpop.f32.mrb[0].mxu0
    %224 = vmatprep.mubr.bf16.mxu0 0
    %225 = vmatmul.mubr.bf16.gmra.mrb[0].mxu0 %v114
    %v226 = vpop.f32.mrb[0].mxu0
    %v227 = vadd.f32 %v97, %v226
    %v228 = vpop.f32.mrb[0].mxu0
    %v229 = vpop.f32.mrb[0].mxu0
    %v230 = vadd.f32 %v97, %v229
    %v231 = vpop.f32.mrb[0].mxu0
    %232 = vmatprep.mubr.bf16.mxu0 0
    %233 = vmatmul.mubr.bf16.gmra.mrb[0].mxu0 %v117
    %v234 = vpop.f32.mrb[0].mxu0
    %v235 = vadd.f32 %v97, %v234
    %v236 = vpop.f32.mrb[0].mxu0
    %v237 = vpop.f32.mrb[0].mxu0
    %v238 = vadd.f32 %v97, %v237
    %v239 = vpop.f32.mrb[0].mxu0
    %240 = vmatprep.mubr.bf16.mxu0 0
    %241 = vmatmul.mubr.bf16.gmra.mrb[0].mxu0 %v120
    %v242 = vpop.f32.mrb[0].mxu0
    %v243 = vadd.f32 %v97, %v242
    %v244 = vpop.f32.mrb[0].mxu0
    %v245 = vpop.f32.mrb[0].mxu0
    %v246 = vadd.f32 %v97, %v245
    %v247 = vpop.f32.mrb[0].mxu0
    %248 = vmatprep.mubr.bf16.mxu0 0
    %249 = vmatmul.mubr.bf16.gmra.mrb[0].mxu0 %v123
    %v250 = vpop.f32.mrb[0].mxu0
    %v251 = vadd.f32 %v97, %v250
    %v252 = vpop.f32.mrb[0].mxu0
    %v253 = vpop.f32.mrb[0].mxu0
    %v254 = vadd.f32 %v97, %v253
    %v255 = vpop.f32.mrb[0].mxu0
    %256 = vmatprep.mubr.bf16.mxu0 0
    %257 = vmatmul.mubr.bf16.gmra.mrb[0].mxu0 %v126
    %v258 = vpop.f32.mrb[0].mxu0
    %v259 = vadd.f32 %v97, %v258
    %v260 = vpop.f32.mrb[0].mxu0
    %v261 = vpop.f32.mrb[0].mxu0
    %v262 = vadd.f32 %v97, %v261
    %v263 = vpop.f32.mrb[0].mxu0
    %264 = vmatprep.mubr.bf16.mxu0 0
    %265 = vmatmul.mubr.bf16.gmra.mrb[0].mxu0 %v129
    %v266 = vpop.f32.mrb[0].mxu0
    %v267 = vadd.f32 %v97, %v266
    %v268 = vpop.f32.mrb[0].mxu0
    %v269 = vpop.f32.mrb[0].mxu0
    %v270 = vadd.f32 %v97, %v269
    %v271 = vpop.f32.mrb[0].mxu0
    %272 = vmatprep.mubr.bf16.mxu0 0
    %273 = vmatmul.mubr.bf16.gmra.mrb[0].mxu0 %v132
    %v274 = vpop.f32.mrb[0].mxu0
    %v275 = vadd.f32 %v97, %v274
    %v276 = vpop.f32.mrb[0].mxu0
    %v277 = vpop.f32.mrb[0].mxu0
    %v278 = vadd.f32 %v97, %v277
    %v279 = vpop.f32.mrb[0].mxu0
    %280 = vmatprep.mubr.bf16.mxu0 0
    %281 = vmatmul.mubr.bf16.gmra.mrb[0].mxu0 %v135
    %v282 = vpop.f32.mrb[0].mxu0
    %v283 = vadd.f32 %v97, %v282
    %v284 = vpop.f32.mrb[0].mxu0
    %v285 = vpop.f32.mrb[0].mxu0
    %v286 = vadd.f32 %v97, %v285
    %v287 = vpop.f32.mrb[0].mxu0
    %288 = vmatprep.mubr.bf16.mxu0 0
    %289 = vmatmul.mubr.bf16.gmra.mrb[0].mxu0 %v138
    %v290 = vpop.f32.mrb[0].mxu0
    %v291 = vadd.f32 %v97, %v290
    %v292 = vpop.f32.mrb[0].mxu0
    %v293 = vpop.f32.mrb[0].mxu0
    %v294 = vadd.f32 %v97, %v293
    %v295 = vpop.f32.mrb[0].mxu0
    %296 = vmatprep.mubr.bf16.mxu0 0
    %297 = vmatmul.mubr.bf16.gmra.mrb[0].mxu0 %v141
    %v298 = vpop.f32.mrb[0].mxu0
    %v299 = vadd.f32 %v97, %v298
    %v300 = vpop.f32.mrb[0].mxu0
    %v301 = vpop.f32.mrb[0].mxu0
    %v302 = vadd.f32 %v97, %v301
    %v303 = vpop.f32.mrb[0].mxu0
    %304 = vmatprep.mubr.bf16.mxu0 0
    %305 = vmatmul.mubr.bf16.gmra.mrb[0].mxu0 %v144
    %v306 = vpop.f32.mrb[0].mxu0
    %v307 = vadd.f32 %v97, %v306
    %v308 = vpop.f32.mrb[0].mxu0
    %v309 = vpop.f32.mrb[0].mxu0
    %v310 = vadd.f32 %v97, %v309
    %v311 = vpop.f32.mrb[0].mxu0
    %312 = vmatprep.mubr.bf16.mxu0 0
    %313 = vmatmul.mubr.bf16.gmra.mrb[0].mxu0 %v147
    %v314 = vpop.f32.mrb[0].mxu0
    %v315 = vadd.f32 %v97, %v314
    %v316 = vpop.f32.mrb[0].mxu0
    %v317 = vpop.f32.mrb[0].mxu0
    %v318 = vadd.f32 %v97, %v317
    %v319 = vpop.f32.mrb[0].mxu0
    %320 = vmatprep.mubr.bf16.mxu0 0
    %321 = vmatmul.mubr.bf16.gmra.mrb[0].mxu0 %v150
    %v322 = vpop.f32.mrb[0].mxu0
    %v323 = vadd.f32 %v97, %v322
    %v324 = vpop.f32.mrb[0].mxu0
    %v325 = vpop.f32.mrb[0].mxu0
    %v326 = vadd.f32 %v97, %v325
    %v327 = vpop.f32.mrb[0].mxu0
    %328 = vmatprep.mubr.bf16.mxu0 0
    %329 = vmatmul.mubr.bf16.gmra.mrb[0].mxu0 %v153
    %v330 = vpop.f32.mrb[0].mxu0
    %v331 = vadd.f32 %v97, %v330
    %v332 = vpop.f32.mrb[0].mxu0
    %v333 = vpop.f32.mrb[0].mxu0
    %v334 = vadd.f32 %v97, %v333
    %v335 = vpop.f32.mrb[0].mxu0
    %336 = vmatprep.mubr.bf16.mxu0 0
    %337 = vmatmul.mubr.bf16.gmra.mrb[0].mxu0 %v156
    %v338 = vpop.f32.mrb[0].mxu0
    %v339 = vadd.f32 %v97, %v338
    %v340 = vpop.f32.mrb[0].mxu0
    %v341 = vpop.f32.mrb[0].mxu0
    %v342 = vadd.f32 %v97, %v341
    %v343 = vpop.f32.mrb[0].mxu0
    %344 = vmatprep.mubr.bf16.mxu0 0
    %345 = vmatmul.mubr.bf16.gmra.mrb[0].mxu0 %v159
    %v346 = vpop.f32.mrb[0].mxu0
    %v347 = vadd.f32 %v97, %v346
    %v348 = vpop.f32.mrb[0].mxu0
    %v349 = vpop.f32.mrb[0].mxu0
    %v350 = vadd.f32 %v97, %v349
    %v351 = vpop.f32.mrb[0].mxu0
    %352 = vmatprep.mubr.bf16.mxu0 0
    %353 = vmatmul.mubr.bf16.gmra.mrb[0].mxu0 %v162
    %v354 = vpop.f32.mrb[0].mxu0
    %v355 = vadd.f32 %v97, %v354
    %v356 = vpop.f32.mrb[0].mxu0
    %v357 = vpop.f32.mrb[0].mxu0
    %v358 = vadd.f32 %v97, %v357
    %v359 = vpop.f32.mrb[0].mxu0
    %360 = vdwg.mxu0
    %v361 = vmax.f32 %v203, 0.0
    %v362 = vmax.f32 %v206, 0.0
    %v363 = vmax.f32 %v211, 0.0
    %v364 = vmax.f32 %v214, 0.0
    %v365 = vmax.f32 %v219, 0.0
    %v366 = vmax.f32 %v222, 0.0
    %v367 = vmax.f32 %v227, 0.0
    %v368 = vmax.f32 %v230, 0.0
    %v369 = vmax.f32 %v235, 0.0
    %v370 = vmax.f32 %v238, 0.0
    %v371 = vmax.f32 %v243, 0.0
    %v372 = vmax.f32 %v246, 0.0
    %v373 = vmax.f32 %v251, 0.0
    %v374 = vmax.f32 %v254, 0.0
    %v375 = vmax.f32 %v259, 0.0
    %v376 = vmax.f32 %v262, 0.0
    %v377 = vmax.f32 %v267, 0.0
    %v378 = vmax.f32 %v270, 0.0
    %v379 = vmax.f32 %v275, 0.0
    %v380 = vmax.f32 %v278, 0.0
    %v381 = vmax.f32 %v283, 0.0
    %v382 = vmax.f32 %v286, 0.0
    %v383 = vmax.f32 %v291, 0.0
    %v384 = vmax.f32 %v294, 0.0
    %v385 = vmax.f32 %v299, 0.0
    %v386 = vmax.f32 %v302, 0.0
    %v387 = vmax.f32 %v307, 0.0
    %v388 = vmax.f32 %v310, 0.0
    %v389 = vmax.f32 %v315, 0.0
    %v390 = vmax.f32 %v318, 0.0
    %v391 = vmax.f32 %v323, 0.0
    %v392 = vmax.f32 %v326, 0.0
    %v393 = vmax.f32 %v331, 0.0
    %v394 = vmax.f32 %v334, 0.0
    %v395 = vmax.f32 %v339, 0.0
    %v396 = vmax.f32 %v342, 0.0
    %v397 = vmax.f32 %v347, 0.0
    %v398 = vmax.f32 %v350, 0.0
    %v399 = vmax.f32 %v355, 0.0
    %v400 = vmax.f32 %v358, 0.0
    %v401 = vpack.c.bf16 %v362, %v361
    %v402 = vpack.c.bf16 %v364, %v363
    %v403 = vpack.c.bf16 %v366, %v365
    %v404 = vpack.c.bf16 %v368, %v367
    %v405 = vpack.c.bf16 %v370, %v369
    %v406 = vpack.c.bf16 %v372, %v371
    %v407 = vpack.c.bf16 %v374, %v373
    %v408 = vpack.c.bf16 %v376, %v375
    %v409 = vpack.c.bf16 %v378, %v377
    %v410 = vpack.c.bf16 %v380, %v379
    %v411 = vpack.c.bf16 %v382, %v381
    %v412 = vpack.c.bf16 %v384, %v383
    %v413 = vpack.c.bf16 %v386, %v385
    %v414 = vpack.c.bf16 %v388, %v387
    %v415 = vpack.c.bf16 %v390, %v389
    %v416 = vpack.c.bf16 %v392, %v391
    %v417 = vpack.c.bf16 %v394, %v393
    %v418 = vpack.c.bf16 %v396, %v395
    %v419 = vpack.c.bf16 %v398, %v397
    %v420 = vpack.c.bf16 %v400, %v399
    %v421 = vld [vmem:[%s2] sm:$0xff]
    %v422 = vld [vmem:[%s2 + $0x8] sm:$0xff]
    %v423 = vld [vmem:[%s2 + $0x10] sm:$0xff]
    %v424 = vld [vmem:[%s2 + $0x18] sm:$0xff]
    %v425 = vld [vmem:[%s2 + $0x20] sm:$0xff]
    %v426 = vld [vmem:[%s2 + $0x28] sm:$0xff]
    %v427 = vld [vmem:[%s2 + $0x30] sm:$0xff]
    %v428 = vld [vmem:[%s2 + $0x38] sm:$0xff]
    %v429 = vld [vmem:[%s2 + $0x40] sm:$0xff]
    %v430 = vld [vmem:[%s2 + $0x48] sm:$0xff]
    %v431 = vld [vmem:[%s2 + $0x50] sm:$0xff]
    %v432 = vld [vmem:[%s2 + $0x58] sm:$0xff]
    %v433 = vld [vmem:[%s2 + $0x60] sm:$0xff]
    %v434 = vld [vmem:[%s2 + $0x68] sm:$0xff]
    %v435 = vld [vmem:[%s2 + $0x70] sm:$0xff]
    %v436 = vld [vmem:[%s2 + $0x78] sm:$0xff]
    %s437 = scalar_lea.vmem %s7, 1
    %v438 = vld [vmem:[%s437] ss:$2 sm:$0xf]
    %v440 = vlaneseq
    %v441 = vshrl.u32 %v440, 7
    %v442 = vsub.s32 0, %v441
    %v443 = vrot.slane %v438, %v442
    %v444 = vlaneseq
    %v445 = vshrl.u32 %v444, 7
    %v446 = vsub.s32 1, %v445
    %v447 = vrot.slane %v438, %v446
    %v448 = vlaneseq
    %v449 = vshrl.u32 %v448, 7
    %v450 = vsub.s32 2, %v449
    %v451 = vrot.slane %v438, %v450
    %v452 = vlaneseq
    %v453 = vshrl.u32 %v452, 7
    %v454 = vsub.s32 3, %v453
    %v455 = vrot.slane %v438, %v454
    %v476 = vunpack.c.l.b16 %v421
    %v477 = vunpack.c.h.b16 %v421
    %v478 = vunpack.c.l.b16 %v422
    %v479 = vunpack.c.h.b16 %v422
    %v480 = vunpack.c.l.b16 %v423
    %v481 = vunpack.c.h.b16 %v423
    %v482 = vunpack.c.l.b16 %v424
    %v483 = vunpack.c.h.b16 %v424
    %v484 = vunpack.c.l.b16 %v425
    %v485 = vunpack.c.h.b16 %v425
    %v486 = vunpack.c.l.b16 %v426
    %v487 = vunpack.c.h.b16 %v426
    %v488 = vunpack.c.l.b16 %v427
    %v489 = vunpack.c.h.b16 %v427
    %v490 = vunpack.c.l.b16 %v428
    %v491 = vunpack.c.h.b16 %v428
    %v492 = vunpack.c.l.b16 %v429
    %v493 = vunpack.c.h.b16 %v429
    %v494 = vunpack.c.l.b16 %v430
    %v495 = vunpack.c.h.b16 %v430
    %v496 = vunpack.c.l.b16 %v431
    %v497 = vunpack.c.h.b16 %v431
    %v498 = vunpack.c.l.b16 %v432
    %v499 = vunpack.c.h.b16 %v432
    %v500 = vunpack.c.l.b16 %v433
    %v501 = vunpack.c.h.b16 %v433
    %v502 = vunpack.c.l.b16 %v434
    %v503 = vunpack.c.h.b16 %v434
    %v504 = vunpack.c.l.b16 %v435
    %v505 = vunpack.c.h.b16 %v435
    %v506 = vunpack.c.l.b16 %v436
    %v507 = vunpack.c.h.b16 %v436
    %v508 = vpack.c.b16 %v480, %v476
    %v509 = vpack.c.b16 %v481, %v477
    %v510 = vpack.c.b16 %v482, %v478
    %v511 = vpack.c.b16 %v483, %v479
    %v512 = vpack.c.b16 %v488, %v484
    %v513 = vpack.c.b16 %v489, %v485
    %v514 = vpack.c.b16 %v490, %v486
    %v515 = vpack.c.b16 %v491, %v487
    %v516 = vpack.c.b16 %v496, %v492
    %v517 = vpack.c.b16 %v497, %v493
    %v518 = vpack.c.b16 %v498, %v494
    %v519 = vpack.c.b16 %v499, %v495
    %v520 = vpack.c.b16 %v504, %v500
    %v521 = vpack.c.b16 %v505, %v501
    %v522 = vpack.c.b16 %v506, %v502
    %v523 = vpack.c.b16 %v507, %v503
    %vm540 = vcmask 523264
    %v542 = vsel %vm540, %v401, 0
    %v545 = vsel %vm540, %v402, 0
    %v548 = vsel %vm540, %v403, 0
    %v551 = vsel %vm540, %v404, 0
    %v554 = vsel %vm540, %v405, 0
    %v557 = vsel %vm540, %v406, 0
    %v560 = vsel %vm540, %v407, 0
    %v563 = vsel %vm540, %v408, 0
    %v566 = vsel %vm540, %v409, 0
    %v569 = vsel %vm540, %v410, 0
    %v572 = vsel %vm540, %v411, 0
    %v575 = vsel %vm540, %v412, 0
    %v578 = vsel %vm540, %v413, 0
    %v581 = vsel %vm540, %v414, 0
    %v584 = vsel %vm540, %v415, 0
    %v587 = vsel %vm540, %v416, 0
    %v590 = vsel %vm540, %v417, 0
    %v593 = vsel %vm540, %v418, 0
    %v596 = vsel %vm540, %v419, 0
    %v599 = vsel %vm540, %v420, 0
    %601 = vmatprep.subr.bf16.mxu0 %v509
    %602 = vmatpush1.bf16.msra.mxu0 %v508
    %603 = vmatprep.subr.bf16.mxu0 %v513
    %604 = vmatpush1.bf16.msra.mxu0 %v512
    %605 = vmatprep.subr.bf16.mxu0 %v517
    %606 = vmatpush1.bf16.msra.mxu0 %v516
    %607 = vmatprep.subr.bf16.mxu0 %v521
    %608 = vmatpush1.bf16.msra.mxu0 %v520
    %609 = vmatprep.subr.bf16.mxu0 0
    %610 = vmatpush1.bf16.msra.mxu0 0
    %611 = vmatprep.subr.bf16.mxu0 0
    %612 = vmatpush1.bf16.msra.mxu0 0
    %613 = vmatprep.subr.bf16.mxu0 0
    %614 = vmatpush1.bf16.msra.mxu0 0
    %615 = vmatprep.subr.bf16.mxu0 0
    %616 = vmatpush1.bf16.msra.mxu0 0
    %617 = vmatprep.subr.bf16.mxu0 0
    %618 = vmatpush1.bf16.msra.mxu0 0
    %619 = vmatprep.subr.bf16.mxu0 0
    %620 = vmatpush1.bf16.msra.mxu0 0
    %621 = vmatprep.subr.bf16.mxu0 0
    %622 = vmatpush1.bf16.msra.mxu0 0
    %623 = vmatprep.subr.bf16.mxu0 0
    %624 = vmatpush1.bf16.msra.mxu0 0
    %625 = vmatprep.subr.bf16.mxu0 0
    %626 = vmatpush1.bf16.msra.mxu0 0
    %627 = vmatprep.subr.bf16.mxu0 0
    %628 = vmatpush1.bf16.msra.mxu0 0
    %629 = vmatprep.subr.bf16.mxu0 0
    %630 = vmatpush1.bf16.msra.mxu0 0
    %631 = vmatprep.subr.bf16.mxu0 0
    %632 = vmatpush1.bf16.msra.mxu0 0
    %633 = vmatprep.mubr.bf16.mxu0 0
    %634 = vmatmul.mubr.bf16.gmra.mrb[0].mxu0 %v542
    %v635 = vpop.f32.mrb[0].mxu0
    %v636 = vadd.f32 %v443, %v635
    %v637 = vpop.f32.mrb[0].mxu0
    %v638 = vadd.f32 %v447, %v637
    %v639 = vpop.f32.mrb[0].mxu0
    %v640 = vadd.f32 %v443, %v639
    %v641 = vpop.f32.mrb[0].mxu0
    %v642 = vadd.f32 %v447, %v641
    %643 = vmatprep.mubr.bf16.mxu0 0
    %644 = vmatmul.mubr.bf16.gmra.mrb[0].mxu0 %v545
    %v645 = vpop.f32.mrb[0].mxu0
    %v646 = vadd.f32 %v443, %v645
    %v647 = vpop.f32.mrb[0].mxu0
    %v648 = vadd.f32 %v447, %v647
    %v649 = vpop.f32.mrb[0].mxu0
    %v650 = vadd.f32 %v443, %v649
    %v651 = vpop.f32.mrb[0].mxu0
    %v652 = vadd.f32 %v447, %v651
    %653 = vmatprep.mubr.bf16.mxu0 0
    %654 = vmatmul.mubr.bf16.gmra.mrb[0].mxu0 %v548
    %v655 = vpop.f32.mrb[0].mxu0
    %v656 = vadd.f32 %v443, %v655
    %v657 = vpop.f32.mrb[0].mxu0
    %v658 = vadd.f32 %v447, %v657
    %v659 = vpop.f32.mrb[0].mxu0
    %v660 = vadd.f32 %v443, %v659
    %v661 = vpop.f32.mrb[0].mxu0
    %v662 = vadd.f32 %v447, %v661
    %663 = vmatprep.mubr.bf16.mxu0 0
    %664 = vmatmul.mubr.bf16.gmra.mrb[0].mxu0 %v551
    %v665 = vpop.f32.mrb[0].mxu0
    %v666 = vadd.f32 %v443, %v665
    %v667 = vpop.f32.mrb[0].mxu0
    %v668 = vadd.f32 %v447, %v667
    %v669 = vpop.f32.mrb[0].mxu0
    %v670 = vadd.f32 %v443, %v669
    %v671 = vpop.f32.mrb[0].mxu0
    %v672 = vadd.f32 %v447, %v671
    %673 = vmatprep.mubr.bf16.mxu0 0
    %674 = vmatmul.mubr.bf16.gmra.mrb[0].mxu0 %v554
    %v675 = vpop.f32.mrb[0].mxu0
    %v676 = vadd.f32 %v443, %v675
    %v677 = vpop.f32.mrb[0].mxu0
    %v678 = vadd.f32 %v447, %v677
    %v679 = vpop.f32.mrb[0].mxu0
    %v680 = vadd.f32 %v443, %v679
    %v681 = vpop.f32.mrb[0].mxu0
    %v682 = vadd.f32 %v447, %v681
    %683 = vmatprep.mubr.bf16.mxu0 0
    %684 = vmatmul.mubr.bf16.gmra.mrb[0].mxu0 %v557
    %v685 = vpop.f32.mrb[0].mxu0
    %v686 = vadd.f32 %v443, %v685
    %v687 = vpop.f32.mrb[0].mxu0
    %v688 = vadd.f32 %v447, %v687
    %v689 = vpop.f32.mrb[0].mxu0
    %v690 = vadd.f32 %v443, %v689
    %v691 = vpop.f32.mrb[0].mxu0
    %v692 = vadd.f32 %v447, %v691
    %693 = vmatprep.mubr.bf16.mxu0 0
    %694 = vmatmul.mubr.bf16.gmra.mrb[0].mxu0 %v560
    %v695 = vpop.f32.mrb[0].mxu0
    %v696 = vadd.f32 %v443, %v695
    %v697 = vpop.f32.mrb[0].mxu0
    %v698 = vadd.f32 %v447, %v697
    %v699 = vpop.f32.mrb[0].mxu0
    %v700 = vadd.f32 %v443, %v699
    %v701 = vpop.f32.mrb[0].mxu0
    %v702 = vadd.f32 %v447, %v701
    %703 = vmatprep.mubr.bf16.mxu0 0
    %704 = vmatmul.mubr.bf16.gmra.mrb[0].mxu0 %v563
    %v705 = vpop.f32.mrb[0].mxu0
    %v706 = vadd.f32 %v443, %v705
    %v707 = vpop.f32.mrb[0].mxu0
    %v708 = vadd.f32 %v447, %v707
    %v709 = vpop.f32.mrb[0].mxu0
    %v710 = vadd.f32 %v443, %v709
    %v711 = vpop.f32.mrb[0].mxu0
    %v712 = vadd.f32 %v447, %v711
    %713 = vmatprep.mubr.bf16.mxu0 0
    %714 = vmatmul.mubr.bf16.gmra.mrb[0].mxu0 %v566
    %v715 = vpop.f32.mrb[0].mxu0
    %v716 = vadd.f32 %v443, %v715
    %v717 = vpop.f32.mrb[0].mxu0
    %v718 = vadd.f32 %v447, %v717
    %v719 = vpop.f32.mrb[0].mxu0
    %v720 = vadd.f32 %v443, %v719
    %v721 = vpop.f32.mrb[0].mxu0
    %v722 = vadd.f32 %v447, %v721
    %723 = vmatprep.mubr.bf16.mxu0 0
    %724 = vmatmul.mubr.bf16.gmra.mrb[0].mxu0 %v569
    %v725 = vpop.f32.mrb[0].mxu0
    %v726 = vadd.f32 %v443, %v725
    %v727 = vpop.f32.mrb[0].mxu0
    %v728 = vadd.f32 %v447, %v727
    %v729 = vpop.f32.mrb[0].mxu0
    %v730 = vadd.f32 %v443, %v729
    %v731 = vpop.f32.mrb[0].mxu0
    %v732 = vadd.f32 %v447, %v731
    %733 = vmatprep.mubr.bf16.mxu0 0
    %734 = vmatmul.mubr.bf16.gmra.mrb[0].mxu0 %v572
    %v735 = vpop.f32.mrb[0].mxu0
    %v736 = vadd.f32 %v443, %v735
    %v737 = vpop.f32.mrb[0].mxu0
    %v738 = vadd.f32 %v447, %v737
    %v739 = vpop.f32.mrb[0].mxu0
    %v740 = vadd.f32 %v443, %v739
    %v741 = vpop.f32.mrb[0].mxu0
    %v742 = vadd.f32 %v447, %v741
    %743 = vmatprep.mubr.bf16.mxu0 0
    %744 = vmatmul.mubr.bf16.gmra.mrb[0].mxu0 %v575
    %v745 = vpop.f32.mrb[0].mxu0
    %v746 = vadd.f32 %v443, %v745
    %v747 = vpop.f32.mrb[0].mxu0
    %v748 = vadd.f32 %v447, %v747
    %v749 = vpop.f32.mrb[0].mxu0
    %v750 = vadd.f32 %v443, %v749
    %v751 = vpop.f32.mrb[0].mxu0
    %v752 = vadd.f32 %v447, %v751
    %753 = vmatprep.mubr.bf16.mxu0 0
    %754 = vmatmul.mubr.bf16.gmra.mrb[0].mxu0 %v578
    %v755 = vpop.f32.mrb[0].mxu0
    %v756 = vadd.f32 %v443, %v755
    %v757 = vpop.f32.mrb[0].mxu0
    %v758 = vadd.f32 %v447, %v757
    %v759 = vpop.f32.mrb[0].mxu0
    %v760 = vadd.f32 %v443, %v759
    %v761 = vpop.f32.mrb[0].mxu0
    %v762 = vadd.f32 %v447, %v761
    %763 = vmatprep.mubr.bf16.mxu0 0
    %764 = vmatmul.mubr.bf16.gmra.mrb[0].mxu0 %v581
    %v765 = vpop.f32.mrb[0].mxu0
    %v766 = vadd.f32 %v443, %v765
    %v767 = vpop.f32.mrb[0].mxu0
    %v768 = vadd.f32 %v447, %v767
    %v769 = vpop.f32.mrb[0].mxu0
    %v770 = vadd.f32 %v443, %v769
    %v771 = vpop.f32.mrb[0].mxu0
    %v772 = vadd.f32 %v447, %v771
    %773 = vmatprep.mubr.bf16.mxu0 0
    %774 = vmatmul.mubr.bf16.gmra.mrb[0].mxu0 %v584
    %v775 = vpop.f32.mrb[0].mxu0
    %v776 = vadd.f32 %v443, %v775
    %v777 = vpop.f32.mrb[0].mxu0
    %v778 = vadd.f32 %v447, %v777
    %v779 = vpop.f32.mrb[0].mxu0
    %v780 = vadd.f32 %v443, %v779
    %v781 = vpop.f32.mrb[0].mxu0
    %v782 = vadd.f32 %v447, %v781
    %783 = vmatprep.mubr.bf16.mxu0 0
    %784 = vmatmul.mubr.bf16.gmra.mrb[0].mxu0 %v587
    %v785 = vpop.f32.mrb[0].mxu0
    %v786 = vadd.f32 %v443, %v785
    %v787 = vpop.f32.mrb[0].mxu0
    %v788 = vadd.f32 %v447, %v787
    %v789 = vpop.f32.mrb[0].mxu0
    %v790 = vadd.f32 %v443, %v789
    %v791 = vpop.f32.mrb[0].mxu0
    %v792 = vadd.f32 %v447, %v791
    %793 = vmatprep.mubr.bf16.mxu0 0
    %794 = vmatmul.mubr.bf16.gmra.mrb[0].mxu0 %v590
    %v795 = vpop.f32.mrb[0].mxu0
    %v796 = vadd.f32 %v443, %v795
    %v797 = vpop.f32.mrb[0].mxu0
    %v798 = vadd.f32 %v447, %v797
    %v799 = vpop.f32.mrb[0].mxu0
    %v800 = vadd.f32 %v443, %v799
    %v801 = vpop.f32.mrb[0].mxu0
    %v802 = vadd.f32 %v447, %v801
    %803 = vmatprep.mubr.bf16.mxu0 0
    %804 = vmatmul.mubr.bf16.gmra.mrb[0].mxu0 %v593
    %v805 = vpop.f32.mrb[0].mxu0
    %v806 = vadd.f32 %v443, %v805
    %v807 = vpop.f32.mrb[0].mxu0
    %v808 = vadd.f32 %v447, %v807
    %v809 = vpop.f32.mrb[0].mxu0
    %v810 = vadd.f32 %v443, %v809
    %v811 = vpop.f32.mrb[0].mxu0
    %v812 = vadd.f32 %v447, %v811
    %813 = vmatprep.mubr.bf16.mxu0 0
    %814 = vmatmul.mubr.bf16.gmra.mrb[0].mxu0 %v596
    %v815 = vpop.f32.mrb[0].mxu0
    %v816 = vadd.f32 %v443, %v815
    %v817 = vpop.f32.mrb[0].mxu0
    %v818 = vadd.f32 %v447, %v817
    %v819 = vpop.f32.mrb[0].mxu0
    %v820 = vadd.f32 %v443, %v819
    %v821 = vpop.f32.mrb[0].mxu0
    %v822 = vadd.f32 %v447, %v821
    %823 = vmatprep.mubr.bf16.mxu0 0
    %824 = vmatmul.mubr.bf16.gmra.mrb[0].mxu0 %v599
    %v825 = vpop.f32.mrb[0].mxu0
    %v826 = vadd.f32 %v443, %v825
    %v827 = vpop.f32.mrb[0].mxu0
    %v828 = vadd.f32 %v447, %v827
    %v829 = vpop.f32.mrb[0].mxu0
    %v830 = vadd.f32 %v443, %v829
    %v831 = vpop.f32.mrb[0].mxu0
    %v832 = vadd.f32 %v447, %v831
    %833 = vdwg.mxu0
    %834 = vmatprep.subr.bf16.mxu0 %v511
    %835 = vmatpush1.bf16.msra.mxu0 %v510
    %836 = vmatprep.subr.bf16.mxu0 %v515
    %837 = vmatpush1.bf16.msra.mxu0 %v514
    %838 = vmatprep.subr.bf16.mxu0 %v519
    %839 = vmatpush1.bf16.msra.mxu0 %v518
    %840 = vmatprep.subr.bf16.mxu0 %v523
    %841 = vmatpush1.bf16.msra.mxu0 %v522
    %842 = vmatprep.subr.bf16.mxu0 0
    %843 = vmatpush1.bf16.msra.mxu0 0
    %844 = vmatprep.subr.bf16.mxu0 0
    %845 = vmatpush1.bf16.msra.mxu0 0
    %846 = vmatprep.subr.bf16.mxu0 0
    %847 = vmatpush1.bf16.msra.mxu0 0
    %848 = vmatprep.subr.bf16.mxu0 0
    %849 = vmatpush1.bf16.msra.mxu0 0
    %850 = vmatprep.subr.bf16.mxu0 0
    %851 = vmatpush1.bf16.msra.mxu0 0
    %852 = vmatprep.subr.bf16.mxu0 0
    %853 = vmatpush1.bf16.msra.mxu0 0
    %854 = vmatprep.subr.bf16.mxu0 0
    %855 = vmatpush1.bf16.msra.mxu0 0
    %856 = vmatprep.subr.bf16.mxu0 0
    %857 = vmatpush1.bf16.msra.mxu0 0
    %858 = vmatprep.subr.bf16.mxu0 0
    %859 = vmatpush1.bf16.msra.mxu0 0
    %860 = vmatprep.subr.bf16.mxu0 0
    %861 = vmatpush1.bf16.msra.mxu0 0
    %862 = vmatprep.subr.bf16.mxu0 0
    %863 = vmatpush1.bf16.msra.mxu0 0
    %864 = vmatprep.subr.bf16.mxu0 0
    %865 = vmatpush1.bf16.msra.mxu0 0
    %866 = vmatprep.mubr.bf16.mxu0 0
    %867 = vmatmul.mubr.bf16.gmra.mrb[0].mxu0 %v542
    %v868 = vpop.f32.mrb[0].mxu0
    %v869 = vadd.f32 %v451, %v868
    %v870 = vpop.f32.mrb[0].mxu0
    %v871 = vadd.f32 %v455, %v870
    %v872 = vpop.f32.mrb[0].mxu0
    %v873 = vadd.f32 %v451, %v872
    %v874 = vpop.f32.mrb[0].mxu0
    %v875 = vadd.f32 %v455, %v874
    %876 = vmatprep.mubr.bf16.mxu0 0
    %877 = vmatmul.mubr.bf16.gmra.mrb[0].mxu0 %v545
    %v878 = vpop.f32.mrb[0].mxu0
    %v879 = vadd.f32 %v451, %v878
    %v880 = vpop.f32.mrb[0].mxu0
    %v881 = vadd.f32 %v455, %v880
    %v882 = vpop.f32.mrb[0].mxu0
    %v883 = vadd.f32 %v451, %v882
    %v884 = vpop.f32.mrb[0].mxu0
    %v885 = vadd.f32 %v455, %v884
    %886 = vmatprep.mubr.bf16.mxu0 0
    %887 = vmatmul.mubr.bf16.gmra.mrb[0].mxu0 %v548
    %v888 = vpop.f32.mrb[0].mxu0
    %v889 = vadd.f32 %v451, %v888
    %v890 = vpop.f32.mrb[0].mxu0
    %v891 = vadd.f32 %v455, %v890
    %v892 = vpop.f32.mrb[0].mxu0
    %v893 = vadd.f32 %v451, %v892
    %v894 = vpop.f32.mrb[0].mxu0
    %v895 = vadd.f32 %v455, %v894
    %896 = vmatprep.mubr.bf16.mxu0 0
    %897 = vmatmul.mubr.bf16.gmra.mrb[0].mxu0 %v551
    %v898 = vpop.f32.mrb[0].mxu0
    %v899 = vadd.f32 %v451, %v898
    %v900 = vpop.f32.mrb[0].mxu0
    %v901 = vadd.f32 %v455, %v900
    %v902 = vpop.f32.mrb[0].mxu0
    %v903 = vadd.f32 %v451, %v902
    %v904 = vpop.f32.mrb[0].mxu0
    %v905 = vadd.f32 %v455, %v904
    %906 = vmatprep.mubr.bf16.mxu0 0
    %907 = vmatmul.mubr.bf16.gmra.mrb[0].mxu0 %v554
    %v908 = vpop.f32.mrb[0].mxu0
    %v909 = vadd.f32 %v451, %v908
    %v910 = vpop.f32.mrb[0].mxu0
    %v911 = vadd.f32 %v455, %v910
    %v912 = vpop.f32.mrb[0].mxu0
    %v913 = vadd.f32 %v451, %v912
    %v914 = vpop.f32.mrb[0].mxu0
    %v915 = vadd.f32 %v455, %v914
    %916 = vmatprep.mubr.bf16.mxu0 0
    %917 = vmatmul.mubr.bf16.gmra.mrb[0].mxu0 %v557
    %v918 = vpop.f32.mrb[0].mxu0
    %v919 = vadd.f32 %v451, %v918
    %v920 = vpop.f32.mrb[0].mxu0
    %v921 = vadd.f32 %v455, %v920
    %v922 = vpop.f32.mrb[0].mxu0
    %v923 = vadd.f32 %v451, %v922
    %v924 = vpop.f32.mrb[0].mxu0
    %v925 = vadd.f32 %v455, %v924
    %926 = vmatprep.mubr.bf16.mxu0 0
    %927 = vmatmul.mubr.bf16.gmra.mrb[0].mxu0 %v560
    %v928 = vpop.f32.mrb[0].mxu0
    %v929 = vadd.f32 %v451, %v928
    %v930 = vpop.f32.mrb[0].mxu0
    %v931 = vadd.f32 %v455, %v930
    %v932 = vpop.f32.mrb[0].mxu0
    %v933 = vadd.f32 %v451, %v932
    %v934 = vpop.f32.mrb[0].mxu0
    %v935 = vadd.f32 %v455, %v934
    %936 = vmatprep.mubr.bf16.mxu0 0
    %937 = vmatmul.mubr.bf16.gmra.mrb[0].mxu0 %v563
    %v938 = vpop.f32.mrb[0].mxu0
    %v939 = vadd.f32 %v451, %v938
    %v940 = vpop.f32.mrb[0].mxu0
    %v941 = vadd.f32 %v455, %v940
    %v942 = vpop.f32.mrb[0].mxu0
    %v943 = vadd.f32 %v451, %v942
    %v944 = vpop.f32.mrb[0].mxu0
    %v945 = vadd.f32 %v455, %v944
    %946 = vmatprep.mubr.bf16.mxu0 0
    %947 = vmatmul.mubr.bf16.gmra.mrb[0].mxu0 %v566
    %v948 = vpop.f32.mrb[0].mxu0
    %v949 = vadd.f32 %v451, %v948
    %v950 = vpop.f32.mrb[0].mxu0
    %v951 = vadd.f32 %v455, %v950
    %v952 = vpop.f32.mrb[0].mxu0
    %v953 = vadd.f32 %v451, %v952
    %v954 = vpop.f32.mrb[0].mxu0
    %v955 = vadd.f32 %v455, %v954
    %956 = vmatprep.mubr.bf16.mxu0 0
    %957 = vmatmul.mubr.bf16.gmra.mrb[0].mxu0 %v569
    %v958 = vpop.f32.mrb[0].mxu0
    %v959 = vadd.f32 %v451, %v958
    %v960 = vpop.f32.mrb[0].mxu0
    %v961 = vadd.f32 %v455, %v960
    %v962 = vpop.f32.mrb[0].mxu0
    %v963 = vadd.f32 %v451, %v962
    %v964 = vpop.f32.mrb[0].mxu0
    %v965 = vadd.f32 %v455, %v964
    %966 = vmatprep.mubr.bf16.mxu0 0
    %967 = vmatmul.mubr.bf16.gmra.mrb[0].mxu0 %v572
    %v968 = vpop.f32.mrb[0].mxu0
    %v969 = vadd.f32 %v451, %v968
    %v970 = vpop.f32.mrb[0].mxu0
    %v971 = vadd.f32 %v455, %v970
    %v972 = vpop.f32.mrb[0].mxu0
    %v973 = vadd.f32 %v451, %v972
    %v974 = vpop.f32.mrb[0].mxu0
    %v975 = vadd.f32 %v455, %v974
    %976 = vmatprep.mubr.bf16.mxu0 0
    %977 = vmatmul.mubr.bf16.gmra.mrb[0].mxu0 %v575
    %v978 = vpop.f32.mrb[0].mxu0
    %v979 = vadd.f32 %v451, %v978
    %v980 = vpop.f32.mrb[0].mxu0
    %v981 = vadd.f32 %v455, %v980
    %v982 = vpop.f32.mrb[0].mxu0
    %v983 = vadd.f32 %v451, %v982
    %v984 = vpop.f32.mrb[0].mxu0
    %v985 = vadd.f32 %v455, %v984
    %986 = vmatprep.mubr.bf16.mxu0 0
    %987 = vmatmul.mubr.bf16.gmra.mrb[0].mxu0 %v578
    %v988 = vpop.f32.mrb[0].mxu0
    %v989 = vadd.f32 %v451, %v988
    %v990 = vpop.f32.mrb[0].mxu0
    %v991 = vadd.f32 %v455, %v990
    %v992 = vpop.f32.mrb[0].mxu0
    %v993 = vadd.f32 %v451, %v992
    %v994 = vpop.f32.mrb[0].mxu0
    %v995 = vadd.f32 %v455, %v994
    %996 = vmatprep.mubr.bf16.mxu0 0
    %997 = vmatmul.mubr.bf16.gmra.mrb[0].mxu0 %v581
    %v998 = vpop.f32.mrb[0].mxu0
    %v999 = vadd.f32 %v451, %v998
    %v1000 = vpop.f32.mrb[0].mxu0
    %v1001 = vadd.f32 %v455, %v1000
    %v1002 = vpop.f32.mrb[0].mxu0
    %v1003 = vadd.f32 %v451, %v1002
    %v1004 = vpop.f32.mrb[0].mxu0
    %v1005 = vadd.f32 %v455, %v1004
    %1006 = vmatprep.mubr.bf16.mxu0 0
    %1007 = vmatmul.mubr.bf16.gmra.mrb[0].mxu0 %v584
    %v1008 = vpop.f32.mrb[0].mxu0
    %v1009 = vadd.f32 %v451, %v1008
    %v1010 = vpop.f32.mrb[0].mxu0
    %v1011 = vadd.f32 %v455, %v1010
    %v1012 = vpop.f32.mrb[0].mxu0
    %v1013 = vadd.f32 %v451, %v1012
    %v1014 = vpop.f32.mrb[0].mxu0
    %v1015 = vadd.f32 %v455, %v1014
    %1016 = vmatprep.mubr.bf16.mxu0 0
    %1017 = vmatmul.mubr.bf16.gmra.mrb[0].mxu0 %v587
    %v1018 = vpop.f32.mrb[0].mxu0
    %v1019 = vadd.f32 %v451, %v1018
    %v1020 = vpop.f32.mrb[0].mxu0
    %v1021 = vadd.f32 %v455, %v1020
    %v1022 = vpop.f32.mrb[0].mxu0
    %v1023 = vadd.f32 %v451, %v1022
    %v1024 = vpop.f32.mrb[0].mxu0
    %v1025 = vadd.f32 %v455, %v1024
    %1026 = vmatprep.mubr.bf16.mxu0 0
    %1027 = vmatmul.mubr.bf16.gmra.mrb[0].mxu0 %v590
    %v1028 = vpop.f32.mrb[0].mxu0
    %v1029 = vadd.f32 %v451, %v1028
    %v1030 = vpop.f32.mrb[0].mxu0
    %v1031 = vadd.f32 %v455, %v1030
    %v1032 = vpop.f32.mrb[0].mxu0
    %v1033 = vadd.f32 %v451, %v1032
    %v1034 = vpop.f32.mrb[0].mxu0
    %v1035 = vadd.f32 %v455, %v1034
    %1036 = vmatprep.mubr.bf16.mxu0 0
    %1037 = vmatmul.mubr.bf16.gmra.mrb[0].mxu0 %v593
    %v1038 = vpop.f32.mrb[0].mxu0
    %v1039 = vadd.f32 %v451, %v1038
    %v1040 = vpop.f32.mrb[0].mxu0
    %v1041 = vadd.f32 %v455, %v1040
    %v1042 = vpop.f32.mrb[0].mxu0
    %v1043 = vadd.f32 %v451, %v1042
    %v1044 = vpop.f32.mrb[0].mxu0
    %v1045 = vadd.f32 %v455, %v1044
    %1046 = vmatprep.mubr.bf16.mxu0 0
    %1047 = vmatmul.mubr.bf16.gmra.mrb[0].mxu0 %v596
    %v1048 = vpop.f32.mrb[0].mxu0
    %v1049 = vadd.f32 %v451, %v1048
    %v1050 = vpop.f32.mrb[0].mxu0
    %v1051 = vadd.f32 %v455, %v1050
    %v1052 = vpop.f32.mrb[0].mxu0
    %v1053 = vadd.f32 %v451, %v1052
    %v1054 = vpop.f32.mrb[0].mxu0
    %v1055 = vadd.f32 %v455, %v1054
    %1056 = vmatprep.mubr.bf16.mxu0 0
    %1057 = vmatmul.mubr.bf16.gmra.mrb[0].mxu0 %v599
    %v1058 = vpop.f32.mrb[0].mxu0
    %v1059 = vadd.f32 %v451, %v1058
    %v1060 = vpop.f32.mrb[0].mxu0
    %v1061 = vadd.f32 %v455, %v1060
    %v1062 = vpop.f32.mrb[0].mxu0
    %v1063 = vadd.f32 %v451, %v1062
    %v1064 = vpop.f32.mrb[0].mxu0
    %v1065 = vadd.f32 %v455, %v1064
    %1066 = vdwg.mxu0
    %1067 = vst [vmem:[#allocation2] sm:$0xff] %v636
    %1068 = vst [vmem:[#allocation2 + $0x8] sm:$0xff] %v638
    %1069 = vst [vmem:[#allocation2 + $0x10] sm:$0xff] %v869
    %1070 = vst [vmem:[#allocation2 + $0x18] sm:$0xff] %v871
    %1071 = vst [vmem:[#allocation2 + $0x20] sm:$0xff] %v640
    %1072 = vst [vmem:[#allocation2 + $0x28] sm:$0xff] %v642
    %1073 = vst [vmem:[#allocation2 + $0x30] sm:$0xff] %v873
    %1074 = vst [vmem:[#allocation2 + $0x38] sm:$0xff] %v875
    %1075 = vst [vmem:[#allocation2 + $0x40] sm:$0xff] %v646
    %1076 = vst [vmem:[#allocation2 + $0x48] sm:$0xff] %v648
    %1077 = vst [vmem:[#allocation2 + $0x50] sm:$0xff] %v879
    %1078 = vst [vmem:[#allocation2 + $0x58] sm:$0xff] %v881
    %1079 = vst [vmem:[#allocation2 + $0x60] sm:$0xff] %v650
    %1080 = vst [vmem:[#allocation2 + $0x68] sm:$0xff] %v652
    %1081 = vst [vmem:[#allocation2 + $0x70] sm:$0xff] %v883
    %1082 = vst [vmem:[#allocation2 + $0x78] sm:$0xff] %v885
    %1083 = vst [vmem:[#allocation2 + $0x80] sm:$0xff] %v656
    %1084 = vst [vmem:[#allocation2 + $0x88] sm:$0xff] %v658
    %1085 = vst [vmem:[#allocation2 + $0x90] sm:$0xff] %v889
    %1086 = vst [vmem:[#allocation2 + $0x98] sm:$0xff] %v891
    %1087 = vst [vmem:[#allocation2 + $0xa0] sm:$0xff] %v660
    %1088 = vst [vmem:[#allocation2 + $0xa8] sm:$0xff] %v662
    %1089 = vst [vmem:[#allocation2 + $0xb0] sm:$0xff] %v893
    %1090 = vst [vmem:[#allocation2 + $0xb8] sm:$0xff] %v895
    %1091 = vst [vmem:[#allocation2 + $0xc0] sm:$0xff] %v666
    %1092 = vst [vmem:[#allocation2 + $0xc8] sm:$0xff] %v668
    %1093 = vst [vmem:[#allocation2 + $0xd0] sm:$0xff] %v899
    %1094 = vst [vmem:[#allocation2 + $0xd8] sm:$0xff] %v901
    %1095 = vst [vmem:[#allocation2 + $0xe0] sm:$0xff] %v670
    %1096 = vst [vmem:[#allocation2 + $0xe8] sm:$0xff] %v672
    %1097 = vst [vmem:[#allocation2 + $0xf0] sm:$0xff] %v903
    %1098 = vst [vmem:[#allocation2 + $0xf8] sm:$0xff] %v905
    %1099 = vst [vmem:[#allocation2 + $0x100] sm:$0xff] %v676
    %1100 = vst [vmem:[#allocation2 + $0x108] sm:$0xff] %v678
    %1101 = vst [vmem:[#allocation2 + $0x110] sm:$0xff] %v909
    %1102 = vst [vmem:[#allocation2 + $0x118] sm:$0xff] %v911
    %1103 = vst [vmem:[#allocation2 + $0x120] sm:$0xff] %v680
    %1104 = vst [vmem:[#allocation2 + $0x128] sm:$0xff] %v682
    %1105 = vst [vmem:[#allocation2 + $0x130] sm:$0xff] %v913
    %1106 = vst [vmem:[#allocation2 + $0x138] sm:$0xff] %v915
    %1107 = vst [vmem:[#allocation2 + $0x140] sm:$0xff] %v686
    %1108 = vst [vmem:[#allocation2 + $0x148] sm:$0xff] %v688
    %1109 = vst [vmem:[#allocation2 + $0x150] sm:$0xff] %v919
    %1110 = vst [vmem:[#allocation2 + $0x158] sm:$0xff] %v921
    %1111 = vst [vmem:[#allocation2 + $0x160] sm:$0xff] %v690
    %1112 = vst [vmem:[#allocation2 + $0x168] sm:$0xff] %v692
    %1113 = vst [vmem:[#allocation2 + $0x170] sm:$0xff] %v923
    %1114 = vst [vmem:[#allocation2 + $0x178] sm:$0xff] %v925
    %1115 = vst [vmem:[#allocation2 + $0x180] sm:$0xff] %v696
    %1116 = vst [vmem:[#allocation2 + $0x188] sm:$0xff] %v698
    %1117 = vst [vmem:[#allocation2 + $0x190] sm:$0xff] %v929
    %1118 = vst [vmem:[#allocation2 + $0x198] sm:$0xff] %v931
    %1119 = vst [vmem:[#allocation2 + $0x1a0] sm:$0xff] %v700
    %1120 = vst [vmem:[#allocation2 + $0x1a8] sm:$0xff] %v702
    %1121 = vst [vmem:[#allocation2 + $0x1b0] sm:$0xff] %v933
    %1122 = vst [vmem:[#allocation2 + $0x1b8] sm:$0xff] %v935
    %1123 = vst [vmem:[#allocation2 + $0x1c0] sm:$0xff] %v706
    %1124 = vst [vmem:[#allocation2 + $0x1c8] sm:$0xff] %v708
    %1125 = vst [vmem:[#allocation2 + $0x1d0] sm:$0xff] %v939
    %1126 = vst [vmem:[#allocation2 + $0x1d8] sm:$0xff] %v941
    %1127 = vst [vmem:[#allocation2 + $0x1e0] sm:$0xff] %v710
    %1128 = vst [vmem:[#allocation2 + $0x1e8] sm:$0xff] %v712
    %1129 = vst [vmem:[#allocation2 + $0x1f0] sm:$0xff] %v943
    %1130 = vst [vmem:[#allocation2 + $0x1f8] sm:$0xff] %v945
    %1131 = vst [vmem:[#allocation2 + $0x200] sm:$0xff] %v716
    %1132 = vst [vmem:[#allocation2 + $0x208] sm:$0xff] %v718
    %1133 = vst [vmem:[#allocation2 + $0x210] sm:$0xff] %v949
    %1134 = vst [vmem:[#allocation2 + $0x218] sm:$0xff] %v951
    %1135 = vst [vmem:[#allocation2 + $0x220] sm:$0xff] %v720
    %1136 = vst [vmem:[#allocation2 + $0x228] sm:$0xff] %v722
    %1137 = vst [vmem:[#allocation2 + $0x230] sm:$0xff] %v953
    %1138 = vst [vmem:[#allocation2 + $0x238] sm:$0xff] %v955
    %1139 = vst [vmem:[#allocation2 + $0x240] sm:$0xff] %v726
    %1140 = vst [vmem:[#allocation2 + $0x248] sm:$0xff] %v728
    %1141 = vst [vmem:[#allocation2 + $0x250] sm:$0xff] %v959
    %1142 = vst [vmem:[#allocation2 + $0x258] sm:$0xff] %v961
    %1143 = vst [vmem:[#allocation2 + $0x260] sm:$0xff] %v730
    %1144 = vst [vmem:[#allocation2 + $0x268] sm:$0xff] %v732
    %1145 = vst [vmem:[#allocation2 + $0x270] sm:$0xff] %v963
    %1146 = vst [vmem:[#allocation2 + $0x278] sm:$0xff] %v965
    %1147 = vst [vmem:[#allocation2 + $0x280] sm:$0xff] %v736
    %1148 = vst [vmem:[#allocation2 + $0x288] sm:$0xff] %v738
    %1149 = vst [vmem:[#allocation2 + $0x290] sm:$0xff] %v969
    %1150 = vst [vmem:[#allocation2 + $0x298] sm:$0xff] %v971
    %1151 = vst [vmem:[#allocation2 + $0x2a0] sm:$0xff] %v740
    %1152 = vst [vmem:[#allocation2 + $0x2a8] sm:$0xff] %v742
    %1153 = vst [vmem:[#allocation2 + $0x2b0] sm:$0xff] %v973
    %1154 = vst [vmem:[#allocation2 + $0x2b8] sm:$0xff] %v975
    %1155 = vst [vmem:[#allocation2 + $0x2c0] sm:$0xff] %v746
    %1156 = vst [vmem:[#allocation2 + $0x2c8] sm:$0xff] %v748
    %1157 = vst [vmem:[#allocation2 + $0x2d0] sm:$0xff] %v979
    %1158 = vst [vmem:[#allocation2 + $0x2d8] sm:$0xff] %v981
    %1159 = vst [vmem:[#allocation2 + $0x2e0] sm:$0xff] %v750
    %1160 = vst [vmem:[#allocation2 + $0x2e8] sm:$0xff] %v752
    %1161 = vst [vmem:[#allocation2 + $0x2f0] sm:$0xff] %v983
    %1162 = vst [vmem:[#allocation2 + $0x2f8] sm:$0xff] %v985
    %1163 = vst [vmem:[#allocation2 + $0x300] sm:$0xff] %v756
    %1164 = vst [vmem:[#allocation2 + $0x308] sm:$0xff] %v758
    %1165 = vst [vmem:[#allocation2 + $0x310] sm:$0xff] %v989
    %1166 = vst [vmem:[#allocation2 + $0x318] sm:$0xff] %v991
    %1167 = vst [vmem:[#allocation2 + $0x320] sm:$0xff] %v760
    %1168 = vst [vmem:[#allocation2 + $0x328] sm:$0xff] %v762
    %1169 = vst [vmem:[#allocation2 + $0x330] sm:$0xff] %v993
    %1170 = vst [vmem:[#allocation2 + $0x338] sm:$0xff] %v995
    %1171 = vst [vmem:[#allocation2 + $0x340] sm:$0xff] %v766
    %1172 = vst [vmem:[#allocation2 + $0x348] sm:$0xff] %v768
    %1173 = vst [vmem:[#allocation2 + $0x350] sm:$0xff] %v999
    %1174 = vst [vmem:[#allocation2 + $0x358] sm:$0xff] %v1001
    %1175 = vst [vmem:[#allocation2 + $0x360] sm:$0xff] %v770
    %1176 = vst [vmem:[#allocation2 + $0x368] sm:$0xff] %v772
    %1177 = vst [vmem:[#allocation2 + $0x370] sm:$0xff] %v1003
    %1178 = vst [vmem:[#allocation2 + $0x378] sm:$0xff] %v1005
    %1179 = vst [vmem:[#allocation2 + $0x380] sm:$0xff] %v776
    %1180 = vst [vmem:[#allocation2 + $0x388] sm:$0xff] %v778
    %1181 = vst [vmem:[#allocation2 + $0x390] sm:$0xff] %v1009
    %1182 = vst [vmem:[#allocation2 + $0x398] sm:$0xff] %v1011
    %1183 = vst [vmem:[#allocation2 + $0x3a0] sm:$0xff] %v780
    %1184 = vst [vmem:[#allocation2 + $0x3a8] sm:$0xff] %v782
    %1185 = vst [vmem:[#allocation2 + $0x3b0] sm:$0xff] %v1013
    %1186 = vst [vmem:[#allocation2 + $0x3b8] sm:$0xff] %v1015
    %1187 = vst [vmem:[#allocation2 + $0x3c0] sm:$0xff] %v786
    %1188 = vst [vmem:[#allocation2 + $0x3c8] sm:$0xff] %v788
    %1189 = vst [vmem:[#allocation2 + $0x3d0] sm:$0xff] %v1019
    %1190 = vst [vmem:[#allocation2 + $0x3d8] sm:$0xff] %v1021
    %1191 = vst [vmem:[#allocation2 + $0x3e0] sm:$0xff] %v790
    %1192 = vst [vmem:[#allocation2 + $0x3e8] sm:$0xff] %v792
    %1193 = vst [vmem:[#allocation2 + $0x3f0] sm:$0xff] %v1023
    %1194 = vst [vmem:[#allocation2 + $0x3f8] sm:$0xff] %v1025
    %1195 = vst [vmem:[#allocation2 + $0x400] sm:$0xff] %v796
    %1196 = vst [vmem:[#allocation2 + $0x408] sm:$0xff] %v798
    %1197 = vst [vmem:[#allocation2 + $0x410] sm:$0xff] %v1029
    %1198 = vst [vmem:[#allocation2 + $0x418] sm:$0xff] %v1031
    %1199 = vst [vmem:[#allocation2 + $0x420] sm:$0xff] %v800
    %1200 = vst [vmem:[#allocation2 + $0x428] sm:$0xff] %v802
    %1201 = vst [vmem:[#allocation2 + $0x430] sm:$0xff] %v1033
    %1202 = vst [vmem:[#allocation2 + $0x438] sm:$0xff] %v1035
    %1203 = vst [vmem:[#allocation2 + $0x440] sm:$0xff] %v806
    %1204 = vst [vmem:[#allocation2 + $0x448] sm:$0xff] %v808
    %1205 = vst [vmem:[#allocation2 + $0x450] sm:$0xff] %v1039
    %1206 = vst [vmem:[#allocation2 + $0x458] sm:$0xff] %v1041
    %1207 = vst [vmem:[#allocation2 + $0x460] sm:$0xff] %v810
    %1208 = vst [vmem:[#allocation2 + $0x468] sm:$0xff] %v812
    %1209 = vst [vmem:[#allocation2 + $0x470] sm:$0xff] %v1043
    %1210 = vst [vmem:[#allocation2 + $0x478] sm:$0xff] %v1045
    %1211 = vst [vmem:[#allocation2 + $0x480] sm:$0xff] %v816
    %1212 = vst [vmem:[#allocation2 + $0x488] sm:$0xff] %v818
    %1213 = vst [vmem:[#allocation2 + $0x490] sm:$0xff] %v1049
    %1214 = vst [vmem:[#allocation2 + $0x498] sm:$0xff] %v1051
    %1215 = vst [vmem:[#allocation2 + $0x4a0] sm:$0xff] %v820
    %1216 = vst [vmem:[#allocation2 + $0x4a8] sm:$0xff] %v822
    %1217 = vst [vmem:[#allocation2 + $0x4b0] sm:$0xff] %v1053
    %1218 = vst [vmem:[#allocation2 + $0x4b8] sm:$0xff] %v1055
    %1219 = vst [vmem:[#allocation2 + $0x4c0] sm:$0xff] %v826
    %1220 = vst [vmem:[#allocation2 + $0x4c8] sm:$0xff] %v828
    %1221 = vst [vmem:[#allocation2 + $0x4d0] sm:$0xff] %v1059
    %1222 = vst [vmem:[#allocation2 + $0x4d8] sm:$0xff] %v1061
    %1223 = vst [vmem:[#allocation2 + $0x4e0] sm:$0xff] %v830
    %1224 = vst [vmem:[#allocation2 + $0x4e8] sm:$0xff] %v832
    %1225 = vst [vmem:[#allocation2 + $0x4f0] sm:$0xff] %v1063
    %1226 = vst [vmem:[#allocation2 + $0x4f8] sm:$0xff] %v1065
    %v1227 = vld [vmem:[%s3] sm:$0xf]
    %v1228 = vld [vmem:[%s3 + $0x10] sm:$0xf]
    %v1229 = vld [vmem:[%s3 + $0x20] sm:$0xf]
    %v1230 = vld [vmem:[%s3 + $0x30] sm:$0xf]
    %v1231 = vld [vmem:[%s3 + $0x40] sm:$0xf]
    %v1232 = vld [vmem:[%s3 + $0x50] sm:$0xf]
    %v1233 = vld [vmem:[%s3 + $0x60] sm:$0xf]
    %v1234 = vld [vmem:[%s3 + $0x70] sm:$0xf]
    %v1235 = vld [vmem:[%s3 + $0x4] sm:$0xf]
    %v1236 = vld [vmem:[%s3 + $0x14] sm:$0xf]
    %v1237 = vld [vmem:[%s3 + $0x24] sm:$0xf]
    %v1238 = vld [vmem:[%s3 + $0x34] sm:$0xf]
    %v1239 = vld [vmem:[%s3 + $0x44] sm:$0xf]
    %v1240 = vld [vmem:[%s3 + $0x54] sm:$0xf]
    %v1241 = vld [vmem:[%s3 + $0x64] sm:$0xf]
    %v1242 = vld [vmem:[%s3 + $0x74] sm:$0xf]
    %v1243 = vld [vmem:[%s3 + $0x8] sm:$0xf]
    %v1244 = vld [vmem:[%s3 + $0x18] sm:$0xf]
    %v1245 = vld [vmem:[%s3 + $0x28] sm:$0xf]
    %v1246 = vld [vmem:[%s3 + $0x38] sm:$0xf]
    %v1247 = vld [vmem:[%s3 + $0x48] sm:$0xf]
    %v1248 = vld [vmem:[%s3 + $0x58] sm:$0xf]
    %v1249 = vld [vmem:[%s3 + $0x68] sm:$0xf]
    %v1250 = vld [vmem:[%s3 + $0x78] sm:$0xf]
    %v1251 = vld [vmem:[%s3 + $0xc] sm:$0xf]
    %v1252 = vld [vmem:[%s3 + $0x1c] sm:$0xf]
    %v1253 = vld [vmem:[%s3 + $0x2c] sm:$0xf]
    %v1254 = vld [vmem:[%s3 + $0x3c] sm:$0xf]
    %v1255 = vld [vmem:[%s3 + $0x4c] sm:$0xf]
    %v1256 = vld [vmem:[%s3 + $0x5c] sm:$0xf]
    %v1257 = vld [vmem:[%s3 + $0x6c] sm:$0xf]
    %v1258 = vld [vmem:[%s3 + $0x7c] sm:$0xf]
    %v1259 = vld [vmem:[#allocation2] sm:$0xff]
    %v1260 = vld [vmem:[#allocation2 + $0x20] sm:$0xff]
    %v1269 = vunpack.c.l.b16 %v1227
    %v1270 = vunpack.c.l.b16 %v1228
    %v1271 = vunpack.c.l.b16 %v1229
    %v1272 = vunpack.c.l.b16 %v1230
    %v1273 = vunpack.c.l.b16 %v1231
    %v1274 = vunpack.c.l.b16 %v1232
    %v1275 = vunpack.c.l.b16 %v1233
    %v1276 = vunpack.c.l.b16 %v1234
    %v1277 = vpack.c.b16 %v1270, %v1269
    %v1278 = vpack.c.b16 %v1272, %v1271
    %v1279 = vpack.c.b16 %v1274, %v1273
    %v1280 = vpack.c.b16 %v1276, %v1275
    %v1286 = vsel %vm540, 0, 0
    %1288 = vmatprep.subr.bf16.mxu0 0
    %1289 = vmatpush1.bf16.msra.mxu0 %v1277
    %1290 = vmatprep.subr.bf16.mxu0 0
    %1291 = vmatpush1.bf16.msra.mxu0 %v1278
    %1292 = vmatprep.subr.bf16.mxu0 0
    %1293 = vmatpush1.bf16.msra.mxu0 %v1279
    %1294 = vmatprep.subr.bf16.mxu0 0
    %1295 = vmatpush1.bf16.msra.mxu0 %v1280
    %1296 = vmatprep.subr.bf16.mxu0 0
    %1297 = vmatpush1.bf16.msra.mxu0 0
    %1298 = vmatprep.subr.bf16.mxu0 0
    %1299 = vmatpush1.bf16.msra.mxu0 0
    %1300 = vmatprep.subr.bf16.mxu0 0
    %1301 = vmatpush1.bf16.msra.mxu0 0
    %1302 = vmatprep.subr.bf16.mxu0 0
    %1303 = vmatpush1.bf16.msra.mxu0 0
    %1304 = vmatprep.subr.bf16.mxu0 0
    %1305 = vmatpush1.bf16.msra.mxu0 0
    %1306 = vmatprep.subr.bf16.mxu0 0
    %1307 = vmatpush1.bf16.msra.mxu0 0
    %1308 = vmatprep.subr.bf16.mxu0 0
    %1309 = vmatpush1.bf16.msra.mxu0 0
    %1310 = vmatprep.subr.bf16.mxu0 0
    %1311 = vmatpush1.bf16.msra.mxu0 0
    %1312 = vmatprep.subr.bf16.mxu0 0
    %1313 = vmatpush1.bf16.msra.mxu0 0
    %1314 = vmatprep.subr.bf16.mxu0 0
    %1315 = vmatpush1.bf16.msra.mxu0 0
    %1316 = vmatprep.subr.bf16.mxu0 0
    %1317 = vmatpush1.bf16.msra.mxu0 0
    %1318 = vmatprep.subr.bf16.mxu0 0
    %1319 = vmatpush1.bf16.msra.mxu0 0
    %1320 = vmatprep.mubr.bf16.mxu0 0
    %1321 = vmatmul.mubr.bf16.gmra.mrb[0].mxu0 %v1286
    %v1322 = vpop.f32.mrb[0].mxu0
    %v1323 = vadd.f32 0.0, %v1322
    %v1324 = vpop.f32.mrb[0].mxu0
    %v1325 = vpop.f32.mrb[0].mxu0
    %v1326 = vadd.f32 0.0, %v1325
    %v1327 = vpop.f32.mrb[0].mxu0
    %1328 = vdwg.mxu0
    %v1329 = vadd.f32 %v1259, %v1323
    %v1330 = vadd.f32 %v1260, %v1326
    %v1331 = vmul.f32 %v1329, 0.5
    %v1332 = vmul.f32 %v1330, 0.5
    %v1333 = vtanh.pop %v1331
    %v1334 = vtanh.pop %v1332
    %v1335 = vmul.f32 %v1333, 0.5
    %v1336 = vmul.f32 %v1334, 0.5
    %v1337 = vadd.f32 %v1335, 0.5
    %v1338 = vadd.f32 %v1336, 0.5
    %v1339 = vld [vmem:[#allocation2 + $0x8] sm:$0xff]
    %v1340 = vld [vmem:[#allocation2 + $0x28] sm:$0xff]
    %v1349 = vunpack.c.l.b16 %v1235
    %v1350 = vunpack.c.l.b16 %v1236
    %v1351 = vunpack.c.l.b16 %v1237
    %v1352 = vunpack.c.l.b16 %v1238
    %v1353 = vunpack.c.l.b16 %v1239
    %v1354 = vunpack.c.l.b16 %v1240
    %v1355 = vunpack.c.l.b16 %v1241
    %v1356 = vunpack.c.l.b16 %v1242
    %v1357 = vpack.c.b16 %v1350, %v1349
    %v1358 = vpack.c.b16 %v1352, %v1351
    %v1359 = vpack.c.b16 %v1354, %v1353
    %v1360 = vpack.c.b16 %v1356, %v1355
    %1365 = vmatprep.subr.bf16.mxu0 0
    %1366 = vmatpush1.bf16.msra.mxu0 %v1357
    %1367 = vmatprep.subr.bf16.mxu0 0
    %1368 = vmatpush1.bf16.msra.mxu0 %v1358
    %1369 = vmatprep.subr.bf16.mxu0 0
    %1370 = vmatpush1.bf16.msra.mxu0 %v1359
    %1371 = vmatprep.subr.bf16.mxu0 0
    %1372 = vmatpush1.bf16.msra.mxu0 %v1360
    %1373 = vmatprep.subr.bf16.mxu0 0
    %1374 = vmatpush1.bf16.msra.mxu0 0
    %1375 = vmatprep.subr.bf16.mxu0 0
    %1376 = vmatpush1.bf16.msra.mxu0 0
    %1377 = vmatprep.subr.bf16.mxu0 0
    %1378 = vmatpush1.bf16.msra.mxu0 0
    %1379 = vmatprep.subr.bf16.mxu0 0
    %1380 = vmatpush1.bf16.msra.mxu0 0
    %1381 = vmatprep.subr.bf16.mxu0 0
    %1382 = vmatpush1.bf16.msra.mxu0 0
    %1383 = vmatprep.subr.bf16.mxu0 0
    %1384 = vmatpush1.bf16.msra.mxu0 0
    %1385 = vmatprep.subr.bf16.mxu0 0
    %1386 = vmatpush1.bf16.msra.mxu0 0
    %1387 = vmatprep.subr.bf16.mxu0 0
    %1388 = vmatpush1.bf16.msra.mxu0 0
    %1389 = vmatprep.subr.bf16.mxu0 0
    %1390 = vmatpush1.bf16.msra.mxu0 0
    %1391 = vmatprep.subr.bf16.mxu0 0
    %1392 = vmatpush1.bf16.msra.mxu0 0
    %1393 = vmatprep.subr.bf16.mxu0 0
    %1394 = vmatpush1.bf16.msra.mxu0 0
    %1395 = vmatprep.subr.bf16.mxu0 0
    %1396 = vmatpush1.bf16.msra.mxu0 0
    %1397 = vmatprep.mubr.bf16.mxu0 0
    %1398 = vmatmul.mubr.bf16.gmra.mrb[0].mxu0 %v1286
    %v1399 = vpop.f32.mrb[0].mxu0
    %v1400 = vadd.f32 0.0, %v1399
    %v1401 = vpop.f32.mrb[0].mxu0
    %v1402 = vpop.f32.mrb[0].mxu0
    %v1403 = vadd.f32 0.0, %v1402
    %v1404 = vpop.f32.mrb[0].mxu0
    %1405 = vdwg.mxu0
    %v1406 = vadd.f32 %v1339, %v1400
    %v1407 = vadd.f32 %v1340, %v1403
    %v1408 = vmul.f32 %v1406, 0.5
    %v1409 = vmul.f32 %v1407, 0.5
    %v1410 = vtanh.pop %v1408
    %v1411 = vtanh.pop %v1409
    %v1412 = vmul.f32 %v1410, 0.5
    %v1413 = vmul.f32 %v1411, 0.5
    %v1414 = vadd.f32 %v1412, 0.5
    %v1415 = vadd.f32 %v1413, 0.5
    %v1416 = vld [vmem:[#allocation2 + $0x10] sm:$0xff]
    %v1417 = vld [vmem:[#allocation2 + $0x30] sm:$0xff]
    %v1426 = vunpack.c.l.b16 %v1243
    %v1427 = vunpack.c.l.b16 %v1244
    %v1428 = vunpack.c.l.b16 %v1245
    %v1429 = vunpack.c.l.b16 %v1246
    %v1430 = vunpack.c.l.b16 %v1247
    %v1431 = vunpack.c.l.b16 %v1248
    %v1432 = vunpack.c.l.b16 %v1249
    %v1433 = vunpack.c.l.b16 %v1250
    %v1434 = vpack.c.b16 %v1427, %v1426
    %v1435 = vpack.c.b16 %v1429, %v1428
    %v1436 = vpack.c.b16 %v1431, %v1430
    %v1437 = vpack.c.b16 %v1433, %v1432
    %1442 = vmatprep.subr.bf16.mxu0 0
    %1443 = vmatpush1.bf16.msra.mxu0 %v1434
    %1444 = vmatprep.subr.bf16.mxu0 0
    %1445 = vmatpush1.bf16.msra.mxu0 %v1435
    %1446 = vmatprep.subr.bf16.mxu0 0
    %1447 = vmatpush1.bf16.msra.mxu0 %v1436
    %1448 = vmatprep.subr.bf16.mxu0 0
    %1449 = vmatpush1.bf16.msra.mxu0 %v1437
    %1450 = vmatprep.subr.bf16.mxu0 0
    %1451 = vmatpush1.bf16.msra.mxu0 0
    %1452 = vmatprep.subr.bf16.mxu0 0
    %1453 = vmatpush1.bf16.msra.mxu0 0
    %1454 = vmatprep.subr.bf16.mxu0 0
    %1455 = vmatpush1.bf16.msra.mxu0 0
    %1456 = vmatprep.subr.bf16.mxu0 0
    %1457 = vmatpush1.bf16.msra.mxu0 0
    %1458 = vmatprep.subr.bf16.mxu0 0
    %1459 = vmatpush1.bf16.msra.mxu0 0
    %1460 = vmatprep.subr.bf16.mxu0 0
    %1461 = vmatpush1.bf16.msra.mxu0 0
    %1462 = vmatprep.subr.bf16.mxu0 0
    %1463 = vmatpush1.bf16.msra.mxu0 0
    %1464 = vmatprep.subr.bf16.mxu0 0
    %1465 = vmatpush1.bf16.msra.mxu0 0
    %1466 = vmatprep.subr.bf16.mxu0 0
    %1467 = vmatpush1.bf16.msra.mxu0 0
    %1468 = vmatprep.subr.bf16.mxu0 0
    %1469 = vmatpush1.bf16.msra.mxu0 0
    %1470 = vmatprep.subr.bf16.mxu0 0
    %1471 = vmatpush1.bf16.msra.mxu0 0
    %1472 = vmatprep.subr.bf16.mxu0 0
    %1473 = vmatpush1.bf16.msra.mxu0 0
    %1474 = vmatprep.mubr.bf16.mxu0 0
    %1475 = vmatmul.mubr.bf16.gmra.mrb[0].mxu0 %v1286
    %v1476 = vpop.f32.mrb[0].mxu0
    %v1477 = vadd.f32 0.0, %v1476
    %v1478 = vpop.f32.mrb[0].mxu0
    %v1479 = vpop.f32.mrb[0].mxu0
    %v1480 = vadd.f32 0.0, %v1479
    %v1481 = vpop.f32.mrb[0].mxu0
    %1482 = vdwg.mxu0
    %v1483 = vadd.f32 %v1416, %v1477
    %v1484 = vadd.f32 %v1417, %v1480
    %v1485 = vtanh.pop %v1483
    %v1486 = vtanh.pop %v1484
    %v1487 = vld [vmem:[#allocation2 + $0x18] sm:$0xff]
    %v1488 = vld [vmem:[#allocation2 + $0x38] sm:$0xff]
    %v1497 = vunpack.c.l.b16 %v1251
    %v1498 = vunpack.c.l.b16 %v1252
    %v1499 = vunpack.c.l.b16 %v1253
    %v1500 = vunpack.c.l.b16 %v1254
    %v1501 = vunpack.c.l.b16 %v1255
    %v1502 = vunpack.c.l.b16 %v1256
    %v1503 = vunpack.c.l.b16 %v1257
    %v1504 = vunpack.c.l.b16 %v1258
    %v1505 = vpack.c.b16 %v1498, %v1497
    %v1506 = vpack.c.b16 %v1500, %v1499
    %v1507 = vpack.c.b16 %v1502, %v1501
    %v1508 = vpack.c.b16 %v1504, %v1503
    %1513 = vmatprep.subr.bf16.mxu0 0
    %1514 = vmatpush1.bf16.msra.mxu0 %v1505
    %1515 = vmatprep.subr.bf16.mxu0 0
    %1516 = vmatpush1.bf16.msra.mxu0 %v1506
    %1517 = vmatprep.subr.bf16.mxu0 0
    %1518 = vmatpush1.bf16.msra.mxu0 %v1507
    %1519 = vmatprep.subr.bf16.mxu0 0
    %1520 = vmatpush1.bf16.msra.mxu0 %v1508
    %1521 = vmatprep.subr.bf16.mxu0 0
    %1522 = vmatpush1.bf16.msra.mxu0 0
    %1523 = vmatprep.subr.bf16.mxu0 0
    %1524 = vmatpush1.bf16.msra.mxu0 0
    %1525 = vmatprep.subr.bf16.mxu0 0
    %1526 = vmatpush1.bf16.msra.mxu0 0
    %1527 = vmatprep.subr.bf16.mxu0 0
    %1528 = vmatpush1.bf16.msra.mxu0 0
    %1529 = vmatprep.subr.bf16.mxu0 0
    %1530 = vmatpush1.bf16.msra.mxu0 0
    %1531 = vmatprep.subr.bf16.mxu0 0
    %1532 = vmatpush1.bf16.msra.mxu0 0
    %1533 = vmatprep.subr.bf16.mxu0 0
    %1534 = vmatpush1.bf16.msra.mxu0 0
    %1535 = vmatprep.subr.bf16.mxu0 0
    %1536 = vmatpush1.bf16.msra.mxu0 0
    %1537 = vmatprep.subr.bf16.mxu0 0
    %1538 = vmatpush1.bf16.msra.mxu0 0
    %1539 = vmatprep.subr.bf16.mxu0 0
    %1540 = vmatpush1.bf16.msra.mxu0 0
    %1541 = vmatprep.subr.bf16.mxu0 0
    %1542 = vmatpush1.bf16.msra.mxu0 0
    %1543 = vmatprep.subr.bf16.mxu0 0
    %1544 = vmatpush1.bf16.msra.mxu0 0
    %1545 = vmatprep.mubr.bf16.mxu0 0
    %1546 = vmatmul.mubr.bf16.gmra.mrb[0].mxu0 %v1286
    %v1547 = vpop.f32.mrb[0].mxu0
    %v1548 = vadd.f32 0.0, %v1547
    %v1549 = vpop.f32.mrb[0].mxu0
    %v1550 = vpop.f32.mrb[0].mxu0
    %v1551 = vadd.f32 0.0, %v1550
    %v1552 = vpop.f32.mrb[0].mxu0
    %1553 = vdwg.mxu0
    %v1554 = vadd.f32 %v1487, %v1548
    %v1555 = vadd.f32 %v1488, %v1551
    %v1556 = vmul.f32 %v1554, 0.5
    %v1557 = vmul.f32 %v1555, 0.5
    %v1558 = vtanh.pop %v1556
    %v1559 = vtanh.pop %v1557
    %v1560 = vmul.f32 %v1558, 0.5
    %v1561 = vmul.f32 %v1559, 0.5
    %v1562 = vadd.f32 %v1560, 0.5
    %v1563 = vadd.f32 %v1561, 0.5
    %v1564 = vmul.f32 %v1414, 0.0
    %v1565 = vmul.f32 %v1415, 0.0
    %v1566 = vmul.f32 %v1337, %v1485
    %v1567 = vmul.f32 %v1338, %v1486
    %v1568 = vadd.f32 %v1564, %v1566
    %v1569 = vadd.f32 %v1565, %v1567
    %v1570 = vtanh.pop %v1568
    %v1571 = vtanh.pop %v1569
    %v1572 = vmul.f32 %v1562, %v1570
    %v1573 = vmul.f32 %v1563, %v1571
    %1574 = vst.msk [vmem:[#allocation3] sm:$0xff] %vm540, %v1572
    %1575 = vst.msk [vmem:[#allocation3 + $0x8] sm:$0xff] %vm540, %v1573
    %v1576 = vpack.c.bf16 %v1573, %v1572
    %v1577 = vld [vmem:[#allocation2 + $0x40] sm:$0xff]
    %v1578 = vld [vmem:[#allocation2 + $0x60] sm:$0xff]
    %v1580 = vsel %vm540, %v1576, 0
    %1582 = vmatprep.subr.bf16.mxu0 0
    %1583 = vmatpush1.bf16.msra.mxu0 %v1277
    %1584 = vmatprep.subr.bf16.mxu0 0
    %1585 = vmatpush1.bf16.msra.mxu0 %v1278
    %1586 = vmatprep.subr.bf16.mxu0 0
    %1587 = vmatpush1.bf16.msra.mxu0 %v1279
    %1588 = vmatprep.subr.bf16.mxu0 0
    %1589 = vmatpush1.bf16.msra.mxu0 %v1280
    %1590 = vmatprep.subr.bf16.mxu0 0
    %1591 = vmatpush1.bf16.msra.mxu0 0
    %1592 = vmatprep.subr.bf16.mxu0 0
    %1593 = vmatpush1.bf16.msra.mxu0 0
    %1594 = vmatprep.subr.bf16.mxu0 0
    %1595 = vmatpush1.bf16.msra.mxu0 0
    %1596 = vmatprep.subr.bf16.mxu0 0
    %1597 = vmatpush1.bf16.msra.mxu0 0
    %1598 = vmatprep.subr.bf16.mxu0 0
    %1599 = vmatpush1.bf16.msra.mxu0 0
    %1600 = vmatprep.subr.bf16.mxu0 0
    %1601 = vmatpush1.bf16.msra.mxu0 0
    %1602 = vmatprep.subr.bf16.mxu0 0
    %1603 = vmatpush1.bf16.msra.mxu0 0
    %1604 = vmatprep.subr.bf16.mxu0 0
    %1605 = vmatpush1.bf16.msra.mxu0 0
    %1606 = vmatprep.subr.bf16.mxu0 0
    %1607 = vmatpush1.bf16.msra.mxu0 0
    %1608 = vmatprep.subr.bf16.mxu0 0
    %1609 = vmatpush1.bf16.msra.mxu0 0
    %1610 = vmatprep.subr.bf16.mxu0 0
    %1611 = vmatpush1.bf16.msra.mxu0 0
    %1612 = vmatprep.subr.bf16.mxu0 0
    %1613 = vmatpush1.bf16.msra.mxu0 0
    %1614 = vmatprep.mubr.bf16.mxu0 0
    %1615 = vmatmul.mubr.bf16.gmra.mrb[0].mxu0 %v1580
    %v1616 = vpop.f32.mrb[0].mxu0
    %v1617 = vadd.f32 0.0, %v1616
    %v1618 = vpop.f32.mrb[0].mxu0
    %v1619 = vpop.f32.mrb[0].mxu0
    %v1620 = vadd.f32 0.0, %v1619
    %v1621 = vpop.f32.mrb[0].mxu0
    %1622 = vdwg.mxu0
    %v1623 = vadd.f32 %v1577, %v1617
    %v1624 = vadd.f32 %v1578, %v1620
    %v1625 = vmul.f32 %v1623, 0.5
    %v1626 = vmul.f32 %v1624, 0.5
    %v1627 = vtanh.pop %v1625
    %v1628 = vtanh.pop %v1626
    %v1629 = vmul.f32 %v1627, 0.5
    %v1630 = vmul.f32 %v1628, 0.5
    %v1631 = vadd.f32 %v1629, 0.5
    %v1632 = vadd.f32 %v1630, 0.5
    %v1633 = vld [vmem:[#allocation2 + $0x48] sm:$0xff]
    %v1634 = vld [vmem:[#allocation2 + $0x68] sm:$0xff]
    %1635 = vmatprep.subr.bf16.mxu0 0
    %1636 = vmatpush1.bf16.msra.mxu0 %v1357
    %1637 = vmatprep.subr.bf16.mxu0 0
    %1638 = vmatpush1.bf16.msra.mxu0 %v1358
    %1639 = vmatprep.subr.bf16.mxu0 0
    %1640 = vmatpush1.bf16.msra.mxu0 %v1359
    %1641 = vmatprep.subr.bf16.mxu0 0
    %1642 = vmatpush1.bf16.msra.mxu0 %v1360
    %1643 = vmatprep.subr.bf16.mxu0 0
    %1644 = vmatpush1.bf16.msra.mxu0 0
    %1645 = vmatprep.subr.bf16.mxu0 0
    %1646 = vmatpush1.bf16.msra.mxu0 0
    %1647 = vmatprep.subr.bf16.mxu0 0
    %1648 = vmatpush1.bf16.msra.mxu0 0
    %1649 = vmatprep.subr.bf16.mxu0 0
    %1650 = vmatpush1.bf16.msra.mxu0 0
    %1651 = vmatprep.subr.bf16.mxu0 0
    %1652 = vmatpush1.bf16.msra.mxu0 0
    %1653 = vmatprep.subr.bf16.mxu0 0
    %1654 = vmatpush1.bf16.msra.mxu0 0
    %1655 = vmatprep.subr.bf16.mxu0 0
    %1656 = vmatpush1.bf16.msra.mxu0 0
    %1657 = vmatprep.subr.bf16.mxu0 0
    %1658 = vmatpush1.bf16.msra.mxu0 0
    %1659 = vmatprep.subr.bf16.mxu0 0
    %1660 = vmatpush1.bf16.msra.mxu0 0
    %1661 = vmatprep.subr.bf16.mxu0 0
    %1662 = vmatpush1.bf16.msra.mxu0 0
    %1663 = vmatprep.subr.bf16.mxu0 0
    %1664 = vmatpush1.bf16.msra.mxu0 0
    %1665 = vmatprep.subr.bf16.mxu0 0
    %1666 = vmatpush1.bf16.msra.mxu0 0
    %1667 = vmatprep.mubr.bf16.mxu0 0
    %1668 = vmatmul.mubr.bf16.gmra.mrb[0].mxu0 %v1580
    %v1669 = vpop.f32.mrb[0].mxu0
    %v1670 = vadd.f32 0.0, %v1669
    %v1671 = vpop.f32.mrb[0].mxu0
    %v1672 = vpop.f32.mrb[0].mxu0
    %v1673 = vadd.f32 0.0, %v1672
    %v1674 = vpop.f32.mrb[0].mxu0
    %1675 = vdwg.mxu0
    %v1676 = vadd.f32 %v1633, %v1670
    %v1677 = vadd.f32 %v1634, %v1673
    %v1678 = vmul.f32 %v1676, 0.5
    %v1679 = vmul.f32 %v1677, 0.5
    %v1680 = vtanh.pop %v1678
    %v1681 = vtanh.pop %v1679
    %v1682 = vmul.f32 %v1680, 0.5
    %v1683 = vmul.f32 %v1681, 0.5
    %v1684 = vadd.f32 %v1682, 0.5
    %v1685 = vadd.f32 %v1683, 0.5
    %v1686 = vld [vmem:[#allocation2 + $0x50] sm:$0xff]
    %v1687 = vld [vmem:[#allocation2 + $0x70] sm:$0xff]
    %1688 = vmatprep.subr.bf16.mxu0 0
    %1689 = vmatpush1.bf16.msra.mxu0 %v1434
    %1690 = vmatprep.subr.bf16.mxu0 0
    %1691 = vmatpush1.bf16.msra.mxu0 %v1435
    %1692 = vmatprep.subr.bf16.mxu0 0
    %1693 = vmatpush1.bf16.msra.mxu0 %v1436
    %1694 = vmatprep.subr.bf16.mxu0 0
    %1695 = vmatpush1.bf16.msra.mxu0 %v1437
    %1696 = vmatprep.subr.bf16.mxu0 0
    %1697 = vmatpush1.bf16.msra.mxu0 0
    %1698 = vmatprep.subr.bf16.mxu0 0
    %1699 = vmatpush1.bf16.msra.mxu0 0
    %1700 = vmatprep.subr.bf16.mxu0 0
    %1701 = vmatpush1.bf16.msra.mxu0 0
    %1702 = vmatprep.subr.bf16.mxu0 0
    %1703 = vmatpush1.bf16.msra.mxu0 0
    %1704 = vmatprep.subr.bf16.mxu0 0
    %1705 = vmatpush1.bf16.msra.mxu0 0
    %1706 = vmatprep.subr.bf16.mxu0 0
    %1707 = vmatpush1.bf16.msra.mxu0 0
    %1708 = vmatprep.subr.bf16.mxu0 0
    %1709 = vmatpush1.bf16.msra.mxu0 0
    %1710 = vmatprep.subr.bf16.mxu0 0
    %1711 = vmatpush1.bf16.msra.mxu0 0
    %1712 = vmatprep.subr.bf16.mxu0 0
    %1713 = vmatpush1.bf16.msra.mxu0 0
    %1714 = vmatprep.subr.bf16.mxu0 0
    %1715 = vmatpush1.bf16.msra.mxu0 0
    %1716 = vmatprep.subr.bf16.mxu0 0
    %1717 = vmatpush1.bf16.msra.mxu0 0
    %1718 = vmatprep.subr.bf16.mxu0 0
    %1719 = vmatpush1.bf16.msra.mxu0 0
    %1720 = vmatprep.mubr.bf16.mxu0 0
    %1721 = vmatmul.mubr.bf16.gmra.mrb[0].mxu0 %v1580
    %v1722 = vpop.f32.mrb[0].mxu0
    %v1723 = vadd.f32 0.0, %v1722
    %v1724 = vpop.f32.mrb[0].mxu0
    %v1725 = vpop.f32.mrb[0].mxu0
    %v1726 = vadd.f32 0.0, %v1725
    %v1727 = vpop.f32.mrb[0].mxu0
    %1728 = vdwg.mxu0
    %v1729 = vadd.f32 %v1686, %v1723
    %v1730 = vadd.f32 %v1687, %v1726
    %v1731 = vtanh.pop %v1729
    %v1732 = vtanh.pop %v1730
    %v1733 = vld [vmem:[#allocation2 + $0x58] sm:$0xff]
    %v1734 = vld [vmem:[#allocation2 + $0x78] sm:$0xff]
    %1735 = vmatprep.subr.bf16.mxu0 0
    %1736 = vmatpush1.bf16.msra.mxu0 %v1505
    %1737 = vmatprep.subr.bf16.mxu0 0
    %1738 = vmatpush1.bf16.msra.mxu0 %v1506
    %1739 = vmatprep.subr.bf16.mxu0 0
    %1740 = vmatpush1.bf16.msra.mxu0 %v1507
    %1741 = vmatprep.subr.bf16.mxu0 0
    %1742 = vmatpush1.bf16.msra.mxu0 %v1508
    %1743 = vmatprep.subr.bf16.mxu0 0
    %1744 = vmatpush1.bf16.msra.mxu0 0
    %1745 = vmatprep.subr.bf16.mxu0 0
    %1746 = vmatpush1.bf16.msra.mxu0 0
    %1747 = vmatprep.subr.bf16.mxu0 0
    %1748 = vmatpush1.bf16.msra.mxu0 0
    %1749 = vmatprep.subr.bf16.mxu0 0
    %1750 = vmatpush1.bf16.msra.mxu0 0
    %1751 = vmatprep.subr.bf16.mxu0 0
    %1752 = vmatpush1.bf16.msra.mxu0 0
    %1753 = vmatprep.subr.bf16.mxu0 0
    %1754 = vmatpush1.bf16.msra.mxu0 0
    %1755 = vmatprep.subr.bf16.mxu0 0
    %1756 = vmatpush1.bf16.msra.mxu0 0
    %1757 = vmatprep.subr.bf16.mxu0 0
    %1758 = vmatpush1.bf16.msra.mxu0 0
    %1759 = vmatprep.subr.bf16.mxu0 0
    %1760 = vmatpush1.bf16.msra.mxu0 0
    %1761 = vmatprep.subr.bf16.mxu0 0
    %1762 = vmatpush1.bf16.msra.mxu0 0
    %1763 = vmatprep.subr.bf16.mxu0 0
    %1764 = vmatpush1.bf16.msra.mxu0 0
    %1765 = vmatprep.subr.bf16.mxu0 0
    %1766 = vmatpush1.bf16.msra.mxu0 0
    %1767 = vmatprep.mubr.bf16.mxu0 0
    %1768 = vmatmul.mubr.bf16.gmra.mrb[0].mxu0 %v1580
    %v1769 = vpop.f32.mrb[0].mxu0
    %v1770 = vadd.f32 0.0, %v1769
    %v1771 = vpop.f32.mrb[0].mxu0
    %v1772 = vpop.f32.mrb[0].mxu0
    %v1773 = vadd.f32 0.0, %v1772
    %v1774 = vpop.f32.mrb[0].mxu0
    %1775 = vdwg.mxu0
    %v1776 = vadd.f32 %v1733, %v1770
    %v1777 = vadd.f32 %v1734, %v1773
    %v1778 = vmul.f32 %v1776, 0.5
    %v1779 = vmul.f32 %v1777, 0.5
    %v1780 = vtanh.pop %v1778
    %v1781 = vtanh.pop %v1779
    %v1782 = vmul.f32 %v1780, 0.5
    %v1783 = vmul.f32 %v1781, 0.5
    %v1784 = vadd.f32 %v1782, 0.5
    %v1785 = vadd.f32 %v1783, 0.5
    %v1786 = vmul.f32 %v1684, %v1568
    %v1787 = vmul.f32 %v1685, %v1569
    %v1788 = vmul.f32 %v1631, %v1731
    %v1789 = vmul.f32 %v1632, %v1732
    %v1790 = vadd.f32 %v1786, %v1788
    %v1791 = vadd.f32 %v1787, %v1789
    %v1792 = vtanh.pop %v1790
    %v1793 = vtanh.pop %v1791
    %v1794 = vmul.f32 %v1784, %v1792
    %v1795 = vmul.f32 %v1785, %v1793
    %1796 = vst.msk [vmem:[#allocation3 + $0x10] sm:$0xff] %vm540, %v1794
    %1797 = vst.msk [vmem:[#allocation3 + $0x18] sm:$0xff] %vm540, %v1795
    %v1798 = vpack.c.bf16 %v1795, %v1794
    %v1799 = vld [vmem:[#allocation2 + $0x80] sm:$0xff]
    %v1800 = vld [vmem:[#allocation2 + $0xa0] sm:$0xff]
    %v1802 = vsel %vm540, %v1798, 0
    %1804 = vmatprep.subr.bf16.mxu0 0
    %1805 = vmatpush1.bf16.msra.mxu0 %v1277
    %1806 = vmatprep.subr.bf16.mxu0 0
    %1807 = vmatpush1.bf16.msra.mxu0 %v1278
    %1808 = vmatprep.subr.bf16.mxu0 0
    %1809 = vmatpush1.bf16.msra.mxu0 %v1279
    %1810 = vmatprep.subr.bf16.mxu0 0
    %1811 = vmatpush1.bf16.msra.mxu0 %v1280
    %1812 = vmatprep.subr.bf16.mxu0 0
    %1813 = vmatpush1.bf16.msra.mxu0 0
    %1814 = vmatprep.subr.bf16.mxu0 0
    %1815 = vmatpush1.bf16.msra.mxu0 0
    %1816 = vmatprep.subr.bf16.mxu0 0
    %1817 = vmatpush1.bf16.msra.mxu0 0
    %1818 = vmatprep.subr.bf16.mxu0 0
    %1819 = vmatpush1.bf16.msra.mxu0 0
    %1820 = vmatprep.subr.bf16.mxu0 0
    %1821 = vmatpush1.bf16.msra.mxu0 0
    %1822 = vmatprep.subr.bf16.mxu0 0
    %1823 = vmatpush1.bf16.msra.mxu0 0
    %1824 = vmatprep.subr.bf16.mxu0 0
    %1825 = vmatpush1.bf16.msra.mxu0 0
    %1826 = vmatprep.subr.bf16.mxu0 0
    %1827 = vmatpush1.bf16.msra.mxu0 0
    %1828 = vmatprep.subr.bf16.mxu0 0
    %1829 = vmatpush1.bf16.msra.mxu0 0
    %1830 = vmatprep.subr.bf16.mxu0 0
    %1831 = vmatpush1.bf16.msra.mxu0 0
    %1832 = vmatprep.subr.bf16.mxu0 0
    %1833 = vmatpush1.bf16.msra.mxu0 0
    %1834 = vmatprep.subr.bf16.mxu0 0
    %1835 = vmatpush1.bf16.msra.mxu0 0
    %1836 = vmatprep.mubr.bf16.mxu0 0
    %1837 = vmatmul.mubr.bf16.gmra.mrb[0].mxu0 %v1802
    %v1838 = vpop.f32.mrb[0].mxu0
    %v1839 = vadd.f32 0.0, %v1838
    %v1840 = vpop.f32.mrb[0].mxu0
    %v1841 = vpop.f32.mrb[0].mxu0
    %v1842 = vadd.f32 0.0, %v1841
    %v1843 = vpop.f32.mrb[0].mxu0
    %1844 = vdwg.mxu0
    %v1845 = vadd.f32 %v1799, %v1839
    %v1846 = vadd.f32 %v1800, %v1842
    %v1847 = vmul.f32 %v1845, 0.5
    %v1848 = vmul.f32 %v1846, 0.5
    %v1849 = vtanh.pop %v1847
    %v1850 = vtanh.pop %v1848
    %v1851 = vmul.f32 %v1849, 0.5
    %v1852 = vmul.f32 %v1850, 0.5
    %v1853 = vadd.f32 %v1851, 0.5
    %v1854 = vadd.f32 %v1852, 0.5
    %v1855 = vld [vmem:[#allocation2 + $0x88] sm:$0xff]
    %v1856 = vld [vmem:[#allocation2 + $0xa8] sm:$0xff]
    %1857 = vmatprep.subr.bf16.mxu0 0
    %1858 = vmatpush1.bf16.msra.mxu0 %v1357
    %1859 = vmatprep.subr.bf16.mxu0 0
    %1860 = vmatpush1.bf16.msra.mxu0 %v1358
    %1861 = vmatprep.subr.bf16.mxu0 0
    %1862 = vmatpush1.bf16.msra.mxu0 %v1359
    %1863 = vmatprep.subr.bf16.mxu0 0
    %1864 = vmatpush1.bf16.msra.mxu0 %v1360
    %1865 = vmatprep.subr.bf16.mxu0 0
    %1866 = vmatpush1.bf16.msra.mxu0 0
    %1867 = vmatprep.subr.bf16.mxu0 0
    %1868 = vmatpush1.bf16.msra.mxu0 0
    %1869 = vmatprep.subr.bf16.mxu0 0
    %1870 = vmatpush1.bf16.msra.mxu0 0
    %1871 = vmatprep.subr.bf16.mxu0 0
    %1872 = vmatpush1.bf16.msra.mxu0 0
    %1873 = vmatprep.subr.bf16.mxu0 0
    %1874 = vmatpush1.bf16.msra.mxu0 0
    %1875 = vmatprep.subr.bf16.mxu0 0
    %1876 = vmatpush1.bf16.msra.mxu0 0
    %1877 = vmatprep.subr.bf16.mxu0 0
    %1878 = vmatpush1.bf16.msra.mxu0 0
    %1879 = vmatprep.subr.bf16.mxu0 0
    %1880 = vmatpush1.bf16.msra.mxu0 0
    %1881 = vmatprep.subr.bf16.mxu0 0
    %1882 = vmatpush1.bf16.msra.mxu0 0
    %1883 = vmatprep.subr.bf16.mxu0 0
    %1884 = vmatpush1.bf16.msra.mxu0 0
    %1885 = vmatprep.subr.bf16.mxu0 0
    %1886 = vmatpush1.bf16.msra.mxu0 0
    %1887 = vmatprep.subr.bf16.mxu0 0
    %1888 = vmatpush1.bf16.msra.mxu0 0
    %1889 = vmatprep.mubr.bf16.mxu0 0
    %1890 = vmatmul.mubr.bf16.gmra.mrb[0].mxu0 %v1802
    %v1891 = vpop.f32.mrb[0].mxu0
    %v1892 = vadd.f32 0.0, %v1891
    %v1893 = vpop.f32.mrb[0].mxu0
    %v1894 = vpop.f32.mrb[0].mxu0
    %v1895 = vadd.f32 0.0, %v1894
    %v1896 = vpop.f32.mrb[0].mxu0
    %1897 = vdwg.mxu0
    %v1898 = vadd.f32 %v1855, %v1892
    %v1899 = vadd.f32 %v1856, %v1895
    %v1900 = vmul.f32 %v1898, 0.5
    %v1901 = vmul.f32 %v1899, 0.5
    %v1902 = vtanh.pop %v1900
    %v1903 = vtanh.pop %v1901
    %v1904 = vmul.f32 %v1902, 0.5
    %v1905 = vmul.f32 %v1903, 0.5
    %v1906 = vadd.f32 %v1904, 0.5
    %v1907 = vadd.f32 %v1905, 0.5
    %v1908 = vld [vmem:[#allocation2 + $0x90] sm:$0xff]
    %v1909 = vld [vmem:[#allocation2 + $0xb0] sm:$0xff]
    %1910 = vmatprep.subr.bf16.mxu0 0
    %1911 = vmatpush1.bf16.msra.mxu0 %v1434
    %1912 = vmatprep.subr.bf16.mxu0 0
    %1913 = vmatpush1.bf16.msra.mxu0 %v1435
    %1914 = vmatprep.subr.bf16.mxu0 0
    %1915 = vmatpush1.bf16.msra.mxu0 %v1436
    %1916 = vmatprep.subr.bf16.mxu0 0
    %1917 = vmatpush1.bf16.msra.mxu0 %v1437
    %1918 = vmatprep.subr.bf16.mxu0 0
    %1919 = vmatpush1.bf16.msra.mxu0 0
    %1920 = vmatprep.subr.bf16.mxu0 0
    %1921 = vmatpush1.bf16.msra.mxu0 0
    %1922 = vmatprep.subr.bf16.mxu0 0
    %1923 = vmatpush1.bf16.msra.mxu0 0
    %1924 = vmatprep.subr.bf16.mxu0 0
    %1925 = vmatpush1.bf16.msra.mxu0 0
    %1926 = vmatprep.subr.bf16.mxu0 0
    %1927 = vmatpush1.bf16.msra.mxu0 0
    %1928 = vmatprep.subr.bf16.mxu0 0
    %1929 = vmatpush1.bf16.msra.mxu0 0
    %1930 = vmatprep.subr.bf16.mxu0 0
    %1931 = vmatpush1.bf16.msra.mxu0 0
    %1932 = vmatprep.subr.bf16.mxu0 0
    %1933 = vmatpush1.bf16.msra.mxu0 0
    %1934 = vmatprep.subr.bf16.mxu0 0
    %1935 = vmatpush1.bf16.msra.mxu0 0
    %1936 = vmatprep.subr.bf16.mxu0 0
    %1937 = vmatpush1.bf16.msra.mxu0 0
    %1938 = vmatprep.subr.bf16.mxu0 0
    %1939 = vmatpush1.bf16.msra.mxu0 0
    %1940 = vmatprep.subr.bf16.mxu0 0
    %1941 = vmatpush1.bf16.msra.mxu0 0
    %1942 = vmatprep.mubr.bf16.mxu0 0
    %1943 = vmatmul.mubr.bf16.gmra.mrb[0].mxu0 %v1802
    %v1944 = vpop.f32.mrb[0].mxu0
    %v1945 = vadd.f32 0.0, %v1944
    %v1946 = vpop.f32.mrb[0].mxu0
    %v1947 = vpop.f32.mrb[0].mxu0
    %v1948 = vadd.f32 0.0, %v1947
    %v1949 = vpop.f32.mrb[0].mxu0
    %1950 = vdwg.mxu0
    %v1951 = vadd.f32 %v1908, %v1945
    %v1952 = vadd.f32 %v1909, %v1948
    %v1953 = vtanh.pop %v1951
    %v1954 = vtanh.pop %v1952
    %v1955 = vld [vmem:[#allocation2 + $0x98] sm:$0xff]
    %v1956 = vld [vmem:[#allocation2 + $0xb8] sm:$0xff]
    %1957 = vmatprep.subr.bf16.mxu0 0
    %1958 = vmatpush1.bf16.msra.mxu0 %v1505
    %1959 = vmatprep.subr.bf16.mxu0 0
    %1960 = vmatpush1.bf16.msra.mxu0 %v1506
    %1961 = vmatprep.subr.bf16.mxu0 0
    %1962 = vmatpush1.bf16.msra.mxu0 %v1507
    %1963 = vmatprep.subr.bf16.mxu0 0
    %1964 = vmatpush1.bf16.msra.mxu0 %v1508
    %1965 = vmatprep.subr.bf16.mxu0 0
    %1966 = vmatpush1.bf16.msra.mxu0 0
    %1967 = vmatprep.subr.bf16.mxu0 0
    %1968 = vmatpush1.bf16.msra.mxu0 0
    %1969 = vmatprep.subr.bf16.mxu0 0
    %1970 = vmatpush1.bf16.msra.mxu0 0
    %1971 = vmatprep.subr.bf16.mxu0 0
    %1972 = vmatpush1.bf16.msra.mxu0 0
    %1973 = vmatprep.subr.bf16.mxu0 0
    %1974 = vmatpush1.bf16.msra.mxu0 0
    %1975 = vmatprep.subr.bf16.mxu0 0
    %1976 = vmatpush1.bf16.msra.mxu0 0
    %1977 = vmatprep.subr.bf16.mxu0 0
    %1978 = vmatpush1.bf16.msra.mxu0 0
    %1979 = vmatprep.subr.bf16.mxu0 0
    %1980 = vmatpush1.bf16.msra.mxu0 0
    %1981 = vmatprep.subr.bf16.mxu0 0
    %1982 = vmatpush1.bf16.msra.mxu0 0
    %1983 = vmatprep.subr.bf16.mxu0 0
    %1984 = vmatpush1.bf16.msra.mxu0 0
    %1985 = vmatprep.subr.bf16.mxu0 0
    %1986 = vmatpush1.bf16.msra.mxu0 0
    %1987 = vmatprep.subr.bf16.mxu0 0
    %1988 = vmatpush1.bf16.msra.mxu0 0
    %1989 = vmatprep.mubr.bf16.mxu0 0
    %1990 = vmatmul.mubr.bf16.gmra.mrb[0].mxu0 %v1802
    %v1991 = vpop.f32.mrb[0].mxu0
    %v1992 = vadd.f32 0.0, %v1991
    %v1993 = vpop.f32.mrb[0].mxu0
    %v1994 = vpop.f32.mrb[0].mxu0
    %v1995 = vadd.f32 0.0, %v1994
    %v1996 = vpop.f32.mrb[0].mxu0
    %1997 = vdwg.mxu0
    %v1998 = vadd.f32 %v1955, %v1992
    %v1999 = vadd.f32 %v1956, %v1995
    %v2000 = vmul.f32 %v1998, 0.5
    %v2001 = vmul.f32 %v1999, 0.5
    %v2002 = vtanh.pop %v2000
    %v2003 = vtanh.pop %v2001
    %v2004 = vmul.f32 %v2002, 0.5
    %v2005 = vmul.f32 %v2003, 0.5
    %v2006 = vadd.f32 %v2004, 0.5
    %v2007 = vadd.f32 %v2005, 0.5
    %v2008 = vmul.f32 %v1906, %v1790
    %v2009 = vmul.f32 %v1907, %v1791
    %v2010 = vmul.f32 %v1853, %v1953
    %v2011 = vmul.f32 %v1854, %v1954
    %v2012 = vadd.f32 %v2008, %v2010
    %v2013 = vadd.f32 %v2009, %v2011
    %v2014 = vtanh.pop %v2012
    %v2015 = vtanh.pop %v2013
    %v2016 = vmul.f32 %v2006, %v2014
    %v2017 = vmul.f32 %v2007, %v2015
    %2018 = vst.msk [vmem:[#allocation3 + $0x20] sm:$0xff] %vm540, %v2016
    %2019 = vst.msk [vmem:[#allocation3 + $0x28] sm:$0xff] %vm540, %v2017
    %v2020 = vpack.c.bf16 %v2017, %v2016
    %v2021 = vld [vmem:[#allocation2 + $0xc0] sm:$0xff]
    %v2022 = vld [vmem:[#allocation2 + $0xe0] sm:$0xff]
    %v2024 = vsel %vm540, %v2020, 0
    %2026 = vmatprep.subr.bf16.mxu0 0
    %2027 = vmatpush1.bf16.msra.mxu0 %v1277
    %2028 = vmatprep.subr.bf16.mxu0 0
    %2029 = vmatpush1.bf16.msra.mxu0 %v1278
    %2030 = vmatprep.subr.bf16.mxu0 0
    %2031 = vmatpush1.bf16.msra.mxu0 %v1279
    %2032 = vmatprep.subr.bf16.mxu0 0
    %2033 = vmatpush1.bf16.msra.mxu0 %v1280
    %2034 = vmatprep.subr.bf16.mxu0 0
    %2035 = vmatpush1.bf16.msra.mxu0 0
    %2036 = vmatprep.subr.bf16.mxu0 0
    %2037 = vmatpush1.bf16.msra.mxu0 0
    %2038 = vmatprep.subr.bf16.mxu0 0
    %2039 = vmatpush1.bf16.msra.mxu0 0
    %2040 = vmatprep.subr.bf16.mxu0 0
    %2041 = vmatpush1.bf16.msra.mxu0 0
    %2042 = vmatprep.subr.bf16.mxu0 0
    %2043 = vmatpush1.bf16.msra.mxu0 0
    %2044 = vmatprep.subr.bf16.mxu0 0
    %2045 = vmatpush1.bf16.msra.mxu0 0
    %2046 = vmatprep.subr.bf16.mxu0 0
    %2047 = vmatpush1.bf16.msra.mxu0 0
    %2048 = vmatprep.subr.bf16.mxu0 0
    %2049 = vmatpush1.bf16.msra.mxu0 0
    %2050 = vmatprep.subr.bf16.mxu0 0
    %2051 = vmatpush1.bf16.msra.mxu0 0
    %2052 = vmatprep.subr.bf16.mxu0 0
    %2053 = vmatpush1.bf16.msra.mxu0 0
    %2054 = vmatprep.subr.bf16.mxu0 0
    %2055 = vmatpush1.bf16.msra.mxu0 0
    %2056 = vmatprep.subr.bf16.mxu0 0
    %2057 = vmatpush1.bf16.msra.mxu0 0
    %2058 = vmatprep.mubr.bf16.mxu0 0
    %2059 = vmatmul.mubr.bf16.gmra.mrb[0].mxu0 %v2024
    %v2060 = vpop.f32.mrb[0].mxu0
    %v2061 = vadd.f32 0.0, %v2060
    %v2062 = vpop.f32.mrb[0].mxu0
    %v2063 = vpop.f32.mrb[0].mxu0
    %v2064 = vadd.f32 0.0, %v2063
    %v2065 = vpop.f32.mrb[0].mxu0
    %2066 = vdwg.mxu0
    %v2067 = vadd.f32 %v2021, %v2061
    %v2068 = vadd.f32 %v2022, %v2064
    %v2069 = vmul.f32 %v2067, 0.5
    %v2070 = vmul.f32 %v2068, 0.5
    %v2071 = vtanh.pop %v2069
    %v2072 = vtanh.pop %v2070
    %v2073 = vmul.f32 %v2071, 0.5
    %v2074 = vmul.f32 %v2072, 0.5
    %v2075 = vadd.f32 %v2073, 0.5
    %v2076 = vadd.f32 %v2074, 0.5
    %v2077 = vld [vmem:[#allocation2 + $0xc8] sm:$0xff]
    %v2078 = vld [vmem:[#allocation2 + $0xe8] sm:$0xff]
    %2079 = vmatprep.subr.bf16.mxu0 0
    %2080 = vmatpush1.bf16.msra.mxu0 %v1357
    %2081 = vmatprep.subr.bf16.mxu0 0
    %2082 = vmatpush1.bf16.msra.mxu0 %v1358
    %2083 = vmatprep.subr.bf16.mxu0 0
    %2084 = vmatpush1.bf16.msra.mxu0 %v1359
    %2085 = vmatprep.subr.bf16.mxu0 0
    %2086 = vmatpush1.bf16.msra.mxu0 %v1360
    %2087 = vmatprep.subr.bf16.mxu0 0
    %2088 = vmatpush1.bf16.msra.mxu0 0
    %2089 = vmatprep.subr.bf16.mxu0 0
    %2090 = vmatpush1.bf16.msra.mxu0 0
    %2091 = vmatprep.subr.bf16.mxu0 0
    %2092 = vmatpush1.bf16.msra.mxu0 0
    %2093 = vmatprep.subr.bf16.mxu0 0
    %2094 = vmatpush1.bf16.msra.mxu0 0
    %2095 = vmatprep.subr.bf16.mxu0 0
    %2096 = vmatpush1.bf16.msra.mxu0 0
    %2097 = vmatprep.subr.bf16.mxu0 0
    %2098 = vmatpush1.bf16.msra.mxu0 0
    %2099 = vmatprep.subr.bf16.mxu0 0
    %2100 = vmatpush1.bf16.msra.mxu0 0
    %2101 = vmatprep.subr.bf16.mxu0 0
    %2102 = vmatpush1.bf16.msra.mxu0 0
    %2103 = vmatprep.subr.bf16.mxu0 0
    %2104 = vmatpush1.bf16.msra.mxu0 0
    %2105 = vmatprep.subr.bf16.mxu0 0
    %2106 = vmatpush1.bf16.msra.mxu0 0
    %2107 = vmatprep.subr.bf16.mxu0 0
    %2108 = vmatpush1.bf16.msra.mxu0 0
    %2109 = vmatprep.subr.bf16.mxu0 0
    %2110 = vmatpush1.bf16.msra.mxu0 0
    %2111 = vmatprep.mubr.bf16.mxu0 0
    %2112 = vmatmul.mubr.bf16.gmra.mrb[0].mxu0 %v2024
    %v2113 = vpop.f32.mrb[0].mxu0
    %v2114 = vadd.f32 0.0, %v2113
    %v2115 = vpop.f32.mrb[0].mxu0
    %v2116 = vpop.f32.mrb[0].mxu0
    %v2117 = vadd.f32 0.0, %v2116
    %v2118 = vpop.f32.mrb[0].mxu0
    %2119 = vdwg.mxu0
    %v2120 = vadd.f32 %v2077, %v2114
    %v2121 = vadd.f32 %v2078, %v2117
    %v2122 = vmul.f32 %v2120, 0.5
    %v2123 = vmul.f32 %v2121, 0.5
    %v2124 = vtanh.pop %v2122
    %v2125 = vtanh.pop %v2123
    %v2126 = vmul.f32 %v2124, 0.5
    %v2127 = vmul.f32 %v2125, 0.5
    %v2128 = vadd.f32 %v2126, 0.5
    %v2129 = vadd.f32 %v2127, 0.5
    %v2130 = vld [vmem:[#allocation2 + $0xd0] sm:$0xff]
    %v2131 = vld [vmem:[#allocation2 + $0xf0] sm:$0xff]
    %2132 = vmatprep.subr.bf16.mxu0 0
    %2133 = vmatpush1.bf16.msra.mxu0 %v1434
    %2134 = vmatprep.subr.bf16.mxu0 0
    %2135 = vmatpush1.bf16.msra.mxu0 %v1435
    %2136 = vmatprep.subr.bf16.mxu0 0
    %2137 = vmatpush1.bf16.msra.mxu0 %v1436
    %2138 = vmatprep.subr.bf16.mxu0 0
    %2139 = vmatpush1.bf16.msra.mxu0 %v1437
    %2140 = vmatprep.subr.bf16.mxu0 0
    %2141 = vmatpush1.bf16.msra.mxu0 0
    %2142 = vmatprep.subr.bf16.mxu0 0
    %2143 = vmatpush1.bf16.msra.mxu0 0
    %2144 = vmatprep.subr.bf16.mxu0 0
    %2145 = vmatpush1.bf16.msra.mxu0 0
    %2146 = vmatprep.subr.bf16.mxu0 0
    %2147 = vmatpush1.bf16.msra.mxu0 0
    %2148 = vmatprep.subr.bf16.mxu0 0
    %2149 = vmatpush1.bf16.msra.mxu0 0
    %2150 = vmatprep.subr.bf16.mxu0 0
    %2151 = vmatpush1.bf16.msra.mxu0 0
    %2152 = vmatprep.subr.bf16.mxu0 0
    %2153 = vmatpush1.bf16.msra.mxu0 0
    %2154 = vmatprep.subr.bf16.mxu0 0
    %2155 = vmatpush1.bf16.msra.mxu0 0
    %2156 = vmatprep.subr.bf16.mxu0 0
    %2157 = vmatpush1.bf16.msra.mxu0 0
    %2158 = vmatprep.subr.bf16.mxu0 0
    %2159 = vmatpush1.bf16.msra.mxu0 0
    %2160 = vmatprep.subr.bf16.mxu0 0
    %2161 = vmatpush1.bf16.msra.mxu0 0
    %2162 = vmatprep.subr.bf16.mxu0 0
    %2163 = vmatpush1.bf16.msra.mxu0 0
    %2164 = vmatprep.mubr.bf16.mxu0 0
    %2165 = vmatmul.mubr.bf16.gmra.mrb[0].mxu0 %v2024
    %v2166 = vpop.f32.mrb[0].mxu0
    %v2167 = vadd.f32 0.0, %v2166
    %v2168 = vpop.f32.mrb[0].mxu0
    %v2169 = vpop.f32.mrb[0].mxu0
    %v2170 = vadd.f32 0.0, %v2169
    %v2171 = vpop.f32.mrb[0].mxu0
    %2172 = vdwg.mxu0
    %v2173 = vadd.f32 %v2130, %v2167
    %v2174 = vadd.f32 %v2131, %v2170
    %v2175 = vtanh.pop %v2173
    %v2176 = vtanh.pop %v2174
    %v2177 = vld [vmem:[#allocation2 + $0xd8] sm:$0xff]
    %v2178 = vld [vmem:[#allocation2 + $0xf8] sm:$0xff]
    %2179 = vmatprep.subr.bf16.mxu0 0
    %2180 = vmatpush1.bf16.msra.mxu0 %v1505
    %2181 = vmatprep.subr.bf16.mxu0 0
    %2182 = vmatpush1.bf16.msra.mxu0 %v1506
    %2183 = vmatprep.subr.bf16.mxu0 0
    %2184 = vmatpush1.bf16.msra.mxu0 %v1507
    %2185 = vmatprep.subr.bf16.mxu0 0
    %2186 = vmatpush1.bf16.msra.mxu0 %v1508
    %2187 = vmatprep.subr.bf16.mxu0 0
    %2188 = vmatpush1.bf16.msra.mxu0 0
    %2189 = vmatprep.subr.bf16.mxu0 0
    %2190 = vmatpush1.bf16.msra.mxu0 0
    %2191 = vmatprep.subr.bf16.mxu0 0
    %2192 = vmatpush1.bf16.msra.mxu0 0
    %2193 = vmatprep.subr.bf16.mxu0 0
    %2194 = vmatpush1.bf16.msra.mxu0 0
    %2195 = vmatprep.subr.bf16.mxu0 0
    %2196 = vmatpush1.bf16.msra.mxu0 0
    %2197 = vmatprep.subr.bf16.mxu0 0
    %2198 = vmatpush1.bf16.msra.mxu0 0
    %2199 = vmatprep.subr.bf16.mxu0 0
    %2200 = vmatpush1.bf16.msra.mxu0 0
    %2201 = vmatprep.subr.bf16.mxu0 0
    %2202 = vmatpush1.bf16.msra.mxu0 0
    %2203 = vmatprep.subr.bf16.mxu0 0
    %2204 = vmatpush1.bf16.msra.mxu0 0
    %2205 = vmatprep.subr.bf16.mxu0 0
    %2206 = vmatpush1.bf16.msra.mxu0 0
    %2207 = vmatprep.subr.bf16.mxu0 0
    %2208 = vmatpush1.bf16.msra.mxu0 0
    %2209 = vmatprep.subr.bf16.mxu0 0
    %2210 = vmatpush1.bf16.msra.mxu0 0
    %2211 = vmatprep.mubr.bf16.mxu0 0
    %2212 = vmatmul.mubr.bf16.gmra.mrb[0].mxu0 %v2024
    %v2213 = vpop.f32.mrb[0].mxu0
    %v2214 = vadd.f32 0.0, %v2213
    %v2215 = vpop.f32.mrb[0].mxu0
    %v2216 = vpop.f32.mrb[0].mxu0
    %v2217 = vadd.f32 0.0, %v2216
    %v2218 = vpop.f32.mrb[0].mxu0
    %2219 = vdwg.mxu0
    %v2220 = vadd.f32 %v2177, %v2214
    %v2221 = vadd.f32 %v2178, %v2217
    %v2222 = vmul.f32 %v2220, 0.5
    %v2223 = vmul.f32 %v2221, 0.5
    %v2224 = vtanh.pop %v2222
    %v2225 = vtanh.pop %v2223
    %v2226 = vmul.f32 %v2224, 0.5
    %v2227 = vmul.f32 %v2225, 0.5
    %v2228 = vadd.f32 %v2226, 0.5
    %v2229 = vadd.f32 %v2227, 0.5
    %v2230 = vmul.f32 %v2128, %v2012
    %v2231 = vmul.f32 %v2129, %v2013
    %v2232 = vmul.f32 %v2075, %v2175
    %v2233 = vmul.f32 %v2076, %v2176
    %v2234 = vadd.f32 %v2230, %v2232
    %v2235 = vadd.f32 %v2231, %v2233
    %v2236 = vtanh.pop %v2234
    %v2237 = vtanh.pop %v2235
    %v2238 = vmul.f32 %v2228, %v2236
    %v2239 = vmul.f32 %v2229, %v2237
    %2240 = vst.msk [vmem:[#allocation3 + $0x30] sm:$0xff] %vm540, %v2238
    %2241 = vst.msk [vmem:[#allocation3 + $0x38] sm:$0xff] %vm540, %v2239
    %v2242 = vpack.c.bf16 %v2239, %v2238
    %v2243 = vld [vmem:[#allocation2 + $0x100] sm:$0xff]
    %v2244 = vld [vmem:[#allocation2 + $0x120] sm:$0xff]
    %v2246 = vsel %vm540, %v2242, 0
    %2248 = vmatprep.subr.bf16.mxu0 0
    %2249 = vmatpush1.bf16.msra.mxu0 %v1277
    %2250 = vmatprep.subr.bf16.mxu0 0
    %2251 = vmatpush1.bf16.msra.mxu0 %v1278
    %2252 = vmatprep.subr.bf16.mxu0 0
    %2253 = vmatpush1.bf16.msra.mxu0 %v1279
    %2254 = vmatprep.subr.bf16.mxu0 0
    %2255 = vmatpush1.bf16.msra.mxu0 %v1280
    %2256 = vmatprep.subr.bf16.mxu0 0
    %2257 = vmatpush1.bf16.msra.mxu0 0
    %2258 = vmatprep.subr.bf16.mxu0 0
    %2259 = vmatpush1.bf16.msra.mxu0 0
    %2260 = vmatprep.subr.bf16.mxu0 0
    %2261 = vmatpush1.bf16.msra.mxu0 0
    %2262 = vmatprep.subr.bf16.mxu0 0
    %2263 = vmatpush1.bf16.msra.mxu0 0
    %2264 = vmatprep.subr.bf16.mxu0 0
    %2265 = vmatpush1.bf16.msra.mxu0 0
    %2266 = vmatprep.subr.bf16.mxu0 0
    %2267 = vmatpush1.bf16.msra.mxu0 0
    %2268 = vmatprep.subr.bf16.mxu0 0
    %2269 = vmatpush1.bf16.msra.mxu0 0
    %2270 = vmatprep.subr.bf16.mxu0 0
    %2271 = vmatpush1.bf16.msra.mxu0 0
    %2272 = vmatprep.subr.bf16.mxu0 0
    %2273 = vmatpush1.bf16.msra.mxu0 0
    %2274 = vmatprep.subr.bf16.mxu0 0
    %2275 = vmatpush1.bf16.msra.mxu0 0
    %2276 = vmatprep.subr.bf16.mxu0 0
    %2277 = vmatpush1.bf16.msra.mxu0 0
    %2278 = vmatprep.subr.bf16.mxu0 0
    %2279 = vmatpush1.bf16.msra.mxu0 0
    %2280 = vmatprep.mubr.bf16.mxu0 0
    %2281 = vmatmul.mubr.bf16.gmra.mrb[0].mxu0 %v2246
    %v2282 = vpop.f32.mrb[0].mxu0
    %v2283 = vadd.f32 0.0, %v2282
    %v2284 = vpop.f32.mrb[0].mxu0
    %v2285 = vpop.f32.mrb[0].mxu0
    %v2286 = vadd.f32 0.0, %v2285
    %v2287 = vpop.f32.mrb[0].mxu0
    %2288 = vdwg.mxu0
    %v2289 = vadd.f32 %v2243, %v2283
    %v2290 = vadd.f32 %v2244, %v2286
    %v2291 = vmul.f32 %v2289, 0.5
    %v2292 = vmul.f32 %v2290, 0.5
    %v2293 = vtanh.pop %v2291
    %v2294 = vtanh.pop %v2292
    %v2295 = vmul.f32 %v2293, 0.5
    %v2296 = vmul.f32 %v2294, 0.5
    %v2297 = vadd.f32 %v2295, 0.5
    %v2298 = vadd.f32 %v2296, 0.5
    %v2299 = vld [vmem:[#allocation2 + $0x108] sm:$0xff]
    %v2300 = vld [vmem:[#allocation2 + $0x128] sm:$0xff]
    %2301 = vmatprep.subr.bf16.mxu0 0
    %2302 = vmatpush1.bf16.msra.mxu0 %v1357
    %2303 = vmatprep.subr.bf16.mxu0 0
    %2304 = vmatpush1.bf16.msra.mxu0 %v1358
    %2305 = vmatprep.subr.bf16.mxu0 0
    %2306 = vmatpush1.bf16.msra.mxu0 %v1359
    %2307 = vmatprep.subr.bf16.mxu0 0
    %2308 = vmatpush1.bf16.msra.mxu0 %v1360
    %2309 = vmatprep.subr.bf16.mxu0 0
    %2310 = vmatpush1.bf16.msra.mxu0 0
    %2311 = vmatprep.subr.bf16.mxu0 0
    %2312 = vmatpush1.bf16.msra.mxu0 0
    %2313 = vmatprep.subr.bf16.mxu0 0
    %2314 = vmatpush1.bf16.msra.mxu0 0
    %2315 = vmatprep.subr.bf16.mxu0 0
    %2316 = vmatpush1.bf16.msra.mxu0 0
    %2317 = vmatprep.subr.bf16.mxu0 0
    %2318 = vmatpush1.bf16.msra.mxu0 0
    %2319 = vmatprep.subr.bf16.mxu0 0
    %2320 = vmatpush1.bf16.msra.mxu0 0
    %2321 = vmatprep.subr.bf16.mxu0 0
    %2322 = vmatpush1.bf16.msra.mxu0 0
    %2323 = vmatprep.subr.bf16.mxu0 0
    %2324 = vmatpush1.bf16.msra.mxu0 0
    %2325 = vmatprep.subr.bf16.mxu0 0
    %2326 = vmatpush1.bf16.msra.mxu0 0
    %2327 = vmatprep.subr.bf16.mxu0 0
    %2328 = vmatpush1.bf16.msra.mxu0 0
    %2329 = vmatprep.subr.bf16.mxu0 0
    %2330 = vmatpush1.bf16.msra.mxu0 0
    %2331 = vmatprep.subr.bf16.mxu0 0
    %2332 = vmatpush1.bf16.msra.mxu0 0
    %2333 = vmatprep.mubr.bf16.mxu0 0
    %2334 = vmatmul.mubr.bf16.gmra.mrb[0].mxu0 %v2246
    %v2335 = vpop.f32.mrb[0].mxu0
    %v2336 = vadd.f32 0.0, %v2335
    %v2337 = vpop.f32.mrb[0].mxu0
    %v2338 = vpop.f32.mrb[0].mxu0
    %v2339 = vadd.f32 0.0, %v2338
    %v2340 = vpop.f32.mrb[0].mxu0
    %2341 = vdwg.mxu0
    %v2342 = vadd.f32 %v2299, %v2336
    %v2343 = vadd.f32 %v2300, %v2339
    %v2344 = vmul.f32 %v2342, 0.5
    %v2345 = vmul.f32 %v2343, 0.5
    %v2346 = vtanh.pop %v2344
    %v2347 = vtanh.pop %v2345
    %v2348 = vmul.f32 %v2346, 0.5
    %v2349 = vmul.f32 %v2347, 0.5
    %v2350 = vadd.f32 %v2348, 0.5
    %v2351 = vadd.f32 %v2349, 0.5
    %v2352 = vld [vmem:[#allocation2 + $0x110] sm:$0xff]
    %v2353 = vld [vmem:[#allocation2 + $0x130] sm:$0xff]
    %2354 = vmatprep.subr.bf16.mxu0 0
    %2355 = vmatpush1.bf16.msra.mxu0 %v1434
    %2356 = vmatprep.subr.bf16.mxu0 0
    %2357 = vmatpush1.bf16.msra.mxu0 %v1435
    %2358 = vmatprep.subr.bf16.mxu0 0
    %2359 = vmatpush1.bf16.msra.mxu0 %v1436
    %2360 = vmatprep.subr.bf16.mxu0 0
    %2361 = vmatpush1.bf16.msra.mxu0 %v1437
    %2362 = vmatprep.subr.bf16.mxu0 0
    %2363 = vmatpush1.bf16.msra.mxu0 0
    %2364 = vmatprep.subr.bf16.mxu0 0
    %2365 = vmatpush1.bf16.msra.mxu0 0
    %2366 = vmatprep.subr.bf16.mxu0 0
    %2367 = vmatpush1.bf16.msra.mxu0 0
    %2368 = vmatprep.subr.bf16.mxu0 0
    %2369 = vmatpush1.bf16.msra.mxu0 0
    %2370 = vmatprep.subr.bf16.mxu0 0
    %2371 = vmatpush1.bf16.msra.mxu0 0
    %2372 = vmatprep.subr.bf16.mxu0 0
    %2373 = vmatpush1.bf16.msra.mxu0 0
    %2374 = vmatprep.subr.bf16.mxu0 0
    %2375 = vmatpush1.bf16.msra.mxu0 0
    %2376 = vmatprep.subr.bf16.mxu0 0
    %2377 = vmatpush1.bf16.msra.mxu0 0
    %2378 = vmatprep.subr.bf16.mxu0 0
    %2379 = vmatpush1.bf16.msra.mxu0 0
    %2380 = vmatprep.subr.bf16.mxu0 0
    %2381 = vmatpush1.bf16.msra.mxu0 0
    %2382 = vmatprep.subr.bf16.mxu0 0
    %2383 = vmatpush1.bf16.msra.mxu0 0
    %2384 = vmatprep.subr.bf16.mxu0 0
    %2385 = vmatpush1.bf16.msra.mxu0 0
    %2386 = vmatprep.mubr.bf16.mxu0 0
    %2387 = vmatmul.mubr.bf16.gmra.mrb[0].mxu0 %v2246
    %v2388 = vpop.f32.mrb[0].mxu0
    %v2389 = vadd.f32 0.0, %v2388
    %v2390 = vpop.f32.mrb[0].mxu0
    %v2391 = vpop.f32.mrb[0].mxu0
    %v2392 = vadd.f32 0.0, %v2391
    %v2393 = vpop.f32.mrb[0].mxu0
    %2394 = vdwg.mxu0
    %v2395 = vadd.f32 %v2352, %v2389
    %v2396 = vadd.f32 %v2353, %v2392
    %v2397 = vtanh.pop %v2395
    %v2398 = vtanh.pop %v2396
    %v2399 = vld [vmem:[#allocation2 + $0x118] sm:$0xff]
    %v2400 = vld [vmem:[#allocation2 + $0x138] sm:$0xff]
    %2401 = vmatprep.subr.bf16.mxu0 0
    %2402 = vmatpush1.bf16.msra.mxu0 %v1505
    %2403 = vmatprep.subr.bf16.mxu0 0
    %2404 = vmatpush1.bf16.msra.mxu0 %v1506
    %2405 = vmatprep.subr.bf16.mxu0 0
    %2406 = vmatpush1.bf16.msra.mxu0 %v1507
    %2407 = vmatprep.subr.bf16.mxu0 0
    %2408 = vmatpush1.bf16.msra.mxu0 %v1508
    %2409 = vmatprep.subr.bf16.mxu0 0
    %2410 = vmatpush1.bf16.msra.mxu0 0
    %2411 = vmatprep.subr.bf16.mxu0 0
    %2412 = vmatpush1.bf16.msra.mxu0 0
    %2413 = vmatprep.subr.bf16.mxu0 0
    %2414 = vmatpush1.bf16.msra.mxu0 0
    %2415 = vmatprep.subr.bf16.mxu0 0
    %2416 = vmatpush1.bf16.msra.mxu0 0
    %2417 = vmatprep.subr.bf16.mxu0 0
    %2418 = vmatpush1.bf16.msra.mxu0 0
    %2419 = vmatprep.subr.bf16.mxu0 0
    %2420 = vmatpush1.bf16.msra.mxu0 0
    %2421 = vmatprep.subr.bf16.mxu0 0
    %2422 = vmatpush1.bf16.msra.mxu0 0
    %2423 = vmatprep.subr.bf16.mxu0 0
    %2424 = vmatpush1.bf16.msra.mxu0 0
    %2425 = vmatprep.subr.bf16.mxu0 0
    %2426 = vmatpush1.bf16.msra.mxu0 0
    %2427 = vmatprep.subr.bf16.mxu0 0
    %2428 = vmatpush1.bf16.msra.mxu0 0
    %2429 = vmatprep.subr.bf16.mxu0 0
    %2430 = vmatpush1.bf16.msra.mxu0 0
    %2431 = vmatprep.subr.bf16.mxu0 0
    %2432 = vmatpush1.bf16.msra.mxu0 0
    %2433 = vmatprep.mubr.bf16.mxu0 0
    %2434 = vmatmul.mubr.bf16.gmra.mrb[0].mxu0 %v2246
    %v2435 = vpop.f32.mrb[0].mxu0
    %v2436 = vadd.f32 0.0, %v2435
    %v2437 = vpop.f32.mrb[0].mxu0
    %v2438 = vpop.f32.mrb[0].mxu0
    %v2439 = vadd.f32 0.0, %v2438
    %v2440 = vpop.f32.mrb[0].mxu0
    %2441 = vdwg.mxu0
    %v2442 = vadd.f32 %v2399, %v2436
    %v2443 = vadd.f32 %v2400, %v2439
    %v2444 = vmul.f32 %v2442, 0.5
    %v2445 = vmul.f32 %v2443, 0.5
    %v2446 = vtanh.pop %v2444
    %v2447 = vtanh.pop %v2445
    %v2448 = vmul.f32 %v2446, 0.5
    %v2449 = vmul.f32 %v2447, 0.5
    %v2450 = vadd.f32 %v2448, 0.5
    %v2451 = vadd.f32 %v2449, 0.5
    %v2452 = vmul.f32 %v2350, %v2234
    %v2453 = vmul.f32 %v2351, %v2235
    %v2454 = vmul.f32 %v2297, %v2397
    %v2455 = vmul.f32 %v2298, %v2398
    %v2456 = vadd.f32 %v2452, %v2454
    %v2457 = vadd.f32 %v2453, %v2455
    %v2458 = vtanh.pop %v2456
    %v2459 = vtanh.pop %v2457
    %v2460 = vmul.f32 %v2450, %v2458
    %v2461 = vmul.f32 %v2451, %v2459
    %2462 = vst.msk [vmem:[#allocation3 + $0x40] sm:$0xff] %vm540, %v2460
    %2463 = vst.msk [vmem:[#allocation3 + $0x48] sm:$0xff] %vm540, %v2461
    %v2464 = vpack.c.bf16 %v2461, %v2460
    %v2465 = vld [vmem:[#allocation2 + $0x140] sm:$0xff]
    %v2466 = vld [vmem:[#allocation2 + $0x160] sm:$0xff]
    %v2468 = vsel %vm540, %v2464, 0
    %2470 = vmatprep.subr.bf16.mxu0 0
    %2471 = vmatpush1.bf16.msra.mxu0 %v1277
    %2472 = vmatprep.subr.bf16.mxu0 0
    %2473 = vmatpush1.bf16.msra.mxu0 %v1278
    %2474 = vmatprep.subr.bf16.mxu0 0
    %2475 = vmatpush1.bf16.msra.mxu0 %v1279
    %2476 = vmatprep.subr.bf16.mxu0 0
    %2477 = vmatpush1.bf16.msra.mxu0 %v1280
    %2478 = vmatprep.subr.bf16.mxu0 0
    %2479 = vmatpush1.bf16.msra.mxu0 0
    %2480 = vmatprep.subr.bf16.mxu0 0
    %2481 = vmatpush1.bf16.msra.mxu0 0
    %2482 = vmatprep.subr.bf16.mxu0 0
    %2483 = vmatpush1.bf16.msra.mxu0 0
    %2484 = vmatprep.subr.bf16.mxu0 0
    %2485 = vmatpush1.bf16.msra.mxu0 0
    %2486 = vmatprep.subr.bf16.mxu0 0
    %2487 = vmatpush1.bf16.msra.mxu0 0
    %2488 = vmatprep.subr.bf16.mxu0 0
    %2489 = vmatpush1.bf16.msra.mxu0 0
    %2490 = vmatprep.subr.bf16.mxu0 0
    %2491 = vmatpush1.bf16.msra.mxu0 0
    %2492 = vmatprep.subr.bf16.mxu0 0
    %2493 = vmatpush1.bf16.msra.mxu0 0
    %2494 = vmatprep.subr.bf16.mxu0 0
    %2495 = vmatpush1.bf16.msra.mxu0 0
    %2496 = vmatprep.subr.bf16.mxu0 0
    %2497 = vmatpush1.bf16.msra.mxu0 0
    %2498 = vmatprep.subr.bf16.mxu0 0
    %2499 = vmatpush1.bf16.msra.mxu0 0
    %2500 = vmatprep.subr.bf16.mxu0 0
    %2501 = vmatpush1.bf16.msra.mxu0 0
    %2502 = vmatprep.mubr.bf16.mxu0 0
    %2503 = vmatmul.mubr.bf16.gmra.mrb[0].mxu0 %v2468
    %v2504 = vpop.f32.mrb[0].mxu0
    %v2505 = vadd.f32 0.0, %v2504
    %v2506 = vpop.f32.mrb[0].mxu0
    %v2507 = vpop.f32.mrb[0].mxu0
    %v2508 = vadd.f32 0.0, %v2507
    %v2509 = vpop.f32.mrb[0].mxu0
    %2510 = vdwg.mxu0
    %v2511 = vadd.f32 %v2465, %v2505
    %v2512 = vadd.f32 %v2466, %v2508
    %v2513 = vmul.f32 %v2511, 0.5
    %v2514 = vmul.f32 %v2512, 0.5
    %v2515 = vtanh.pop %v2513
    %v2516 = vtanh.pop %v2514
    %v2517 = vmul.f32 %v2515, 0.5
    %v2518 = vmul.f32 %v2516, 0.5
    %v2519 = vadd.f32 %v2517, 0.5
    %v2520 = vadd.f32 %v2518, 0.5
    %v2521 = vld [vmem:[#allocation2 + $0x148] sm:$0xff]
    %v2522 = vld [vmem:[#allocation2 + $0x168] sm:$0xff]
    %2523 = vmatprep.subr.bf16.mxu0 0
    %2524 = vmatpush1.bf16.msra.mxu0 %v1357
    %2525 = vmatprep.subr.bf16.mxu0 0
    %2526 = vmatpush1.bf16.msra.mxu0 %v1358
    %2527 = vmatprep.subr.bf16.mxu0 0
    %2528 = vmatpush1.bf16.msra.mxu0 %v1359
    %2529 = vmatprep.subr.bf16.mxu0 0
    %2530 = vmatpush1.bf16.msra.mxu0 %v1360
    %2531 = vmatprep.subr.bf16.mxu0 0
    %2532 = vmatpush1.bf16.msra.mxu0 0
    %2533 = vmatprep.subr.bf16.mxu0 0
    %2534 = vmatpush1.bf16.msra.mxu0 0
    %2535 = vmatprep.subr.bf16.mxu0 0
    %2536 = vmatpush1.bf16.msra.mxu0 0
    %2537 = vmatprep.subr.bf16.mxu0 0
    %2538 = vmatpush1.bf16.msra.mxu0 0
    %2539 = vmatprep.subr.bf16.mxu0 0
    %2540 = vmatpush1.bf16.msra.mxu0 0
    %2541 = vmatprep.subr.bf16.mxu0 0
    %2542 = vmatpush1.bf16.msra.mxu0 0
    %2543 = vmatprep.subr.bf16.mxu0 0
    %2544 = vmatpush1.bf16.msra.mxu0 0
    %2545 = vmatprep.subr.bf16.mxu0 0
    %2546 = vmatpush1.bf16.msra.mxu0 0
    %2547 = vmatprep.subr.bf16.mxu0 0
    %2548 = vmatpush1.bf16.msra.mxu0 0
    %2549 = vmatprep.subr.bf16.mxu0 0
    %2550 = vmatpush1.bf16.msra.mxu0 0
    %2551 = vmatprep.subr.bf16.mxu0 0
    %2552 = vmatpush1.bf16.msra.mxu0 0
    %2553 = vmatprep.subr.bf16.mxu0 0
    %2554 = vmatpush1.bf16.msra.mxu0 0
    %2555 = vmatprep.mubr.bf16.mxu0 0
    %2556 = vmatmul.mubr.bf16.gmra.mrb[0].mxu0 %v2468
    %v2557 = vpop.f32.mrb[0].mxu0
    %v2558 = vadd.f32 0.0, %v2557
    %v2559 = vpop.f32.mrb[0].mxu0
    %v2560 = vpop.f32.mrb[0].mxu0
    %v2561 = vadd.f32 0.0, %v2560
    %v2562 = vpop.f32.mrb[0].mxu0
    %2563 = vdwg.mxu0
    %v2564 = vadd.f32 %v2521, %v2558
    %v2565 = vadd.f32 %v2522, %v2561
    %v2566 = vmul.f32 %v2564, 0.5
    %v2567 = vmul.f32 %v2565, 0.5
    %v2568 = vtanh.pop %v2566
    %v2569 = vtanh.pop %v2567
    %v2570 = vmul.f32 %v2568, 0.5
    %v2571 = vmul.f32 %v2569, 0.5
    %v2572 = vadd.f32 %v2570, 0.5
    %v2573 = vadd.f32 %v2571, 0.5
    %v2574 = vld [vmem:[#allocation2 + $0x150] sm:$0xff]
    %v2575 = vld [vmem:[#allocation2 + $0x170] sm:$0xff]
    %2576 = vmatprep.subr.bf16.mxu0 0
    %2577 = vmatpush1.bf16.msra.mxu0 %v1434
    %2578 = vmatprep.subr.bf16.mxu0 0
    %2579 = vmatpush1.bf16.msra.mxu0 %v1435
    %2580 = vmatprep.subr.bf16.mxu0 0
    %2581 = vmatpush1.bf16.msra.mxu0 %v1436
    %2582 = vmatprep.subr.bf16.mxu0 0
    %2583 = vmatpush1.bf16.msra.mxu0 %v1437
    %2584 = vmatprep.subr.bf16.mxu0 0
    %2585 = vmatpush1.bf16.msra.mxu0 0
    %2586 = vmatprep.subr.bf16.mxu0 0
    %2587 = vmatpush1.bf16.msra.mxu0 0
    %2588 = vmatprep.subr.bf16.mxu0 0
    %2589 = vmatpush1.bf16.msra.mxu0 0
    %2590 = vmatprep.subr.bf16.mxu0 0
    %2591 = vmatpush1.bf16.msra.mxu0 0
    %2592 = vmatprep.subr.bf16.mxu0 0
    %2593 = vmatpush1.bf16.msra.mxu0 0
    %2594 = vmatprep.subr.bf16.mxu0 0
    %2595 = vmatpush1.bf16.msra.mxu0 0
    %2596 = vmatprep.subr.bf16.mxu0 0
    %2597 = vmatpush1.bf16.msra.mxu0 0
    %2598 = vmatprep.subr.bf16.mxu0 0
    %2599 = vmatpush1.bf16.msra.mxu0 0
    %2600 = vmatprep.subr.bf16.mxu0 0
    %2601 = vmatpush1.bf16.msra.mxu0 0
    %2602 = vmatprep.subr.bf16.mxu0 0
    %2603 = vmatpush1.bf16.msra.mxu0 0
    %2604 = vmatprep.subr.bf16.mxu0 0
    %2605 = vmatpush1.bf16.msra.mxu0 0
    %2606 = vmatprep.subr.bf16.mxu0 0
    %2607 = vmatpush1.bf16.msra.mxu0 0
    %2608 = vmatprep.mubr.bf16.mxu0 0
    %2609 = vmatmul.mubr.bf16.gmra.mrb[0].mxu0 %v2468
    %v2610 = vpop.f32.mrb[0].mxu0
    %v2611 = vadd.f32 0.0, %v2610
    %v2612 = vpop.f32.mrb[0].mxu0
    %v2613 = vpop.f32.mrb[0].mxu0
    %v2614 = vadd.f32 0.0, %v2613
    %v2615 = vpop.f32.mrb[0].mxu0
    %2616 = vdwg.mxu0
    %v2617 = vadd.f32 %v2574, %v2611
    %v2618 = vadd.f32 %v2575, %v2614
    %v2619 = vtanh.pop %v2617
    %v2620 = vtanh.pop %v2618
    %v2621 = vld [vmem:[#allocation2 + $0x158] sm:$0xff]
    %v2622 = vld [vmem:[#allocation2 + $0x178] sm:$0xff]
    %2623 = vmatprep.subr.bf16.mxu0 0
    %2624 = vmatpush1.bf16.msra.mxu0 %v1505
    %2625 = vmatprep.subr.bf16.mxu0 0
    %2626 = vmatpush1.bf16.msra.mxu0 %v1506
    %2627 = vmatprep.subr.bf16.mxu0 0
    %2628 = vmatpush1.bf16.msra.mxu0 %v1507
    %2629 = vmatprep.subr.bf16.mxu0 0
    %2630 = vmatpush1.bf16.msra.mxu0 %v1508
    %2631 = vmatprep.subr.bf16.mxu0 0
    %2632 = vmatpush1.bf16.msra.mxu0 0
    %2633 = vmatprep.subr.bf16.mxu0 0
    %2634 = vmatpush1.bf16.msra.mxu0 0
    %2635 = vmatprep.subr.bf16.mxu0 0
    %2636 = vmatpush1.bf16.msra.mxu0 0
    %2637 = vmatprep.subr.bf16.mxu0 0
    %2638 = vmatpush1.bf16.msra.mxu0 0
    %2639 = vmatprep.subr.bf16.mxu0 0
    %2640 = vmatpush1.bf16.msra.mxu0 0
    %2641 = vmatprep.subr.bf16.mxu0 0
    %2642 = vmatpush1.bf16.msra.mxu0 0
    %2643 = vmatprep.subr.bf16.mxu0 0
    %2644 = vmatpush1.bf16.msra.mxu0 0
    %2645 = vmatprep.subr.bf16.mxu0 0
    %2646 = vmatpush1.bf16.msra.mxu0 0
    %2647 = vmatprep.subr.bf16.mxu0 0
    %2648 = vmatpush1.bf16.msra.mxu0 0
    %2649 = vmatprep.subr.bf16.mxu0 0
    %2650 = vmatpush1.bf16.msra.mxu0 0
    %2651 = vmatprep.subr.bf16.mxu0 0
    %2652 = vmatpush1.bf16.msra.mxu0 0
    %2653 = vmatprep.subr.bf16.mxu0 0
    %2654 = vmatpush1.bf16.msra.mxu0 0
    %2655 = vmatprep.mubr.bf16.mxu0 0
    %2656 = vmatmul.mubr.bf16.gmra.mrb[0].mxu0 %v2468
    %v2657 = vpop.f32.mrb[0].mxu0
    %v2658 = vadd.f32 0.0, %v2657
    %v2659 = vpop.f32.mrb[0].mxu0
    %v2660 = vpop.f32.mrb[0].mxu0
    %v2661 = vadd.f32 0.0, %v2660
    %v2662 = vpop.f32.mrb[0].mxu0
    %2663 = vdwg.mxu0
    %v2664 = vadd.f32 %v2621, %v2658
    %v2665 = vadd.f32 %v2622, %v2661
    %v2666 = vmul.f32 %v2664, 0.5
    %v2667 = vmul.f32 %v2665, 0.5
    %v2668 = vtanh.pop %v2666
    %v2669 = vtanh.pop %v2667
    %v2670 = vmul.f32 %v2668, 0.5
    %v2671 = vmul.f32 %v2669, 0.5
    %v2672 = vadd.f32 %v2670, 0.5
    %v2673 = vadd.f32 %v2671, 0.5
    %v2674 = vmul.f32 %v2572, %v2456
    %v2675 = vmul.f32 %v2573, %v2457
    %v2676 = vmul.f32 %v2519, %v2619
    %v2677 = vmul.f32 %v2520, %v2620
    %v2678 = vadd.f32 %v2674, %v2676
    %v2679 = vadd.f32 %v2675, %v2677
    %v2680 = vtanh.pop %v2678
    %v2681 = vtanh.pop %v2679
    %v2682 = vmul.f32 %v2672, %v2680
    %v2683 = vmul.f32 %v2673, %v2681
    %2684 = vst.msk [vmem:[#allocation3 + $0x50] sm:$0xff] %vm540, %v2682
    %2685 = vst.msk [vmem:[#allocation3 + $0x58] sm:$0xff] %vm540, %v2683
    %v2686 = vpack.c.bf16 %v2683, %v2682
    %v2687 = vld [vmem:[#allocation2 + $0x180] sm:$0xff]
    %v2688 = vld [vmem:[#allocation2 + $0x1a0] sm:$0xff]
    %v2690 = vsel %vm540, %v2686, 0
    %2692 = vmatprep.subr.bf16.mxu0 0
    %2693 = vmatpush1.bf16.msra.mxu0 %v1277
    %2694 = vmatprep.subr.bf16.mxu0 0
    %2695 = vmatpush1.bf16.msra.mxu0 %v1278
    %2696 = vmatprep.subr.bf16.mxu0 0
    %2697 = vmatpush1.bf16.msra.mxu0 %v1279
    %2698 = vmatprep.subr.bf16.mxu0 0
    %2699 = vmatpush1.bf16.msra.mxu0 %v1280
    %2700 = vmatprep.subr.bf16.mxu0 0
    %2701 = vmatpush1.bf16.msra.mxu0 0
    %2702 = vmatprep.subr.bf16.mxu0 0
    %2703 = vmatpush1.bf16.msra.mxu0 0
    %2704 = vmatprep.subr.bf16.mxu0 0
    %2705 = vmatpush1.bf16.msra.mxu0 0
    %2706 = vmatprep.subr.bf16.mxu0 0
    %2707 = vmatpush1.bf16.msra.mxu0 0
    %2708 = vmatprep.subr.bf16.mxu0 0
    %2709 = vmatpush1.bf16.msra.mxu0 0
    %2710 = vmatprep.subr.bf16.mxu0 0
    %2711 = vmatpush1.bf16.msra.mxu0 0
    %2712 = vmatprep.subr.bf16.mxu0 0
    %2713 = vmatpush1.bf16.msra.mxu0 0
    %2714 = vmatprep.subr.bf16.mxu0 0
    %2715 = vmatpush1.bf16.msra.mxu0 0
    %2716 = vmatprep.subr.bf16.mxu0 0
    %2717 = vmatpush1.bf16.msra.mxu0 0
    %2718 = vmatprep.subr.bf16.mxu0 0
    %2719 = vmatpush1.bf16.msra.mxu0 0
    %2720 = vmatprep.subr.bf16.mxu0 0
    %2721 = vmatpush1.bf16.msra.mxu0 0
    %2722 = vmatprep.subr.bf16.mxu0 0
    %2723 = vmatpush1.bf16.msra.mxu0 0
    %2724 = vmatprep.mubr.bf16.mxu0 0
    %2725 = vmatmul.mubr.bf16.gmra.mrb[0].mxu0 %v2690
    %v2726 = vpop.f32.mrb[0].mxu0
    %v2727 = vadd.f32 0.0, %v2726
    %v2728 = vpop.f32.mrb[0].mxu0
    %v2729 = vpop.f32.mrb[0].mxu0
    %v2730 = vadd.f32 0.0, %v2729
    %v2731 = vpop.f32.mrb[0].mxu0
    %2732 = vdwg.mxu0
    %v2733 = vadd.f32 %v2687, %v2727
    %v2734 = vadd.f32 %v2688, %v2730
    %v2735 = vmul.f32 %v2733, 0.5
    %v2736 = vmul.f32 %v2734, 0.5
    %v2737 = vtanh.pop %v2735
    %v2738 = vtanh.pop %v2736
    %v2739 = vmul.f32 %v2737, 0.5
    %v2740 = vmul.f32 %v2738, 0.5
    %v2741 = vadd.f32 %v2739, 0.5
    %v2742 = vadd.f32 %v2740, 0.5
    %v2743 = vld [vmem:[#allocation2 + $0x188] sm:$0xff]
    %v2744 = vld [vmem:[#allocation2 + $0x1a8] sm:$0xff]
    %2745 = vmatprep.subr.bf16.mxu0 0
    %2746 = vmatpush1.bf16.msra.mxu0 %v1357
    %2747 = vmatprep.subr.bf16.mxu0 0
    %2748 = vmatpush1.bf16.msra.mxu0 %v1358
    %2749 = vmatprep.subr.bf16.mxu0 0
    %2750 = vmatpush1.bf16.msra.mxu0 %v1359
    %2751 = vmatprep.subr.bf16.mxu0 0
    %2752 = vmatpush1.bf16.msra.mxu0 %v1360
    %2753 = vmatprep.subr.bf16.mxu0 0
    %2754 = vmatpush1.bf16.msra.mxu0 0
    %2755 = vmatprep.subr.bf16.mxu0 0
    %2756 = vmatpush1.bf16.msra.mxu0 0
    %2757 = vmatprep.subr.bf16.mxu0 0
    %2758 = vmatpush1.bf16.msra.mxu0 0
    %2759 = vmatprep.subr.bf16.mxu0 0
    %2760 = vmatpush1.bf16.msra.mxu0 0
    %2761 = vmatprep.subr.bf16.mxu0 0
    %2762 = vmatpush1.bf16.msra.mxu0 0
    %2763 = vmatprep.subr.bf16.mxu0 0
    %2764 = vmatpush1.bf16.msra.mxu0 0
    %2765 = vmatprep.subr.bf16.mxu0 0
    %2766 = vmatpush1.bf16.msra.mxu0 0
    %2767 = vmatprep.subr.bf16.mxu0 0
    %2768 = vmatpush1.bf16.msra.mxu0 0
    %2769 = vmatprep.subr.bf16.mxu0 0
    %2770 = vmatpush1.bf16.msra.mxu0 0
    %2771 = vmatprep.subr.bf16.mxu0 0
    %2772 = vmatpush1.bf16.msra.mxu0 0
    %2773 = vmatprep.subr.bf16.mxu0 0
    %2774 = vmatpush1.bf16.msra.mxu0 0
    %2775 = vmatprep.subr.bf16.mxu0 0
    %2776 = vmatpush1.bf16.msra.mxu0 0
    %2777 = vmatprep.mubr.bf16.mxu0 0
    %2778 = vmatmul.mubr.bf16.gmra.mrb[0].mxu0 %v2690
    %v2779 = vpop.f32.mrb[0].mxu0
    %v2780 = vadd.f32 0.0, %v2779
    %v2781 = vpop.f32.mrb[0].mxu0
    %v2782 = vpop.f32.mrb[0].mxu0
    %v2783 = vadd.f32 0.0, %v2782
    %v2784 = vpop.f32.mrb[0].mxu0
    %2785 = vdwg.mxu0
    %v2786 = vadd.f32 %v2743, %v2780
    %v2787 = vadd.f32 %v2744, %v2783
    %v2788 = vmul.f32 %v2786, 0.5
    %v2789 = vmul.f32 %v2787, 0.5
    %v2790 = vtanh.pop %v2788
    %v2791 = vtanh.pop %v2789
    %v2792 = vmul.f32 %v2790, 0.5
    %v2793 = vmul.f32 %v2791, 0.5
    %v2794 = vadd.f32 %v2792, 0.5
    %v2795 = vadd.f32 %v2793, 0.5
    %v2796 = vld [vmem:[#allocation2 + $0x190] sm:$0xff]
    %v2797 = vld [vmem:[#allocation2 + $0x1b0] sm:$0xff]
    %2798 = vmatprep.subr.bf16.mxu0 0
    %2799 = vmatpush1.bf16.msra.mxu0 %v1434
    %2800 = vmatprep.subr.bf16.mxu0 0
    %2801 = vmatpush1.bf16.msra.mxu0 %v1435
    %2802 = vmatprep.subr.bf16.mxu0 0
    %2803 = vmatpush1.bf16.msra.mxu0 %v1436
    %2804 = vmatprep.subr.bf16.mxu0 0
    %2805 = vmatpush1.bf16.msra.mxu0 %v1437
    %2806 = vmatprep.subr.bf16.mxu0 0
    %2807 = vmatpush1.bf16.msra.mxu0 0
    %2808 = vmatprep.subr.bf16.mxu0 0
    %2809 = vmatpush1.bf16.msra.mxu0 0
    %2810 = vmatprep.subr.bf16.mxu0 0
    %2811 = vmatpush1.bf16.msra.mxu0 0
    %2812 = vmatprep.subr.bf16.mxu0 0
    %2813 = vmatpush1.bf16.msra.mxu0 0
    %2814 = vmatprep.subr.bf16.mxu0 0
    %2815 = vmatpush1.bf16.msra.mxu0 0
    %2816 = vmatprep.subr.bf16.mxu0 0
    %2817 = vmatpush1.bf16.msra.mxu0 0
    %2818 = vmatprep.subr.bf16.mxu0 0
    %2819 = vmatpush1.bf16.msra.mxu0 0
    %2820 = vmatprep.subr.bf16.mxu0 0
    %2821 = vmatpush1.bf16.msra.mxu0 0
    %2822 = vmatprep.subr.bf16.mxu0 0
    %2823 = vmatpush1.bf16.msra.mxu0 0
    %2824 = vmatprep.subr.bf16.mxu0 0
    %2825 = vmatpush1.bf16.msra.mxu0 0
    %2826 = vmatprep.subr.bf16.mxu0 0
    %2827 = vmatpush1.bf16.msra.mxu0 0
    %2828 = vmatprep.subr.bf16.mxu0 0
    %2829 = vmatpush1.bf16.msra.mxu0 0
    %2830 = vmatprep.mubr.bf16.mxu0 0
    %2831 = vmatmul.mubr.bf16.gmra.mrb[0].mxu0 %v2690
    %v2832 = vpop.f32.mrb[0].mxu0
    %v2833 = vadd.f32 0.0, %v2832
    %v2834 = vpop.f32.mrb[0].mxu0
    %v2835 = vpop.f32.mrb[0].mxu0
    %v2836 = vadd.f32 0.0, %v2835
    %v2837 = vpop.f32.mrb[0].mxu0
    %2838 = vdwg.mxu0
    %v2839 = vadd.f32 %v2796, %v2833
    %v2840 = vadd.f32 %v2797, %v2836
    %v2841 = vtanh.pop %v2839
    %v2842 = vtanh.pop %v2840
    %v2843 = vld [vmem:[#allocation2 + $0x198] sm:$0xff]
    %v2844 = vld [vmem:[#allocation2 + $0x1b8] sm:$0xff]
    %2845 = vmatprep.subr.bf16.mxu0 0
    %2846 = vmatpush1.bf16.msra.mxu0 %v1505
    %2847 = vmatprep.subr.bf16.mxu0 0
    %2848 = vmatpush1.bf16.msra.mxu0 %v1506
    %2849 = vmatprep.subr.bf16.mxu0 0
    %2850 = vmatpush1.bf16.msra.mxu0 %v1507
    %2851 = vmatprep.subr.bf16.mxu0 0
    %2852 = vmatpush1.bf16.msra.mxu0 %v1508
    %2853 = vmatprep.subr.bf16.mxu0 0
    %2854 = vmatpush1.bf16.msra.mxu0 0
    %2855 = vmatprep.subr.bf16.mxu0 0
    %2856 = vmatpush1.bf16.msra.mxu0 0
    %2857 = vmatprep.subr.bf16.mxu0 0
    %2858 = vmatpush1.bf16.msra.mxu0 0
    %2859 = vmatprep.subr.bf16.mxu0 0
    %2860 = vmatpush1.bf16.msra.mxu0 0
    %2861 = vmatprep.subr.bf16.mxu0 0
    %2862 = vmatpush1.bf16.msra.mxu0 0
    %2863 = vmatprep.subr.bf16.mxu0 0
    %2864 = vmatpush1.bf16.msra.mxu0 0
    %2865 = vmatprep.subr.bf16.mxu0 0
    %2866 = vmatpush1.bf16.msra.mxu0 0
    %2867 = vmatprep.subr.bf16.mxu0 0
    %2868 = vmatpush1.bf16.msra.mxu0 0
    %2869 = vmatprep.subr.bf16.mxu0 0
    %2870 = vmatpush1.bf16.msra.mxu0 0
    %2871 = vmatprep.subr.bf16.mxu0 0
    %2872 = vmatpush1.bf16.msra.mxu0 0
    %2873 = vmatprep.subr.bf16.mxu0 0
    %2874 = vmatpush1.bf16.msra.mxu0 0
    %2875 = vmatprep.subr.bf16.mxu0 0
    %2876 = vmatpush1.bf16.msra.mxu0 0
    %2877 = vmatprep.mubr.bf16.mxu0 0
    %2878 = vmatmul.mubr.bf16.gmra.mrb[0].mxu0 %v2690
    %v2879 = vpop.f32.mrb[0].mxu0
    %v2880 = vadd.f32 0.0, %v2879
    %v2881 = vpop.f32.mrb[0].mxu0
    %v2882 = vpop.f32.mrb[0].mxu0
    %v2883 = vadd.f32 0.0, %v2882
    %v2884 = vpop.f32.mrb[0].mxu0
    %2885 = vdwg.mxu0
    %v2886 = vadd.f32 %v2843, %v2880
    %v2887 = vadd.f32 %v2844, %v2883
    %v2888 = vmul.f32 %v2886, 0.5
    %v2889 = vmul.f32 %v2887, 0.5
    %v2890 = vtanh.pop %v2888
    %v2891 = vtanh.pop %v2889
    %v2892 = vmul.f32 %v2890, 0.5
    %v2893 = vmul.f32 %v2891, 0.5
    %v2894 = vadd.f32 %v2892, 0.5
    %v2895 = vadd.f32 %v2893, 0.5
    %v2896 = vmul.f32 %v2794, %v2678
    %v2897 = vmul.f32 %v2795, %v2679
    %v2898 = vmul.f32 %v2741, %v2841
    %v2899 = vmul.f32 %v2742, %v2842
    %v2900 = vadd.f32 %v2896, %v2898
    %v2901 = vadd.f32 %v2897, %v2899
    %v2902 = vtanh.pop %v2900
    %v2903 = vtanh.pop %v2901
    %v2904 = vmul.f32 %v2894, %v2902
    %v2905 = vmul.f32 %v2895, %v2903
    %2906 = vst.msk [vmem:[#allocation3 + $0x60] sm:$0xff] %vm540, %v2904
    %2907 = vst.msk [vmem:[#allocation3 + $0x68] sm:$0xff] %vm540, %v2905
    %v2908 = vpack.c.bf16 %v2905, %v2904
    %v2909 = vld [vmem:[#allocation2 + $0x1c0] sm:$0xff]
    %v2910 = vld [vmem:[#allocation2 + $0x1e0] sm:$0xff]
    %v2912 = vsel %vm540, %v2908, 0
    %2914 = vmatprep.subr.bf16.mxu0 0
    %2915 = vmatpush1.bf16.msra.mxu0 %v1277
    %2916 = vmatprep.subr.bf16.mxu0 0
    %2917 = vmatpush1.bf16.msra.mxu0 %v1278
    %2918 = vmatprep.subr.bf16.mxu0 0
    %2919 = vmatpush1.bf16.msra.mxu0 %v1279
    %2920 = vmatprep.subr.bf16.mxu0 0
    %2921 = vmatpush1.bf16.msra.mxu0 %v1280
    %2922 = vmatprep.subr.bf16.mxu0 0
    %2923 = vmatpush1.bf16.msra.mxu0 0
    %2924 = vmatprep.subr.bf16.mxu0 0
    %2925 = vmatpush1.bf16.msra.mxu0 0
    %2926 = vmatprep.subr.bf16.mxu0 0
    %2927 = vmatpush1.bf16.msra.mxu0 0
    %2928 = vmatprep.subr.bf16.mxu0 0
    %2929 = vmatpush1.bf16.msra.mxu0 0
    %2930 = vmatprep.subr.bf16.mxu0 0
    %2931 = vmatpush1.bf16.msra.mxu0 0
    %2932 = vmatprep.subr.bf16.mxu0 0
    %2933 = vmatpush1.bf16.msra.mxu0 0
    %2934 = vmatprep.subr.bf16.mxu0 0
    %2935 = vmatpush1.bf16.msra.mxu0 0
    %2936 = vmatprep.subr.bf16.mxu0 0
    %2937 = vmatpush1.bf16.msra.mxu0 0
    %2938 = vmatprep.subr.bf16.mxu0 0
    %2939 = vmatpush1.bf16.msra.mxu0 0
    %2940 = vmatprep.subr.bf16.mxu0 0
    %2941 = vmatpush1.bf16.msra.mxu0 0
    %2942 = vmatprep.subr.bf16.mxu0 0
    %2943 = vmatpush1.bf16.msra.mxu0 0
    %2944 = vmatprep.subr.bf16.mxu0 0
    %2945 = vmatpush1.bf16.msra.mxu0 0
    %2946 = vmatprep.mubr.bf16.mxu0 0
    %2947 = vmatmul.mubr.bf16.gmra.mrb[0].mxu0 %v2912
    %v2948 = vpop.f32.mrb[0].mxu0
    %v2949 = vadd.f32 0.0, %v2948
    %v2950 = vpop.f32.mrb[0].mxu0
    %v2951 = vpop.f32.mrb[0].mxu0
    %v2952 = vadd.f32 0.0, %v2951
    %v2953 = vpop.f32.mrb[0].mxu0
    %2954 = vdwg.mxu0
    %v2955 = vadd.f32 %v2909, %v2949
    %v2956 = vadd.f32 %v2910, %v2952
    %v2957 = vmul.f32 %v2955, 0.5
    %v2958 = vmul.f32 %v2956, 0.5
    %v2959 = vtanh.pop %v2957
    %v2960 = vtanh.pop %v2958
    %v2961 = vmul.f32 %v2959, 0.5
    %v2962 = vmul.f32 %v2960, 0.5
    %v2963 = vadd.f32 %v2961, 0.5
    %v2964 = vadd.f32 %v2962, 0.5
    %v2965 = vld [vmem:[#allocation2 + $0x1c8] sm:$0xff]
    %v2966 = vld [vmem:[#allocation2 + $0x1e8] sm:$0xff]
    %2967 = vmatprep.subr.bf16.mxu0 0
    %2968 = vmatpush1.bf16.msra.mxu0 %v1357
    %2969 = vmatprep.subr.bf16.mxu0 0
    %2970 = vmatpush1.bf16.msra.mxu0 %v1358
    %2971 = vmatprep.subr.bf16.mxu0 0
    %2972 = vmatpush1.bf16.msra.mxu0 %v1359
    %2973 = vmatprep.subr.bf16.mxu0 0
    %2974 = vmatpush1.bf16.msra.mxu0 %v1360
    %2975 = vmatprep.subr.bf16.mxu0 0
    %2976 = vmatpush1.bf16.msra.mxu0 0
    %2977 = vmatprep.subr.bf16.mxu0 0
    %2978 = vmatpush1.bf16.msra.mxu0 0
    %2979 = vmatprep.subr.bf16.mxu0 0
    %2980 = vmatpush1.bf16.msra.mxu0 0
    %2981 = vmatprep.subr.bf16.mxu0 0
    %2982 = vmatpush1.bf16.msra.mxu0 0
    %2983 = vmatprep.subr.bf16.mxu0 0
    %2984 = vmatpush1.bf16.msra.mxu0 0
    %2985 = vmatprep.subr.bf16.mxu0 0
    %2986 = vmatpush1.bf16.msra.mxu0 0
    %2987 = vmatprep.subr.bf16.mxu0 0
    %2988 = vmatpush1.bf16.msra.mxu0 0
    %2989 = vmatprep.subr.bf16.mxu0 0
    %2990 = vmatpush1.bf16.msra.mxu0 0
    %2991 = vmatprep.subr.bf16.mxu0 0
    %2992 = vmatpush1.bf16.msra.mxu0 0
    %2993 = vmatprep.subr.bf16.mxu0 0
    %2994 = vmatpush1.bf16.msra.mxu0 0
    %2995 = vmatprep.subr.bf16.mxu0 0
    %2996 = vmatpush1.bf16.msra.mxu0 0
    %2997 = vmatprep.subr.bf16.mxu0 0
    %2998 = vmatpush1.bf16.msra.mxu0 0
    %2999 = vmatprep.mubr.bf16.mxu0 0
    %3000 = vmatmul.mubr.bf16.gmra.mrb[0].mxu0 %v2912
    %v3001 = vpop.f32.mrb[0].mxu0
    %v3002 = vadd.f32 0.0, %v3001
    %v3003 = vpop.f32.mrb[0].mxu0
    %v3004 = vpop.f32.mrb[0].mxu0
    %v3005 = vadd.f32 0.0, %v3004
    %v3006 = vpop.f32.mrb[0].mxu0
    %3007 = vdwg.mxu0
    %v3008 = vadd.f32 %v2965, %v3002
    %v3009 = vadd.f32 %v2966, %v3005
    %v3010 = vmul.f32 %v3008, 0.5
    %v3011 = vmul.f32 %v3009, 0.5
    %v3012 = vtanh.pop %v3010
    %v3013 = vtanh.pop %v3011
    %v3014 = vmul.f32 %v3012, 0.5
    %v3015 = vmul.f32 %v3013, 0.5
    %v3016 = vadd.f32 %v3014, 0.5
    %v3017 = vadd.f32 %v3015, 0.5
    %v3018 = vld [vmem:[#allocation2 + $0x1d0] sm:$0xff]
    %v3019 = vld [vmem:[#allocation2 + $0x1f0] sm:$0xff]
    %3020 = vmatprep.subr.bf16.mxu0 0
    %3021 = vmatpush1.bf16.msra.mxu0 %v1434
    %3022 = vmatprep.subr.bf16.mxu0 0
    %3023 = vmatpush1.bf16.msra.mxu0 %v1435
    %3024 = vmatprep.subr.bf16.mxu0 0
    %3025 = vmatpush1.bf16.msra.mxu0 %v1436
    %3026 = vmatprep.subr.bf16.mxu0 0
    %3027 = vmatpush1.bf16.msra.mxu0 %v1437
    %3028 = vmatprep.subr.bf16.mxu0 0
    %3029 = vmatpush1.bf16.msra.mxu0 0
    %3030 = vmatprep.subr.bf16.mxu0 0
    %3031 = vmatpush1.bf16.msra.mxu0 0
    %3032 = vmatprep.subr.bf16.mxu0 0
    %3033 = vmatpush1.bf16.msra.mxu0 0
    %3034 = vmatprep.subr.bf16.mxu0 0
    %3035 = vmatpush1.bf16.msra.mxu0 0
    %3036 = vmatprep.subr.bf16.mxu0 0
    %3037 = vmatpush1.bf16.msra.mxu0 0
    %3038 = vmatprep.subr.bf16.mxu0 0
    %3039 = vmatpush1.bf16.msra.mxu0 0
    %3040 = vmatprep.subr.bf16.mxu0 0
    %3041 = vmatpush1.bf16.msra.mxu0 0
    %3042 = vmatprep.subr.bf16.mxu0 0
    %3043 = vmatpush1.bf16.msra.mxu0 0
    %3044 = vmatprep.subr.bf16.mxu0 0
    %3045 = vmatpush1.bf16.msra.mxu0 0
    %3046 = vmatprep.subr.bf16.mxu0 0
    %3047 = vmatpush1.bf16.msra.mxu0 0
    %3048 = vmatprep.subr.bf16.mxu0 0
    %3049 = vmatpush1.bf16.msra.mxu0 0
    %3050 = vmatprep.subr.bf16.mxu0 0
    %3051 = vmatpush1.bf16.msra.mxu0 0
    %3052 = vmatprep.mubr.bf16.mxu0 0
    %3053 = vmatmul.mubr.bf16.gmra.mrb[0].mxu0 %v2912
    %v3054 = vpop.f32.mrb[0].mxu0
    %v3055 = vadd.f32 0.0, %v3054
    %v3056 = vpop.f32.mrb[0].mxu0
    %v3057 = vpop.f32.mrb[0].mxu0
    %v3058 = vadd.f32 0.0, %v3057
    %v3059 = vpop.f32.mrb[0].mxu0
    %3060 = vdwg.mxu0
    %v3061 = vadd.f32 %v3018, %v3055
    %v3062 = vadd.f32 %v3019, %v3058
    %v3063 = vtanh.pop %v3061
    %v3064 = vtanh.pop %v3062
    %v3065 = vld [vmem:[#allocation2 + $0x1d8] sm:$0xff]
    %v3066 = vld [vmem:[#allocation2 + $0x1f8] sm:$0xff]
    %3067 = vmatprep.subr.bf16.mxu0 0
    %3068 = vmatpush1.bf16.msra.mxu0 %v1505
    %3069 = vmatprep.subr.bf16.mxu0 0
    %3070 = vmatpush1.bf16.msra.mxu0 %v1506
    %3071 = vmatprep.subr.bf16.mxu0 0
    %3072 = vmatpush1.bf16.msra.mxu0 %v1507
    %3073 = vmatprep.subr.bf16.mxu0 0
    %3074 = vmatpush1.bf16.msra.mxu0 %v1508
    %3075 = vmatprep.subr.bf16.mxu0 0
    %3076 = vmatpush1.bf16.msra.mxu0 0
    %3077 = vmatprep.subr.bf16.mxu0 0
    %3078 = vmatpush1.bf16.msra.mxu0 0
    %3079 = vmatprep.subr.bf16.mxu0 0
    %3080 = vmatpush1.bf16.msra.mxu0 0
    %3081 = vmatprep.subr.bf16.mxu0 0
    %3082 = vmatpush1.bf16.msra.mxu0 0
    %3083 = vmatprep.subr.bf16.mxu0 0
    %3084 = vmatpush1.bf16.msra.mxu0 0
    %3085 = vmatprep.subr.bf16.mxu0 0
    %3086 = vmatpush1.bf16.msra.mxu0 0
    %3087 = vmatprep.subr.bf16.mxu0 0
    %3088 = vmatpush1.bf16.msra.mxu0 0
    %3089 = vmatprep.subr.bf16.mxu0 0
    %3090 = vmatpush1.bf16.msra.mxu0 0
    %3091 = vmatprep.subr.bf16.mxu0 0
    %3092 = vmatpush1.bf16.msra.mxu0 0
    %3093 = vmatprep.subr.bf16.mxu0 0
    %3094 = vmatpush1.bf16.msra.mxu0 0
    %3095 = vmatprep.subr.bf16.mxu0 0
    %3096 = vmatpush1.bf16.msra.mxu0 0
    %3097 = vmatprep.subr.bf16.mxu0 0
    %3098 = vmatpush1.bf16.msra.mxu0 0
    %3099 = vmatprep.mubr.bf16.mxu0 0
    %3100 = vmatmul.mubr.bf16.gmra.mrb[0].mxu0 %v2912
    %v3101 = vpop.f32.mrb[0].mxu0
    %v3102 = vadd.f32 0.0, %v3101
    %v3103 = vpop.f32.mrb[0].mxu0
    %v3104 = vpop.f32.mrb[0].mxu0
    %v3105 = vadd.f32 0.0, %v3104
    %v3106 = vpop.f32.mrb[0].mxu0
    %3107 = vdwg.mxu0
    %v3108 = vadd.f32 %v3065, %v3102
    %v3109 = vadd.f32 %v3066, %v3105
    %v3110 = vmul.f32 %v3108, 0.5
    %v3111 = vmul.f32 %v3109, 0.5
    %v3112 = vtanh.pop %v3110
    %v3113 = vtanh.pop %v3111
    %v3114 = vmul.f32 %v3112, 0.5
    %v3115 = vmul.f32 %v3113, 0.5
    %v3116 = vadd.f32 %v3114, 0.5
    %v3117 = vadd.f32 %v3115, 0.5
    %v3118 = vmul.f32 %v3016, %v2900
    %v3119 = vmul.f32 %v3017, %v2901
    %v3120 = vmul.f32 %v2963, %v3063
    %v3121 = vmul.f32 %v2964, %v3064
    %v3122 = vadd.f32 %v3118, %v3120
    %v3123 = vadd.f32 %v3119, %v3121
    %v3124 = vtanh.pop %v3122
    %v3125 = vtanh.pop %v3123
    %v3126 = vmul.f32 %v3116, %v3124
    %v3127 = vmul.f32 %v3117, %v3125
    %3128 = vst.msk [vmem:[#allocation3 + $0x70] sm:$0xff] %vm540, %v3126
    %3129 = vst.msk [vmem:[#allocation3 + $0x78] sm:$0xff] %vm540, %v3127
    %v3130 = vpack.c.bf16 %v3127, %v3126
    %v3131 = vld [vmem:[#allocation2 + $0x200] sm:$0xff]
    %v3132 = vld [vmem:[#allocation2 + $0x220] sm:$0xff]
    %v3134 = vsel %vm540, %v3130, 0
    %3136 = vmatprep.subr.bf16.mxu0 0
    %3137 = vmatpush1.bf16.msra.mxu0 %v1277
    %3138 = vmatprep.subr.bf16.mxu0 0
    %3139 = vmatpush1.bf16.msra.mxu0 %v1278
    %3140 = vmatprep.subr.bf16.mxu0 0
    %3141 = vmatpush1.bf16.msra.mxu0 %v1279
    %3142 = vmatprep.subr.bf16.mxu0 0
    %3143 = vmatpush1.bf16.msra.mxu0 %v1280
    %3144 = vmatprep.subr.bf16.mxu0 0
    %3145 = vmatpush1.bf16.msra.mxu0 0
    %3146 = vmatprep.subr.bf16.mxu0 0
    %3147 = vmatpush1.bf16.msra.mxu0 0
    %3148 = vmatprep.subr.bf16.mxu0 0
    %3149 = vmatpush1.bf16.msra.mxu0 0
    %3150 = vmatprep.subr.bf16.mxu0 0
    %3151 = vmatpush1.bf16.msra.mxu0 0
    %3152 = vmatprep.subr.bf16.mxu0 0
    %3153 = vmatpush1.bf16.msra.mxu0 0
    %3154 = vmatprep.subr.bf16.mxu0 0
    %3155 = vmatpush1.bf16.msra.mxu0 0
    %3156 = vmatprep.subr.bf16.mxu0 0
    %3157 = vmatpush1.bf16.msra.mxu0 0
    %3158 = vmatprep.subr.bf16.mxu0 0
    %3159 = vmatpush1.bf16.msra.mxu0 0
    %3160 = vmatprep.subr.bf16.mxu0 0
    %3161 = vmatpush1.bf16.msra.mxu0 0
    %3162 = vmatprep.subr.bf16.mxu0 0
    %3163 = vmatpush1.bf16.msra.mxu0 0
    %3164 = vmatprep.subr.bf16.mxu0 0
    %3165 = vmatpush1.bf16.msra.mxu0 0
    %3166 = vmatprep.subr.bf16.mxu0 0
    %3167 = vmatpush1.bf16.msra.mxu0 0
    %3168 = vmatprep.mubr.bf16.mxu0 0
    %3169 = vmatmul.mubr.bf16.gmra.mrb[0].mxu0 %v3134
    %v3170 = vpop.f32.mrb[0].mxu0
    %v3171 = vadd.f32 0.0, %v3170
    %v3172 = vpop.f32.mrb[0].mxu0
    %v3173 = vpop.f32.mrb[0].mxu0
    %v3174 = vadd.f32 0.0, %v3173
    %v3175 = vpop.f32.mrb[0].mxu0
    %3176 = vdwg.mxu0
    %v3177 = vadd.f32 %v3131, %v3171
    %v3178 = vadd.f32 %v3132, %v3174
    %v3179 = vmul.f32 %v3177, 0.5
    %v3180 = vmul.f32 %v3178, 0.5
    %v3181 = vtanh.pop %v3179
    %v3182 = vtanh.pop %v3180
    %v3183 = vmul.f32 %v3181, 0.5
    %v3184 = vmul.f32 %v3182, 0.5
    %v3185 = vadd.f32 %v3183, 0.5
    %v3186 = vadd.f32 %v3184, 0.5
    %v3187 = vld [vmem:[#allocation2 + $0x208] sm:$0xff]
    %v3188 = vld [vmem:[#allocation2 + $0x228] sm:$0xff]
    %3189 = vmatprep.subr.bf16.mxu0 0
    %3190 = vmatpush1.bf16.msra.mxu0 %v1357
    %3191 = vmatprep.subr.bf16.mxu0 0
    %3192 = vmatpush1.bf16.msra.mxu0 %v1358
    %3193 = vmatprep.subr.bf16.mxu0 0
    %3194 = vmatpush1.bf16.msra.mxu0 %v1359
    %3195 = vmatprep.subr.bf16.mxu0 0
    %3196 = vmatpush1.bf16.msra.mxu0 %v1360
    %3197 = vmatprep.subr.bf16.mxu0 0
    %3198 = vmatpush1.bf16.msra.mxu0 0
    %3199 = vmatprep.subr.bf16.mxu0 0
    %3200 = vmatpush1.bf16.msra.mxu0 0
    %3201 = vmatprep.subr.bf16.mxu0 0
    %3202 = vmatpush1.bf16.msra.mxu0 0
    %3203 = vmatprep.subr.bf16.mxu0 0
    %3204 = vmatpush1.bf16.msra.mxu0 0
    %3205 = vmatprep.subr.bf16.mxu0 0
    %3206 = vmatpush1.bf16.msra.mxu0 0
    %3207 = vmatprep.subr.bf16.mxu0 0
    %3208 = vmatpush1.bf16.msra.mxu0 0
    %3209 = vmatprep.subr.bf16.mxu0 0
    %3210 = vmatpush1.bf16.msra.mxu0 0
    %3211 = vmatprep.subr.bf16.mxu0 0
    %3212 = vmatpush1.bf16.msra.mxu0 0
    %3213 = vmatprep.subr.bf16.mxu0 0
    %3214 = vmatpush1.bf16.msra.mxu0 0
    %3215 = vmatprep.subr.bf16.mxu0 0
    %3216 = vmatpush1.bf16.msra.mxu0 0
    %3217 = vmatprep.subr.bf16.mxu0 0
    %3218 = vmatpush1.bf16.msra.mxu0 0
    %3219 = vmatprep.subr.bf16.mxu0 0
    %3220 = vmatpush1.bf16.msra.mxu0 0
    %3221 = vmatprep.mubr.bf16.mxu0 0
    %3222 = vmatmul.mubr.bf16.gmra.mrb[0].mxu0 %v3134
    %v3223 = vpop.f32.mrb[0].mxu0
    %v3224 = vadd.f32 0.0, %v3223
    %v3225 = vpop.f32.mrb[0].mxu0
    %v3226 = vpop.f32.mrb[0].mxu0
    %v3227 = vadd.f32 0.0, %v3226
    %v3228 = vpop.f32.mrb[0].mxu0
    %3229 = vdwg.mxu0
    %v3230 = vadd.f32 %v3187, %v3224
    %v3231 = vadd.f32 %v3188, %v3227
    %v3232 = vmul.f32 %v3230, 0.5
    %v3233 = vmul.f32 %v3231, 0.5
    %v3234 = vtanh.pop %v3232
    %v3235 = vtanh.pop %v3233
    %v3236 = vmul.f32 %v3234, 0.5
    %v3237 = vmul.f32 %v3235, 0.5
    %v3238 = vadd.f32 %v3236, 0.5
    %v3239 = vadd.f32 %v3237, 0.5
    %v3240 = vld [vmem:[#allocation2 + $0x210] sm:$0xff]
    %v3241 = vld [vmem:[#allocation2 + $0x230] sm:$0xff]
    %3242 = vmatprep.subr.bf16.mxu0 0
    %3243 = vmatpush1.bf16.msra.mxu0 %v1434
    %3244 = vmatprep.subr.bf16.mxu0 0
    %3245 = vmatpush1.bf16.msra.mxu0 %v1435
    %3246 = vmatprep.subr.bf16.mxu0 0
    %3247 = vmatpush1.bf16.msra.mxu0 %v1436
    %3248 = vmatprep.subr.bf16.mxu0 0
    %3249 = vmatpush1.bf16.msra.mxu0 %v1437
    %3250 = vmatprep.subr.bf16.mxu0 0
    %3251 = vmatpush1.bf16.msra.mxu0 0
    %3252 = vmatprep.subr.bf16.mxu0 0
    %3253 = vmatpush1.bf16.msra.mxu0 0
    %3254 = vmatprep.subr.bf16.mxu0 0
    %3255 = vmatpush1.bf16.msra.mxu0 0
    %3256 = vmatprep.subr.bf16.mxu0 0
    %3257 = vmatpush1.bf16.msra.mxu0 0
    %3258 = vmatprep.subr.bf16.mxu0 0
    %3259 = vmatpush1.bf16.msra.mxu0 0
    %3260 = vmatprep.subr.bf16.mxu0 0
    %3261 = vmatpush1.bf16.msra.mxu0 0
    %3262 = vmatprep.subr.bf16.mxu0 0
    %3263 = vmatpush1.bf16.msra.mxu0 0
    %3264 = vmatprep.subr.bf16.mxu0 0
    %3265 = vmatpush1.bf16.msra.mxu0 0
    %3266 = vmatprep.subr.bf16.mxu0 0
    %3267 = vmatpush1.bf16.msra.mxu0 0
    %3268 = vmatprep.subr.bf16.mxu0 0
    %3269 = vmatpush1.bf16.msra.mxu0 0
    %3270 = vmatprep.subr.bf16.mxu0 0
    %3271 = vmatpush1.bf16.msra.mxu0 0
    %3272 = vmatprep.subr.bf16.mxu0 0
    %3273 = vmatpush1.bf16.msra.mxu0 0
    %3274 = vmatprep.mubr.bf16.mxu0 0
    %3275 = vmatmul.mubr.bf16.gmra.mrb[0].mxu0 %v3134
    %v3276 = vpop.f32.mrb[0].mxu0
    %v3277 = vadd.f32 0.0, %v3276
    %v3278 = vpop.f32.mrb[0].mxu0
    %v3279 = vpop.f32.mrb[0].mxu0
    %v3280 = vadd.f32 0.0, %v3279
    %v3281 = vpop.f32.mrb[0].mxu0
    %3282 = vdwg.mxu0
    %v3283 = vadd.f32 %v3240, %v3277
    %v3284 = vadd.f32 %v3241, %v3280
    %v3285 = vtanh.pop %v3283
    %v3286 = vtanh.pop %v3284
    %v3287 = vld [vmem:[#allocation2 + $0x218] sm:$0xff]
    %v3288 = vld [vmem:[#allocation2 + $0x238] sm:$0xff]
    %3289 = vmatprep.subr.bf16.mxu0 0
    %3290 = vmatpush1.bf16.msra.mxu0 %v1505
    %3291 = vmatprep.subr.bf16.mxu0 0
    %3292 = vmatpush1.bf16.msra.mxu0 %v1506
    %3293 = vmatprep.subr.bf16.mxu0 0
    %3294 = vmatpush1.bf16.msra.mxu0 %v1507
    %3295 = vmatprep.subr.bf16.mxu0 0
    %3296 = vmatpush1.bf16.msra.mxu0 %v1508
    %3297 = vmatprep.subr.bf16.mxu0 0
    %3298 = vmatpush1.bf16.msra.mxu0 0
    %3299 = vmatprep.subr.bf16.mxu0 0
    %3300 = vmatpush1.bf16.msra.mxu0 0
    %3301 = vmatprep.subr.bf16.mxu0 0
    %3302 = vmatpush1.bf16.msra.mxu0 0
    %3303 = vmatprep.subr.bf16.mxu0 0
    %3304 = vmatpush1.bf16.msra.mxu0 0
    %3305 = vmatprep.subr.bf16.mxu0 0
    %3306 = vmatpush1.bf16.msra.mxu0 0
    %3307 = vmatprep.subr.bf16.mxu0 0
    %3308 = vmatpush1.bf16.msra.mxu0 0
    %3309 = vmatprep.subr.bf16.mxu0 0
    %3310 = vmatpush1.bf16.msra.mxu0 0
    %3311 = vmatprep.subr.bf16.mxu0 0
    %3312 = vmatpush1.bf16.msra.mxu0 0
    %3313 = vmatprep.subr.bf16.mxu0 0
    %3314 = vmatpush1.bf16.msra.mxu0 0
    %3315 = vmatprep.subr.bf16.mxu0 0
    %3316 = vmatpush1.bf16.msra.mxu0 0
    %3317 = vmatprep.subr.bf16.mxu0 0
    %3318 = vmatpush1.bf16.msra.mxu0 0
    %3319 = vmatprep.subr.bf16.mxu0 0
    %3320 = vmatpush1.bf16.msra.mxu0 0
    %3321 = vmatprep.mubr.bf16.mxu0 0
    %3322 = vmatmul.mubr.bf16.gmra.mrb[0].mxu0 %v3134
    %v3323 = vpop.f32.mrb[0].mxu0
    %v3324 = vadd.f32 0.0, %v3323
    %v3325 = vpop.f32.mrb[0].mxu0
    %v3326 = vpop.f32.mrb[0].mxu0
    %v3327 = vadd.f32 0.0, %v3326
    %v3328 = vpop.f32.mrb[0].mxu0
    %3329 = vdwg.mxu0
    %v3330 = vadd.f32 %v3287, %v3324
    %v3331 = vadd.f32 %v3288, %v3327
    %v3332 = vmul.f32 %v3330, 0.5
    %v3333 = vmul.f32 %v3331, 0.5
    %v3334 = vtanh.pop %v3332
    %v3335 = vtanh.pop %v3333
    %v3336 = vmul.f32 %v3334, 0.5
    %v3337 = vmul.f32 %v3335, 0.5
    %v3338 = vadd.f32 %v3336, 0.5
    %v3339 = vadd.f32 %v3337, 0.5
    %v3340 = vmul.f32 %v3238, %v3122
    %v3341 = vmul.f32 %v3239, %v3123
    %v3342 = vmul.f32 %v3185, %v3285
    %v3343 = vmul.f32 %v3186, %v3286
    %v3344 = vadd.f32 %v3340, %v3342
    %v3345 = vadd.f32 %v3341, %v3343
    %v3346 = vtanh.pop %v3344
    %v3347 = vtanh.pop %v3345
    %v3348 = vmul.f32 %v3338, %v3346
    %v3349 = vmul.f32 %v3339, %v3347
    %3350 = vst.msk [vmem:[#allocation3 + $0x80] sm:$0xff] %vm540, %v3348
    %3351 = vst.msk [vmem:[#allocation3 + $0x88] sm:$0xff] %vm540, %v3349
    %v3352 = vpack.c.bf16 %v3349, %v3348
    %v3353 = vld [vmem:[#allocation2 + $0x240] sm:$0xff]
    %v3354 = vld [vmem:[#allocation2 + $0x260] sm:$0xff]
    %v3356 = vsel %vm540, %v3352, 0
    %3358 = vmatprep.subr.bf16.mxu0 0
    %3359 = vmatpush1.bf16.msra.mxu0 %v1277
    %3360 = vmatprep.subr.bf16.mxu0 0
    %3361 = vmatpush1.bf16.msra.mxu0 %v1278
    %3362 = vmatprep.subr.bf16.mxu0 0
    %3363 = vmatpush1.bf16.msra.mxu0 %v1279
    %3364 = vmatprep.subr.bf16.mxu0 0
    %3365 = vmatpush1.bf16.msra.mxu0 %v1280
    %3366 = vmatprep.subr.bf16.mxu0 0
    %3367 = vmatpush1.bf16.msra.mxu0 0
    %3368 = vmatprep.subr.bf16.mxu0 0
    %3369 = vmatpush1.bf16.msra.mxu0 0
    %3370 = vmatprep.subr.bf16.mxu0 0
    %3371 = vmatpush1.bf16.msra.mxu0 0
    %3372 = vmatprep.subr.bf16.mxu0 0
    %3373 = vmatpush1.bf16.msra.mxu0 0
    %3374 = vmatprep.subr.bf16.mxu0 0
    %3375 = vmatpush1.bf16.msra.mxu0 0
    %3376 = vmatprep.subr.bf16.mxu0 0
    %3377 = vmatpush1.bf16.msra.mxu0 0
    %3378 = vmatprep.subr.bf16.mxu0 0
    %3379 = vmatpush1.bf16.msra.mxu0 0
    %3380 = vmatprep.subr.bf16.mxu0 0
    %3381 = vmatpush1.bf16.msra.mxu0 0
    %3382 = vmatprep.subr.bf16.mxu0 0
    %3383 = vmatpush1.bf16.msra.mxu0 0
    %3384 = vmatprep.subr.bf16.mxu0 0
    %3385 = vmatpush1.bf16.msra.mxu0 0
    %3386 = vmatprep.subr.bf16.mxu0 0
    %3387 = vmatpush1.bf16.msra.mxu0 0
    %3388 = vmatprep.subr.bf16.mxu0 0
    %3389 = vmatpush1.bf16.msra.mxu0 0
    %3390 = vmatprep.mubr.bf16.mxu0 0
    %3391 = vmatmul.mubr.bf16.gmra.mrb[0].mxu0 %v3356
    %v3392 = vpop.f32.mrb[0].mxu0
    %v3393 = vadd.f32 0.0, %v3392
    %v3394 = vpop.f32.mrb[0].mxu0
    %v3395 = vpop.f32.mrb[0].mxu0
    %v3396 = vadd.f32 0.0, %v3395
    %v3397 = vpop.f32.mrb[0].mxu0
    %3398 = vdwg.mxu0
    %v3399 = vadd.f32 %v3353, %v3393
    %v3400 = vadd.f32 %v3354, %v3396
    %v3401 = vmul.f32 %v3399, 0.5
    %v3402 = vmul.f32 %v3400, 0.5
    %v3403 = vtanh.pop %v3401
    %v3404 = vtanh.pop %v3402
    %v3405 = vmul.f32 %v3403, 0.5
    %v3406 = vmul.f32 %v3404, 0.5
    %v3407 = vadd.f32 %v3405, 0.5
    %v3408 = vadd.f32 %v3406, 0.5
    %v3409 = vld [vmem:[#allocation2 + $0x248] sm:$0xff]
    %v3410 = vld [vmem:[#allocation2 + $0x268] sm:$0xff]
    %3411 = vmatprep.subr.bf16.mxu0 0
    %3412 = vmatpush1.bf16.msra.mxu0 %v1357
    %3413 = vmatprep.subr.bf16.mxu0 0
    %3414 = vmatpush1.bf16.msra.mxu0 %v1358
    %3415 = vmatprep.subr.bf16.mxu0 0
    %3416 = vmatpush1.bf16.msra.mxu0 %v1359
    %3417 = vmatprep.subr.bf16.mxu0 0
    %3418 = vmatpush1.bf16.msra.mxu0 %v1360
    %3419 = vmatprep.subr.bf16.mxu0 0
    %3420 = vmatpush1.bf16.msra.mxu0 0
    %3421 = vmatprep.subr.bf16.mxu0 0
    %3422 = vmatpush1.bf16.msra.mxu0 0
    %3423 = vmatprep.subr.bf16.mxu0 0
    %3424 = vmatpush1.bf16.msra.mxu0 0
    %3425 = vmatprep.subr.bf16.mxu0 0
    %3426 = vmatpush1.bf16.msra.mxu0 0
    %3427 = vmatprep.subr.bf16.mxu0 0
    %3428 = vmatpush1.bf16.msra.mxu0 0
    %3429 = vmatprep.subr.bf16.mxu0 0
    %3430 = vmatpush1.bf16.msra.mxu0 0
    %3431 = vmatprep.subr.bf16.mxu0 0
    %3432 = vmatpush1.bf16.msra.mxu0 0
    %3433 = vmatprep.subr.bf16.mxu0 0
    %3434 = vmatpush1.bf16.msra.mxu0 0
    %3435 = vmatprep.subr.bf16.mxu0 0
    %3436 = vmatpush1.bf16.msra.mxu0 0
    %3437 = vmatprep.subr.bf16.mxu0 0
    %3438 = vmatpush1.bf16.msra.mxu0 0
    %3439 = vmatprep.subr.bf16.mxu0 0
    %3440 = vmatpush1.bf16.msra.mxu0 0
    %3441 = vmatprep.subr.bf16.mxu0 0
    %3442 = vmatpush1.bf16.msra.mxu0 0
    %3443 = vmatprep.mubr.bf16.mxu0 0
    %3444 = vmatmul.mubr.bf16.gmra.mrb[0].mxu0 %v3356
    %v3445 = vpop.f32.mrb[0].mxu0
    %v3446 = vadd.f32 0.0, %v3445
    %v3447 = vpop.f32.mrb[0].mxu0
    %v3448 = vpop.f32.mrb[0].mxu0
    %v3449 = vadd.f32 0.0, %v3448
    %v3450 = vpop.f32.mrb[0].mxu0
    %3451 = vdwg.mxu0
    %v3452 = vadd.f32 %v3409, %v3446
    %v3453 = vadd.f32 %v3410, %v3449
    %v3454 = vmul.f32 %v3452, 0.5
    %v3455 = vmul.f32 %v3453, 0.5
    %v3456 = vtanh.pop %v3454
    %v3457 = vtanh.pop %v3455
    %v3458 = vmul.f32 %v3456, 0.5
    %v3459 = vmul.f32 %v3457, 0.5
    %v3460 = vadd.f32 %v3458, 0.5
    %v3461 = vadd.f32 %v3459, 0.5
    %v3462 = vld [vmem:[#allocation2 + $0x250] sm:$0xff]
    %v3463 = vld [vmem:[#allocation2 + $0x270] sm:$0xff]
    %3464 = vmatprep.subr.bf16.mxu0 0
    %3465 = vmatpush1.bf16.msra.mxu0 %v1434
    %3466 = vmatprep.subr.bf16.mxu0 0
    %3467 = vmatpush1.bf16.msra.mxu0 %v1435
    %3468 = vmatprep.subr.bf16.mxu0 0
    %3469 = vmatpush1.bf16.msra.mxu0 %v1436
    %3470 = vmatprep.subr.bf16.mxu0 0
    %3471 = vmatpush1.bf16.msra.mxu0 %v1437
    %3472 = vmatprep.subr.bf16.mxu0 0
    %3473 = vmatpush1.bf16.msra.mxu0 0
    %3474 = vmatprep.subr.bf16.mxu0 0
    %3475 = vmatpush1.bf16.msra.mxu0 0
    %3476 = vmatprep.subr.bf16.mxu0 0
    %3477 = vmatpush1.bf16.msra.mxu0 0
    %3478 = vmatprep.subr.bf16.mxu0 0
    %3479 = vmatpush1.bf16.msra.mxu0 0
    %3480 = vmatprep.subr.bf16.mxu0 0
    %3481 = vmatpush1.bf16.msra.mxu0 0
    %3482 = vmatprep.subr.bf16.mxu0 0
    %3483 = vmatpush1.bf16.msra.mxu0 0
    %3484 = vmatprep.subr.bf16.mxu0 0
    %3485 = vmatpush1.bf16.msra.mxu0 0
    %3486 = vmatprep.subr.bf16.mxu0 0
    %3487 = vmatpush1.bf16.msra.mxu0 0
    %3488 = vmatprep.subr.bf16.mxu0 0
    %3489 = vmatpush1.bf16.msra.mxu0 0
    %3490 = vmatprep.subr.bf16.mxu0 0
    %3491 = vmatpush1.bf16.msra.mxu0 0
    %3492 = vmatprep.subr.bf16.mxu0 0
    %3493 = vmatpush1.bf16.msra.mxu0 0
    %3494 = vmatprep.subr.bf16.mxu0 0
    %3495 = vmatpush1.bf16.msra.mxu0 0
    %3496 = vmatprep.mubr.bf16.mxu0 0
    %3497 = vmatmul.mubr.bf16.gmra.mrb[0].mxu0 %v3356
    %v3498 = vpop.f32.mrb[0].mxu0
    %v3499 = vadd.f32 0.0, %v3498
    %v3500 = vpop.f32.mrb[0].mxu0
    %v3501 = vpop.f32.mrb[0].mxu0
    %v3502 = vadd.f32 0.0, %v3501
    %v3503 = vpop.f32.mrb[0].mxu0
    %3504 = vdwg.mxu0
    %v3505 = vadd.f32 %v3462, %v3499
    %v3506 = vadd.f32 %v3463, %v3502
    %v3507 = vtanh.pop %v3505
    %v3508 = vtanh.pop %v3506
    %v3509 = vld [vmem:[#allocation2 + $0x258] sm:$0xff]
    %v3510 = vld [vmem:[#allocation2 + $0x278] sm:$0xff]
    %3511 = vmatprep.subr.bf16.mxu0 0
    %3512 = vmatpush1.bf16.msra.mxu0 %v1505
    %3513 = vmatprep.subr.bf16.mxu0 0
    %3514 = vmatpush1.bf16.msra.mxu0 %v1506
    %3515 = vmatprep.subr.bf16.mxu0 0
    %3516 = vmatpush1.bf16.msra.mxu0 %v1507
    %3517 = vmatprep.subr.bf16.mxu0 0
    %3518 = vmatpush1.bf16.msra.mxu0 %v1508
    %3519 = vmatprep.subr.bf16.mxu0 0
    %3520 = vmatpush1.bf16.msra.mxu0 0
    %3521 = vmatprep.subr.bf16.mxu0 0
    %3522 = vmatpush1.bf16.msra.mxu0 0
    %3523 = vmatprep.subr.bf16.mxu0 0
    %3524 = vmatpush1.bf16.msra.mxu0 0
    %3525 = vmatprep.subr.bf16.mxu0 0
    %3526 = vmatpush1.bf16.msra.mxu0 0
    %3527 = vmatprep.subr.bf16.mxu0 0
    %3528 = vmatpush1.bf16.msra.mxu0 0
    %3529 = vmatprep.subr.bf16.mxu0 0
    %3530 = vmatpush1.bf16.msra.mxu0 0
    %3531 = vmatprep.subr.bf16.mxu0 0
    %3532 = vmatpush1.bf16.msra.mxu0 0
    %3533 = vmatprep.subr.bf16.mxu0 0
    %3534 = vmatpush1.bf16.msra.mxu0 0
    %3535 = vmatprep.subr.bf16.mxu0 0
    %3536 = vmatpush1.bf16.msra.mxu0 0
    %3537 = vmatprep.subr.bf16.mxu0 0
    %3538 = vmatpush1.bf16.msra.mxu0 0
    %3539 = vmatprep.subr.bf16.mxu0 0
    %3540 = vmatpush1.bf16.msra.mxu0 0
    %3541 = vmatprep.subr.bf16.mxu0 0
    %3542 = vmatpush1.bf16.msra.mxu0 0
    %3543 = vmatprep.mubr.bf16.mxu0 0
    %3544 = vmatmul.mubr.bf16.gmra.mrb[0].mxu0 %v3356
    %v3545 = vpop.f32.mrb[0].mxu0
    %v3546 = vadd.f32 0.0, %v3545
    %v3547 = vpop.f32.mrb[0].mxu0
    %v3548 = vpop.f32.mrb[0].mxu0
    %v3549 = vadd.f32 0.0, %v3548
    %v3550 = vpop.f32.mrb[0].mxu0
    %3551 = vdwg.mxu0
    %v3552 = vadd.f32 %v3509, %v3546
    %v3553 = vadd.f32 %v3510, %v3549
    %v3554 = vmul.f32 %v3552, 0.5
    %v3555 = vmul.f32 %v3553, 0.5
    %v3556 = vtanh.pop %v3554
    %v3557 = vtanh.pop %v3555
    %v3558 = vmul.f32 %v3556, 0.5
    %v3559 = vmul.f32 %v3557, 0.5
    %v3560 = vadd.f32 %v3558, 0.5
    %v3561 = vadd.f32 %v3559, 0.5
    %v3562 = vmul.f32 %v3460, %v3344
    %v3563 = vmul.f32 %v3461, %v3345
    %v3564 = vmul.f32 %v3407, %v3507
    %v3565 = vmul.f32 %v3408, %v3508
    %v3566 = vadd.f32 %v3562, %v3564
    %v3567 = vadd.f32 %v3563, %v3565
    %v3568 = vtanh.pop %v3566
    %v3569 = vtanh.pop %v3567
    %v3570 = vmul.f32 %v3560, %v3568
    %v3571 = vmul.f32 %v3561, %v3569
    %3572 = vst.msk [vmem:[#allocation3 + $0x90] sm:$0xff] %vm540, %v3570
    %3573 = vst.msk [vmem:[#allocation3 + $0x98] sm:$0xff] %vm540, %v3571
    %v3574 = vpack.c.bf16 %v3571, %v3570
    %v3575 = vld [vmem:[#allocation2 + $0x280] sm:$0xff]
    %v3576 = vld [vmem:[#allocation2 + $0x2a0] sm:$0xff]
    %v3578 = vsel %vm540, %v3574, 0
    %3580 = vmatprep.subr.bf16.mxu0 0
    %3581 = vmatpush1.bf16.msra.mxu0 %v1277
    %3582 = vmatprep.subr.bf16.mxu0 0
    %3583 = vmatpush1.bf16.msra.mxu0 %v1278
    %3584 = vmatprep.subr.bf16.mxu0 0
    %3585 = vmatpush1.bf16.msra.mxu0 %v1279
    %3586 = vmatprep.subr.bf16.mxu0 0
    %3587 = vmatpush1.bf16.msra.mxu0 %v1280
    %3588 = vmatprep.subr.bf16.mxu0 0
    %3589 = vmatpush1.bf16.msra.mxu0 0
    %3590 = vmatprep.subr.bf16.mxu0 0
    %3591 = vmatpush1.bf16.msra.mxu0 0
    %3592 = vmatprep.subr.bf16.mxu0 0
    %3593 = vmatpush1.bf16.msra.mxu0 0
    %3594 = vmatprep.subr.bf16.mxu0 0
    %3595 = vmatpush1.bf16.msra.mxu0 0
    %3596 = vmatprep.subr.bf16.mxu0 0
    %3597 = vmatpush1.bf16.msra.mxu0 0
    %3598 = vmatprep.subr.bf16.mxu0 0
    %3599 = vmatpush1.bf16.msra.mxu0 0
    %3600 = vmatprep.subr.bf16.mxu0 0
    %3601 = vmatpush1.bf16.msra.mxu0 0
    %3602 = vmatprep.subr.bf16.mxu0 0
    %3603 = vmatpush1.bf16.msra.mxu0 0
    %3604 = vmatprep.subr.bf16.mxu0 0
    %3605 = vmatpush1.bf16.msra.mxu0 0
    %3606 = vmatprep.subr.bf16.mxu0 0
    %3607 = vmatpush1.bf16.msra.mxu0 0
    %3608 = vmatprep.subr.bf16.mxu0 0
    %3609 = vmatpush1.bf16.msra.mxu0 0
    %3610 = vmatprep.subr.bf16.mxu0 0
    %3611 = vmatpush1.bf16.msra.mxu0 0
    %3612 = vmatprep.mubr.bf16.mxu0 0
    %3613 = vmatmul.mubr.bf16.gmra.mrb[0].mxu0 %v3578
    %v3614 = vpop.f32.mrb[0].mxu0
    %v3615 = vadd.f32 0.0, %v3614
    %v3616 = vpop.f32.mrb[0].mxu0
    %v3617 = vpop.f32.mrb[0].mxu0
    %v3618 = vadd.f32 0.0, %v3617
    %v3619 = vpop.f32.mrb[0].mxu0
    %3620 = vdwg.mxu0
    %v3621 = vadd.f32 %v3575, %v3615
    %v3622 = vadd.f32 %v3576, %v3618
    %v3623 = vmul.f32 %v3621, 0.5
    %v3624 = vmul.f32 %v3622, 0.5
    %v3625 = vtanh.pop %v3623
    %v3626 = vtanh.pop %v3624
    %v3627 = vmul.f32 %v3625, 0.5
    %v3628 = vmul.f32 %v3626, 0.5
    %v3629 = vadd.f32 %v3627, 0.5
    %v3630 = vadd.f32 %v3628, 0.5
    %v3631 = vld [vmem:[#allocation2 + $0x288] sm:$0xff]
    %v3632 = vld [vmem:[#allocation2 + $0x2a8] sm:$0xff]
    %3633 = vmatprep.subr.bf16.mxu0 0
    %3634 = vmatpush1.bf16.msra.mxu0 %v1357
    %3635 = vmatprep.subr.bf16.mxu0 0
    %3636 = vmatpush1.bf16.msra.mxu0 %v1358
    %3637 = vmatprep.subr.bf16.mxu0 0
    %3638 = vmatpush1.bf16.msra.mxu0 %v1359
    %3639 = vmatprep.subr.bf16.mxu0 0
    %3640 = vmatpush1.bf16.msra.mxu0 %v1360
    %3641 = vmatprep.subr.bf16.mxu0 0
    %3642 = vmatpush1.bf16.msra.mxu0 0
    %3643 = vmatprep.subr.bf16.mxu0 0
    %3644 = vmatpush1.bf16.msra.mxu0 0
    %3645 = vmatprep.subr.bf16.mxu0 0
    %3646 = vmatpush1.bf16.msra.mxu0 0
    %3647 = vmatprep.subr.bf16.mxu0 0
    %3648 = vmatpush1.bf16.msra.mxu0 0
    %3649 = vmatprep.subr.bf16.mxu0 0
    %3650 = vmatpush1.bf16.msra.mxu0 0
    %3651 = vmatprep.subr.bf16.mxu0 0
    %3652 = vmatpush1.bf16.msra.mxu0 0
    %3653 = vmatprep.subr.bf16.mxu0 0
    %3654 = vmatpush1.bf16.msra.mxu0 0
    %3655 = vmatprep.subr.bf16.mxu0 0
    %3656 = vmatpush1.bf16.msra.mxu0 0
    %3657 = vmatprep.subr.bf16.mxu0 0
    %3658 = vmatpush1.bf16.msra.mxu0 0
    %3659 = vmatprep.subr.bf16.mxu0 0
    %3660 = vmatpush1.bf16.msra.mxu0 0
    %3661 = vmatprep.subr.bf16.mxu0 0
    %3662 = vmatpush1.bf16.msra.mxu0 0
    %3663 = vmatprep.subr.bf16.mxu0 0
    %3664 = vmatpush1.bf16.msra.mxu0 0
    %3665 = vmatprep.mubr.bf16.mxu0 0
    %3666 = vmatmul.mubr.bf16.gmra.mrb[0].mxu0 %v3578
    %v3667 = vpop.f32.mrb[0].mxu0
    %v3668 = vadd.f32 0.0, %v3667
    %v3669 = vpop.f32.mrb[0].mxu0
    %v3670 = vpop.f32.mrb[0].mxu0
    %v3671 = vadd.f32 0.0, %v3670
    %v3672 = vpop.f32.mrb[0].mxu0
    %3673 = vdwg.mxu0
    %v3674 = vadd.f32 %v3631, %v3668
    %v3675 = vadd.f32 %v3632, %v3671
    %v3676 = vmul.f32 %v3674, 0.5
    %v3677 = vmul.f32 %v3675, 0.5
    %v3678 = vtanh.pop %v3676
    %v3679 = vtanh.pop %v3677
    %v3680 = vmul.f32 %v3678, 0.5
    %v3681 = vmul.f32 %v3679, 0.5
    %v3682 = vadd.f32 %v3680, 0.5
    %v3683 = vadd.f32 %v3681, 0.5
    %v3684 = vld [vmem:[#allocation2 + $0x290] sm:$0xff]
    %v3685 = vld [vmem:[#allocation2 + $0x2b0] sm:$0xff]
    %3686 = vmatprep.subr.bf16.mxu0 0
    %3687 = vmatpush1.bf16.msra.mxu0 %v1434
    %3688 = vmatprep.subr.bf16.mxu0 0
    %3689 = vmatpush1.bf16.msra.mxu0 %v1435
    %3690 = vmatprep.subr.bf16.mxu0 0
    %3691 = vmatpush1.bf16.msra.mxu0 %v1436
    %3692 = vmatprep.subr.bf16.mxu0 0
    %3693 = vmatpush1.bf16.msra.mxu0 %v1437
    %3694 = vmatprep.subr.bf16.mxu0 0
    %3695 = vmatpush1.bf16.msra.mxu0 0
    %3696 = vmatprep.subr.bf16.mxu0 0
    %3697 = vmatpush1.bf16.msra.mxu0 0
    %3698 = vmatprep.subr.bf16.mxu0 0
    %3699 = vmatpush1.bf16.msra.mxu0 0
    %3700 = vmatprep.subr.bf16.mxu0 0
    %3701 = vmatpush1.bf16.msra.mxu0 0
    %3702 = vmatprep.subr.bf16.mxu0 0
    %3703 = vmatpush1.bf16.msra.mxu0 0
    %3704 = vmatprep.subr.bf16.mxu0 0
    %3705 = vmatpush1.bf16.msra.mxu0 0
    %3706 = vmatprep.subr.bf16.mxu0 0
    %3707 = vmatpush1.bf16.msra.mxu0 0
    %3708 = vmatprep.subr.bf16.mxu0 0
    %3709 = vmatpush1.bf16.msra.mxu0 0
    %3710 = vmatprep.subr.bf16.mxu0 0
    %3711 = vmatpush1.bf16.msra.mxu0 0
    %3712 = vmatprep.subr.bf16.mxu0 0
    %3713 = vmatpush1.bf16.msra.mxu0 0
    %3714 = vmatprep.subr.bf16.mxu0 0
    %3715 = vmatpush1.bf16.msra.mxu0 0
    %3716 = vmatprep.subr.bf16.mxu0 0
    %3717 = vmatpush1.bf16.msra.mxu0 0
    %3718 = vmatprep.mubr.bf16.mxu0 0
    %3719 = vmatmul.mubr.bf16.gmra.mrb[0].mxu0 %v3578
    %v3720 = vpop.f32.mrb[0].mxu0
    %v3721 = vadd.f32 0.0, %v3720
    %v3722 = vpop.f32.mrb[0].mxu0
    %v3723 = vpop.f32.mrb[0].mxu0
    %v3724 = vadd.f32 0.0, %v3723
    %v3725 = vpop.f32.mrb[0].mxu0
    %3726 = vdwg.mxu0
    %v3727 = vadd.f32 %v3684, %v3721
    %v3728 = vadd.f32 %v3685, %v3724
    %v3729 = vtanh.pop %v3727
    %v3730 = vtanh.pop %v3728
    %v3731 = vld [vmem:[#allocation2 + $0x298] sm:$0xff]
    %v3732 = vld [vmem:[#allocation2 + $0x2b8] sm:$0xff]
    %3733 = vmatprep.subr.bf16.mxu0 0
    %3734 = vmatpush1.bf16.msra.mxu0 %v1505
    %3735 = vmatprep.subr.bf16.mxu0 0
    %3736 = vmatpush1.bf16.msra.mxu0 %v1506
    %3737 = vmatprep.subr.bf16.mxu0 0
    %3738 = vmatpush1.bf16.msra.mxu0 %v1507
    %3739 = vmatprep.subr.bf16.mxu0 0
    %3740 = vmatpush1.bf16.msra.mxu0 %v1508
    %3741 = vmatprep.subr.bf16.mxu0 0
    %3742 = vmatpush1.bf16.msra.mxu0 0
    %3743 = vmatprep.subr.bf16.mxu0 0
    %3744 = vmatpush1.bf16.msra.mxu0 0
    %3745 = vmatprep.subr.bf16.mxu0 0
    %3746 = vmatpush1.bf16.msra.mxu0 0
    %3747 = vmatprep.subr.bf16.mxu0 0
    %3748 = vmatpush1.bf16.msra.mxu0 0
    %3749 = vmatprep.subr.bf16.mxu0 0
    %3750 = vmatpush1.bf16.msra.mxu0 0
    %3751 = vmatprep.subr.bf16.mxu0 0
    %3752 = vmatpush1.bf16.msra.mxu0 0
    %3753 = vmatprep.subr.bf16.mxu0 0
    %3754 = vmatpush1.bf16.msra.mxu0 0
    %3755 = vmatprep.subr.bf16.mxu0 0
    %3756 = vmatpush1.bf16.msra.mxu0 0
    %3757 = vmatprep.subr.bf16.mxu0 0
    %3758 = vmatpush1.bf16.msra.mxu0 0
    %3759 = vmatprep.subr.bf16.mxu0 0
    %3760 = vmatpush1.bf16.msra.mxu0 0
    %3761 = vmatprep.subr.bf16.mxu0 0
    %3762 = vmatpush1.bf16.msra.mxu0 0
    %3763 = vmatprep.subr.bf16.mxu0 0
    %3764 = vmatpush1.bf16.msra.mxu0 0
    %3765 = vmatprep.mubr.bf16.mxu0 0
    %3766 = vmatmul.mubr.bf16.gmra.mrb[0].mxu0 %v3578
    %v3767 = vpop.f32.mrb[0].mxu0
    %v3768 = vadd.f32 0.0, %v3767
    %v3769 = vpop.f32.mrb[0].mxu0
    %v3770 = vpop.f32.mrb[0].mxu0
    %v3771 = vadd.f32 0.0, %v3770
    %v3772 = vpop.f32.mrb[0].mxu0
    %3773 = vdwg.mxu0
    %v3774 = vadd.f32 %v3731, %v3768
    %v3775 = vadd.f32 %v3732, %v3771
    %v3776 = vmul.f32 %v3774, 0.5
    %v3777 = vmul.f32 %v3775, 0.5
    %v3778 = vtanh.pop %v3776
    %v3779 = vtanh.pop %v3777
    %v3780 = vmul.f32 %v3778, 0.5
    %v3781 = vmul.f32 %v3779, 0.5
    %v3782 = vadd.f32 %v3780, 0.5
    %v3783 = vadd.f32 %v3781, 0.5
    %v3784 = vmul.f32 %v3682, %v3566
    %v3785 = vmul.f32 %v3683, %v3567
    %v3786 = vmul.f32 %v3629, %v3729
    %v3787 = vmul.f32 %v3630, %v3730
    %v3788 = vadd.f32 %v3784, %v3786
    %v3789 = vadd.f32 %v3785, %v3787
    %v3790 = vtanh.pop %v3788
    %v3791 = vtanh.pop %v3789
    %v3792 = vmul.f32 %v3782, %v3790
    %v3793 = vmul.f32 %v3783, %v3791
    %3794 = vst.msk [vmem:[#allocation3 + $0xa0] sm:$0xff] %vm540, %v3792
    %3795 = vst.msk [vmem:[#allocation3 + $0xa8] sm:$0xff] %vm540, %v3793
    %v3796 = vpack.c.bf16 %v3793, %v3792
    %v3797 = vld [vmem:[#allocation2 + $0x2c0] sm:$0xff]
    %v3798 = vld [vmem:[#allocation2 + $0x2e0] sm:$0xff]
    %v3800 = vsel %vm540, %v3796, 0
    %3802 = vmatprep.subr.bf16.mxu0 0
    %3803 = vmatpush1.bf16.msra.mxu0 %v1277
    %3804 = vmatprep.subr.bf16.mxu0 0
    %3805 = vmatpush1.bf16.msra.mxu0 %v1278
    %3806 = vmatprep.subr.bf16.mxu0 0
    %3807 = vmatpush1.bf16.msra.mxu0 %v1279
    %3808 = vmatprep.subr.bf16.mxu0 0
    %3809 = vmatpush1.bf16.msra.mxu0 %v1280
    %3810 = vmatprep.subr.bf16.mxu0 0
    %3811 = vmatpush1.bf16.msra.mxu0 0
    %3812 = vmatprep.subr.bf16.mxu0 0
    %3813 = vmatpush1.bf16.msra.mxu0 0
    %3814 = vmatprep.subr.bf16.mxu0 0
    %3815 = vmatpush1.bf16.msra.mxu0 0
    %3816 = vmatprep.subr.bf16.mxu0 0
    %3817 = vmatpush1.bf16.msra.mxu0 0
    %3818 = vmatprep.subr.bf16.mxu0 0
    %3819 = vmatpush1.bf16.msra.mxu0 0
    %3820 = vmatprep.subr.bf16.mxu0 0
    %3821 = vmatpush1.bf16.msra.mxu0 0
    %3822 = vmatprep.subr.bf16.mxu0 0
    %3823 = vmatpush1.bf16.msra.mxu0 0
    %3824 = vmatprep.subr.bf16.mxu0 0
    %3825 = vmatpush1.bf16.msra.mxu0 0
    %3826 = vmatprep.subr.bf16.mxu0 0
    %3827 = vmatpush1.bf16.msra.mxu0 0
    %3828 = vmatprep.subr.bf16.mxu0 0
    %3829 = vmatpush1.bf16.msra.mxu0 0
    %3830 = vmatprep.subr.bf16.mxu0 0
    %3831 = vmatpush1.bf16.msra.mxu0 0
    %3832 = vmatprep.subr.bf16.mxu0 0
    %3833 = vmatpush1.bf16.msra.mxu0 0
    %3834 = vmatprep.mubr.bf16.mxu0 0
    %3835 = vmatmul.mubr.bf16.gmra.mrb[0].mxu0 %v3800
    %v3836 = vpop.f32.mrb[0].mxu0
    %v3837 = vadd.f32 0.0, %v3836
    %v3838 = vpop.f32.mrb[0].mxu0
    %v3839 = vpop.f32.mrb[0].mxu0
    %v3840 = vadd.f32 0.0, %v3839
    %v3841 = vpop.f32.mrb[0].mxu0
    %3842 = vdwg.mxu0
    %v3843 = vadd.f32 %v3797, %v3837
    %v3844 = vadd.f32 %v3798, %v3840
    %v3845 = vmul.f32 %v3843, 0.5
    %v3846 = vmul.f32 %v3844, 0.5
    %v3847 = vtanh.pop %v3845
    %v3848 = vtanh.pop %v3846
    %v3849 = vmul.f32 %v3847, 0.5
    %v3850 = vmul.f32 %v3848, 0.5
    %v3851 = vadd.f32 %v3849, 0.5
    %v3852 = vadd.f32 %v3850, 0.5
    %v3853 = vld [vmem:[#allocation2 + $0x2c8] sm:$0xff]
    %v3854 = vld [vmem:[#allocation2 + $0x2e8] sm:$0xff]
    %3855 = vmatprep.subr.bf16.mxu0 0
    %3856 = vmatpush1.bf16.msra.mxu0 %v1357
    %3857 = vmatprep.subr.bf16.mxu0 0
    %3858 = vmatpush1.bf16.msra.mxu0 %v1358
    %3859 = vmatprep.subr.bf16.mxu0 0
    %3860 = vmatpush1.bf16.msra.mxu0 %v1359
    %3861 = vmatprep.subr.bf16.mxu0 0
    %3862 = vmatpush1.bf16.msra.mxu0 %v1360
    %3863 = vmatprep.subr.bf16.mxu0 0
    %3864 = vmatpush1.bf16.msra.mxu0 0
    %3865 = vmatprep.subr.bf16.mxu0 0
    %3866 = vmatpush1.bf16.msra.mxu0 0
    %3867 = vmatprep.subr.bf16.mxu0 0
    %3868 = vmatpush1.bf16.msra.mxu0 0
    %3869 = vmatprep.subr.bf16.mxu0 0
    %3870 = vmatpush1.bf16.msra.mxu0 0
    %3871 = vmatprep.subr.bf16.mxu0 0
    %3872 = vmatpush1.bf16.msra.mxu0 0
    %3873 = vmatprep.subr.bf16.mxu0 0
    %3874 = vmatpush1.bf16.msra.mxu0 0
    %3875 = vmatprep.subr.bf16.mxu0 0
    %3876 = vmatpush1.bf16.msra.mxu0 0
    %3877 = vmatprep.subr.bf16.mxu0 0
    %3878 = vmatpush1.bf16.msra.mxu0 0
    %3879 = vmatprep.subr.bf16.mxu0 0
    %3880 = vmatpush1.bf16.msra.mxu0 0
    %3881 = vmatprep.subr.bf16.mxu0 0
    %3882 = vmatpush1.bf16.msra.mxu0 0
    %3883 = vmatprep.subr.bf16.mxu0 0
    %3884 = vmatpush1.bf16.msra.mxu0 0
    %3885 = vmatprep.subr.bf16.mxu0 0
    %3886 = vmatpush1.bf16.msra.mxu0 0
    %3887 = vmatprep.mubr.bf16.mxu0 0
    %3888 = vmatmul.mubr.bf16.gmra.mrb[0].mxu0 %v3800
    %v3889 = vpop.f32.mrb[0].mxu0
    %v3890 = vadd.f32 0.0, %v3889
    %v3891 = vpop.f32.mrb[0].mxu0
    %v3892 = vpop.f32.mrb[0].mxu0
    %v3893 = vadd.f32 0.0, %v3892
    %v3894 = vpop.f32.mrb[0].mxu0
    %3895 = vdwg.mxu0
    %v3896 = vadd.f32 %v3853, %v3890
    %v3897 = vadd.f32 %v3854, %v3893
    %v3898 = vmul.f32 %v3896, 0.5
    %v3899 = vmul.f32 %v3897, 0.5
    %v3900 = vtanh.pop %v3898
    %v3901 = vtanh.pop %v3899
    %v3902 = vmul.f32 %v3900, 0.5
    %v3903 = vmul.f32 %v3901, 0.5
    %v3904 = vadd.f32 %v3902, 0.5
    %v3905 = vadd.f32 %v3903, 0.5
    %v3906 = vld [vmem:[#allocation2 + $0x2d0] sm:$0xff]
    %v3907 = vld [vmem:[#allocation2 + $0x2f0] sm:$0xff]
    %3908 = vmatprep.subr.bf16.mxu0 0
    %3909 = vmatpush1.bf16.msra.mxu0 %v1434
    %3910 = vmatprep.subr.bf16.mxu0 0
    %3911 = vmatpush1.bf16.msra.mxu0 %v1435
    %3912 = vmatprep.subr.bf16.mxu0 0
    %3913 = vmatpush1.bf16.msra.mxu0 %v1436
    %3914 = vmatprep.subr.bf16.mxu0 0
    %3915 = vmatpush1.bf16.msra.mxu0 %v1437
    %3916 = vmatprep.subr.bf16.mxu0 0
    %3917 = vmatpush1.bf16.msra.mxu0 0
    %3918 = vmatprep.subr.bf16.mxu0 0
    %3919 = vmatpush1.bf16.msra.mxu0 0
    %3920 = vmatprep.subr.bf16.mxu0 0
    %3921 = vmatpush1.bf16.msra.mxu0 0
    %3922 = vmatprep.subr.bf16.mxu0 0
    %3923 = vmatpush1.bf16.msra.mxu0 0
    %3924 = vmatprep.subr.bf16.mxu0 0
    %3925 = vmatpush1.bf16.msra.mxu0 0
    %3926 = vmatprep.subr.bf16.mxu0 0
    %3927 = vmatpush1.bf16.msra.mxu0 0
    %3928 = vmatprep.subr.bf16.mxu0 0
    %3929 = vmatpush1.bf16.msra.mxu0 0
    %3930 = vmatprep.subr.bf16.mxu0 0
    %3931 = vmatpush1.bf16.msra.mxu0 0
    %3932 = vmatprep.subr.bf16.mxu0 0
    %3933 = vmatpush1.bf16.msra.mxu0 0
    %3934 = vmatprep.subr.bf16.mxu0 0
    %3935 = vmatpush1.bf16.msra.mxu0 0
    %3936 = vmatprep.subr.bf16.mxu0 0
    %3937 = vmatpush1.bf16.msra.mxu0 0
    %3938 = vmatprep.subr.bf16.mxu0 0
    %3939 = vmatpush1.bf16.msra.mxu0 0
    %3940 = vmatprep.mubr.bf16.mxu0 0
    %3941 = vmatmul.mubr.bf16.gmra.mrb[0].mxu0 %v3800
    %v3942 = vpop.f32.mrb[0].mxu0
    %v3943 = vadd.f32 0.0, %v3942
    %v3944 = vpop.f32.mrb[0].mxu0
    %v3945 = vpop.f32.mrb[0].mxu0
    %v3946 = vadd.f32 0.0, %v3945
    %v3947 = vpop.f32.mrb[0].mxu0
    %3948 = vdwg.mxu0
    %v3949 = vadd.f32 %v3906, %v3943
    %v3950 = vadd.f32 %v3907, %v3946
    %v3951 = vtanh.pop %v3949
    %v3952 = vtanh.pop %v3950
    %v3953 = vld [vmem:[#allocation2 + $0x2d8] sm:$0xff]
    %v3954 = vld [vmem:[#allocation2 + $0x2f8] sm:$0xff]
    %3955 = vmatprep.subr.bf16.mxu0 0
    %3956 = vmatpush1.bf16.msra.mxu0 %v1505
    %3957 = vmatprep.subr.bf16.mxu0 0
    %3958 = vmatpush1.bf16.msra.mxu0 %v1506
    %3959 = vmatprep.subr.bf16.mxu0 0
    %3960 = vmatpush1.bf16.msra.mxu0 %v1507
    %3961 = vmatprep.subr.bf16.mxu0 0
    %3962 = vmatpush1.bf16.msra.mxu0 %v1508
    %3963 = vmatprep.subr.bf16.mxu0 0
    %3964 = vmatpush1.bf16.msra.mxu0 0
    %3965 = vmatprep.subr.bf16.mxu0 0
    %3966 = vmatpush1.bf16.msra.mxu0 0
    %3967 = vmatprep.subr.bf16.mxu0 0
    %3968 = vmatpush1.bf16.msra.mxu0 0
    %3969 = vmatprep.subr.bf16.mxu0 0
    %3970 = vmatpush1.bf16.msra.mxu0 0
    %3971 = vmatprep.subr.bf16.mxu0 0
    %3972 = vmatpush1.bf16.msra.mxu0 0
    %3973 = vmatprep.subr.bf16.mxu0 0
    %3974 = vmatpush1.bf16.msra.mxu0 0
    %3975 = vmatprep.subr.bf16.mxu0 0
    %3976 = vmatpush1.bf16.msra.mxu0 0
    %3977 = vmatprep.subr.bf16.mxu0 0
    %3978 = vmatpush1.bf16.msra.mxu0 0
    %3979 = vmatprep.subr.bf16.mxu0 0
    %3980 = vmatpush1.bf16.msra.mxu0 0
    %3981 = vmatprep.subr.bf16.mxu0 0
    %3982 = vmatpush1.bf16.msra.mxu0 0
    %3983 = vmatprep.subr.bf16.mxu0 0
    %3984 = vmatpush1.bf16.msra.mxu0 0
    %3985 = vmatprep.subr.bf16.mxu0 0
    %3986 = vmatpush1.bf16.msra.mxu0 0
    %3987 = vmatprep.mubr.bf16.mxu0 0
    %3988 = vmatmul.mubr.bf16.gmra.mrb[0].mxu0 %v3800
    %v3989 = vpop.f32.mrb[0].mxu0
    %v3990 = vadd.f32 0.0, %v3989
    %v3991 = vpop.f32.mrb[0].mxu0
    %v3992 = vpop.f32.mrb[0].mxu0
    %v3993 = vadd.f32 0.0, %v3992
    %v3994 = vpop.f32.mrb[0].mxu0
    %3995 = vdwg.mxu0
    %v3996 = vadd.f32 %v3953, %v3990
    %v3997 = vadd.f32 %v3954, %v3993
    %v3998 = vmul.f32 %v3996, 0.5
    %v3999 = vmul.f32 %v3997, 0.5
    %v4000 = vtanh.pop %v3998
    %v4001 = vtanh.pop %v3999
    %v4002 = vmul.f32 %v4000, 0.5
    %v4003 = vmul.f32 %v4001, 0.5
    %v4004 = vadd.f32 %v4002, 0.5
    %v4005 = vadd.f32 %v4003, 0.5
    %v4006 = vmul.f32 %v3904, %v3788
    %v4007 = vmul.f32 %v3905, %v3789
    %v4008 = vmul.f32 %v3851, %v3951
    %v4009 = vmul.f32 %v3852, %v3952
    %v4010 = vadd.f32 %v4006, %v4008
    %v4011 = vadd.f32 %v4007, %v4009
    %v4012 = vtanh.pop %v4010
    %v4013 = vtanh.pop %v4011
    %v4014 = vmul.f32 %v4004, %v4012
    %v4015 = vmul.f32 %v4005, %v4013
    %4016 = vst.msk [vmem:[#allocation3 + $0xb0] sm:$0xff] %vm540, %v4014
    %4017 = vst.msk [vmem:[#allocation3 + $0xb8] sm:$0xff] %vm540, %v4015
    %v4018 = vpack.c.bf16 %v4015, %v4014
    %v4019 = vld [vmem:[#allocation2 + $0x300] sm:$0xff]
    %v4020 = vld [vmem:[#allocation2 + $0x320] sm:$0xff]
    %v4022 = vsel %vm540, %v4018, 0
    %4024 = vmatprep.subr.bf16.mxu0 0
    %4025 = vmatpush1.bf16.msra.mxu0 %v1277
    %4026 = vmatprep.subr.bf16.mxu0 0
    %4027 = vmatpush1.bf16.msra.mxu0 %v1278
    %4028 = vmatprep.subr.bf16.mxu0 0
    %4029 = vmatpush1.bf16.msra.mxu0 %v1279
    %4030 = vmatprep.subr.bf16.mxu0 0
    %4031 = vmatpush1.bf16.msra.mxu0 %v1280
    %4032 = vmatprep.subr.bf16.mxu0 0
    %4033 = vmatpush1.bf16.msra.mxu0 0
    %4034 = vmatprep.subr.bf16.mxu0 0
    %4035 = vmatpush1.bf16.msra.mxu0 0
    %4036 = vmatprep.subr.bf16.mxu0 0
    %4037 = vmatpush1.bf16.msra.mxu0 0
    %4038 = vmatprep.subr.bf16.mxu0 0
    %4039 = vmatpush1.bf16.msra.mxu0 0
    %4040 = vmatprep.subr.bf16.mxu0 0
    %4041 = vmatpush1.bf16.msra.mxu0 0
    %4042 = vmatprep.subr.bf16.mxu0 0
    %4043 = vmatpush1.bf16.msra.mxu0 0
    %4044 = vmatprep.subr.bf16.mxu0 0
    %4045 = vmatpush1.bf16.msra.mxu0 0
    %4046 = vmatprep.subr.bf16.mxu0 0
    %4047 = vmatpush1.bf16.msra.mxu0 0
    %4048 = vmatprep.subr.bf16.mxu0 0
    %4049 = vmatpush1.bf16.msra.mxu0 0
    %4050 = vmatprep.subr.bf16.mxu0 0
    %4051 = vmatpush1.bf16.msra.mxu0 0
    %4052 = vmatprep.subr.bf16.mxu0 0
    %4053 = vmatpush1.bf16.msra.mxu0 0
    %4054 = vmatprep.subr.bf16.mxu0 0
    %4055 = vmatpush1.bf16.msra.mxu0 0
    %4056 = vmatprep.mubr.bf16.mxu0 0
    %4057 = vmatmul.mubr.bf16.gmra.mrb[0].mxu0 %v4022
    %v4058 = vpop.f32.mrb[0].mxu0
    %v4059 = vadd.f32 0.0, %v4058
    %v4060 = vpop.f32.mrb[0].mxu0
    %v4061 = vpop.f32.mrb[0].mxu0
    %v4062 = vadd.f32 0.0, %v4061
    %v4063 = vpop.f32.mrb[0].mxu0
    %4064 = vdwg.mxu0
    %v4065 = vadd.f32 %v4019, %v4059
    %v4066 = vadd.f32 %v4020, %v4062
    %v4067 = vmul.f32 %v4065, 0.5
    %v4068 = vmul.f32 %v4066, 0.5
    %v4069 = vtanh.pop %v4067
    %v4070 = vtanh.pop %v4068
    %v4071 = vmul.f32 %v4069, 0.5
    %v4072 = vmul.f32 %v4070, 0.5
    %v4073 = vadd.f32 %v4071, 0.5
    %v4074 = vadd.f32 %v4072, 0.5
    %v4075 = vld [vmem:[#allocation2 + $0x308] sm:$0xff]
    %v4076 = vld [vmem:[#allocation2 + $0x328] sm:$0xff]
    %4077 = vmatprep.subr.bf16.mxu0 0
    %4078 = vmatpush1.bf16.msra.mxu0 %v1357
    %4079 = vmatprep.subr.bf16.mxu0 0
    %4080 = vmatpush1.bf16.msra.mxu0 %v1358
    %4081 = vmatprep.subr.bf16.mxu0 0
    %4082 = vmatpush1.bf16.msra.mxu0 %v1359
    %4083 = vmatprep.subr.bf16.mxu0 0
    %4084 = vmatpush1.bf16.msra.mxu0 %v1360
    %4085 = vmatprep.subr.bf16.mxu0 0
    %4086 = vmatpush1.bf16.msra.mxu0 0
    %4087 = vmatprep.subr.bf16.mxu0 0
    %4088 = vmatpush1.bf16.msra.mxu0 0
    %4089 = vmatprep.subr.bf16.mxu0 0
    %4090 = vmatpush1.bf16.msra.mxu0 0
    %4091 = vmatprep.subr.bf16.mxu0 0
    %4092 = vmatpush1.bf16.msra.mxu0 0
    %4093 = vmatprep.subr.bf16.mxu0 0
    %4094 = vmatpush1.bf16.msra.mxu0 0
    %4095 = vmatprep.subr.bf16.mxu0 0
    %4096 = vmatpush1.bf16.msra.mxu0 0
    %4097 = vmatprep.subr.bf16.mxu0 0
    %4098 = vmatpush1.bf16.msra.mxu0 0
    %4099 = vmatprep.subr.bf16.mxu0 0
    %4100 = vmatpush1.bf16.msra.mxu0 0
    %4101 = vmatprep.subr.bf16.mxu0 0
    %4102 = vmatpush1.bf16.msra.mxu0 0
    %4103 = vmatprep.subr.bf16.mxu0 0
    %4104 = vmatpush1.bf16.msra.mxu0 0
    %4105 = vmatprep.subr.bf16.mxu0 0
    %4106 = vmatpush1.bf16.msra.mxu0 0
    %4107 = vmatprep.subr.bf16.mxu0 0
    %4108 = vmatpush1.bf16.msra.mxu0 0
    %4109 = vmatprep.mubr.bf16.mxu0 0
    %4110 = vmatmul.mubr.bf16.gmra.mrb[0].mxu0 %v4022
    %v4111 = vpop.f32.mrb[0].mxu0
    %v4112 = vadd.f32 0.0, %v4111
    %v4113 = vpop.f32.mrb[0].mxu0
    %v4114 = vpop.f32.mrb[0].mxu0
    %v4115 = vadd.f32 0.0, %v4114
    %v4116 = vpop.f32.mrb[0].mxu0
    %4117 = vdwg.mxu0
    %v4118 = vadd.f32 %v4075, %v4112
    %v4119 = vadd.f32 %v4076, %v4115
    %v4120 = vmul.f32 %v4118, 0.5
    %v4121 = vmul.f32 %v4119, 0.5
    %v4122 = vtanh.pop %v4120
    %v4123 = vtanh.pop %v4121
    %v4124 = vmul.f32 %v4122, 0.5
    %v4125 = vmul.f32 %v4123, 0.5
    %v4126 = vadd.f32 %v4124, 0.5
    %v4127 = vadd.f32 %v4125, 0.5
    %v4128 = vld [vmem:[#allocation2 + $0x310] sm:$0xff]
    %v4129 = vld [vmem:[#allocation2 + $0x330] sm:$0xff]
    %4130 = vmatprep.subr.bf16.mxu0 0
    %4131 = vmatpush1.bf16.msra.mxu0 %v1434
    %4132 = vmatprep.subr.bf16.mxu0 0
    %4133 = vmatpush1.bf16.msra.mxu0 %v1435
    %4134 = vmatprep.subr.bf16.mxu0 0
    %4135 = vmatpush1.bf16.msra.mxu0 %v1436
    %4136 = vmatprep.subr.bf16.mxu0 0
    %4137 = vmatpush1.bf16.msra.mxu0 %v1437
    %4138 = vmatprep.subr.bf16.mxu0 0
    %4139 = vmatpush1.bf16.msra.mxu0 0
    %4140 = vmatprep.subr.bf16.mxu0 0
    %4141 = vmatpush1.bf16.msra.mxu0 0
    %4142 = vmatprep.subr.bf16.mxu0 0
    %4143 = vmatpush1.bf16.msra.mxu0 0
    %4144 = vmatprep.subr.bf16.mxu0 0
    %4145 = vmatpush1.bf16.msra.mxu0 0
    %4146 = vmatprep.subr.bf16.mxu0 0
    %4147 = vmatpush1.bf16.msra.mxu0 0
    %4148 = vmatprep.subr.bf16.mxu0 0
    %4149 = vmatpush1.bf16.msra.mxu0 0
    %4150 = vmatprep.subr.bf16.mxu0 0
    %4151 = vmatpush1.bf16.msra.mxu0 0
    %4152 = vmatprep.subr.bf16.mxu0 0
    %4153 = vmatpush1.bf16.msra.mxu0 0
    %4154 = vmatprep.subr.bf16.mxu0 0
    %4155 = vmatpush1.bf16.msra.mxu0 0
    %4156 = vmatprep.subr.bf16.mxu0 0
    %4157 = vmatpush1.bf16.msra.mxu0 0
    %4158 = vmatprep.subr.bf16.mxu0 0
    %4159 = vmatpush1.bf16.msra.mxu0 0
    %4160 = vmatprep.subr.bf16.mxu0 0
    %4161 = vmatpush1.bf16.msra.mxu0 0
    %4162 = vmatprep.mubr.bf16.mxu0 0
    %4163 = vmatmul.mubr.bf16.gmra.mrb[0].mxu0 %v4022
    %v4164 = vpop.f32.mrb[0].mxu0
    %v4165 = vadd.f32 0.0, %v4164
    %v4166 = vpop.f32.mrb[0].mxu0
    %v4167 = vpop.f32.mrb[0].mxu0
    %v4168 = vadd.f32 0.0, %v4167
    %v4169 = vpop.f32.mrb[0].mxu0
    %4170 = vdwg.mxu0
    %v4171 = vadd.f32 %v4128, %v4165
    %v4172 = vadd.f32 %v4129, %v4168
    %v4173 = vtanh.pop %v4171
    %v4174 = vtanh.pop %v4172
    %v4175 = vld [vmem:[#allocation2 + $0x318] sm:$0xff]
    %v4176 = vld [vmem:[#allocation2 + $0x338] sm:$0xff]
    %4177 = vmatprep.subr.bf16.mxu0 0
    %4178 = vmatpush1.bf16.msra.mxu0 %v1505
    %4179 = vmatprep.subr.bf16.mxu0 0
    %4180 = vmatpush1.bf16.msra.mxu0 %v1506
    %4181 = vmatprep.subr.bf16.mxu0 0
    %4182 = vmatpush1.bf16.msra.mxu0 %v1507
    %4183 = vmatprep.subr.bf16.mxu0 0
    %4184 = vmatpush1.bf16.msra.mxu0 %v1508
    %4185 = vmatprep.subr.bf16.mxu0 0
    %4186 = vmatpush1.bf16.msra.mxu0 0
    %4187 = vmatprep.subr.bf16.mxu0 0
    %4188 = vmatpush1.bf16.msra.mxu0 0
    %4189 = vmatprep.subr.bf16.mxu0 0
    %4190 = vmatpush1.bf16.msra.mxu0 0
    %4191 = vmatprep.subr.bf16.mxu0 0
    %4192 = vmatpush1.bf16.msra.mxu0 0
    %4193 = vmatprep.subr.bf16.mxu0 0
    %4194 = vmatpush1.bf16.msra.mxu0 0
    %4195 = vmatprep.subr.bf16.mxu0 0
    %4196 = vmatpush1.bf16.msra.mxu0 0
    %4197 = vmatprep.subr.bf16.mxu0 0
    %4198 = vmatpush1.bf16.msra.mxu0 0
    %4199 = vmatprep.subr.bf16.mxu0 0
    %4200 = vmatpush1.bf16.msra.mxu0 0
    %4201 = vmatprep.subr.bf16.mxu0 0
    %4202 = vmatpush1.bf16.msra.mxu0 0
    %4203 = vmatprep.subr.bf16.mxu0 0
    %4204 = vmatpush1.bf16.msra.mxu0 0
    %4205 = vmatprep.subr.bf16.mxu0 0
    %4206 = vmatpush1.bf16.msra.mxu0 0
    %4207 = vmatprep.subr.bf16.mxu0 0
    %4208 = vmatpush1.bf16.msra.mxu0 0
    %4209 = vmatprep.mubr.bf16.mxu0 0
    %4210 = vmatmul.mubr.bf16.gmra.mrb[0].mxu0 %v4022
    %v4211 = vpop.f32.mrb[0].mxu0
    %v4212 = vadd.f32 0.0, %v4211
    %v4213 = vpop.f32.mrb[0].mxu0
    %v4214 = vpop.f32.mrb[0].mxu0
    %v4215 = vadd.f32 0.0, %v4214
    %v4216 = vpop.f32.mrb[0].mxu0
    %4217 = vdwg.mxu0
    %v4218 = vadd.f32 %v4175, %v4212
    %v4219 = vadd.f32 %v4176, %v4215
    %v4220 = vmul.f32 %v4218, 0.5
    %v4221 = vmul.f32 %v4219, 0.5
    %v4222 = vtanh.pop %v4220
    %v4223 = vtanh.pop %v4221
    %v4224 = vmul.f32 %v4222, 0.5
    %v4225 = vmul.f32 %v4223, 0.5
    %v4226 = vadd.f32 %v4224, 0.5
    %v4227 = vadd.f32 %v4225, 0.5
    %v4228 = vmul.f32 %v4126, %v4010
    %v4229 = vmul.f32 %v4127, %v4011
    %v4230 = vmul.f32 %v4073, %v4173
    %v4231 = vmul.f32 %v4074, %v4174
    %v4232 = vadd.f32 %v4228, %v4230
    %v4233 = vadd.f32 %v4229, %v4231
    %v4234 = vtanh.pop %v4232
    %v4235 = vtanh.pop %v4233
    %v4236 = vmul.f32 %v4226, %v4234
    %v4237 = vmul.f32 %v4227, %v4235
    %4238 = vst.msk [vmem:[#allocation3 + $0xc0] sm:$0xff] %vm540, %v4236
    %4239 = vst.msk [vmem:[#allocation3 + $0xc8] sm:$0xff] %vm540, %v4237
    %v4240 = vpack.c.bf16 %v4237, %v4236
    %v4241 = vld [vmem:[#allocation2 + $0x340] sm:$0xff]
    %v4242 = vld [vmem:[#allocation2 + $0x360] sm:$0xff]
    %v4244 = vsel %vm540, %v4240, 0
    %4246 = vmatprep.subr.bf16.mxu0 0
    %4247 = vmatpush1.bf16.msra.mxu0 %v1277
    %4248 = vmatprep.subr.bf16.mxu0 0
    %4249 = vmatpush1.bf16.msra.mxu0 %v1278
    %4250 = vmatprep.subr.bf16.mxu0 0
    %4251 = vmatpush1.bf16.msra.mxu0 %v1279
    %4252 = vmatprep.subr.bf16.mxu0 0
    %4253 = vmatpush1.bf16.msra.mxu0 %v1280
    %4254 = vmatprep.subr.bf16.mxu0 0
    %4255 = vmatpush1.bf16.msra.mxu0 0
    %4256 = vmatprep.subr.bf16.mxu0 0
    %4257 = vmatpush1.bf16.msra.mxu0 0
    %4258 = vmatprep.subr.bf16.mxu0 0
    %4259 = vmatpush1.bf16.msra.mxu0 0
    %4260 = vmatprep.subr.bf16.mxu0 0
    %4261 = vmatpush1.bf16.msra.mxu0 0
    %4262 = vmatprep.subr.bf16.mxu0 0
    %4263 = vmatpush1.bf16.msra.mxu0 0
    %4264 = vmatprep.subr.bf16.mxu0 0
    %4265 = vmatpush1.bf16.msra.mxu0 0
    %4266 = vmatprep.subr.bf16.mxu0 0
    %4267 = vmatpush1.bf16.msra.mxu0 0
    %4268 = vmatprep.subr.bf16.mxu0 0
    %4269 = vmatpush1.bf16.msra.mxu0 0
    %4270 = vmatprep.subr.bf16.mxu0 0
    %4271 = vmatpush1.bf16.msra.mxu0 0
    %4272 = vmatprep.subr.bf16.mxu0 0
    %4273 = vmatpush1.bf16.msra.mxu0 0
    %4274 = vmatprep.subr.bf16.mxu0 0
    %4275 = vmatpush1.bf16.msra.mxu0 0
    %4276 = vmatprep.subr.bf16.mxu0 0
    %4277 = vmatpush1.bf16.msra.mxu0 0
    %4278 = vmatprep.mubr.bf16.mxu0 0
    %4279 = vmatmul.mubr.bf16.gmra.mrb[0].mxu0 %v4244
    %v4280 = vpop.f32.mrb[0].mxu0
    %v4281 = vadd.f32 0.0, %v4280
    %v4282 = vpop.f32.mrb[0].mxu0
    %v4283 = vpop.f32.mrb[0].mxu0
    %v4284 = vadd.f32 0.0, %v4283
    %v4285 = vpop.f32.mrb[0].mxu0
    %4286 = vdwg.mxu0
    %v4287 = vadd.f32 %v4241, %v4281
    %v4288 = vadd.f32 %v4242, %v4284
    %v4289 = vmul.f32 %v4287, 0.5
    %v4290 = vmul.f32 %v4288, 0.5
    %v4291 = vtanh.pop %v4289
    %v4292 = vtanh.pop %v4290
    %v4293 = vmul.f32 %v4291, 0.5
    %v4294 = vmul.f32 %v4292, 0.5
    %v4295 = vadd.f32 %v4293, 0.5
    %v4296 = vadd.f32 %v4294, 0.5
    %v4297 = vld [vmem:[#allocation2 + $0x348] sm:$0xff]
    %v4298 = vld [vmem:[#allocation2 + $0x368] sm:$0xff]
    %4299 = vmatprep.subr.bf16.mxu0 0
    %4300 = vmatpush1.bf16.msra.mxu0 %v1357
    %4301 = vmatprep.subr.bf16.mxu0 0
    %4302 = vmatpush1.bf16.msra.mxu0 %v1358
    %4303 = vmatprep.subr.bf16.mxu0 0
    %4304 = vmatpush1.bf16.msra.mxu0 %v1359
    %4305 = vmatprep.subr.bf16.mxu0 0
    %4306 = vmatpush1.bf16.msra.mxu0 %v1360
    %4307 = vmatprep.subr.bf16.mxu0 0
    %4308 = vmatpush1.bf16.msra.mxu0 0
    %4309 = vmatprep.subr.bf16.mxu0 0
    %4310 = vmatpush1.bf16.msra.mxu0 0
    %4311 = vmatprep.subr.bf16.mxu0 0
    %4312 = vmatpush1.bf16.msra.mxu0 0
    %4313 = vmatprep.subr.bf16.mxu0 0
    %4314 = vmatpush1.bf16.msra.mxu0 0
    %4315 = vmatprep.subr.bf16.mxu0 0
    %4316 = vmatpush1.bf16.msra.mxu0 0
    %4317 = vmatprep.subr.bf16.mxu0 0
    %4318 = vmatpush1.bf16.msra.mxu0 0
    %4319 = vmatprep.subr.bf16.mxu0 0
    %4320 = vmatpush1.bf16.msra.mxu0 0
    %4321 = vmatprep.subr.bf16.mxu0 0
    %4322 = vmatpush1.bf16.msra.mxu0 0
    %4323 = vmatprep.subr.bf16.mxu0 0
    %4324 = vmatpush1.bf16.msra.mxu0 0
    %4325 = vmatprep.subr.bf16.mxu0 0
    %4326 = vmatpush1.bf16.msra.mxu0 0
    %4327 = vmatprep.subr.bf16.mxu0 0
    %4328 = vmatpush1.bf16.msra.mxu0 0
    %4329 = vmatprep.subr.bf16.mxu0 0
    %4330 = vmatpush1.bf16.msra.mxu0 0
    %4331 = vmatprep.mubr.bf16.mxu0 0
    %4332 = vmatmul.mubr.bf16.gmra.mrb[0].mxu0 %v4244
    %v4333 = vpop.f32.mrb[0].mxu0
    %v4334 = vadd.f32 0.0, %v4333
    %v4335 = vpop.f32.mrb[0].mxu0
    %v4336 = vpop.f32.mrb[0].mxu0
    %v4337 = vadd.f32 0.0, %v4336
    %v4338 = vpop.f32.mrb[0].mxu0
    %4339 = vdwg.mxu0
    %v4340 = vadd.f32 %v4297, %v4334
    %v4341 = vadd.f32 %v4298, %v4337
    %v4342 = vmul.f32 %v4340, 0.5
    %v4343 = vmul.f32 %v4341, 0.5
    %v4344 = vtanh.pop %v4342
    %v4345 = vtanh.pop %v4343
    %v4346 = vmul.f32 %v4344, 0.5
    %v4347 = vmul.f32 %v4345, 0.5
    %v4348 = vadd.f32 %v4346, 0.5
    %v4349 = vadd.f32 %v4347, 0.5
    %v4350 = vld [vmem:[#allocation2 + $0x350] sm:$0xff]
    %v4351 = vld [vmem:[#allocation2 + $0x370] sm:$0xff]
    %4352 = vmatprep.subr.bf16.mxu0 0
    %4353 = vmatpush1.bf16.msra.mxu0 %v1434
    %4354 = vmatprep.subr.bf16.mxu0 0
    %4355 = vmatpush1.bf16.msra.mxu0 %v1435
    %4356 = vmatprep.subr.bf16.mxu0 0
    %4357 = vmatpush1.bf16.msra.mxu0 %v1436
    %4358 = vmatprep.subr.bf16.mxu0 0
    %4359 = vmatpush1.bf16.msra.mxu0 %v1437
    %4360 = vmatprep.subr.bf16.mxu0 0
    %4361 = vmatpush1.bf16.msra.mxu0 0
    %4362 = vmatprep.subr.bf16.mxu0 0
    %4363 = vmatpush1.bf16.msra.mxu0 0
    %4364 = vmatprep.subr.bf16.mxu0 0
    %4365 = vmatpush1.bf16.msra.mxu0 0
    %4366 = vmatprep.subr.bf16.mxu0 0
    %4367 = vmatpush1.bf16.msra.mxu0 0
    %4368 = vmatprep.subr.bf16.mxu0 0
    %4369 = vmatpush1.bf16.msra.mxu0 0
    %4370 = vmatprep.subr.bf16.mxu0 0
    %4371 = vmatpush1.bf16.msra.mxu0 0
    %4372 = vmatprep.subr.bf16.mxu0 0
    %4373 = vmatpush1.bf16.msra.mxu0 0
    %4374 = vmatprep.subr.bf16.mxu0 0
    %4375 = vmatpush1.bf16.msra.mxu0 0
    %4376 = vmatprep.subr.bf16.mxu0 0
    %4377 = vmatpush1.bf16.msra.mxu0 0
    %4378 = vmatprep.subr.bf16.mxu0 0
    %4379 = vmatpush1.bf16.msra.mxu0 0
    %4380 = vmatprep.subr.bf16.mxu0 0
    %4381 = vmatpush1.bf16.msra.mxu0 0
    %4382 = vmatprep.subr.bf16.mxu0 0
    %4383 = vmatpush1.bf16.msra.mxu0 0
    %4384 = vmatprep.mubr.bf16.mxu0 0
    %4385 = vmatmul.mubr.bf16.gmra.mrb[0].mxu0 %v4244
    %v4386 = vpop.f32.mrb[0].mxu0
    %v4387 = vadd.f32 0.0, %v4386
    %v4388 = vpop.f32.mrb[0].mxu0
    %v4389 = vpop.f32.mrb[0].mxu0
    %v4390 = vadd.f32 0.0, %v4389
    %v4391 = vpop.f32.mrb[0].mxu0
    %4392 = vdwg.mxu0
    %v4393 = vadd.f32 %v4350, %v4387
    %v4394 = vadd.f32 %v4351, %v4390
    %v4395 = vtanh.pop %v4393
    %v4396 = vtanh.pop %v4394
    %v4397 = vld [vmem:[#allocation2 + $0x358] sm:$0xff]
    %v4398 = vld [vmem:[#allocation2 + $0x378] sm:$0xff]
    %4399 = vmatprep.subr.bf16.mxu0 0
    %4400 = vmatpush1.bf16.msra.mxu0 %v1505
    %4401 = vmatprep.subr.bf16.mxu0 0
    %4402 = vmatpush1.bf16.msra.mxu0 %v1506
    %4403 = vmatprep.subr.bf16.mxu0 0
    %4404 = vmatpush1.bf16.msra.mxu0 %v1507
    %4405 = vmatprep.subr.bf16.mxu0 0
    %4406 = vmatpush1.bf16.msra.mxu0 %v1508
    %4407 = vmatprep.subr.bf16.mxu0 0
    %4408 = vmatpush1.bf16.msra.mxu0 0
    %4409 = vmatprep.subr.bf16.mxu0 0
    %4410 = vmatpush1.bf16.msra.mxu0 0
    %4411 = vmatprep.subr.bf16.mxu0 0
    %4412 = vmatpush1.bf16.msra.mxu0 0
    %4413 = vmatprep.subr.bf16.mxu0 0
    %4414 = vmatpush1.bf16.msra.mxu0 0
    %4415 = vmatprep.subr.bf16.mxu0 0
    %4416 = vmatpush1.bf16.msra.mxu0 0
    %4417 = vmatprep.subr.bf16.mxu0 0
    %4418 = vmatpush1.bf16.msra.mxu0 0
    %4419 = vmatprep.subr.bf16.mxu0 0
    %4420 = vmatpush1.bf16.msra.mxu0 0
    %4421 = vmatprep.subr.bf16.mxu0 0
    %4422 = vmatpush1.bf16.msra.mxu0 0
    %4423 = vmatprep.subr.bf16.mxu0 0
    %4424 = vmatpush1.bf16.msra.mxu0 0
    %4425 = vmatprep.subr.bf16.mxu0 0
    %4426 = vmatpush1.bf16.msra.mxu0 0
    %4427 = vmatprep.subr.bf16.mxu0 0
    %4428 = vmatpush1.bf16.msra.mxu0 0
    %4429 = vmatprep.subr.bf16.mxu0 0
    %4430 = vmatpush1.bf16.msra.mxu0 0
    %4431 = vmatprep.mubr.bf16.mxu0 0
    %4432 = vmatmul.mubr.bf16.gmra.mrb[0].mxu0 %v4244
    %v4433 = vpop.f32.mrb[0].mxu0
    %v4434 = vadd.f32 0.0, %v4433
    %v4435 = vpop.f32.mrb[0].mxu0
    %v4436 = vpop.f32.mrb[0].mxu0
    %v4437 = vadd.f32 0.0, %v4436
    %v4438 = vpop.f32.mrb[0].mxu0
    %4439 = vdwg.mxu0
    %v4440 = vadd.f32 %v4397, %v4434
    %v4441 = vadd.f32 %v4398, %v4437
    %v4442 = vmul.f32 %v4440, 0.5
    %v4443 = vmul.f32 %v4441, 0.5
    %v4444 = vtanh.pop %v4442
    %v4445 = vtanh.pop %v4443
    %v4446 = vmul.f32 %v4444, 0.5
    %v4447 = vmul.f32 %v4445, 0.5
    %v4448 = vadd.f32 %v4446, 0.5
    %v4449 = vadd.f32 %v4447, 0.5
    %v4450 = vmul.f32 %v4348, %v4232
    %v4451 = vmul.f32 %v4349, %v4233
    %v4452 = vmul.f32 %v4295, %v4395
    %v4453 = vmul.f32 %v4296, %v4396
    %v4454 = vadd.f32 %v4450, %v4452
    %v4455 = vadd.f32 %v4451, %v4453
    %v4456 = vtanh.pop %v4454
    %v4457 = vtanh.pop %v4455
    %v4458 = vmul.f32 %v4448, %v4456
    %v4459 = vmul.f32 %v4449, %v4457
    %4460 = vst.msk [vmem:[#allocation3 + $0xd0] sm:$0xff] %vm540, %v4458
    %4461 = vst.msk [vmem:[#allocation3 + $0xd8] sm:$0xff] %vm540, %v4459
    %v4462 = vpack.c.bf16 %v4459, %v4458
    %v4463 = vld [vmem:[#allocation2 + $0x380] sm:$0xff]
    %v4464 = vld [vmem:[#allocation2 + $0x3a0] sm:$0xff]
    %v4466 = vsel %vm540, %v4462, 0
    %4468 = vmatprep.subr.bf16.mxu0 0
    %4469 = vmatpush1.bf16.msra.mxu0 %v1277
    %4470 = vmatprep.subr.bf16.mxu0 0
    %4471 = vmatpush1.bf16.msra.mxu0 %v1278
    %4472 = vmatprep.subr.bf16.mxu0 0
    %4473 = vmatpush1.bf16.msra.mxu0 %v1279
    %4474 = vmatprep.subr.bf16.mxu0 0
    %4475 = vmatpush1.bf16.msra.mxu0 %v1280
    %4476 = vmatprep.subr.bf16.mxu0 0
    %4477 = vmatpush1.bf16.msra.mxu0 0
    %4478 = vmatprep.subr.bf16.mxu0 0
    %4479 = vmatpush1.bf16.msra.mxu0 0
    %4480 = vmatprep.subr.bf16.mxu0 0
    %4481 = vmatpush1.bf16.msra.mxu0 0
    %4482 = vmatprep.subr.bf16.mxu0 0
    %4483 = vmatpush1.bf16.msra.mxu0 0
    %4484 = vmatprep.subr.bf16.mxu0 0
    %4485 = vmatpush1.bf16.msra.mxu0 0
    %4486 = vmatprep.subr.bf16.mxu0 0
    %4487 = vmatpush1.bf16.msra.mxu0 0
    %4488 = vmatprep.subr.bf16.mxu0 0
    %4489 = vmatpush1.bf16.msra.mxu0 0
    %4490 = vmatprep.subr.bf16.mxu0 0
    %4491 = vmatpush1.bf16.msra.mxu0 0
    %4492 = vmatprep.subr.bf16.mxu0 0
    %4493 = vmatpush1.bf16.msra.mxu0 0
    %4494 = vmatprep.subr.bf16.mxu0 0
    %4495 = vmatpush1.bf16.msra.mxu0 0
    %4496 = vmatprep.subr.bf16.mxu0 0
    %4497 = vmatpush1.bf16.msra.mxu0 0
    %4498 = vmatprep.subr.bf16.mxu0 0
    %4499 = vmatpush1.bf16.msra.mxu0 0
    %4500 = vmatprep.mubr.bf16.mxu0 0
    %4501 = vmatmul.mubr.bf16.gmra.mrb[0].mxu0 %v4466
    %v4502 = vpop.f32.mrb[0].mxu0
    %v4503 = vadd.f32 0.0, %v4502
    %v4504 = vpop.f32.mrb[0].mxu0
    %v4505 = vpop.f32.mrb[0].mxu0
    %v4506 = vadd.f32 0.0, %v4505
    %v4507 = vpop.f32.mrb[0].mxu0
    %4508 = vdwg.mxu0
    %v4509 = vadd.f32 %v4463, %v4503
    %v4510 = vadd.f32 %v4464, %v4506
    %v4511 = vmul.f32 %v4509, 0.5
    %v4512 = vmul.f32 %v4510, 0.5
    %v4513 = vtanh.pop %v4511
    %v4514 = vtanh.pop %v4512
    %v4515 = vmul.f32 %v4513, 0.5
    %v4516 = vmul.f32 %v4514, 0.5
    %v4517 = vadd.f32 %v4515, 0.5
    %v4518 = vadd.f32 %v4516, 0.5
    %v4519 = vld [vmem:[#allocation2 + $0x388] sm:$0xff]
    %v4520 = vld [vmem:[#allocation2 + $0x3a8] sm:$0xff]
    %4521 = vmatprep.subr.bf16.mxu0 0
    %4522 = vmatpush1.bf16.msra.mxu0 %v1357
    %4523 = vmatprep.subr.bf16.mxu0 0
    %4524 = vmatpush1.bf16.msra.mxu0 %v1358
    %4525 = vmatprep.subr.bf16.mxu0 0
    %4526 = vmatpush1.bf16.msra.mxu0 %v1359
    %4527 = vmatprep.subr.bf16.mxu0 0
    %4528 = vmatpush1.bf16.msra.mxu0 %v1360
    %4529 = vmatprep.subr.bf16.mxu0 0
    %4530 = vmatpush1.bf16.msra.mxu0 0
    %4531 = vmatprep.subr.bf16.mxu0 0
    %4532 = vmatpush1.bf16.msra.mxu0 0
    %4533 = vmatprep.subr.bf16.mxu0 0
    %4534 = vmatpush1.bf16.msra.mxu0 0
    %4535 = vmatprep.subr.bf16.mxu0 0
    %4536 = vmatpush1.bf16.msra.mxu0 0
    %4537 = vmatprep.subr.bf16.mxu0 0
    %4538 = vmatpush1.bf16.msra.mxu0 0
    %4539 = vmatprep.subr.bf16.mxu0 0
    %4540 = vmatpush1.bf16.msra.mxu0 0
    %4541 = vmatprep.subr.bf16.mxu0 0
    %4542 = vmatpush1.bf16.msra.mxu0 0
    %4543 = vmatprep.subr.bf16.mxu0 0
    %4544 = vmatpush1.bf16.msra.mxu0 0
    %4545 = vmatprep.subr.bf16.mxu0 0
    %4546 = vmatpush1.bf16.msra.mxu0 0
    %4547 = vmatprep.subr.bf16.mxu0 0
    %4548 = vmatpush1.bf16.msra.mxu0 0
    %4549 = vmatprep.subr.bf16.mxu0 0
    %4550 = vmatpush1.bf16.msra.mxu0 0
    %4551 = vmatprep.subr.bf16.mxu0 0
    %4552 = vmatpush1.bf16.msra.mxu0 0
    %4553 = vmatprep.mubr.bf16.mxu0 0
    %4554 = vmatmul.mubr.bf16.gmra.mrb[0].mxu0 %v4466
    %v4555 = vpop.f32.mrb[0].mxu0
    %v4556 = vadd.f32 0.0, %v4555
    %v4557 = vpop.f32.mrb[0].mxu0
    %v4558 = vpop.f32.mrb[0].mxu0
    %v4559 = vadd.f32 0.0, %v4558
    %v4560 = vpop.f32.mrb[0].mxu0
    %4561 = vdwg.mxu0
    %v4562 = vadd.f32 %v4519, %v4556
    %v4563 = vadd.f32 %v4520, %v4559
    %v4564 = vmul.f32 %v4562, 0.5
    %v4565 = vmul.f32 %v4563, 0.5
    %v4566 = vtanh.pop %v4564
    %v4567 = vtanh.pop %v4565
    %v4568 = vmul.f32 %v4566, 0.5
    %v4569 = vmul.f32 %v4567, 0.5
    %v4570 = vadd.f32 %v4568, 0.5
    %v4571 = vadd.f32 %v4569, 0.5
    %v4572 = vld [vmem:[#allocation2 + $0x390] sm:$0xff]
    %v4573 = vld [vmem:[#allocation2 + $0x3b0] sm:$0xff]
    %4574 = vmatprep.subr.bf16.mxu0 0
    %4575 = vmatpush1.bf16.msra.mxu0 %v1434
    %4576 = vmatprep.subr.bf16.mxu0 0
    %4577 = vmatpush1.bf16.msra.mxu0 %v1435
    %4578 = vmatprep.subr.bf16.mxu0 0
    %4579 = vmatpush1.bf16.msra.mxu0 %v1436
    %4580 = vmatprep.subr.bf16.mxu0 0
    %4581 = vmatpush1.bf16.msra.mxu0 %v1437
    %4582 = vmatprep.subr.bf16.mxu0 0
    %4583 = vmatpush1.bf16.msra.mxu0 0
    %4584 = vmatprep.subr.bf16.mxu0 0
    %4585 = vmatpush1.bf16.msra.mxu0 0
    %4586 = vmatprep.subr.bf16.mxu0 0
    %4587 = vmatpush1.bf16.msra.mxu0 0
    %4588 = vmatprep.subr.bf16.mxu0 0
    %4589 = vmatpush1.bf16.msra.mxu0 0
    %4590 = vmatprep.subr.bf16.mxu0 0
    %4591 = vmatpush1.bf16.msra.mxu0 0
    %4592 = vmatprep.subr.bf16.mxu0 0
    %4593 = vmatpush1.bf16.msra.mxu0 0
    %4594 = vmatprep.subr.bf16.mxu0 0
    %4595 = vmatpush1.bf16.msra.mxu0 0
    %4596 = vmatprep.subr.bf16.mxu0 0
    %4597 = vmatpush1.bf16.msra.mxu0 0
    %4598 = vmatprep.subr.bf16.mxu0 0
    %4599 = vmatpush1.bf16.msra.mxu0 0
    %4600 = vmatprep.subr.bf16.mxu0 0
    %4601 = vmatpush1.bf16.msra.mxu0 0
    %4602 = vmatprep.subr.bf16.mxu0 0
    %4603 = vmatpush1.bf16.msra.mxu0 0
    %4604 = vmatprep.subr.bf16.mxu0 0
    %4605 = vmatpush1.bf16.msra.mxu0 0
    %4606 = vmatprep.mubr.bf16.mxu0 0
    %4607 = vmatmul.mubr.bf16.gmra.mrb[0].mxu0 %v4466
    %v4608 = vpop.f32.mrb[0].mxu0
    %v4609 = vadd.f32 0.0, %v4608
    %v4610 = vpop.f32.mrb[0].mxu0
    %v4611 = vpop.f32.mrb[0].mxu0
    %v4612 = vadd.f32 0.0, %v4611
    %v4613 = vpop.f32.mrb[0].mxu0
    %4614 = vdwg.mxu0
    %v4615 = vadd.f32 %v4572, %v4609
    %v4616 = vadd.f32 %v4573, %v4612
    %v4617 = vtanh.pop %v4615
    %v4618 = vtanh.pop %v4616
    %v4619 = vld [vmem:[#allocation2 + $0x398] sm:$0xff]
    %v4620 = vld [vmem:[#allocation2 + $0x3b8] sm:$0xff]
    %4621 = vmatprep.subr.bf16.mxu0 0
    %4622 = vmatpush1.bf16.msra.mxu0 %v1505
    %4623 = vmatprep.subr.bf16.mxu0 0
    %4624 = vmatpush1.bf16.msra.mxu0 %v1506
    %4625 = vmatprep.subr.bf16.mxu0 0
    %4626 = vmatpush1.bf16.msra.mxu0 %v1507
    %4627 = vmatprep.subr.bf16.mxu0 0
    %4628 = vmatpush1.bf16.msra.mxu0 %v1508
    %4629 = vmatprep.subr.bf16.mxu0 0
    %4630 = vmatpush1.bf16.msra.mxu0 0
    %4631 = vmatprep.subr.bf16.mxu0 0
    %4632 = vmatpush1.bf16.msra.mxu0 0
    %4633 = vmatprep.subr.bf16.mxu0 0
    %4634 = vmatpush1.bf16.msra.mxu0 0
    %4635 = vmatprep.subr.bf16.mxu0 0
    %4636 = vmatpush1.bf16.msra.mxu0 0
    %4637 = vmatprep.subr.bf16.mxu0 0
    %4638 = vmatpush1.bf16.msra.mxu0 0
    %4639 = vmatprep.subr.bf16.mxu0 0
    %4640 = vmatpush1.bf16.msra.mxu0 0
    %4641 = vmatprep.subr.bf16.mxu0 0
    %4642 = vmatpush1.bf16.msra.mxu0 0
    %4643 = vmatprep.subr.bf16.mxu0 0
    %4644 = vmatpush1.bf16.msra.mxu0 0
    %4645 = vmatprep.subr.bf16.mxu0 0
    %4646 = vmatpush1.bf16.msra.mxu0 0
    %4647 = vmatprep.subr.bf16.mxu0 0
    %4648 = vmatpush1.bf16.msra.mxu0 0
    %4649 = vmatprep.subr.bf16.mxu0 0
    %4650 = vmatpush1.bf16.msra.mxu0 0
    %4651 = vmatprep.subr.bf16.mxu0 0
    %4652 = vmatpush1.bf16.msra.mxu0 0
    %4653 = vmatprep.mubr.bf16.mxu0 0
    %4654 = vmatmul.mubr.bf16.gmra.mrb[0].mxu0 %v4466
    %v4655 = vpop.f32.mrb[0].mxu0
    %v4656 = vadd.f32 0.0, %v4655
    %v4657 = vpop.f32.mrb[0].mxu0
    %v4658 = vpop.f32.mrb[0].mxu0
    %v4659 = vadd.f32 0.0, %v4658
    %v4660 = vpop.f32.mrb[0].mxu0
    %4661 = vdwg.mxu0
    %v4662 = vadd.f32 %v4619, %v4656
    %v4663 = vadd.f32 %v4620, %v4659
    %v4664 = vmul.f32 %v4662, 0.5
    %v4665 = vmul.f32 %v4663, 0.5
    %v4666 = vtanh.pop %v4664
    %v4667 = vtanh.pop %v4665
    %v4668 = vmul.f32 %v4666, 0.5
    %v4669 = vmul.f32 %v4667, 0.5
    %v4670 = vadd.f32 %v4668, 0.5
    %v4671 = vadd.f32 %v4669, 0.5
    %v4672 = vmul.f32 %v4570, %v4454
    %v4673 = vmul.f32 %v4571, %v4455
    %v4674 = vmul.f32 %v4517, %v4617
    %v4675 = vmul.f32 %v4518, %v4618
    %v4676 = vadd.f32 %v4672, %v4674
    %v4677 = vadd.f32 %v4673, %v4675
    %v4678 = vtanh.pop %v4676
    %v4679 = vtanh.pop %v4677
    %v4680 = vmul.f32 %v4670, %v4678
    %v4681 = vmul.f32 %v4671, %v4679
    %4682 = vst.msk [vmem:[#allocation3 + $0xe0] sm:$0xff] %vm540, %v4680
    %4683 = vst.msk [vmem:[#allocation3 + $0xe8] sm:$0xff] %vm540, %v4681
    %v4684 = vpack.c.bf16 %v4681, %v4680
    %v4685 = vld [vmem:[#allocation2 + $0x3c0] sm:$0xff]
    %v4686 = vld [vmem:[#allocation2 + $0x3e0] sm:$0xff]
    %v4688 = vsel %vm540, %v4684, 0
    %4690 = vmatprep.subr.bf16.mxu0 0
    %4691 = vmatpush1.bf16.msra.mxu0 %v1277
    %4692 = vmatprep.subr.bf16.mxu0 0
    %4693 = vmatpush1.bf16.msra.mxu0 %v1278
    %4694 = vmatprep.subr.bf16.mxu0 0
    %4695 = vmatpush1.bf16.msra.mxu0 %v1279
    %4696 = vmatprep.subr.bf16.mxu0 0
    %4697 = vmatpush1.bf16.msra.mxu0 %v1280
    %4698 = vmatprep.subr.bf16.mxu0 0
    %4699 = vmatpush1.bf16.msra.mxu0 0
    %4700 = vmatprep.subr.bf16.mxu0 0
    %4701 = vmatpush1.bf16.msra.mxu0 0
    %4702 = vmatprep.subr.bf16.mxu0 0
    %4703 = vmatpush1.bf16.msra.mxu0 0
    %4704 = vmatprep.subr.bf16.mxu0 0
    %4705 = vmatpush1.bf16.msra.mxu0 0
    %4706 = vmatprep.subr.bf16.mxu0 0
    %4707 = vmatpush1.bf16.msra.mxu0 0
    %4708 = vmatprep.subr.bf16.mxu0 0
    %4709 = vmatpush1.bf16.msra.mxu0 0
    %4710 = vmatprep.subr.bf16.mxu0 0
    %4711 = vmatpush1.bf16.msra.mxu0 0
    %4712 = vmatprep.subr.bf16.mxu0 0
    %4713 = vmatpush1.bf16.msra.mxu0 0
    %4714 = vmatprep.subr.bf16.mxu0 0
    %4715 = vmatpush1.bf16.msra.mxu0 0
    %4716 = vmatprep.subr.bf16.mxu0 0
    %4717 = vmatpush1.bf16.msra.mxu0 0
    %4718 = vmatprep.subr.bf16.mxu0 0
    %4719 = vmatpush1.bf16.msra.mxu0 0
    %4720 = vmatprep.subr.bf16.mxu0 0
    %4721 = vmatpush1.bf16.msra.mxu0 0
    %4722 = vmatprep.mubr.bf16.mxu0 0
    %4723 = vmatmul.mubr.bf16.gmra.mrb[0].mxu0 %v4688
    %v4724 = vpop.f32.mrb[0].mxu0
    %v4725 = vadd.f32 0.0, %v4724
    %v4726 = vpop.f32.mrb[0].mxu0
    %v4727 = vpop.f32.mrb[0].mxu0
    %v4728 = vadd.f32 0.0, %v4727
    %v4729 = vpop.f32.mrb[0].mxu0
    %4730 = vdwg.mxu0
    %v4731 = vadd.f32 %v4685, %v4725
    %v4732 = vadd.f32 %v4686, %v4728
    %v4733 = vmul.f32 %v4731, 0.5
    %v4734 = vmul.f32 %v4732, 0.5
    %v4735 = vtanh.pop %v4733
    %v4736 = vtanh.pop %v4734
    %v4737 = vmul.f32 %v4735, 0.5
    %v4738 = vmul.f32 %v4736, 0.5
    %v4739 = vadd.f32 %v4737, 0.5
    %v4740 = vadd.f32 %v4738, 0.5
    %v4741 = vld [vmem:[#allocation2 + $0x3c8] sm:$0xff]
    %v4742 = vld [vmem:[#allocation2 + $0x3e8] sm:$0xff]
    %4743 = vmatprep.subr.bf16.mxu0 0
    %4744 = vmatpush1.bf16.msra.mxu0 %v1357
    %4745 = vmatprep.subr.bf16.mxu0 0
    %4746 = vmatpush1.bf16.msra.mxu0 %v1358
    %4747 = vmatprep.subr.bf16.mxu0 0
    %4748 = vmatpush1.bf16.msra.mxu0 %v1359
    %4749 = vmatprep.subr.bf16.mxu0 0
    %4750 = vmatpush1.bf16.msra.mxu0 %v1360
    %4751 = vmatprep.subr.bf16.mxu0 0
    %4752 = vmatpush1.bf16.msra.mxu0 0
    %4753 = vmatprep.subr.bf16.mxu0 0
    %4754 = vmatpush1.bf16.msra.mxu0 0
    %4755 = vmatprep.subr.bf16.mxu0 0
    %4756 = vmatpush1.bf16.msra.mxu0 0
    %4757 = vmatprep.subr.bf16.mxu0 0
    %4758 = vmatpush1.bf16.msra.mxu0 0
    %4759 = vmatprep.subr.bf16.mxu0 0
    %4760 = vmatpush1.bf16.msra.mxu0 0
    %4761 = vmatprep.subr.bf16.mxu0 0
    %4762 = vmatpush1.bf16.msra.mxu0 0
    %4763 = vmatprep.subr.bf16.mxu0 0
    %4764 = vmatpush1.bf16.msra.mxu0 0
    %4765 = vmatprep.subr.bf16.mxu0 0
    %4766 = vmatpush1.bf16.msra.mxu0 0
    %4767 = vmatprep.subr.bf16.mxu0 0
    %4768 = vmatpush1.bf16.msra.mxu0 0
    %4769 = vmatprep.subr.bf16.mxu0 0
    %4770 = vmatpush1.bf16.msra.mxu0 0
    %4771 = vmatprep.subr.bf16.mxu0 0
    %4772 = vmatpush1.bf16.msra.mxu0 0
    %4773 = vmatprep.subr.bf16.mxu0 0
    %4774 = vmatpush1.bf16.msra.mxu0 0
    %4775 = vmatprep.mubr.bf16.mxu0 0
    %4776 = vmatmul.mubr.bf16.gmra.mrb[0].mxu0 %v4688
    %v4777 = vpop.f32.mrb[0].mxu0
    %v4778 = vadd.f32 0.0, %v4777
    %v4779 = vpop.f32.mrb[0].mxu0
    %v4780 = vpop.f32.mrb[0].mxu0
    %v4781 = vadd.f32 0.0, %v4780
    %v4782 = vpop.f32.mrb[0].mxu0
    %4783 = vdwg.mxu0
    %v4784 = vadd.f32 %v4741, %v4778
    %v4785 = vadd.f32 %v4742, %v4781
    %v4786 = vmul.f32 %v4784, 0.5
    %v4787 = vmul.f32 %v4785, 0.5
    %v4788 = vtanh.pop %v4786
    %v4789 = vtanh.pop %v4787
    %v4790 = vmul.f32 %v4788, 0.5
    %v4791 = vmul.f32 %v4789, 0.5
    %v4792 = vadd.f32 %v4790, 0.5
    %v4793 = vadd.f32 %v4791, 0.5
    %v4794 = vld [vmem:[#allocation2 + $0x3d0] sm:$0xff]
    %v4795 = vld [vmem:[#allocation2 + $0x3f0] sm:$0xff]
    %4796 = vmatprep.subr.bf16.mxu0 0
    %4797 = vmatpush1.bf16.msra.mxu0 %v1434
    %4798 = vmatprep.subr.bf16.mxu0 0
    %4799 = vmatpush1.bf16.msra.mxu0 %v1435
    %4800 = vmatprep.subr.bf16.mxu0 0
    %4801 = vmatpush1.bf16.msra.mxu0 %v1436
    %4802 = vmatprep.subr.bf16.mxu0 0
    %4803 = vmatpush1.bf16.msra.mxu0 %v1437
    %4804 = vmatprep.subr.bf16.mxu0 0
    %4805 = vmatpush1.bf16.msra.mxu0 0
    %4806 = vmatprep.subr.bf16.mxu0 0
    %4807 = vmatpush1.bf16.msra.mxu0 0
    %4808 = vmatprep.subr.bf16.mxu0 0
    %4809 = vmatpush1.bf16.msra.mxu0 0
    %4810 = vmatprep.subr.bf16.mxu0 0
    %4811 = vmatpush1.bf16.msra.mxu0 0
    %4812 = vmatprep.subr.bf16.mxu0 0
    %4813 = vmatpush1.bf16.msra.mxu0 0
    %4814 = vmatprep.subr.bf16.mxu0 0
    %4815 = vmatpush1.bf16.msra.mxu0 0
    %4816 = vmatprep.subr.bf16.mxu0 0
    %4817 = vmatpush1.bf16.msra.mxu0 0
    %4818 = vmatprep.subr.bf16.mxu0 0
    %4819 = vmatpush1.bf16.msra.mxu0 0
    %4820 = vmatprep.subr.bf16.mxu0 0
    %4821 = vmatpush1.bf16.msra.mxu0 0
    %4822 = vmatprep.subr.bf16.mxu0 0
    %4823 = vmatpush1.bf16.msra.mxu0 0
    %4824 = vmatprep.subr.bf16.mxu0 0
    %4825 = vmatpush1.bf16.msra.mxu0 0
    %4826 = vmatprep.subr.bf16.mxu0 0
    %4827 = vmatpush1.bf16.msra.mxu0 0
    %4828 = vmatprep.mubr.bf16.mxu0 0
    %4829 = vmatmul.mubr.bf16.gmra.mrb[0].mxu0 %v4688
    %v4830 = vpop.f32.mrb[0].mxu0
    %v4831 = vadd.f32 0.0, %v4830
    %v4832 = vpop.f32.mrb[0].mxu0
    %v4833 = vpop.f32.mrb[0].mxu0
    %v4834 = vadd.f32 0.0, %v4833
    %v4835 = vpop.f32.mrb[0].mxu0
    %4836 = vdwg.mxu0
    %v4837 = vadd.f32 %v4794, %v4831
    %v4838 = vadd.f32 %v4795, %v4834
    %v4839 = vtanh.pop %v4837
    %v4840 = vtanh.pop %v4838
    %v4841 = vld [vmem:[#allocation2 + $0x3d8] sm:$0xff]
    %v4842 = vld [vmem:[#allocation2 + $0x3f8] sm:$0xff]
    %4843 = vmatprep.subr.bf16.mxu0 0
    %4844 = vmatpush1.bf16.msra.mxu0 %v1505
    %4845 = vmatprep.subr.bf16.mxu0 0
    %4846 = vmatpush1.bf16.msra.mxu0 %v1506
    %4847 = vmatprep.subr.bf16.mxu0 0
    %4848 = vmatpush1.bf16.msra.mxu0 %v1507
    %4849 = vmatprep.subr.bf16.mxu0 0
    %4850 = vmatpush1.bf16.msra.mxu0 %v1508
    %4851 = vmatprep.subr.bf16.mxu0 0
    %4852 = vmatpush1.bf16.msra.mxu0 0
    %4853 = vmatprep.subr.bf16.mxu0 0
    %4854 = vmatpush1.bf16.msra.mxu0 0
    %4855 = vmatprep.subr.bf16.mxu0 0
    %4856 = vmatpush1.bf16.msra.mxu0 0
    %4857 = vmatprep.subr.bf16.mxu0 0
    %4858 = vmatpush1.bf16.msra.mxu0 0
    %4859 = vmatprep.subr.bf16.mxu0 0
    %4860 = vmatpush1.bf16.msra.mxu0 0
    %4861 = vmatprep.subr.bf16.mxu0 0
    %4862 = vmatpush1.bf16.msra.mxu0 0
    %4863 = vmatprep.subr.bf16.mxu0 0
    %4864 = vmatpush1.bf16.msra.mxu0 0
    %4865 = vmatprep.subr.bf16.mxu0 0
    %4866 = vmatpush1.bf16.msra.mxu0 0
    %4867 = vmatprep.subr.bf16.mxu0 0
    %4868 = vmatpush1.bf16.msra.mxu0 0
    %4869 = vmatprep.subr.bf16.mxu0 0
    %4870 = vmatpush1.bf16.msra.mxu0 0
    %4871 = vmatprep.subr.bf16.mxu0 0
    %4872 = vmatpush1.bf16.msra.mxu0 0
    %4873 = vmatprep.subr.bf16.mxu0 0
    %4874 = vmatpush1.bf16.msra.mxu0 0
    %4875 = vmatprep.mubr.bf16.mxu0 0
    %4876 = vmatmul.mubr.bf16.gmra.mrb[0].mxu0 %v4688
    %v4877 = vpop.f32.mrb[0].mxu0
    %v4878 = vadd.f32 0.0, %v4877
    %v4879 = vpop.f32.mrb[0].mxu0
    %v4880 = vpop.f32.mrb[0].mxu0
    %v4881 = vadd.f32 0.0, %v4880
    %v4882 = vpop.f32.mrb[0].mxu0
    %4883 = vdwg.mxu0
    %v4884 = vadd.f32 %v4841, %v4878
    %v4885 = vadd.f32 %v4842, %v4881
    %v4886 = vmul.f32 %v4884, 0.5
    %v4887 = vmul.f32 %v4885, 0.5
    %v4888 = vtanh.pop %v4886
    %v4889 = vtanh.pop %v4887
    %v4890 = vmul.f32 %v4888, 0.5
    %v4891 = vmul.f32 %v4889, 0.5
    %v4892 = vadd.f32 %v4890, 0.5
    %v4893 = vadd.f32 %v4891, 0.5
    %v4894 = vmul.f32 %v4792, %v4676
    %v4895 = vmul.f32 %v4793, %v4677
    %v4896 = vmul.f32 %v4739, %v4839
    %v4897 = vmul.f32 %v4740, %v4840
    %v4898 = vadd.f32 %v4894, %v4896
    %v4899 = vadd.f32 %v4895, %v4897
    %v4900 = vtanh.pop %v4898
    %v4901 = vtanh.pop %v4899
    %v4902 = vmul.f32 %v4892, %v4900
    %v4903 = vmul.f32 %v4893, %v4901
    %4904 = vst.msk [vmem:[#allocation3 + $0xf0] sm:$0xff] %vm540, %v4902
    %4905 = vst.msk [vmem:[#allocation3 + $0xf8] sm:$0xff] %vm540, %v4903
    %v4906 = vpack.c.bf16 %v4903, %v4902
    %v4907 = vld [vmem:[#allocation2 + $0x400] sm:$0xff]
    %v4908 = vld [vmem:[#allocation2 + $0x420] sm:$0xff]
    %v4910 = vsel %vm540, %v4906, 0
    %4912 = vmatprep.subr.bf16.mxu0 0
    %4913 = vmatpush1.bf16.msra.mxu0 %v1277
    %4914 = vmatprep.subr.bf16.mxu0 0
    %4915 = vmatpush1.bf16.msra.mxu0 %v1278
    %4916 = vmatprep.subr.bf16.mxu0 0
    %4917 = vmatpush1.bf16.msra.mxu0 %v1279
    %4918 = vmatprep.subr.bf16.mxu0 0
    %4919 = vmatpush1.bf16.msra.mxu0 %v1280
    %4920 = vmatprep.subr.bf16.mxu0 0
    %4921 = vmatpush1.bf16.msra.mxu0 0
    %4922 = vmatprep.subr.bf16.mxu0 0
    %4923 = vmatpush1.bf16.msra.mxu0 0
    %4924 = vmatprep.subr.bf16.mxu0 0
    %4925 = vmatpush1.bf16.msra.mxu0 0
    %4926 = vmatprep.subr.bf16.mxu0 0
    %4927 = vmatpush1.bf16.msra.mxu0 0
    %4928 = vmatprep.subr.bf16.mxu0 0
    %4929 = vmatpush1.bf16.msra.mxu0 0
    %4930 = vmatprep.subr.bf16.mxu0 0
    %4931 = vmatpush1.bf16.msra.mxu0 0
    %4932 = vmatprep.subr.bf16.mxu0 0
    %4933 = vmatpush1.bf16.msra.mxu0 0
    %4934 = vmatprep.subr.bf16.mxu0 0
    %4935 = vmatpush1.bf16.msra.mxu0 0
    %4936 = vmatprep.subr.bf16.mxu0 0
    %4937 = vmatpush1.bf16.msra.mxu0 0
    %4938 = vmatprep.subr.bf16.mxu0 0
    %4939 = vmatpush1.bf16.msra.mxu0 0
    %4940 = vmatprep.subr.bf16.mxu0 0
    %4941 = vmatpush1.bf16.msra.mxu0 0
    %4942 = vmatprep.subr.bf16.mxu0 0
    %4943 = vmatpush1.bf16.msra.mxu0 0
    %4944 = vmatprep.mubr.bf16.mxu0 0
    %4945 = vmatmul.mubr.bf16.gmra.mrb[0].mxu0 %v4910
    %v4946 = vpop.f32.mrb[0].mxu0
    %v4947 = vadd.f32 0.0, %v4946
    %v4948 = vpop.f32.mrb[0].mxu0
    %v4949 = vpop.f32.mrb[0].mxu0
    %v4950 = vadd.f32 0.0, %v4949
    %v4951 = vpop.f32.mrb[0].mxu0
    %4952 = vdwg.mxu0
    %v4953 = vadd.f32 %v4907, %v4947
    %v4954 = vadd.f32 %v4908, %v4950
    %v4955 = vmul.f32 %v4953, 0.5
    %v4956 = vmul.f32 %v4954, 0.5
    %v4957 = vtanh.pop %v4955
    %v4958 = vtanh.pop %v4956
    %v4959 = vmul.f32 %v4957, 0.5
    %v4960 = vmul.f32 %v4958, 0.5
    %v4961 = vadd.f32 %v4959, 0.5
    %v4962 = vadd.f32 %v4960, 0.5
    %v4963 = vld [vmem:[#allocation2 + $0x408] sm:$0xff]
    %v4964 = vld [vmem:[#allocation2 + $0x428] sm:$0xff]
    %4965 = vmatprep.subr.bf16.mxu0 0
    %4966 = vmatpush1.bf16.msra.mxu0 %v1357
    %4967 = vmatprep.subr.bf16.mxu0 0
    %4968 = vmatpush1.bf16.msra.mxu0 %v1358
    %4969 = vmatprep.subr.bf16.mxu0 0
    %4970 = vmatpush1.bf16.msra.mxu0 %v1359
    %4971 = vmatprep.subr.bf16.mxu0 0
    %4972 = vmatpush1.bf16.msra.mxu0 %v1360
    %4973 = vmatprep.subr.bf16.mxu0 0
    %4974 = vmatpush1.bf16.msra.mxu0 0
    %4975 = vmatprep.subr.bf16.mxu0 0
    %4976 = vmatpush1.bf16.msra.mxu0 0
    %4977 = vmatprep.subr.bf16.mxu0 0
    %4978 = vmatpush1.bf16.msra.mxu0 0
    %4979 = vmatprep.subr.bf16.mxu0 0
    %4980 = vmatpush1.bf16.msra.mxu0 0
    %4981 = vmatprep.subr.bf16.mxu0 0
    %4982 = vmatpush1.bf16.msra.mxu0 0
    %4983 = vmatprep.subr.bf16.mxu0 0
    %4984 = vmatpush1.bf16.msra.mxu0 0
    %4985 = vmatprep.subr.bf16.mxu0 0
    %4986 = vmatpush1.bf16.msra.mxu0 0
    %4987 = vmatprep.subr.bf16.mxu0 0
    %4988 = vmatpush1.bf16.msra.mxu0 0
    %4989 = vmatprep.subr.bf16.mxu0 0
    %4990 = vmatpush1.bf16.msra.mxu0 0
    %4991 = vmatprep.subr.bf16.mxu0 0
    %4992 = vmatpush1.bf16.msra.mxu0 0
    %4993 = vmatprep.subr.bf16.mxu0 0
    %4994 = vmatpush1.bf16.msra.mxu0 0
    %4995 = vmatprep.subr.bf16.mxu0 0
    %4996 = vmatpush1.bf16.msra.mxu0 0
    %4997 = vmatprep.mubr.bf16.mxu0 0
    %4998 = vmatmul.mubr.bf16.gmra.mrb[0].mxu0 %v4910
    %v4999 = vpop.f32.mrb[0].mxu0
    %v5000 = vadd.f32 0.0, %v4999
    %v5001 = vpop.f32.mrb[0].mxu0
    %v5002 = vpop.f32.mrb[0].mxu0
    %v5003 = vadd.f32 0.0, %v5002
    %v5004 = vpop.f32.mrb[0].mxu0
    %5005 = vdwg.mxu0
    %v5006 = vadd.f32 %v4963, %v5000
    %v5007 = vadd.f32 %v4964, %v5003
    %v5008 = vmul.f32 %v5006, 0.5
    %v5009 = vmul.f32 %v5007, 0.5
    %v5010 = vtanh.pop %v5008
    %v5011 = vtanh.pop %v5009
    %v5012 = vmul.f32 %v5010, 0.5
    %v5013 = vmul.f32 %v5011, 0.5
    %v5014 = vadd.f32 %v5012, 0.5
    %v5015 = vadd.f32 %v5013, 0.5
    %v5016 = vld [vmem:[#allocation2 + $0x410] sm:$0xff]
    %v5017 = vld [vmem:[#allocation2 + $0x430] sm:$0xff]
    %5018 = vmatprep.subr.bf16.mxu0 0
    %5019 = vmatpush1.bf16.msra.mxu0 %v1434
    %5020 = vmatprep.subr.bf16.mxu0 0
    %5021 = vmatpush1.bf16.msra.mxu0 %v1435
    %5022 = vmatprep.subr.bf16.mxu0 0
    %5023 = vmatpush1.bf16.msra.mxu0 %v1436
    %5024 = vmatprep.subr.bf16.mxu0 0
    %5025 = vmatpush1.bf16.msra.mxu0 %v1437
    %5026 = vmatprep.subr.bf16.mxu0 0
    %5027 = vmatpush1.bf16.msra.mxu0 0
    %5028 = vmatprep.subr.bf16.mxu0 0
    %5029 = vmatpush1.bf16.msra.mxu0 0
    %5030 = vmatprep.subr.bf16.mxu0 0
    %5031 = vmatpush1.bf16.msra.mxu0 0
    %5032 = vmatprep.subr.bf16.mxu0 0
    %5033 = vmatpush1.bf16.msra.mxu0 0
    %5034 = vmatprep.subr.bf16.mxu0 0
    %5035 = vmatpush1.bf16.msra.mxu0 0
    %5036 = vmatprep.subr.bf16.mxu0 0
    %5037 = vmatpush1.bf16.msra.mxu0 0
    %5038 = vmatprep.subr.bf16.mxu0 0
    %5039 = vmatpush1.bf16.msra.mxu0 0
    %5040 = vmatprep.subr.bf16.mxu0 0
    %5041 = vmatpush1.bf16.msra.mxu0 0
    %5042 = vmatprep.subr.bf16.mxu0 0
    %5043 = vmatpush1.bf16.msra.mxu0 0
    %5044 = vmatprep.subr.bf16.mxu0 0
    %5045 = vmatpush1.bf16.msra.mxu0 0
    %5046 = vmatprep.subr.bf16.mxu0 0
    %5047 = vmatpush1.bf16.msra.mxu0 0
    %5048 = vmatprep.subr.bf16.mxu0 0
    %5049 = vmatpush1.bf16.msra.mxu0 0
    %5050 = vmatprep.mubr.bf16.mxu0 0
    %5051 = vmatmul.mubr.bf16.gmra.mrb[0].mxu0 %v4910
    %v5052 = vpop.f32.mrb[0].mxu0
    %v5053 = vadd.f32 0.0, %v5052
    %v5054 = vpop.f32.mrb[0].mxu0
    %v5055 = vpop.f32.mrb[0].mxu0
    %v5056 = vadd.f32 0.0, %v5055
    %v5057 = vpop.f32.mrb[0].mxu0
    %5058 = vdwg.mxu0
    %v5059 = vadd.f32 %v5016, %v5053
    %v5060 = vadd.f32 %v5017, %v5056
    %v5061 = vtanh.pop %v5059
    %v5062 = vtanh.pop %v5060
    %v5063 = vld [vmem:[#allocation2 + $0x418] sm:$0xff]
    %v5064 = vld [vmem:[#allocation2 + $0x438] sm:$0xff]
    %5065 = vmatprep.subr.bf16.mxu0 0
    %5066 = vmatpush1.bf16.msra.mxu0 %v1505
    %5067 = vmatprep.subr.bf16.mxu0 0
    %5068 = vmatpush1.bf16.msra.mxu0 %v1506
    %5069 = vmatprep.subr.bf16.mxu0 0
    %5070 = vmatpush1.bf16.msra.mxu0 %v1507
    %5071 = vmatprep.subr.bf16.mxu0 0
    %5072 = vmatpush1.bf16.msra.mxu0 %v1508
    %5073 = vmatprep.subr.bf16.mxu0 0
    %5074 = vmatpush1.bf16.msra.mxu0 0
    %5075 = vmatprep.subr.bf16.mxu0 0
    %5076 = vmatpush1.bf16.msra.mxu0 0
    %5077 = vmatprep.subr.bf16.mxu0 0
    %5078 = vmatpush1.bf16.msra.mxu0 0
    %5079 = vmatprep.subr.bf16.mxu0 0
    %5080 = vmatpush1.bf16.msra.mxu0 0
    %5081 = vmatprep.subr.bf16.mxu0 0
    %5082 = vmatpush1.bf16.msra.mxu0 0
    %5083 = vmatprep.subr.bf16.mxu0 0
    %5084 = vmatpush1.bf16.msra.mxu0 0
    %5085 = vmatprep.subr.bf16.mxu0 0
    %5086 = vmatpush1.bf16.msra.mxu0 0
    %5087 = vmatprep.subr.bf16.mxu0 0
    %5088 = vmatpush1.bf16.msra.mxu0 0
    %5089 = vmatprep.subr.bf16.mxu0 0
    %5090 = vmatpush1.bf16.msra.mxu0 0
    %5091 = vmatprep.subr.bf16.mxu0 0
    %5092 = vmatpush1.bf16.msra.mxu0 0
    %5093 = vmatprep.subr.bf16.mxu0 0
    %5094 = vmatpush1.bf16.msra.mxu0 0
    %5095 = vmatprep.subr.bf16.mxu0 0
    %5096 = vmatpush1.bf16.msra.mxu0 0
    %5097 = vmatprep.mubr.bf16.mxu0 0
    %5098 = vmatmul.mubr.bf16.gmra.mrb[0].mxu0 %v4910
    %v5099 = vpop.f32.mrb[0].mxu0
    %v5100 = vadd.f32 0.0, %v5099
    %v5101 = vpop.f32.mrb[0].mxu0
    %v5102 = vpop.f32.mrb[0].mxu0
    %v5103 = vadd.f32 0.0, %v5102
    %v5104 = vpop.f32.mrb[0].mxu0
    %5105 = vdwg.mxu0
    %v5106 = vadd.f32 %v5063, %v5100
    %v5107 = vadd.f32 %v5064, %v5103
    %v5108 = vmul.f32 %v5106, 0.5
    %v5109 = vmul.f32 %v5107, 0.5
    %v5110 = vtanh.pop %v5108
    %v5111 = vtanh.pop %v5109
    %v5112 = vmul.f32 %v5110, 0.5
    %v5113 = vmul.f32 %v5111, 0.5
    %v5114 = vadd.f32 %v5112, 0.5
    %v5115 = vadd.f32 %v5113, 0.5
    %v5116 = vmul.f32 %v5014, %v4898
    %v5117 = vmul.f32 %v5015, %v4899
    %v5118 = vmul.f32 %v4961, %v5061
    %v5119 = vmul.f32 %v4962, %v5062
    %v5120 = vadd.f32 %v5116, %v5118
    %v5121 = vadd.f32 %v5117, %v5119
    %v5122 = vtanh.pop %v5120
    %v5123 = vtanh.pop %v5121
    %v5124 = vmul.f32 %v5114, %v5122
    %v5125 = vmul.f32 %v5115, %v5123
    %5126 = vst.msk [vmem:[#allocation3 + $0x100] sm:$0xff] %vm540, %v5124
    %5127 = vst.msk [vmem:[#allocation3 + $0x108] sm:$0xff] %vm540, %v5125
    %v5128 = vpack.c.bf16 %v5125, %v5124
    %v5129 = vld [vmem:[#allocation2 + $0x440] sm:$0xff]
    %v5130 = vld [vmem:[#allocation2 + $0x460] sm:$0xff]
    %v5132 = vsel %vm540, %v5128, 0
    %5134 = vmatprep.subr.bf16.mxu0 0
    %5135 = vmatpush1.bf16.msra.mxu0 %v1277
    %5136 = vmatprep.subr.bf16.mxu0 0
    %5137 = vmatpush1.bf16.msra.mxu0 %v1278
    %5138 = vmatprep.subr.bf16.mxu0 0
    %5139 = vmatpush1.bf16.msra.mxu0 %v1279
    %5140 = vmatprep.subr.bf16.mxu0 0
    %5141 = vmatpush1.bf16.msra.mxu0 %v1280
    %5142 = vmatprep.subr.bf16.mxu0 0
    %5143 = vmatpush1.bf16.msra.mxu0 0
    %5144 = vmatprep.subr.bf16.mxu0 0
    %5145 = vmatpush1.bf16.msra.mxu0 0
    %5146 = vmatprep.subr.bf16.mxu0 0
    %5147 = vmatpush1.bf16.msra.mxu0 0
    %5148 = vmatprep.subr.bf16.mxu0 0
    %5149 = vmatpush1.bf16.msra.mxu0 0
    %5150 = vmatprep.subr.bf16.mxu0 0
    %5151 = vmatpush1.bf16.msra.mxu0 0
    %5152 = vmatprep.subr.bf16.mxu0 0
    %5153 = vmatpush1.bf16.msra.mxu0 0
    %5154 = vmatprep.subr.bf16.mxu0 0
    %5155 = vmatpush1.bf16.msra.mxu0 0
    %5156 = vmatprep.subr.bf16.mxu0 0
    %5157 = vmatpush1.bf16.msra.mxu0 0
    %5158 = vmatprep.subr.bf16.mxu0 0
    %5159 = vmatpush1.bf16.msra.mxu0 0
    %5160 = vmatprep.subr.bf16.mxu0 0
    %5161 = vmatpush1.bf16.msra.mxu0 0
    %5162 = vmatprep.subr.bf16.mxu0 0
    %5163 = vmatpush1.bf16.msra.mxu0 0
    %5164 = vmatprep.subr.bf16.mxu0 0
    %5165 = vmatpush1.bf16.msra.mxu0 0
    %5166 = vmatprep.mubr.bf16.mxu0 0
    %5167 = vmatmul.mubr.bf16.gmra.mrb[0].mxu0 %v5132
    %v5168 = vpop.f32.mrb[0].mxu0
    %v5169 = vadd.f32 0.0, %v5168
    %v5170 = vpop.f32.mrb[0].mxu0
    %v5171 = vpop.f32.mrb[0].mxu0
    %v5172 = vadd.f32 0.0, %v5171
    %v5173 = vpop.f32.mrb[0].mxu0
    %5174 = vdwg.mxu0
    %v5175 = vadd.f32 %v5129, %v5169
    %v5176 = vadd.f32 %v5130, %v5172
    %v5177 = vmul.f32 %v5175, 0.5
    %v5178 = vmul.f32 %v5176, 0.5
    %v5179 = vtanh.pop %v5177
    %v5180 = vtanh.pop %v5178
    %v5181 = vmul.f32 %v5179, 0.5
    %v5182 = vmul.f32 %v5180, 0.5
    %v5183 = vadd.f32 %v5181, 0.5
    %v5184 = vadd.f32 %v5182, 0.5
    %v5185 = vld [vmem:[#allocation2 + $0x448] sm:$0xff]
    %v5186 = vld [vmem:[#allocation2 + $0x468] sm:$0xff]
    %5187 = vmatprep.subr.bf16.mxu0 0
    %5188 = vmatpush1.bf16.msra.mxu0 %v1357
    %5189 = vmatprep.subr.bf16.mxu0 0
    %5190 = vmatpush1.bf16.msra.mxu0 %v1358
    %5191 = vmatprep.subr.bf16.mxu0 0
    %5192 = vmatpush1.bf16.msra.mxu0 %v1359
    %5193 = vmatprep.subr.bf16.mxu0 0
    %5194 = vmatpush1.bf16.msra.mxu0 %v1360
    %5195 = vmatprep.subr.bf16.mxu0 0
    %5196 = vmatpush1.bf16.msra.mxu0 0
    %5197 = vmatprep.subr.bf16.mxu0 0
    %5198 = vmatpush1.bf16.msra.mxu0 0
    %5199 = vmatprep.subr.bf16.mxu0 0
    %5200 = vmatpush1.bf16.msra.mxu0 0
    %5201 = vmatprep.subr.bf16.mxu0 0
    %5202 = vmatpush1.bf16.msra.mxu0 0
    %5203 = vmatprep.subr.bf16.mxu0 0
    %5204 = vmatpush1.bf16.msra.mxu0 0
    %5205 = vmatprep.subr.bf16.mxu0 0
    %5206 = vmatpush1.bf16.msra.mxu0 0
    %5207 = vmatprep.subr.bf16.mxu0 0
    %5208 = vmatpush1.bf16.msra.mxu0 0
    %5209 = vmatprep.subr.bf16.mxu0 0
    %5210 = vmatpush1.bf16.msra.mxu0 0
    %5211 = vmatprep.subr.bf16.mxu0 0
    %5212 = vmatpush1.bf16.msra.mxu0 0
    %5213 = vmatprep.subr.bf16.mxu0 0
    %5214 = vmatpush1.bf16.msra.mxu0 0
    %5215 = vmatprep.subr.bf16.mxu0 0
    %5216 = vmatpush1.bf16.msra.mxu0 0
    %5217 = vmatprep.subr.bf16.mxu0 0
    %5218 = vmatpush1.bf16.msra.mxu0 0
    %5219 = vmatprep.mubr.bf16.mxu0 0
    %5220 = vmatmul.mubr.bf16.gmra.mrb[0].mxu0 %v5132
    %v5221 = vpop.f32.mrb[0].mxu0
    %v5222 = vadd.f32 0.0, %v5221
    %v5223 = vpop.f32.mrb[0].mxu0
    %v5224 = vpop.f32.mrb[0].mxu0
    %v5225 = vadd.f32 0.0, %v5224
    %v5226 = vpop.f32.mrb[0].mxu0
    %5227 = vdwg.mxu0
    %v5228 = vadd.f32 %v5185, %v5222
    %v5229 = vadd.f32 %v5186, %v5225
    %v5230 = vmul.f32 %v5228, 0.5
    %v5231 = vmul.f32 %v5229, 0.5
    %v5232 = vtanh.pop %v5230
    %v5233 = vtanh.pop %v5231
    %v5234 = vmul.f32 %v5232, 0.5
    %v5235 = vmul.f32 %v5233, 0.5
    %v5236 = vadd.f32 %v5234, 0.5
    %v5237 = vadd.f32 %v5235, 0.5
    %v5238 = vld [vmem:[#allocation2 + $0x450] sm:$0xff]
    %v5239 = vld [vmem:[#allocation2 + $0x470] sm:$0xff]
    %5240 = vmatprep.subr.bf16.mxu0 0
    %5241 = vmatpush1.bf16.msra.mxu0 %v1434
    %5242 = vmatprep.subr.bf16.mxu0 0
    %5243 = vmatpush1.bf16.msra.mxu0 %v1435
    %5244 = vmatprep.subr.bf16.mxu0 0
    %5245 = vmatpush1.bf16.msra.mxu0 %v1436
    %5246 = vmatprep.subr.bf16.mxu0 0
    %5247 = vmatpush1.bf16.msra.mxu0 %v1437
    %5248 = vmatprep.subr.bf16.mxu0 0
    %5249 = vmatpush1.bf16.msra.mxu0 0
    %5250 = vmatprep.subr.bf16.mxu0 0
    %5251 = vmatpush1.bf16.msra.mxu0 0
    %5252 = vmatprep.subr.bf16.mxu0 0
    %5253 = vmatpush1.bf16.msra.mxu0 0
    %5254 = vmatprep.subr.bf16.mxu0 0
    %5255 = vmatpush1.bf16.msra.mxu0 0
    %5256 = vmatprep.subr.bf16.mxu0 0
    %5257 = vmatpush1.bf16.msra.mxu0 0
    %5258 = vmatprep.subr.bf16.mxu0 0
    %5259 = vmatpush1.bf16.msra.mxu0 0
    %5260 = vmatprep.subr.bf16.mxu0 0
    %5261 = vmatpush1.bf16.msra.mxu0 0
    %5262 = vmatprep.subr.bf16.mxu0 0
    %5263 = vmatpush1.bf16.msra.mxu0 0
    %5264 = vmatprep.subr.bf16.mxu0 0
    %5265 = vmatpush1.bf16.msra.mxu0 0
    %5266 = vmatprep.subr.bf16.mxu0 0
    %5267 = vmatpush1.bf16.msra.mxu0 0
    %5268 = vmatprep.subr.bf16.mxu0 0
    %5269 = vmatpush1.bf16.msra.mxu0 0
    %5270 = vmatprep.subr.bf16.mxu0 0
    %5271 = vmatpush1.bf16.msra.mxu0 0
    %5272 = vmatprep.mubr.bf16.mxu0 0
    %5273 = vmatmul.mubr.bf16.gmra.mrb[0].mxu0 %v5132
    %v5274 = vpop.f32.mrb[0].mxu0
    %v5275 = vadd.f32 0.0, %v5274
    %v5276 = vpop.f32.mrb[0].mxu0
    %v5277 = vpop.f32.mrb[0].mxu0
    %v5278 = vadd.f32 0.0, %v5277
    %v5279 = vpop.f32.mrb[0].mxu0
    %5280 = vdwg.mxu0
    %v5281 = vadd.f32 %v5238, %v5275
    %v5282 = vadd.f32 %v5239, %v5278
    %v5283 = vtanh.pop %v5281
    %v5284 = vtanh.pop %v5282
    %v5285 = vld [vmem:[#allocation2 + $0x458] sm:$0xff]
    %v5286 = vld [vmem:[#allocation2 + $0x478] sm:$0xff]
    %5287 = vmatprep.subr.bf16.mxu0 0
    %5288 = vmatpush1.bf16.msra.mxu0 %v1505
    %5289 = vmatprep.subr.bf16.mxu0 0
    %5290 = vmatpush1.bf16.msra.mxu0 %v1506
    %5291 = vmatprep.subr.bf16.mxu0 0
    %5292 = vmatpush1.bf16.msra.mxu0 %v1507
    %5293 = vmatprep.subr.bf16.mxu0 0
    %5294 = vmatpush1.bf16.msra.mxu0 %v1508
    %5295 = vmatprep.subr.bf16.mxu0 0
    %5296 = vmatpush1.bf16.msra.mxu0 0
    %5297 = vmatprep.subr.bf16.mxu0 0
    %5298 = vmatpush1.bf16.msra.mxu0 0
    %5299 = vmatprep.subr.bf16.mxu0 0
    %5300 = vmatpush1.bf16.msra.mxu0 0
    %5301 = vmatprep.subr.bf16.mxu0 0
    %5302 = vmatpush1.bf16.msra.mxu0 0
    %5303 = vmatprep.subr.bf16.mxu0 0
    %5304 = vmatpush1.bf16.msra.mxu0 0
    %5305 = vmatprep.subr.bf16.mxu0 0
    %5306 = vmatpush1.bf16.msra.mxu0 0
    %5307 = vmatprep.subr.bf16.mxu0 0
    %5308 = vmatpush1.bf16.msra.mxu0 0
    %5309 = vmatprep.subr.bf16.mxu0 0
    %5310 = vmatpush1.bf16.msra.mxu0 0
    %5311 = vmatprep.subr.bf16.mxu0 0
    %5312 = vmatpush1.bf16.msra.mxu0 0
    %5313 = vmatprep.subr.bf16.mxu0 0
    %5314 = vmatpush1.bf16.msra.mxu0 0
    %5315 = vmatprep.subr.bf16.mxu0 0
    %5316 = vmatpush1.bf16.msra.mxu0 0
    %5317 = vmatprep.subr.bf16.mxu0 0
    %5318 = vmatpush1.bf16.msra.mxu0 0
    %5319 = vmatprep.mubr.bf16.mxu0 0
    %5320 = vmatmul.mubr.bf16.gmra.mrb[0].mxu0 %v5132
    %v5321 = vpop.f32.mrb[0].mxu0
    %v5322 = vadd.f32 0.0, %v5321
    %v5323 = vpop.f32.mrb[0].mxu0
    %v5324 = vpop.f32.mrb[0].mxu0
    %v5325 = vadd.f32 0.0, %v5324
    %v5326 = vpop.f32.mrb[0].mxu0
    %5327 = vdwg.mxu0
    %v5328 = vadd.f32 %v5285, %v5322
    %v5329 = vadd.f32 %v5286, %v5325
    %v5330 = vmul.f32 %v5328, 0.5
    %v5331 = vmul.f32 %v5329, 0.5
    %v5332 = vtanh.pop %v5330
    %v5333 = vtanh.pop %v5331
    %v5334 = vmul.f32 %v5332, 0.5
    %v5335 = vmul.f32 %v5333, 0.5
    %v5336 = vadd.f32 %v5334, 0.5
    %v5337 = vadd.f32 %v5335, 0.5
    %v5338 = vmul.f32 %v5236, %v5120
    %v5339 = vmul.f32 %v5237, %v5121
    %v5340 = vmul.f32 %v5183, %v5283
    %v5341 = vmul.f32 %v5184, %v5284
    %v5342 = vadd.f32 %v5338, %v5340
    %v5343 = vadd.f32 %v5339, %v5341
    %v5344 = vtanh.pop %v5342
    %v5345 = vtanh.pop %v5343
    %v5346 = vmul.f32 %v5336, %v5344
    %v5347 = vmul.f32 %v5337, %v5345
    %5348 = vst.msk [vmem:[#allocation3 + $0x110] sm:$0xff] %vm540, %v5346
    %5349 = vst.msk [vmem:[#allocation3 + $0x118] sm:$0xff] %vm540, %v5347
    %v5350 = vpack.c.bf16 %v5347, %v5346
    %v5351 = vld [vmem:[#allocation2 + $0x480] sm:$0xff]
    %v5352 = vld [vmem:[#allocation2 + $0x4a0] sm:$0xff]
    %v5354 = vsel %vm540, %v5350, 0
    %5356 = vmatprep.subr.bf16.mxu0 0
    %5357 = vmatpush1.bf16.msra.mxu0 %v1277
    %5358 = vmatprep.subr.bf16.mxu0 0
    %5359 = vmatpush1.bf16.msra.mxu0 %v1278
    %5360 = vmatprep.subr.bf16.mxu0 0
    %5361 = vmatpush1.bf16.msra.mxu0 %v1279
    %5362 = vmatprep.subr.bf16.mxu0 0
    %5363 = vmatpush1.bf16.msra.mxu0 %v1280
    %5364 = vmatprep.subr.bf16.mxu0 0
    %5365 = vmatpush1.bf16.msra.mxu0 0
    %5366 = vmatprep.subr.bf16.mxu0 0
    %5367 = vmatpush1.bf16.msra.mxu0 0
    %5368 = vmatprep.subr.bf16.mxu0 0
    %5369 = vmatpush1.bf16.msra.mxu0 0
    %5370 = vmatprep.subr.bf16.mxu0 0
    %5371 = vmatpush1.bf16.msra.mxu0 0
    %5372 = vmatprep.subr.bf16.mxu0 0
    %5373 = vmatpush1.bf16.msra.mxu0 0
    %5374 = vmatprep.subr.bf16.mxu0 0
    %5375 = vmatpush1.bf16.msra.mxu0 0
    %5376 = vmatprep.subr.bf16.mxu0 0
    %5377 = vmatpush1.bf16.msra.mxu0 0
    %5378 = vmatprep.subr.bf16.mxu0 0
    %5379 = vmatpush1.bf16.msra.mxu0 0
    %5380 = vmatprep.subr.bf16.mxu0 0
    %5381 = vmatpush1.bf16.msra.mxu0 0
    %5382 = vmatprep.subr.bf16.mxu0 0
    %5383 = vmatpush1.bf16.msra.mxu0 0
    %5384 = vmatprep.subr.bf16.mxu0 0
    %5385 = vmatpush1.bf16.msra.mxu0 0
    %5386 = vmatprep.subr.bf16.mxu0 0
    %5387 = vmatpush1.bf16.msra.mxu0 0
    %5388 = vmatprep.mubr.bf16.mxu0 0
    %5389 = vmatmul.mubr.bf16.gmra.mrb[0].mxu0 %v5354
    %v5390 = vpop.f32.mrb[0].mxu0
    %v5391 = vadd.f32 0.0, %v5390
    %v5392 = vpop.f32.mrb[0].mxu0
    %v5393 = vpop.f32.mrb[0].mxu0
    %v5394 = vadd.f32 0.0, %v5393
    %v5395 = vpop.f32.mrb[0].mxu0
    %5396 = vdwg.mxu0
    %v5397 = vadd.f32 %v5351, %v5391
    %v5398 = vadd.f32 %v5352, %v5394
    %v5399 = vmul.f32 %v5397, 0.5
    %v5400 = vmul.f32 %v5398, 0.5
    %v5401 = vtanh.pop %v5399
    %v5402 = vtanh.pop %v5400
    %v5403 = vmul.f32 %v5401, 0.5
    %v5404 = vmul.f32 %v5402, 0.5
    %v5405 = vadd.f32 %v5403, 0.5
    %v5406 = vadd.f32 %v5404, 0.5
    %v5407 = vld [vmem:[#allocation2 + $0x488] sm:$0xff]
    %v5408 = vld [vmem:[#allocation2 + $0x4a8] sm:$0xff]
    %5409 = vmatprep.subr.bf16.mxu0 0
    %5410 = vmatpush1.bf16.msra.mxu0 %v1357
    %5411 = vmatprep.subr.bf16.mxu0 0
    %5412 = vmatpush1.bf16.msra.mxu0 %v1358
    %5413 = vmatprep.subr.bf16.mxu0 0
    %5414 = vmatpush1.bf16.msra.mxu0 %v1359
    %5415 = vmatprep.subr.bf16.mxu0 0
    %5416 = vmatpush1.bf16.msra.mxu0 %v1360
    %5417 = vmatprep.subr.bf16.mxu0 0
    %5418 = vmatpush1.bf16.msra.mxu0 0
    %5419 = vmatprep.subr.bf16.mxu0 0
    %5420 = vmatpush1.bf16.msra.mxu0 0
    %5421 = vmatprep.subr.bf16.mxu0 0
    %5422 = vmatpush1.bf16.msra.mxu0 0
    %5423 = vmatprep.subr.bf16.mxu0 0
    %5424 = vmatpush1.bf16.msra.mxu0 0
    %5425 = vmatprep.subr.bf16.mxu0 0
    %5426 = vmatpush1.bf16.msra.mxu0 0
    %5427 = vmatprep.subr.bf16.mxu0 0
    %5428 = vmatpush1.bf16.msra.mxu0 0
    %5429 = vmatprep.subr.bf16.mxu0 0
    %5430 = vmatpush1.bf16.msra.mxu0 0
    %5431 = vmatprep.subr.bf16.mxu0 0
    %5432 = vmatpush1.bf16.msra.mxu0 0
    %5433 = vmatprep.subr.bf16.mxu0 0
    %5434 = vmatpush1.bf16.msra.mxu0 0
    %5435 = vmatprep.subr.bf16.mxu0 0
    %5436 = vmatpush1.bf16.msra.mxu0 0
    %5437 = vmatprep.subr.bf16.mxu0 0
    %5438 = vmatpush1.bf16.msra.mxu0 0
    %5439 = vmatprep.subr.bf16.mxu0 0
    %5440 = vmatpush1.bf16.msra.mxu0 0
    %5441 = vmatprep.mubr.bf16.mxu0 0
    %5442 = vmatmul.mubr.bf16.gmra.mrb[0].mxu0 %v5354
    %v5443 = vpop.f32.mrb[0].mxu0
    %v5444 = vadd.f32 0.0, %v5443
    %v5445 = vpop.f32.mrb[0].mxu0
    %v5446 = vpop.f32.mrb[0].mxu0
    %v5447 = vadd.f32 0.0, %v5446
    %v5448 = vpop.f32.mrb[0].mxu0
    %5449 = vdwg.mxu0
    %v5450 = vadd.f32 %v5407, %v5444
    %v5451 = vadd.f32 %v5408, %v5447
    %v5452 = vmul.f32 %v5450, 0.5
    %v5453 = vmul.f32 %v5451, 0.5
    %v5454 = vtanh.pop %v5452
    %v5455 = vtanh.pop %v5453
    %v5456 = vmul.f32 %v5454, 0.5
    %v5457 = vmul.f32 %v5455, 0.5
    %v5458 = vadd.f32 %v5456, 0.5
    %v5459 = vadd.f32 %v5457, 0.5
    %v5460 = vld [vmem:[#allocation2 + $0x490] sm:$0xff]
    %v5461 = vld [vmem:[#allocation2 + $0x4b0] sm:$0xff]
    %5462 = vmatprep.subr.bf16.mxu0 0
    %5463 = vmatpush1.bf16.msra.mxu0 %v1434
    %5464 = vmatprep.subr.bf16.mxu0 0
    %5465 = vmatpush1.bf16.msra.mxu0 %v1435
    %5466 = vmatprep.subr.bf16.mxu0 0
    %5467 = vmatpush1.bf16.msra.mxu0 %v1436
    %5468 = vmatprep.subr.bf16.mxu0 0
    %5469 = vmatpush1.bf16.msra.mxu0 %v1437
    %5470 = vmatprep.subr.bf16.mxu0 0
    %5471 = vmatpush1.bf16.msra.mxu0 0
    %5472 = vmatprep.subr.bf16.mxu0 0
    %5473 = vmatpush1.bf16.msra.mxu0 0
    %5474 = vmatprep.subr.bf16.mxu0 0
    %5475 = vmatpush1.bf16.msra.mxu0 0
    %5476 = vmatprep.subr.bf16.mxu0 0
    %5477 = vmatpush1.bf16.msra.mxu0 0
    %5478 = vmatprep.subr.bf16.mxu0 0
    %5479 = vmatpush1.bf16.msra.mxu0 0
    %5480 = vmatprep.subr.bf16.mxu0 0
    %5481 = vmatpush1.bf16.msra.mxu0 0
    %5482 = vmatprep.subr.bf16.mxu0 0
    %5483 = vmatpush1.bf16.msra.mxu0 0
    %5484 = vmatprep.subr.bf16.mxu0 0
    %5485 = vmatpush1.bf16.msra.mxu0 0
    %5486 = vmatprep.subr.bf16.mxu0 0
    %5487 = vmatpush1.bf16.msra.mxu0 0
    %5488 = vmatprep.subr.bf16.mxu0 0
    %5489 = vmatpush1.bf16.msra.mxu0 0
    %5490 = vmatprep.subr.bf16.mxu0 0
    %5491 = vmatpush1.bf16.msra.mxu0 0
    %5492 = vmatprep.subr.bf16.mxu0 0
    %5493 = vmatpush1.bf16.msra.mxu0 0
    %5494 = vmatprep.mubr.bf16.mxu0 0
    %5495 = vmatmul.mubr.bf16.gmra.mrb[0].mxu0 %v5354
    %v5496 = vpop.f32.mrb[0].mxu0
    %v5497 = vadd.f32 0.0, %v5496
    %v5498 = vpop.f32.mrb[0].mxu0
    %v5499 = vpop.f32.mrb[0].mxu0
    %v5500 = vadd.f32 0.0, %v5499
    %v5501 = vpop.f32.mrb[0].mxu0
    %5502 = vdwg.mxu0
    %v5503 = vadd.f32 %v5460, %v5497
    %v5504 = vadd.f32 %v5461, %v5500
    %v5505 = vtanh.pop %v5503
    %v5506 = vtanh.pop %v5504
    %v5507 = vld [vmem:[#allocation2 + $0x498] sm:$0xff]
    %v5508 = vld [vmem:[#allocation2 + $0x4b8] sm:$0xff]
    %5509 = vmatprep.subr.bf16.mxu0 0
    %5510 = vmatpush1.bf16.msra.mxu0 %v1505
    %5511 = vmatprep.subr.bf16.mxu0 0
    %5512 = vmatpush1.bf16.msra.mxu0 %v1506
    %5513 = vmatprep.subr.bf16.mxu0 0
    %5514 = vmatpush1.bf16.msra.mxu0 %v1507
    %5515 = vmatprep.subr.bf16.mxu0 0
    %5516 = vmatpush1.bf16.msra.mxu0 %v1508
    %5517 = vmatprep.subr.bf16.mxu0 0
    %5518 = vmatpush1.bf16.msra.mxu0 0
    %5519 = vmatprep.subr.bf16.mxu0 0
    %5520 = vmatpush1.bf16.msra.mxu0 0
    %5521 = vmatprep.subr.bf16.mxu0 0
    %5522 = vmatpush1.bf16.msra.mxu0 0
    %5523 = vmatprep.subr.bf16.mxu0 0
    %5524 = vmatpush1.bf16.msra.mxu0 0
    %5525 = vmatprep.subr.bf16.mxu0 0
    %5526 = vmatpush1.bf16.msra.mxu0 0
    %5527 = vmatprep.subr.bf16.mxu0 0
    %5528 = vmatpush1.bf16.msra.mxu0 0
    %5529 = vmatprep.subr.bf16.mxu0 0
    %5530 = vmatpush1.bf16.msra.mxu0 0
    %5531 = vmatprep.subr.bf16.mxu0 0
    %5532 = vmatpush1.bf16.msra.mxu0 0
    %5533 = vmatprep.subr.bf16.mxu0 0
    %5534 = vmatpush1.bf16.msra.mxu0 0
    %5535 = vmatprep.subr.bf16.mxu0 0
    %5536 = vmatpush1.bf16.msra.mxu0 0
    %5537 = vmatprep.subr.bf16.mxu0 0
    %5538 = vmatpush1.bf16.msra.mxu0 0
    %5539 = vmatprep.subr.bf16.mxu0 0
    %5540 = vmatpush1.bf16.msra.mxu0 0
    %5541 = vmatprep.mubr.bf16.mxu0 0
    %5542 = vmatmul.mubr.bf16.gmra.mrb[0].mxu0 %v5354
    %v5543 = vpop.f32.mrb[0].mxu0
    %v5544 = vadd.f32 0.0, %v5543
    %v5545 = vpop.f32.mrb[0].mxu0
    %v5546 = vpop.f32.mrb[0].mxu0
    %v5547 = vadd.f32 0.0, %v5546
    %v5548 = vpop.f32.mrb[0].mxu0
    %5549 = vdwg.mxu0
    %v5550 = vadd.f32 %v5507, %v5544
    %v5551 = vadd.f32 %v5508, %v5547
    %v5552 = vmul.f32 %v5550, 0.5
    %v5553 = vmul.f32 %v5551, 0.5
    %v5554 = vtanh.pop %v5552
    %v5555 = vtanh.pop %v5553
    %v5556 = vmul.f32 %v5554, 0.5
    %v5557 = vmul.f32 %v5555, 0.5
    %v5558 = vadd.f32 %v5556, 0.5
    %v5559 = vadd.f32 %v5557, 0.5
    %v5560 = vmul.f32 %v5458, %v5342
    %v5561 = vmul.f32 %v5459, %v5343
    %v5562 = vmul.f32 %v5405, %v5505
    %v5563 = vmul.f32 %v5406, %v5506
    %v5564 = vadd.f32 %v5560, %v5562
    %v5565 = vadd.f32 %v5561, %v5563
    %v5566 = vtanh.pop %v5564
    %v5567 = vtanh.pop %v5565
    %v5568 = vmul.f32 %v5558, %v5566
    %v5569 = vmul.f32 %v5559, %v5567
    %5570 = vst.msk [vmem:[#allocation3 + $0x120] sm:$0xff] %vm540, %v5568
    %5571 = vst.msk [vmem:[#allocation3 + $0x128] sm:$0xff] %vm540, %v5569
    %v5572 = vpack.c.bf16 %v5569, %v5568
    %v5573 = vld [vmem:[#allocation2 + $0x4c0] sm:$0xff]
    %v5574 = vld [vmem:[#allocation2 + $0x4e0] sm:$0xff]
    %v5576 = vsel %vm540, %v5572, 0
    %5578 = vmatprep.subr.bf16.mxu0 0
    %5579 = vmatpush1.bf16.msra.mxu0 %v1277
    %5580 = vmatprep.subr.bf16.mxu0 0
    %5581 = vmatpush1.bf16.msra.mxu0 %v1278
    %5582 = vmatprep.subr.bf16.mxu0 0
    %5583 = vmatpush1.bf16.msra.mxu0 %v1279
    %5584 = vmatprep.subr.bf16.mxu0 0
    %5585 = vmatpush1.bf16.msra.mxu0 %v1280
    %5586 = vmatprep.subr.bf16.mxu0 0
    %5587 = vmatpush1.bf16.msra.mxu0 0
    %5588 = vmatprep.subr.bf16.mxu0 0
    %5589 = vmatpush1.bf16.msra.mxu0 0
    %5590 = vmatprep.subr.bf16.mxu0 0
    %5591 = vmatpush1.bf16.msra.mxu0 0
    %5592 = vmatprep.subr.bf16.mxu0 0
    %5593 = vmatpush1.bf16.msra.mxu0 0
    %5594 = vmatprep.subr.bf16.mxu0 0
    %5595 = vmatpush1.bf16.msra.mxu0 0
    %5596 = vmatprep.subr.bf16.mxu0 0
    %5597 = vmatpush1.bf16.msra.mxu0 0
    %5598 = vmatprep.subr.bf16.mxu0 0
    %5599 = vmatpush1.bf16.msra.mxu0 0
    %5600 = vmatprep.subr.bf16.mxu0 0
    %5601 = vmatpush1.bf16.msra.mxu0 0
    %5602 = vmatprep.subr.bf16.mxu0 0
    %5603 = vmatpush1.bf16.msra.mxu0 0
    %5604 = vmatprep.subr.bf16.mxu0 0
    %5605 = vmatpush1.bf16.msra.mxu0 0
    %5606 = vmatprep.subr.bf16.mxu0 0
    %5607 = vmatpush1.bf16.msra.mxu0 0
    %5608 = vmatprep.subr.bf16.mxu0 0
    %5609 = vmatpush1.bf16.msra.mxu0 0
    %5610 = vmatprep.mubr.bf16.mxu0 0
    %5611 = vmatmul.mubr.bf16.gmra.mrb[0].mxu0 %v5576
    %v5612 = vpop.f32.mrb[0].mxu0
    %v5613 = vadd.f32 0.0, %v5612
    %v5614 = vpop.f32.mrb[0].mxu0
    %v5615 = vpop.f32.mrb[0].mxu0
    %v5616 = vadd.f32 0.0, %v5615
    %v5617 = vpop.f32.mrb[0].mxu0
    %5618 = vdwg.mxu0
    %v5619 = vadd.f32 %v5573, %v5613
    %v5620 = vadd.f32 %v5574, %v5616
    %v5621 = vmul.f32 %v5619, 0.5
    %v5622 = vmul.f32 %v5620, 0.5
    %v5623 = vtanh.pop %v5621
    %v5624 = vtanh.pop %v5622
    %v5625 = vmul.f32 %v5623, 0.5
    %v5626 = vmul.f32 %v5624, 0.5
    %v5627 = vadd.f32 %v5625, 0.5
    %v5628 = vadd.f32 %v5626, 0.5
    %v5629 = vld [vmem:[#allocation2 + $0x4c8] sm:$0xff]
    %v5630 = vld [vmem:[#allocation2 + $0x4e8] sm:$0xff]
    %5631 = vmatprep.subr.bf16.mxu0 0
    %5632 = vmatpush1.bf16.msra.mxu0 %v1357
    %5633 = vmatprep.subr.bf16.mxu0 0
    %5634 = vmatpush1.bf16.msra.mxu0 %v1358
    %5635 = vmatprep.subr.bf16.mxu0 0
    %5636 = vmatpush1.bf16.msra.mxu0 %v1359
    %5637 = vmatprep.subr.bf16.mxu0 0
    %5638 = vmatpush1.bf16.msra.mxu0 %v1360
    %5639 = vmatprep.subr.bf16.mxu0 0
    %5640 = vmatpush1.bf16.msra.mxu0 0
    %5641 = vmatprep.subr.bf16.mxu0 0
    %5642 = vmatpush1.bf16.msra.mxu0 0
    %5643 = vmatprep.subr.bf16.mxu0 0
    %5644 = vmatpush1.bf16.msra.mxu0 0
    %5645 = vmatprep.subr.bf16.mxu0 0
    %5646 = vmatpush1.bf16.msra.mxu0 0
    %5647 = vmatprep.subr.bf16.mxu0 0
    %5648 = vmatpush1.bf16.msra.mxu0 0
    %5649 = vmatprep.subr.bf16.mxu0 0
    %5650 = vmatpush1.bf16.msra.mxu0 0
    %5651 = vmatprep.subr.bf16.mxu0 0
    %5652 = vmatpush1.bf16.msra.mxu0 0
    %5653 = vmatprep.subr.bf16.mxu0 0
    %5654 = vmatpush1.bf16.msra.mxu0 0
    %5655 = vmatprep.subr.bf16.mxu0 0
    %5656 = vmatpush1.bf16.msra.mxu0 0
    %5657 = vmatprep.subr.bf16.mxu0 0
    %5658 = vmatpush1.bf16.msra.mxu0 0
    %5659 = vmatprep.subr.bf16.mxu0 0
    %5660 = vmatpush1.bf16.msra.mxu0 0
    %5661 = vmatprep.subr.bf16.mxu0 0
    %5662 = vmatpush1.bf16.msra.mxu0 0
    %5663 = vmatprep.mubr.bf16.mxu0 0
    %5664 = vmatmul.mubr.bf16.gmra.mrb[0].mxu0 %v5576
    %v5665 = vpop.f32.mrb[0].mxu0
    %v5666 = vadd.f32 0.0, %v5665
    %v5667 = vpop.f32.mrb[0].mxu0
    %v5668 = vpop.f32.mrb[0].mxu0
    %v5669 = vadd.f32 0.0, %v5668
    %v5670 = vpop.f32.mrb[0].mxu0
    %5671 = vdwg.mxu0
    %v5672 = vadd.f32 %v5629, %v5666
    %v5673 = vadd.f32 %v5630, %v5669
    %v5674 = vmul.f32 %v5672, 0.5
    %v5675 = vmul.f32 %v5673, 0.5
    %v5676 = vtanh.pop %v5674
    %v5677 = vtanh.pop %v5675
    %v5678 = vmul.f32 %v5676, 0.5
    %v5679 = vmul.f32 %v5677, 0.5
    %v5680 = vadd.f32 %v5678, 0.5
    %v5681 = vadd.f32 %v5679, 0.5
    %v5682 = vld [vmem:[#allocation2 + $0x4d0] sm:$0xff]
    %v5683 = vld [vmem:[#allocation2 + $0x4f0] sm:$0xff]
    %5684 = vmatprep.subr.bf16.mxu0 0
    %5685 = vmatpush1.bf16.msra.mxu0 %v1434
    %5686 = vmatprep.subr.bf16.mxu0 0
    %5687 = vmatpush1.bf16.msra.mxu0 %v1435
    %5688 = vmatprep.subr.bf16.mxu0 0
    %5689 = vmatpush1.bf16.msra.mxu0 %v1436
    %5690 = vmatprep.subr.bf16.mxu0 0
    %5691 = vmatpush1.bf16.msra.mxu0 %v1437
    %5692 = vmatprep.subr.bf16.mxu0 0
    %5693 = vmatpush1.bf16.msra.mxu0 0
    %5694 = vmatprep.subr.bf16.mxu0 0
    %5695 = vmatpush1.bf16.msra.mxu0 0
    %5696 = vmatprep.subr.bf16.mxu0 0
    %5697 = vmatpush1.bf16.msra.mxu0 0
    %5698 = vmatprep.subr.bf16.mxu0 0
    %5699 = vmatpush1.bf16.msra.mxu0 0
    %5700 = vmatprep.subr.bf16.mxu0 0
    %5701 = vmatpush1.bf16.msra.mxu0 0
    %5702 = vmatprep.subr.bf16.mxu0 0
    %5703 = vmatpush1.bf16.msra.mxu0 0
    %5704 = vmatprep.subr.bf16.mxu0 0
    %5705 = vmatpush1.bf16.msra.mxu0 0
    %5706 = vmatprep.subr.bf16.mxu0 0
    %5707 = vmatpush1.bf16.msra.mxu0 0
    %5708 = vmatprep.subr.bf16.mxu0 0
    %5709 = vmatpush1.bf16.msra.mxu0 0
    %5710 = vmatprep.subr.bf16.mxu0 0
    %5711 = vmatpush1.bf16.msra.mxu0 0
    %5712 = vmatprep.subr.bf16.mxu0 0
    %5713 = vmatpush1.bf16.msra.mxu0 0
    %5714 = vmatprep.subr.bf16.mxu0 0
    %5715 = vmatpush1.bf16.msra.mxu0 0
    %5716 = vmatprep.mubr.bf16.mxu0 0
    %5717 = vmatmul.mubr.bf16.gmra.mrb[0].mxu0 %v5576
    %v5718 = vpop.f32.mrb[0].mxu0
    %v5719 = vadd.f32 0.0, %v5718
    %v5720 = vpop.f32.mrb[0].mxu0
    %v5721 = vpop.f32.mrb[0].mxu0
    %v5722 = vadd.f32 0.0, %v5721
    %v5723 = vpop.f32.mrb[0].mxu0
    %5724 = vdwg.mxu0
    %v5725 = vadd.f32 %v5682, %v5719
    %v5726 = vadd.f32 %v5683, %v5722
    %v5727 = vtanh.pop %v5725
    %v5728 = vtanh.pop %v5726
    %v5729 = vld [vmem:[#allocation2 + $0x4d8] sm:$0xff]
    %v5730 = vld [vmem:[#allocation2 + $0x4f8] sm:$0xff]
    %5731 = vmatprep.subr.bf16.mxu0 0
    %5732 = vmatpush1.bf16.msra.mxu0 %v1505
    %5733 = vmatprep.subr.bf16.mxu0 0
    %5734 = vmatpush1.bf16.msra.mxu0 %v1506
    %5735 = vmatprep.subr.bf16.mxu0 0
    %5736 = vmatpush1.bf16.msra.mxu0 %v1507
    %5737 = vmatprep.subr.bf16.mxu0 0
    %5738 = vmatpush1.bf16.msra.mxu0 %v1508
    %5739 = vmatprep.subr.bf16.mxu0 0
    %5740 = vmatpush1.bf16.msra.mxu0 0
    %5741 = vmatprep.subr.bf16.mxu0 0
    %5742 = vmatpush1.bf16.msra.mxu0 0
    %5743 = vmatprep.subr.bf16.mxu0 0
    %5744 = vmatpush1.bf16.msra.mxu0 0
    %5745 = vmatprep.subr.bf16.mxu0 0
    %5746 = vmatpush1.bf16.msra.mxu0 0
    %5747 = vmatprep.subr.bf16.mxu0 0
    %5748 = vmatpush1.bf16.msra.mxu0 0
    %5749 = vmatprep.subr.bf16.mxu0 0
    %5750 = vmatpush1.bf16.msra.mxu0 0
    %5751 = vmatprep.subr.bf16.mxu0 0
    %5752 = vmatpush1.bf16.msra.mxu0 0
    %5753 = vmatprep.subr.bf16.mxu0 0
    %5754 = vmatpush1.bf16.msra.mxu0 0
    %5755 = vmatprep.subr.bf16.mxu0 0
    %5756 = vmatpush1.bf16.msra.mxu0 0
    %5757 = vmatprep.subr.bf16.mxu0 0
    %5758 = vmatpush1.bf16.msra.mxu0 0
    %5759 = vmatprep.subr.bf16.mxu0 0
    %5760 = vmatpush1.bf16.msra.mxu0 0
    %5761 = vmatprep.subr.bf16.mxu0 0
    %5762 = vmatpush1.bf16.msra.mxu0 0
    %5763 = vmatprep.mubr.bf16.mxu0 0
    %5764 = vmatmul.mubr.bf16.gmra.mrb[0].mxu0 %v5576
    %v5765 = vpop.f32.mrb[0].mxu0
    %v5766 = vadd.f32 0.0, %v5765
    %v5767 = vpop.f32.mrb[0].mxu0
    %v5768 = vpop.f32.mrb[0].mxu0
    %v5769 = vadd.f32 0.0, %v5768
    %v5770 = vpop.f32.mrb[0].mxu0
    %5771 = vdwg.mxu0
    %v5772 = vadd.f32 %v5729, %v5766
    %v5773 = vadd.f32 %v5730, %v5769
    %v5774 = vmul.f32 %v5772, 0.5
    %v5775 = vmul.f32 %v5773, 0.5
    %v5776 = vtanh.pop %v5774
    %v5777 = vtanh.pop %v5775
    %v5778 = vmul.f32 %v5776, 0.5
    %v5779 = vmul.f32 %v5777, 0.5
    %v5780 = vadd.f32 %v5778, 0.5
    %v5781 = vadd.f32 %v5779, 0.5
    %v5782 = vmul.f32 %v5680, %v5564
    %v5783 = vmul.f32 %v5681, %v5565
    %v5784 = vmul.f32 %v5627, %v5727
    %v5785 = vmul.f32 %v5628, %v5728
    %v5786 = vadd.f32 %v5782, %v5784
    %v5787 = vadd.f32 %v5783, %v5785
    %v5788 = vtanh.pop %v5786
    %v5789 = vtanh.pop %v5787
    %v5790 = vmul.f32 %v5780, %v5788
    %v5791 = vmul.f32 %v5781, %v5789
    %5792 = vst.msk [vmem:[#allocation3 + $0x130] sm:$0xff] %vm540, %v5790
    %5793 = vst.msk [vmem:[#allocation3 + $0x138] sm:$0xff] %vm540, %v5791
    %v5794 = vld [vmem:[#allocation3] sm:$0xff]
    %v5795 = vld [vmem:[#allocation3 + $0x8] sm:$0xff]
    %v5796 = vld [vmem:[#allocation3 + $0x10] sm:$0xff]
    %v5797 = vld [vmem:[#allocation3 + $0x18] sm:$0xff]
    %v5798 = vld [vmem:[#allocation3 + $0x20] sm:$0xff]
    %v5799 = vld [vmem:[#allocation3 + $0x28] sm:$0xff]
    %v5800 = vld [vmem:[#allocation3 + $0x30] sm:$0xff]
    %v5801 = vld [vmem:[#allocation3 + $0x38] sm:$0xff]
    %v5802 = vld [vmem:[#allocation3 + $0x40] sm:$0xff]
    %v5803 = vld [vmem:[#allocation3 + $0x48] sm:$0xff]
    %v5804 = vld [vmem:[#allocation3 + $0x50] sm:$0xff]
    %v5805 = vld [vmem:[#allocation3 + $0x58] sm:$0xff]
    %v5806 = vld [vmem:[#allocation3 + $0x60] sm:$0xff]
    %v5807 = vld [vmem:[#allocation3 + $0x68] sm:$0xff]
    %v5808 = vld [vmem:[#allocation3 + $0x70] sm:$0xff]
    %v5809 = vld [vmem:[#allocation3 + $0x78] sm:$0xff]
    %v5810 = vld [vmem:[#allocation3 + $0x80] sm:$0xff]
    %v5811 = vld [vmem:[#allocation3 + $0x88] sm:$0xff]
    %v5812 = vld [vmem:[#allocation3 + $0x90] sm:$0xff]
    %v5813 = vld [vmem:[#allocation3 + $0x98] sm:$0xff]
    %v5814 = vld [vmem:[#allocation3 + $0xa0] sm:$0xff]
    %v5815 = vld [vmem:[#allocation3 + $0xa8] sm:$0xff]
    %v5816 = vld [vmem:[#allocation3 + $0xb0] sm:$0xff]
    %v5817 = vld [vmem:[#allocation3 + $0xb8] sm:$0xff]
    %v5818 = vld [vmem:[#allocation3 + $0xc0] sm:$0xff]
    %v5819 = vld [vmem:[#allocation3 + $0xc8] sm:$0xff]
    %v5820 = vld [vmem:[#allocation3 + $0xd0] sm:$0xff]
    %v5821 = vld [vmem:[#allocation3 + $0xd8] sm:$0xff]
    %v5822 = vld [vmem:[#allocation3 + $0xe0] sm:$0xff]
    %v5823 = vld [vmem:[#allocation3 + $0xe8] sm:$0xff]
    %v5824 = vld [vmem:[#allocation3 + $0xf0] sm:$0xff]
    %v5825 = vld [vmem:[#allocation3 + $0xf8] sm:$0xff]
    %v5826 = vld [vmem:[#allocation3 + $0x100] sm:$0xff]
    %v5827 = vld [vmem:[#allocation3 + $0x108] sm:$0xff]
    %v5828 = vld [vmem:[#allocation3 + $0x110] sm:$0xff]
    %v5829 = vld [vmem:[#allocation3 + $0x118] sm:$0xff]
    %v5830 = vld [vmem:[#allocation3 + $0x120] sm:$0xff]
    %v5831 = vld [vmem:[#allocation3 + $0x128] sm:$0xff]
    %v5832 = vld [vmem:[#allocation3 + $0x130] sm:$0xff]
    %v5833 = vld [vmem:[#allocation3 + $0x138] sm:$0xff]
    %v5834 = vld [vmem:[%s7 + $0x2] sm:$0x1]
    %v5835 = vpack.c.bf16 %v5795, %v5794
    %v5836 = vpack.c.bf16 %v5797, %v5796
    %v5837 = vpack.c.bf16 %v5799, %v5798
    %v5838 = vpack.c.bf16 %v5801, %v5800
    %v5839 = vpack.c.bf16 %v5803, %v5802
    %v5840 = vpack.c.bf16 %v5805, %v5804
    %v5841 = vpack.c.bf16 %v5807, %v5806
    %v5842 = vpack.c.bf16 %v5809, %v5808
    %v5843 = vpack.c.bf16 %v5811, %v5810
    %v5844 = vpack.c.bf16 %v5813, %v5812
    %v5845 = vpack.c.bf16 %v5815, %v5814
    %v5846 = vpack.c.bf16 %v5817, %v5816
    %v5847 = vpack.c.bf16 %v5819, %v5818
    %v5848 = vpack.c.bf16 %v5821, %v5820
    %v5849 = vpack.c.bf16 %v5823, %v5822
    %v5850 = vpack.c.bf16 %v5825, %v5824
    %v5851 = vpack.c.bf16 %v5827, %v5826
    %v5852 = vpack.c.bf16 %v5829, %v5828
    %v5853 = vpack.c.bf16 %v5831, %v5830
    %v5854 = vpack.c.bf16 %v5833, %v5832
    %v5855 = vld [vmem:[%s4] sm:$0xf]
    %v5856 = vld [vmem:[%s4 + $0x4] sm:$0xf]
    %v5857 = vld [vmem:[%s4 + $0x8] sm:$0xf]
    %v5858 = vld [vmem:[%s4 + $0xc] sm:$0xf]
    %v5859 = vld [vmem:[%s4 + $0x10] sm:$0xf]
    %v5860 = vld [vmem:[%s4 + $0x14] sm:$0xf]
    %v5861 = vld [vmem:[%s4 + $0x18] sm:$0xf]
    %v5862 = vld [vmem:[%s4 + $0x1c] sm:$0xf]
    %v5863 = vlaneseq
    %v5864 = vshrl.u32 %v5863, 7
    %v5865 = vsub.s32 0, %v5864
    %v5866 = vrot.slane %v5834, %v5865
    %v5875 = vunpack.c.l.b16 %v5855
    %v5876 = vunpack.c.l.b16 %v5856
    %v5877 = vunpack.c.l.b16 %v5857
    %v5878 = vunpack.c.l.b16 %v5858
    %v5879 = vunpack.c.l.b16 %v5859
    %v5880 = vunpack.c.l.b16 %v5860
    %v5881 = vunpack.c.l.b16 %v5861
    %v5882 = vunpack.c.l.b16 %v5862
    %v5883 = vpack.c.b16 %v5876, %v5875
    %v5884 = vpack.c.b16 %v5878, %v5877
    %v5885 = vpack.c.b16 %v5880, %v5879
    %v5886 = vpack.c.b16 %v5882, %v5881
    %v5892 = vsel %vm540, %v5835, 0
    %v5895 = vsel %vm540, %v5836, 0
    %v5898 = vsel %vm540, %v5837, 0
    %v5901 = vsel %vm540, %v5838, 0
    %v5904 = vsel %vm540, %v5839, 0
    %v5907 = vsel %vm540, %v5840, 0
    %v5910 = vsel %vm540, %v5841, 0
    %v5913 = vsel %vm540, %v5842, 0
    %v5916 = vsel %vm540, %v5843, 0
    %v5919 = vsel %vm540, %v5844, 0
    %v5922 = vsel %vm540, %v5845, 0
    %v5925 = vsel %vm540, %v5846, 0
    %v5928 = vsel %vm540, %v5847, 0
    %v5931 = vsel %vm540, %v5848, 0
    %v5934 = vsel %vm540, %v5849, 0
    %v5937 = vsel %vm540, %v5850, 0
    %v5940 = vsel %vm540, %v5851, 0
    %v5943 = vsel %vm540, %v5852, 0
    %v5946 = vsel %vm540, %v5853, 0
    %v5949 = vsel %vm540, %v5854, 0
    %5951 = vmatprep.subr.bf16.mxu0 0
    %5952 = vmatpush1.bf16.msra.mxu0 %v5883
    %5953 = vmatprep.subr.bf16.mxu0 0
    %5954 = vmatpush1.bf16.msra.mxu0 %v5884
    %5955 = vmatprep.subr.bf16.mxu0 0
    %5956 = vmatpush1.bf16.msra.mxu0 %v5885
    %5957 = vmatprep.subr.bf16.mxu0 0
    %5958 = vmatpush1.bf16.msra.mxu0 %v5886
    %5959 = vmatprep.subr.bf16.mxu0 0
    %5960 = vmatpush1.bf16.msra.mxu0 0
    %5961 = vmatprep.subr.bf16.mxu0 0
    %5962 = vmatpush1.bf16.msra.mxu0 0
    %5963 = vmatprep.subr.bf16.mxu0 0
    %5964 = vmatpush1.bf16.msra.mxu0 0
    %5965 = vmatprep.subr.bf16.mxu0 0
    %5966 = vmatpush1.bf16.msra.mxu0 0
    %5967 = vmatprep.subr.bf16.mxu0 0
    %5968 = vmatpush1.bf16.msra.mxu0 0
    %5969 = vmatprep.subr.bf16.mxu0 0
    %5970 = vmatpush1.bf16.msra.mxu0 0
    %5971 = vmatprep.subr.bf16.mxu0 0
    %5972 = vmatpush1.bf16.msra.mxu0 0
    %5973 = vmatprep.subr.bf16.mxu0 0
    %5974 = vmatpush1.bf16.msra.mxu0 0
    %5975 = vmatprep.subr.bf16.mxu0 0
    %5976 = vmatpush1.bf16.msra.mxu0 0
    %5977 = vmatprep.subr.bf16.mxu0 0
    %5978 = vmatpush1.bf16.msra.mxu0 0
    %5979 = vmatprep.subr.bf16.mxu0 0
    %5980 = vmatpush1.bf16.msra.mxu0 0
    %5981 = vmatprep.subr.bf16.mxu0 0
    %5982 = vmatpush1.bf16.msra.mxu0 0
    %5983 = vmatprep.mubr.bf16.mxu0 0
    %5984 = vmatmul.mubr.bf16.gmra.mrb[0].mxu0 %v5892
    %v5985 = vpop.f32.mrb[0].mxu0
    %v5986 = vadd.f32 %v5866, %v5985
    %v5987 = vpop.f32.mrb[0].mxu0
    %v5988 = vpop.f32.mrb[0].mxu0
    %v5989 = vadd.f32 %v5866, %v5988
    %v5990 = vpop.f32.mrb[0].mxu0
    %5991 = vmatprep.mubr.bf16.mxu0 0
    %5992 = vmatmul.mubr.bf16.gmra.mrb[0].mxu0 %v5895
    %v5993 = vpop.f32.mrb[0].mxu0
    %v5994 = vadd.f32 %v5866, %v5993
    %v5995 = vpop.f32.mrb[0].mxu0
    %v5996 = vpop.f32.mrb[0].mxu0
    %v5997 = vadd.f32 %v5866, %v5996
    %v5998 = vpop.f32.mrb[0].mxu0
    %5999 = vmatprep.mubr.bf16.mxu0 0
    %6000 = vmatmul.mubr.bf16.gmra.mrb[0].mxu0 %v5898
    %v6001 = vpop.f32.mrb[0].mxu0
    %v6002 = vadd.f32 %v5866, %v6001
    %v6003 = vpop.f32.mrb[0].mxu0
    %v6004 = vpop.f32.mrb[0].mxu0
    %v6005 = vadd.f32 %v5866, %v6004
    %v6006 = vpop.f32.mrb[0].mxu0
    %6007 = vmatprep.mubr.bf16.mxu0 0
    %6008 = vmatmul.mubr.bf16.gmra.mrb[0].mxu0 %v5901
    %v6009 = vpop.f32.mrb[0].mxu0
    %v6010 = vadd.f32 %v5866, %v6009
    %v6011 = vpop.f32.mrb[0].mxu0
    %v6012 = vpop.f32.mrb[0].mxu0
    %v6013 = vadd.f32 %v5866, %v6012
    %v6014 = vpop.f32.mrb[0].mxu0
    %6015 = vmatprep.mubr.bf16.mxu0 0
    %6016 = vmatmul.mubr.bf16.gmra.mrb[0].mxu0 %v5904
    %v6017 = vpop.f32.mrb[0].mxu0
    %v6018 = vadd.f32 %v5866, %v6017
    %v6019 = vpop.f32.mrb[0].mxu0
    %v6020 = vpop.f32.mrb[0].mxu0
    %v6021 = vadd.f32 %v5866, %v6020
    %v6022 = vpop.f32.mrb[0].mxu0
    %6023 = vmatprep.mubr.bf16.mxu0 0
    %6024 = vmatmul.mubr.bf16.gmra.mrb[0].mxu0 %v5907
    %v6025 = vpop.f32.mrb[0].mxu0
    %v6026 = vadd.f32 %v5866, %v6025
    %v6027 = vpop.f32.mrb[0].mxu0
    %v6028 = vpop.f32.mrb[0].mxu0
    %v6029 = vadd.f32 %v5866, %v6028
    %v6030 = vpop.f32.mrb[0].mxu0
    %6031 = vmatprep.mubr.bf16.mxu0 0
    %6032 = vmatmul.mubr.bf16.gmra.mrb[0].mxu0 %v5910
    %v6033 = vpop.f32.mrb[0].mxu0
    %v6034 = vadd.f32 %v5866, %v6033
    %v6035 = vpop.f32.mrb[0].mxu0
    %v6036 = vpop.f32.mrb[0].mxu0
    %v6037 = vadd.f32 %v5866, %v6036
    %v6038 = vpop.f32.mrb[0].mxu0
    %6039 = vmatprep.mubr.bf16.mxu0 0
    %6040 = vmatmul.mubr.bf16.gmra.mrb[0].mxu0 %v5913
    %v6041 = vpop.f32.mrb[0].mxu0
    %v6042 = vadd.f32 %v5866, %v6041
    %v6043 = vpop.f32.mrb[0].mxu0
    %v6044 = vpop.f32.mrb[0].mxu0
    %v6045 = vadd.f32 %v5866, %v6044
    %v6046 = vpop.f32.mrb[0].mxu0
    %6047 = vmatprep.mubr.bf16.mxu0 0
    %6048 = vmatmul.mubr.bf16.gmra.mrb[0].mxu0 %v5916
    %v6049 = vpop.f32.mrb[0].mxu0
    %v6050 = vadd.f32 %v5866, %v6049
    %v6051 = vpop.f32.mrb[0].mxu0
    %v6052 = vpop.f32.mrb[0].mxu0
    %v6053 = vadd.f32 %v5866, %v6052
    %v6054 = vpop.f32.mrb[0].mxu0
    %6055 = vmatprep.mubr.bf16.mxu0 0
    %6056 = vmatmul.mubr.bf16.gmra.mrb[0].mxu0 %v5919
    %v6057 = vpop.f32.mrb[0].mxu0
    %v6058 = vadd.f32 %v5866, %v6057
    %v6059 = vpop.f32.mrb[0].mxu0
    %v6060 = vpop.f32.mrb[0].mxu0
    %v6061 = vadd.f32 %v5866, %v6060
    %v6062 = vpop.f32.mrb[0].mxu0
    %6063 = vmatprep.mubr.bf16.mxu0 0
    %6064 = vmatmul.mubr.bf16.gmra.mrb[0].mxu0 %v5922
    %v6065 = vpop.f32.mrb[0].mxu0
    %v6066 = vadd.f32 %v5866, %v6065
    %v6067 = vpop.f32.mrb[0].mxu0
    %v6068 = vpop.f32.mrb[0].mxu0
    %v6069 = vadd.f32 %v5866, %v6068
    %v6070 = vpop.f32.mrb[0].mxu0
    %6071 = vmatprep.mubr.bf16.mxu0 0
    %6072 = vmatmul.mubr.bf16.gmra.mrb[0].mxu0 %v5925
    %v6073 = vpop.f32.mrb[0].mxu0
    %v6074 = vadd.f32 %v5866, %v6073
    %v6075 = vpop.f32.mrb[0].mxu0
    %v6076 = vpop.f32.mrb[0].mxu0
    %v6077 = vadd.f32 %v5866, %v6076
    %v6078 = vpop.f32.mrb[0].mxu0
    %6079 = vmatprep.mubr.bf16.mxu0 0
    %6080 = vmatmul.mubr.bf16.gmra.mrb[0].mxu0 %v5928
    %v6081 = vpop.f32.mrb[0].mxu0
    %v6082 = vadd.f32 %v5866, %v6081
    %v6083 = vpop.f32.mrb[0].mxu0
    %v6084 = vpop.f32.mrb[0].mxu0
    %v6085 = vadd.f32 %v5866, %v6084
    %v6086 = vpop.f32.mrb[0].mxu0
    %6087 = vmatprep.mubr.bf16.mxu0 0
    %6088 = vmatmul.mubr.bf16.gmra.mrb[0].mxu0 %v5931
    %v6089 = vpop.f32.mrb[0].mxu0
    %v6090 = vadd.f32 %v5866, %v6089
    %v6091 = vpop.f32.mrb[0].mxu0
    %v6092 = vpop.f32.mrb[0].mxu0
    %v6093 = vadd.f32 %v5866, %v6092
    %v6094 = vpop.f32.mrb[0].mxu0
    %6095 = vmatprep.mubr.bf16.mxu0 0
    %6096 = vmatmul.mubr.bf16.gmra.mrb[0].mxu0 %v5934
    %v6097 = vpop.f32.mrb[0].mxu0
    %v6098 = vadd.f32 %v5866, %v6097
    %v6099 = vpop.f32.mrb[0].mxu0
    %v6100 = vpop.f32.mrb[0].mxu0
    %v6101 = vadd.f32 %v5866, %v6100
    %v6102 = vpop.f32.mrb[0].mxu0
    %6103 = vmatprep.mubr.bf16.mxu0 0
    %6104 = vmatmul.mubr.bf16.gmra.mrb[0].mxu0 %v5937
    %v6105 = vpop.f32.mrb[0].mxu0
    %v6106 = vadd.f32 %v5866, %v6105
    %v6107 = vpop.f32.mrb[0].mxu0
    %v6108 = vpop.f32.mrb[0].mxu0
    %v6109 = vadd.f32 %v5866, %v6108
    %v6110 = vpop.f32.mrb[0].mxu0
    %6111 = vmatprep.mubr.bf16.mxu0 0
    %6112 = vmatmul.mubr.bf16.gmra.mrb[0].mxu0 %v5940
    %v6113 = vpop.f32.mrb[0].mxu0
    %v6114 = vadd.f32 %v5866, %v6113
    %v6115 = vpop.f32.mrb[0].mxu0
    %v6116 = vpop.f32.mrb[0].mxu0
    %v6117 = vadd.f32 %v5866, %v6116
    %v6118 = vpop.f32.mrb[0].mxu0
    %6119 = vmatprep.mubr.bf16.mxu0 0
    %6120 = vmatmul.mubr.bf16.gmra.mrb[0].mxu0 %v5943
    %v6121 = vpop.f32.mrb[0].mxu0
    %v6122 = vadd.f32 %v5866, %v6121
    %v6123 = vpop.f32.mrb[0].mxu0
    %v6124 = vpop.f32.mrb[0].mxu0
    %v6125 = vadd.f32 %v5866, %v6124
    %v6126 = vpop.f32.mrb[0].mxu0
    %6127 = vmatprep.mubr.bf16.mxu0 0
    %6128 = vmatmul.mubr.bf16.gmra.mrb[0].mxu0 %v5946
    %v6129 = vpop.f32.mrb[0].mxu0
    %v6130 = vadd.f32 %v5866, %v6129
    %v6131 = vpop.f32.mrb[0].mxu0
    %v6132 = vpop.f32.mrb[0].mxu0
    %v6133 = vadd.f32 %v5866, %v6132
    %v6134 = vpop.f32.mrb[0].mxu0
    %6135 = vmatprep.mubr.bf16.mxu0 0
    %6136 = vmatmul.mubr.bf16.gmra.mrb[0].mxu0 %v5949
    %v6137 = vpop.f32.mrb[0].mxu0
    %v6138 = vadd.f32 %v5866, %v6137
    %v6139 = vpop.f32.mrb[0].mxu0
    %v6140 = vpop.f32.mrb[0].mxu0
    %v6141 = vadd.f32 %v5866, %v6140
    %v6142 = vpop.f32.mrb[0].mxu0
    %6143 = vdwg.mxu0
    %v6144 = vtanh.pop %v5986
    %v6145 = vtanh.pop %v5989
    %v6146 = vtanh.pop %v5994
    %v6147 = vtanh.pop %v5997
    %v6148 = vtanh.pop %v6002
    %v6149 = vtanh.pop %v6005
    %v6150 = vtanh.pop %v6010
    %v6151 = vtanh.pop %v6013
    %v6152 = vtanh.pop %v6018
    %v6153 = vtanh.pop %v6021
    %v6154 = vtanh.pop %v6026
    %v6155 = vtanh.pop %v6029
    %v6156 = vtanh.pop %v6034
    %v6157 = vtanh.pop %v6037
    %v6158 = vtanh.pop %v6042
    %v6159 = vtanh.pop %v6045
    %v6160 = vtanh.pop %v6050
    %v6161 = vtanh.pop %v6053
    %v6162 = vtanh.pop %v6058
    %v6163 = vtanh.pop %v6061
    %v6164 = vtanh.pop %v6066
    %v6165 = vtanh.pop %v6069
    %v6166 = vtanh.pop %v6074
    %v6167 = vtanh.pop %v6077
    %v6168 = vtanh.pop %v6082
    %v6169 = vtanh.pop %v6085
    %v6170 = vtanh.pop %v6090
    %v6171 = vtanh.pop %v6093
    %v6172 = vtanh.pop %v6098
    %v6173 = vtanh.pop %v6101
    %v6174 = vtanh.pop %v6106
    %v6175 = vtanh.pop %v6109
    %v6176 = vtanh.pop %v6114
    %v6177 = vtanh.pop %v6117
    %v6178 = vtanh.pop %v6122
    %v6179 = vtanh.pop %v6125
    %v6180 = vtanh.pop %v6130
    %v6181 = vtanh.pop %v6133
    %v6182 = vtanh.pop %v6138
    %v6183 = vtanh.pop %v6141
    %v6184 = vpack.c.bf16 %v6145, %v6144
    %v6185 = vpack.c.bf16 %v6147, %v6146
    %v6186 = vpack.c.bf16 %v6149, %v6148
    %v6187 = vpack.c.bf16 %v6151, %v6150
    %v6188 = vpack.c.bf16 %v6153, %v6152
    %v6189 = vpack.c.bf16 %v6155, %v6154
    %v6190 = vpack.c.bf16 %v6157, %v6156
    %v6191 = vpack.c.bf16 %v6159, %v6158
    %v6192 = vpack.c.bf16 %v6161, %v6160
    %v6193 = vpack.c.bf16 %v6163, %v6162
    %v6194 = vpack.c.bf16 %v6165, %v6164
    %v6195 = vpack.c.bf16 %v6167, %v6166
    %v6196 = vpack.c.bf16 %v6169, %v6168
    %v6197 = vpack.c.bf16 %v6171, %v6170
    %v6198 = vpack.c.bf16 %v6173, %v6172
    %v6199 = vpack.c.bf16 %v6175, %v6174
    %v6200 = vpack.c.bf16 %v6177, %v6176
    %v6201 = vpack.c.bf16 %v6179, %v6178
    %v6202 = vpack.c.bf16 %v6181, %v6180
    %v6203 = vpack.c.bf16 %v6183, %v6182
    %v6204 = vld [vmem:[%s5] sm:$0xf]
    %v6205 = vld [vmem:[%s5 + $0x4] sm:$0xf]
    %v6206 = vld [vmem:[%s5 + $0x8] sm:$0xf]
    %v6207 = vld [vmem:[%s5 + $0xc] sm:$0xf]
    %v6208 = vld [vmem:[%s5 + $0x10] sm:$0xf]
    %v6209 = vld [vmem:[%s5 + $0x14] sm:$0xf]
    %v6210 = vld [vmem:[%s5 + $0x18] sm:$0xf]
    %v6211 = vld [vmem:[%s5 + $0x1c] sm:$0xf]
    %v6220 = vunpack.c.l.b16 %v6204
    %v6221 = vunpack.c.l.b16 %v6205
    %v6222 = vunpack.c.l.b16 %v6206
    %v6223 = vunpack.c.l.b16 %v6207
    %v6224 = vunpack.c.l.b16 %v6208
    %v6225 = vunpack.c.l.b16 %v6209
    %v6226 = vunpack.c.l.b16 %v6210
    %v6227 = vunpack.c.l.b16 %v6211
    %v6228 = vpack.c.b16 %v6221, %v6220
    %v6229 = vpack.c.b16 %v6223, %v6222
    %v6230 = vpack.c.b16 %v6225, %v6224
    %v6231 = vpack.c.b16 %v6227, %v6226
    %v6237 = vsel %vm540, %v6184, 0
    %v6240 = vsel %vm540, %v6185, 0
    %v6243 = vsel %vm540, %v6186, 0
    %v6246 = vsel %vm540, %v6187, 0
    %v6249 = vsel %vm540, %v6188, 0
    %v6252 = vsel %vm540, %v6189, 0
    %v6255 = vsel %vm540, %v6190, 0
    %v6258 = vsel %vm540, %v6191, 0
    %v6261 = vsel %vm540, %v6192, 0
    %v6264 = vsel %vm540, %v6193, 0
    %v6267 = vsel %vm540, %v6194, 0
    %v6270 = vsel %vm540, %v6195, 0
    %v6273 = vsel %vm540, %v6196, 0
    %v6276 = vsel %vm540, %v6197, 0
    %v6279 = vsel %vm540, %v6198, 0
    %v6282 = vsel %vm540, %v6199, 0
    %v6285 = vsel %vm540, %v6200, 0
    %v6288 = vsel %vm540, %v6201, 0
    %v6291 = vsel %vm540, %v6202, 0
    %v6294 = vsel %vm540, %v6203, 0
    %6296 = vmatprep.subr.bf16.mxu0 0
    %6297 = vmatpush1.bf16.msra.mxu0 %v6228
    %6298 = vmatprep.subr.bf16.mxu0 0
    %6299 = vmatpush1.bf16.msra.mxu0 %v6229
    %6300 = vmatprep.subr.bf16.mxu0 0
    %6301 = vmatpush1.bf16.msra.mxu0 %v6230
    %6302 = vmatprep.subr.bf16.mxu0 0
    %6303 = vmatpush1.bf16.msra.mxu0 %v6231
    %6304 = vmatprep.subr.bf16.mxu0 0
    %6305 = vmatpush1.bf16.msra.mxu0 0
    %6306 = vmatprep.subr.bf16.mxu0 0
    %6307 = vmatpush1.bf16.msra.mxu0 0
    %6308 = vmatprep.subr.bf16.mxu0 0
    %6309 = vmatpush1.bf16.msra.mxu0 0
    %6310 = vmatprep.subr.bf16.mxu0 0
    %6311 = vmatpush1.bf16.msra.mxu0 0
    %6312 = vmatprep.subr.bf16.mxu0 0
    %6313 = vmatpush1.bf16.msra.mxu0 0
    %6314 = vmatprep.subr.bf16.mxu0 0
    %6315 = vmatpush1.bf16.msra.mxu0 0
    %6316 = vmatprep.subr.bf16.mxu0 0
    %6317 = vmatpush1.bf16.msra.mxu0 0
    %6318 = vmatprep.subr.bf16.mxu0 0
    %6319 = vmatpush1.bf16.msra.mxu0 0
    %6320 = vmatprep.subr.bf16.mxu0 0
    %6321 = vmatpush1.bf16.msra.mxu0 0
    %6322 = vmatprep.subr.bf16.mxu0 0
    %6323 = vmatpush1.bf16.msra.mxu0 0
    %6324 = vmatprep.subr.bf16.mxu0 0
    %6325 = vmatpush1.bf16.msra.mxu0 0
    %6326 = vmatprep.subr.bf16.mxu0 0
    %6327 = vmatpush1.bf16.msra.mxu0 0
    %6328 = vmatprep.mubr.bf16.mxu0 0
    %6329 = vmatmul.mubr.bf16.gmra.mrb[0].mxu0 %v6237
    %v6330 = vpop.f32.mrb[0].mxu0
    %v6331 = vadd.f32 0.0, %v6330
    %v6332 = vpop.f32.mrb[0].mxu0
    %v6333 = vpop.f32.mrb[0].mxu0
    %v6334 = vadd.f32 0.0, %v6333
    %v6335 = vpop.f32.mrb[0].mxu0
    %6336 = vmatprep.mubr.bf16.mxu0 0
    %6337 = vmatmul.mubr.bf16.gmra.mrb[0].mxu0 %v6240
    %v6338 = vpop.f32.mrb[0].mxu0
    %v6339 = vadd.f32 0.0, %v6338
    %v6340 = vpop.f32.mrb[0].mxu0
    %v6341 = vpop.f32.mrb[0].mxu0
    %v6342 = vadd.f32 0.0, %v6341
    %v6343 = vpop.f32.mrb[0].mxu0
    %6344 = vmatprep.mubr.bf16.mxu0 0
    %6345 = vmatmul.mubr.bf16.gmra.mrb[0].mxu0 %v6243
    %v6346 = vpop.f32.mrb[0].mxu0
    %v6347 = vadd.f32 0.0, %v6346
    %v6348 = vpop.f32.mrb[0].mxu0
    %v6349 = vpop.f32.mrb[0].mxu0
    %v6350 = vadd.f32 0.0, %v6349
    %v6351 = vpop.f32.mrb[0].mxu0
    %6352 = vmatprep.mubr.bf16.mxu0 0
    %6353 = vmatmul.mubr.bf16.gmra.mrb[0].mxu0 %v6246
    %v6354 = vpop.f32.mrb[0].mxu0
    %v6355 = vadd.f32 0.0, %v6354
    %v6356 = vpop.f32.mrb[0].mxu0
    %v6357 = vpop.f32.mrb[0].mxu0
    %v6358 = vadd.f32 0.0, %v6357
    %v6359 = vpop.f32.mrb[0].mxu0
    %6360 = vmatprep.mubr.bf16.mxu0 0
    %6361 = vmatmul.mubr.bf16.gmra.mrb[0].mxu0 %v6249
    %v6362 = vpop.f32.mrb[0].mxu0
    %v6363 = vadd.f32 0.0, %v6362
    %v6364 = vpop.f32.mrb[0].mxu0
    %v6365 = vpop.f32.mrb[0].mxu0
    %v6366 = vadd.f32 0.0, %v6365
    %v6367 = vpop.f32.mrb[0].mxu0
    %6368 = vmatprep.mubr.bf16.mxu0 0
    %6369 = vmatmul.mubr.bf16.gmra.mrb[0].mxu0 %v6252
    %v6370 = vpop.f32.mrb[0].mxu0
    %v6371 = vadd.f32 0.0, %v6370
    %v6372 = vpop.f32.mrb[0].mxu0
    %v6373 = vpop.f32.mrb[0].mxu0
    %v6374 = vadd.f32 0.0, %v6373
    %v6375 = vpop.f32.mrb[0].mxu0
    %6376 = vmatprep.mubr.bf16.mxu0 0
    %6377 = vmatmul.mubr.bf16.gmra.mrb[0].mxu0 %v6255
    %v6378 = vpop.f32.mrb[0].mxu0
    %v6379 = vadd.f32 0.0, %v6378
    %v6380 = vpop.f32.mrb[0].mxu0
    %v6381 = vpop.f32.mrb[0].mxu0
    %v6382 = vadd.f32 0.0, %v6381
    %v6383 = vpop.f32.mrb[0].mxu0
    %6384 = vmatprep.mubr.bf16.mxu0 0
    %6385 = vmatmul.mubr.bf16.gmra.mrb[0].mxu0 %v6258
    %v6386 = vpop.f32.mrb[0].mxu0
    %v6387 = vadd.f32 0.0, %v6386
    %v6388 = vpop.f32.mrb[0].mxu0
    %v6389 = vpop.f32.mrb[0].mxu0
    %v6390 = vadd.f32 0.0, %v6389
    %v6391 = vpop.f32.mrb[0].mxu0
    %6392 = vmatprep.mubr.bf16.mxu0 0
    %6393 = vmatmul.mubr.bf16.gmra.mrb[0].mxu0 %v6261
    %v6394 = vpop.f32.mrb[0].mxu0
    %v6395 = vadd.f32 0.0, %v6394
    %v6396 = vpop.f32.mrb[0].mxu0
    %v6397 = vpop.f32.mrb[0].mxu0
    %v6398 = vadd.f32 0.0, %v6397
    %v6399 = vpop.f32.mrb[0].mxu0
    %6400 = vmatprep.mubr.bf16.mxu0 0
    %6401 = vmatmul.mubr.bf16.gmra.mrb[0].mxu0 %v6264
    %v6402 = vpop.f32.mrb[0].mxu0
    %v6403 = vadd.f32 0.0, %v6402
    %v6404 = vpop.f32.mrb[0].mxu0
    %v6405 = vpop.f32.mrb[0].mxu0
    %v6406 = vadd.f32 0.0, %v6405
    %v6407 = vpop.f32.mrb[0].mxu0
    %6408 = vmatprep.mubr.bf16.mxu0 0
    %6409 = vmatmul.mubr.bf16.gmra.mrb[0].mxu0 %v6267
    %v6410 = vpop.f32.mrb[0].mxu0
    %v6411 = vadd.f32 0.0, %v6410
    %v6412 = vpop.f32.mrb[0].mxu0
    %v6413 = vpop.f32.mrb[0].mxu0
    %v6414 = vadd.f32 0.0, %v6413
    %v6415 = vpop.f32.mrb[0].mxu0
    %6416 = vmatprep.mubr.bf16.mxu0 0
    %6417 = vmatmul.mubr.bf16.gmra.mrb[0].mxu0 %v6270
    %v6418 = vpop.f32.mrb[0].mxu0
    %v6419 = vadd.f32 0.0, %v6418
    %v6420 = vpop.f32.mrb[0].mxu0
    %v6421 = vpop.f32.mrb[0].mxu0
    %v6422 = vadd.f32 0.0, %v6421
    %v6423 = vpop.f32.mrb[0].mxu0
    %6424 = vmatprep.mubr.bf16.mxu0 0
    %6425 = vmatmul.mubr.bf16.gmra.mrb[0].mxu0 %v6273
    %v6426 = vpop.f32.mrb[0].mxu0
    %v6427 = vadd.f32 0.0, %v6426
    %v6428 = vpop.f32.mrb[0].mxu0
    %v6429 = vpop.f32.mrb[0].mxu0
    %v6430 = vadd.f32 0.0, %v6429
    %v6431 = vpop.f32.mrb[0].mxu0
    %6432 = vmatprep.mubr.bf16.mxu0 0
    %6433 = vmatmul.mubr.bf16.gmra.mrb[0].mxu0 %v6276
    %v6434 = vpop.f32.mrb[0].mxu0
    %v6435 = vadd.f32 0.0, %v6434
    %v6436 = vpop.f32.mrb[0].mxu0
    %v6437 = vpop.f32.mrb[0].mxu0
    %v6438 = vadd.f32 0.0, %v6437
    %v6439 = vpop.f32.mrb[0].mxu0
    %6440 = vmatprep.mubr.bf16.mxu0 0
    %6441 = vmatmul.mubr.bf16.gmra.mrb[0].mxu0 %v6279
    %v6442 = vpop.f32.mrb[0].mxu0
    %v6443 = vadd.f32 0.0, %v6442
    %v6444 = vpop.f32.mrb[0].mxu0
    %v6445 = vpop.f32.mrb[0].mxu0
    %v6446 = vadd.f32 0.0, %v6445
    %v6447 = vpop.f32.mrb[0].mxu0
    %6448 = vmatprep.mubr.bf16.mxu0 0
    %6449 = vmatmul.mubr.bf16.gmra.mrb[0].mxu0 %v6282
    %v6450 = vpop.f32.mrb[0].mxu0
    %v6451 = vadd.f32 0.0, %v6450
    %v6452 = vpop.f32.mrb[0].mxu0
    %v6453 = vpop.f32.mrb[0].mxu0
    %v6454 = vadd.f32 0.0, %v6453
    %v6455 = vpop.f32.mrb[0].mxu0
    %6456 = vmatprep.mubr.bf16.mxu0 0
    %6457 = vmatmul.mubr.bf16.gmra.mrb[0].mxu0 %v6285
    %v6458 = vpop.f32.mrb[0].mxu0
    %v6459 = vadd.f32 0.0, %v6458
    %v6460 = vpop.f32.mrb[0].mxu0
    %v6461 = vpop.f32.mrb[0].mxu0
    %v6462 = vadd.f32 0.0, %v6461
    %v6463 = vpop.f32.mrb[0].mxu0
    %6464 = vmatprep.mubr.bf16.mxu0 0
    %6465 = vmatmul.mubr.bf16.gmra.mrb[0].mxu0 %v6288
    %v6466 = vpop.f32.mrb[0].mxu0
    %v6467 = vadd.f32 0.0, %v6466
    %v6468 = vpop.f32.mrb[0].mxu0
    %v6469 = vpop.f32.mrb[0].mxu0
    %v6470 = vadd.f32 0.0, %v6469
    %v6471 = vpop.f32.mrb[0].mxu0
    %6472 = vmatprep.mubr.bf16.mxu0 0
    %6473 = vmatmul.mubr.bf16.gmra.mrb[0].mxu0 %v6291
    %v6474 = vpop.f32.mrb[0].mxu0
    %v6475 = vadd.f32 0.0, %v6474
    %v6476 = vpop.f32.mrb[0].mxu0
    %v6477 = vpop.f32.mrb[0].mxu0
    %v6478 = vadd.f32 0.0, %v6477
    %v6479 = vpop.f32.mrb[0].mxu0
    %6480 = vmatprep.mubr.bf16.mxu0 0
    %6481 = vmatmul.mubr.bf16.gmra.mrb[0].mxu0 %v6294
    %v6482 = vpop.f32.mrb[0].mxu0
    %v6483 = vadd.f32 0.0, %v6482
    %v6484 = vpop.f32.mrb[0].mxu0
    %v6485 = vpop.f32.mrb[0].mxu0
    %v6486 = vadd.f32 0.0, %v6485
    %v6487 = vpop.f32.mrb[0].mxu0
    %6488 = vdwg.mxu0
    %v6489 = vlaneseq
    %v6490 = vand.u32 %v6489, 127
    %vm6491 = vcmp.eq.s32.totalorder %v6490, 1
    %vm6492 = vmor %vm6491, 1
    %vm6493 = vmor %vm6491, 0
    %v6494 = vsel %vm6492, %v6331, -1e+09
    %v6495 = vsel %vm6492, %v6334, -1e+09
    %v6496 = vsel %vm6492, %v6339, -1e+09
    %v6497 = vsel %vm6492, %v6342, -1e+09
    %v6498 = vsel %vm6492, %v6347, -1e+09
    %v6499 = vsel %vm6492, %v6350, -1e+09
    %v6500 = vsel %vm6492, %v6355, -1e+09
    %v6501 = vsel %vm6492, %v6358, -1e+09
    %v6502 = vsel %vm6492, %v6363, -1e+09
    %v6503 = vsel %vm6492, %v6366, -1e+09
    %v6504 = vsel %vm6492, %v6371, -1e+09
    %v6505 = vsel %vm6492, %v6374, -1e+09
    %v6506 = vsel %vm6492, %v6379, -1e+09
    %v6507 = vsel %vm6492, %v6382, -1e+09
    %v6508 = vsel %vm6492, %v6387, -1e+09
    %v6509 = vsel %vm6492, %v6390, -1e+09
    %v6510 = vsel %vm6492, %v6395, -1e+09
    %v6511 = vsel %vm6492, %v6398, -1e+09
    %v6512 = vsel %vm6492, %v6403, -1e+09
    %v6513 = vsel %vm6492, %v6406, -1e+09
    %v6514 = vsel %vm6492, %v6411, -1e+09
    %v6515 = vsel %vm6492, %v6414, -1e+09
    %v6516 = vsel %vm6492, %v6419, -1e+09
    %v6517 = vsel %vm6492, %v6422, -1e+09
    %v6518 = vsel %vm6493, %v6427, -1e+09
    %v6519 = vsel %vm6493, %v6430, -1e+09
    %v6520 = vsel %vm6493, %v6435, -1e+09
    %v6521 = vsel %vm6493, %v6438, -1e+09
    %v6522 = vsel %vm6493, %v6443, -1e+09
    %v6523 = vsel %vm6493, %v6446, -1e+09
    %v6524 = vsel %vm6493, %v6451, -1e+09
    %v6525 = vsel %vm6493, %v6454, -1e+09
    %v6526 = vsel %vm6493, %v6459, -1e+09
    %v6527 = vsel %vm6493, %v6462, -1e+09
    %v6528 = vsel %vm6493, %v6467, -1e+09
    %v6529 = vsel %vm6493, %v6470, -1e+09
    %v6530 = vsel %vm6493, %v6475, -1e+09
    %v6531 = vsel %vm6493, %v6478, -1e+09
    %v6532 = vsel %vm6493, %v6483, -1e+09
    %v6533 = vsel %vm6493, %v6486, -1e+09
    %vm6534 = vcmask 15360
    %v6535 = vsel %vm6534, %v6494, -inf
    %v6536 = vsel %vm6534, %v6496, -inf
    %v6537 = vsel %vm6534, %v6498, -inf
    %v6538 = vmax.f32 %v6535, %v6537
    %v6539 = vsel %vm6534, %v6500, -inf
    %v6540 = vmax.f32 %v6536, %v6539
    %v6541 = vsel %vm6534, %v6502, -inf
    %v6542 = vmax.f32 %v6538, %v6541
    %v6543 = vsel %vm6534, %v6504, -inf
    %v6544 = vmax.f32 %v6540, %v6543
    %v6545 = vsel %vm6534, %v6506, -inf
    %v6546 = vmax.f32 %v6542, %v6545
    %v6547 = vsel %vm6534, %v6508, -inf
    %v6548 = vmax.f32 %v6544, %v6547
    %v6549 = vsel %vm6534, %v6510, -inf
    %v6550 = vmax.f32 %v6546, %v6549
    %v6551 = vsel %vm6534, %v6512, -inf
    %v6552 = vmax.f32 %v6548, %v6551
    %v6553 = vsel %vm6534, %v6514, -inf
    %v6554 = vmax.f32 %v6550, %v6553
    %v6555 = vsel %vm6534, %v6516, -inf
    %v6556 = vmax.f32 %v6552, %v6555
    %v6557 = vsel %vm6534, %v6518, -inf
    %v6558 = vmax.f32 %v6554, %v6557
    %v6559 = vsel %vm6534, %v6520, -inf
    %v6560 = vmax.f32 %v6556, %v6559
    %v6561 = vsel %vm6534, %v6522, -inf
    %v6562 = vmax.f32 %v6558, %v6561
    %v6563 = vsel %vm6534, %v6524, -inf
    %v6564 = vmax.f32 %v6560, %v6563
    %v6565 = vsel %vm6534, %v6526, -inf
    %v6566 = vmax.f32 %v6562, %v6565
    %v6567 = vsel %vm6534, %v6528, -inf
    %v6568 = vmax.f32 %v6564, %v6567
    %v6569 = vsel %vm6534, %v6530, -inf
    %v6570 = vmax.f32 %v6566, %v6569
    %v6571 = vsel %vm6534, %v6532, -inf
    %v6572 = vmax.f32 %v6568, %v6571
    %v6573 = vmax.f32 %v6570, %v6572
    %v6574 = vsel %vm6534, %v6495, -inf
    %v6575 = vsel %vm6534, %v6497, -inf
    %v6576 = vsel %vm6534, %v6499, -inf
    %v6577 = vmax.f32 %v6574, %v6576
    %v6578 = vsel %vm6534, %v6501, -inf
    %v6579 = vmax.f32 %v6575, %v6578
    %v6580 = vsel %vm6534, %v6503, -inf
    %v6581 = vmax.f32 %v6577, %v6580
    %v6582 = vsel %vm6534, %v6505, -inf
    %v6583 = vmax.f32 %v6579, %v6582
    %v6584 = vsel %vm6534, %v6507, -inf
    %v6585 = vmax.f32 %v6581, %v6584
    %v6586 = vsel %vm6534, %v6509, -inf
    %v6587 = vmax.f32 %v6583, %v6586
    %v6588 = vsel %vm6534, %v6511, -inf
    %v6589 = vmax.f32 %v6585, %v6588
    %v6590 = vsel %vm6534, %v6513, -inf
    %v6591 = vmax.f32 %v6587, %v6590
    %v6592 = vsel %vm6534, %v6515, -inf
    %v6593 = vmax.f32 %v6589, %v6592
    %v6594 = vsel %vm6534, %v6517, -inf
    %v6595 = vmax.f32 %v6591, %v6594
    %v6596 = vsel %vm6534, %v6519, -inf
    %v6597 = vmax.f32 %v6593, %v6596
    %v6598 = vsel %vm6534, %v6521, -inf
    %v6599 = vmax.f32 %v6595, %v6598
    %v6600 = vsel %vm6534, %v6523, -inf
    %v6601 = vmax.f32 %v6597, %v6600
    %v6602 = vsel %vm6534, %v6525, -inf
    %v6603 = vmax.f32 %v6599, %v6602
    %v6604 = vsel %vm6534, %v6527, -inf
    %v6605 = vmax.f32 %v6601, %v6604
    %v6606 = vsel %vm6534, %v6529, -inf
    %v6607 = vmax.f32 %v6603, %v6606
    %v6608 = vsel %vm6534, %v6531, -inf
    %v6609 = vmax.f32 %v6605, %v6608
    %v6610 = vsel %vm6534, %v6533, -inf
    %v6611 = vmax.f32 %v6607, %v6610
    %v6612 = vmax.f32 %v6609, %v6611
    %v6613 = vsub.f32 %v6494, %v6573
    %v6614 = vsub.f32 %v6495, %v6612
    %v6615 = vsub.f32 %v6496, %v6573
    %v6616 = vsub.f32 %v6497, %v6612
    %v6617 = vsub.f32 %v6498, %v6573
    %v6618 = vsub.f32 %v6499, %v6612
    %v6619 = vsub.f32 %v6500, %v6573
    %v6620 = vsub.f32 %v6501, %v6612
    %v6621 = vsub.f32 %v6502, %v6573
    %v6622 = vsub.f32 %v6503, %v6612
    %v6623 = vsub.f32 %v6504, %v6573
    %v6624 = vsub.f32 %v6505, %v6612
    %v6625 = vsub.f32 %v6506, %v6573
    %v6626 = vsub.f32 %v6507, %v6612
    %v6627 = vsub.f32 %v6508, %v6573
    %v6628 = vsub.f32 %v6509, %v6612
    %v6629 = vsub.f32 %v6510, %v6573
    %v6630 = vsub.f32 %v6511, %v6612
    %v6631 = vsub.f32 %v6512, %v6573
    %v6632 = vsub.f32 %v6513, %v6612
    %v6633 = vsub.f32 %v6514, %v6573
    %v6634 = vsub.f32 %v6515, %v6612
    %v6635 = vsub.f32 %v6516, %v6573
    %v6636 = vsub.f32 %v6517, %v6612
    %v6637 = vsub.f32 %v6518, %v6573
    %v6638 = vsub.f32 %v6519, %v6612
    %v6639 = vsub.f32 %v6520, %v6573
    %v6640 = vsub.f32 %v6521, %v6612
    %v6641 = vsub.f32 %v6522, %v6573
    %v6642 = vsub.f32 %v6523, %v6612
    %v6643 = vsub.f32 %v6524, %v6573
    %v6644 = vsub.f32 %v6525, %v6612
    %v6645 = vsub.f32 %v6526, %v6573
    %v6646 = vsub.f32 %v6527, %v6612
    %v6647 = vsub.f32 %v6528, %v6573
    %v6648 = vsub.f32 %v6529, %v6612
    %v6649 = vsub.f32 %v6530, %v6573
    %v6650 = vsub.f32 %v6531, %v6612
    %v6651 = vsub.f32 %v6532, %v6573
    %v6652 = vsub.f32 %v6533, %v6612
    %v6653 = vmul.f32 %v6613, 1.442695
    %v6654 = vpow.pop %v6653
    %v6655 = vmul.f32 %v6614, 1.442695
    %v6656 = vpow.pop %v6655
    %v6657 = vmul.f32 %v6615, 1.442695
    %v6658 = vpow.pop %v6657
    %v6659 = vmul.f32 %v6616, 1.442695
    %v6660 = vpow.pop %v6659
    %v6661 = vmul.f32 %v6617, 1.442695
    %v6662 = vpow.pop %v6661
    %v6663 = vmul.f32 %v6618, 1.442695
    %v6664 = vpow.pop %v6663
    %v6665 = vmul.f32 %v6619, 1.442695
    %v6666 = vpow.pop %v6665
    %v6667 = vmul.f32 %v6620, 1.442695
    %v6668 = vpow.pop %v6667
    %v6669 = vmul.f32 %v6621, 1.442695
    %v6670 = vpow.pop %v6669
    %v6671 = vmul.f32 %v6622, 1.442695
    %v6672 = vpow.pop %v6671
    %v6673 = vmul.f32 %v6623, 1.442695
    %v6674 = vpow.pop %v6673
    %v6675 = vmul.f32 %v6624, 1.442695
    %v6676 = vpow.pop %v6675
    %v6677 = vmul.f32 %v6625, 1.442695
    %v6678 = vpow.pop %v6677
    %v6679 = vmul.f32 %v6626, 1.442695
    %v6680 = vpow.pop %v6679
    %v6681 = vmul.f32 %v6627, 1.442695
    %v6682 = vpow.pop %v6681
    %v6683 = vmul.f32 %v6628, 1.442695
    %v6684 = vpow.pop %v6683
    %v6685 = vmul.f32 %v6629, 1.442695
    %v6686 = vpow.pop %v6685
    %v6687 = vmul.f32 %v6630, 1.442695
    %v6688 = vpow.pop %v6687
    %v6689 = vmul.f32 %v6631, 1.442695
    %v6690 = vpow.pop %v6689
    %v6691 = vmul.f32 %v6632, 1.442695
    %v6692 = vpow.pop %v6691
    %v6693 = vmul.f32 %v6633, 1.442695
    %v6694 = vpow.pop %v6693
    %v6695 = vmul.f32 %v6634, 1.442695
    %v6696 = vpow.pop %v6695
    %v6697 = vmul.f32 %v6635, 1.442695
    %v6698 = vpow.pop %v6697
    %v6699 = vmul.f32 %v6636, 1.442695
    %v6700 = vpow.pop %v6699
    %v6701 = vmul.f32 %v6637, 1.442695
    %v6702 = vpow.pop %v6701
    %v6703 = vmul.f32 %v6638, 1.442695
    %v6704 = vpow.pop %v6703
    %v6705 = vmul.f32 %v6639, 1.442695
    %v6706 = vpow.pop %v6705
    %v6707 = vmul.f32 %v6640, 1.442695
    %v6708 = vpow.pop %v6707
    %v6709 = vmul.f32 %v6641, 1.442695
    %v6710 = vpow.pop %v6709
    %v6711 = vmul.f32 %v6642, 1.442695
    %v6712 = vpow.pop %v6711
    %v6713 = vmul.f32 %v6643, 1.442695
    %v6714 = vpow.pop %v6713
    %v6715 = vmul.f32 %v6644, 1.442695
    %v6716 = vpow.pop %v6715
    %v6717 = vmul.f32 %v6645, 1.442695
    %v6718 = vpow.pop %v6717
    %v6719 = vmul.f32 %v6646, 1.442695
    %v6720 = vpow.pop %v6719
    %v6721 = vmul.f32 %v6647, 1.442695
    %v6722 = vpow.pop %v6721
    %v6723 = vmul.f32 %v6648, 1.442695
    %v6724 = vpow.pop %v6723
    %v6725 = vmul.f32 %v6649, 1.442695
    %v6726 = vpow.pop %v6725
    %v6727 = vmul.f32 %v6650, 1.442695
    %v6728 = vpow.pop %v6727
    %v6729 = vmul.f32 %v6651, 1.442695
    %v6730 = vpow.pop %v6729
    %v6731 = vmul.f32 %v6652, 1.442695
    %v6732 = vpow.pop %v6731
    %v6733 = vsel %vm6534, %v6654, 0.0
    %v6734 = vsel %vm6534, %v6658, 0.0
    %v6735 = vadd.f32 %v6733, %v6734
    %v6736 = vsel %vm6534, %v6662, 0.0
    %v6737 = vadd.f32 %v6735, %v6736
    %v6738 = vsel %vm6534, %v6666, 0.0
    %v6739 = vadd.f32 %v6737, %v6738
    %v6740 = vsel %vm6534, %v6670, 0.0
    %v6741 = vadd.f32 %v6739, %v6740
    %v6742 = vsel %vm6534, %v6674, 0.0
    %v6743 = vadd.f32 %v6741, %v6742
    %v6744 = vsel %vm6534, %v6678, 0.0
    %v6745 = vadd.f32 %v6743, %v6744
    %v6746 = vsel %vm6534, %v6682, 0.0
    %v6747 = vadd.f32 %v6745, %v6746
    %v6748 = vsel %vm6534, %v6686, 0.0
    %v6749 = vadd.f32 %v6747, %v6748
    %v6750 = vsel %vm6534, %v6690, 0.0
    %v6751 = vadd.f32 %v6749, %v6750
    %v6752 = vsel %vm6534, %v6694, 0.0
    %v6753 = vadd.f32 %v6751, %v6752
    %v6754 = vsel %vm6534, %v6698, 0.0
    %v6755 = vadd.f32 %v6753, %v6754
    %v6756 = vsel %vm6534, %v6702, 0.0
    %v6757 = vadd.f32 %v6755, %v6756
    %v6758 = vsel %vm6534, %v6706, 0.0
    %v6759 = vadd.f32 %v6757, %v6758
    %v6760 = vsel %vm6534, %v6710, 0.0
    %v6761 = vadd.f32 %v6759, %v6760
    %v6762 = vsel %vm6534, %v6714, 0.0
    %v6763 = vadd.f32 %v6761, %v6762
    %v6764 = vsel %vm6534, %v6718, 0.0
    %v6765 = vadd.f32 %v6763, %v6764
    %v6766 = vsel %vm6534, %v6722, 0.0
    %v6767 = vadd.f32 %v6765, %v6766
    %v6768 = vsel %vm6534, %v6726, 0.0
    %v6769 = vadd.f32 %v6767, %v6768
    %v6770 = vsel %vm6534, %v6730, 0.0
    %v6771 = vadd.f32 %v6769, %v6770
    %v6772 = vsel %vm6534, %v6656, 0.0
    %v6773 = vsel %vm6534, %v6660, 0.0
    %v6774 = vadd.f32 %v6772, %v6773
    %v6775 = vsel %vm6534, %v6664, 0.0
    %v6776 = vadd.f32 %v6774, %v6775
    %v6777 = vsel %vm6534, %v6668, 0.0
    %v6778 = vadd.f32 %v6776, %v6777
    %v6779 = vsel %vm6534, %v6672, 0.0
    %v6780 = vadd.f32 %v6778, %v6779
    %v6781 = vsel %vm6534, %v6676, 0.0
    %v6782 = vadd.f32 %v6780, %v6781
    %v6783 = vsel %vm6534, %v6680, 0.0
    %v6784 = vadd.f32 %v6782, %v6783
    %v6785 = vsel %vm6534, %v6684, 0.0
    %v6786 = vadd.f32 %v6784, %v6785
    %v6787 = vsel %vm6534, %v6688, 0.0
    %v6788 = vadd.f32 %v6786, %v6787
    %v6789 = vsel %vm6534, %v6692, 0.0
    %v6790 = vadd.f32 %v6788, %v6789
    %v6791 = vsel %vm6534, %v6696, 0.0
    %v6792 = vadd.f32 %v6790, %v6791
    %v6793 = vsel %vm6534, %v6700, 0.0
    %v6794 = vadd.f32 %v6792, %v6793
    %v6795 = vsel %vm6534, %v6704, 0.0
    %v6796 = vadd.f32 %v6794, %v6795
    %v6797 = vsel %vm6534, %v6708, 0.0
    %v6798 = vadd.f32 %v6796, %v6797
    %v6799 = vsel %vm6534, %v6712, 0.0
    %v6800 = vadd.f32 %v6798, %v6799
    %v6801 = vsel %vm6534, %v6716, 0.0
    %v6802 = vadd.f32 %v6800, %v6801
    %v6803 = vsel %vm6534, %v6720, 0.0
    %v6804 = vadd.f32 %v6802, %v6803
    %v6805 = vsel %vm6534, %v6724, 0.0
    %v6806 = vadd.f32 %v6804, %v6805
    %v6807 = vsel %vm6534, %v6728, 0.0
    %v6808 = vadd.f32 %v6806, %v6807
    %v6809 = vsel %vm6534, %v6732, 0.0
    %v6810 = vadd.f32 %v6808, %v6809
    %v6811 = vrcp.pop %v6771
    %v6812 = vrcp.pop %v6810
    %v6813 = vmul.f32 %v6654, %v6811
    %v6814 = vmul.f32 %v6656, %v6812
    %v6815 = vmul.f32 %v6658, %v6811
    %v6816 = vmul.f32 %v6660, %v6812
    %v6817 = vmul.f32 %v6662, %v6811
    %v6818 = vmul.f32 %v6664, %v6812
    %v6819 = vmul.f32 %v6666, %v6811
    %v6820 = vmul.f32 %v6668, %v6812
    %v6821 = vmul.f32 %v6670, %v6811
    %v6822 = vmul.f32 %v6672, %v6812
    %v6823 = vmul.f32 %v6674, %v6811
    %v6824 = vmul.f32 %v6676, %v6812
    %v6825 = vmul.f32 %v6678, %v6811
    %v6826 = vmul.f32 %v6680, %v6812
    %v6827 = vmul.f32 %v6682, %v6811
    %v6828 = vmul.f32 %v6684, %v6812
    %v6829 = vmul.f32 %v6686, %v6811
    %v6830 = vmul.f32 %v6688, %v6812
    %v6831 = vmul.f32 %v6690, %v6811
    %v6832 = vmul.f32 %v6692, %v6812
    %v6833 = vmul.f32 %v6694, %v6811
    %v6834 = vmul.f32 %v6696, %v6812
    %v6835 = vmul.f32 %v6698, %v6811
    %v6836 = vmul.f32 %v6700, %v6812
    %v6837 = vmul.f32 %v6702, %v6811
    %v6838 = vmul.f32 %v6704, %v6812
    %v6839 = vmul.f32 %v6706, %v6811
    %v6840 = vmul.f32 %v6708, %v6812
    %v6841 = vmul.f32 %v6710, %v6811
    %v6842 = vmul.f32 %v6712, %v6812
    %v6843 = vmul.f32 %v6714, %v6811
    %v6844 = vmul.f32 %v6716, %v6812
    %v6845 = vmul.f32 %v6718, %v6811
    %v6846 = vmul.f32 %v6720, %v6812
    %v6847 = vmul.f32 %v6722, %v6811
    %v6848 = vmul.f32 %v6724, %v6812
    %v6849 = vmul.f32 %v6726, %v6811
    %v6850 = vmul.f32 %v6728, %v6812
    %v6851 = vmul.f32 %v6730, %v6811
    %v6852 = vmul.f32 %v6732, %v6812
    %6854 = vset.pattern.permute.xlu0 0
    %6855 = vperm.xlu0 %6854, %v6813
    %v6856 = vpop.permute.xlu0 %6855
    %6859 = vset.pattern.permute.xlu0 0
    %6860 = vperm.xlu0 %6859, %v6814
    %v6861 = vpop.permute.xlu0 %6860
    %6864 = vset.pattern.permute.xlu0 0
    %6865 = vperm.xlu0 %6864, %v6815
    %v6866 = vpop.permute.xlu0 %6865
    %6869 = vset.pattern.permute.xlu0 0
    %6870 = vperm.xlu0 %6869, %v6816
    %v6871 = vpop.permute.xlu0 %6870
    %6874 = vset.pattern.permute.xlu0 0
    %6875 = vperm.xlu0 %6874, %v6817
    %v6876 = vpop.permute.xlu0 %6875
    %6879 = vset.pattern.permute.xlu0 0
    %6880 = vperm.xlu0 %6879, %v6818
    %v6881 = vpop.permute.xlu0 %6880
    %6884 = vset.pattern.permute.xlu0 0
    %6885 = vperm.xlu0 %6884, %v6819
    %v6886 = vpop.permute.xlu0 %6885
    %6889 = vset.pattern.permute.xlu0 0
    %6890 = vperm.xlu0 %6889, %v6820
    %v6891 = vpop.permute.xlu0 %6890
    %6894 = vset.pattern.permute.xlu0 0
    %6895 = vperm.xlu0 %6894, %v6821
    %v6896 = vpop.permute.xlu0 %6895
    %6899 = vset.pattern.permute.xlu0 0
    %6900 = vperm.xlu0 %6899, %v6822
    %v6901 = vpop.permute.xlu0 %6900
    %6904 = vset.pattern.permute.xlu0 0
    %6905 = vperm.xlu0 %6904, %v6823
    %v6906 = vpop.permute.xlu0 %6905
    %6909 = vset.pattern.permute.xlu0 0
    %6910 = vperm.xlu0 %6909, %v6824
    %v6911 = vpop.permute.xlu0 %6910
    %6914 = vset.pattern.permute.xlu0 0
    %6915 = vperm.xlu0 %6914, %v6825
    %v6916 = vpop.permute.xlu0 %6915
    %6919 = vset.pattern.permute.xlu0 0
    %6920 = vperm.xlu0 %6919, %v6826
    %v6921 = vpop.permute.xlu0 %6920
    %6924 = vset.pattern.permute.xlu0 0
    %6925 = vperm.xlu0 %6924, %v6827
    %v6926 = vpop.permute.xlu0 %6925
    %6929 = vset.pattern.permute.xlu0 0
    %6930 = vperm.xlu0 %6929, %v6828
    %v6931 = vpop.permute.xlu0 %6930
    %6934 = vset.pattern.permute.xlu0 0
    %6935 = vperm.xlu0 %6934, %v6829
    %v6936 = vpop.permute.xlu0 %6935
    %6939 = vset.pattern.permute.xlu0 0
    %6940 = vperm.xlu0 %6939, %v6830
    %v6941 = vpop.permute.xlu0 %6940
    %6944 = vset.pattern.permute.xlu0 0
    %6945 = vperm.xlu0 %6944, %v6831
    %v6946 = vpop.permute.xlu0 %6945
    %6949 = vset.pattern.permute.xlu0 0
    %6950 = vperm.xlu0 %6949, %v6832
    %v6951 = vpop.permute.xlu0 %6950
    %6954 = vset.pattern.permute.xlu0 0
    %6955 = vperm.xlu0 %6954, %v6833
    %v6956 = vpop.permute.xlu0 %6955
    %6959 = vset.pattern.permute.xlu0 0
    %6960 = vperm.xlu0 %6959, %v6834
    %v6961 = vpop.permute.xlu0 %6960
    %6964 = vset.pattern.permute.xlu0 0
    %6965 = vperm.xlu0 %6964, %v6835
    %v6966 = vpop.permute.xlu0 %6965
    %6969 = vset.pattern.permute.xlu0 0
    %6970 = vperm.xlu0 %6969, %v6836
    %v6971 = vpop.permute.xlu0 %6970
    %6974 = vset.pattern.permute.xlu0 0
    %6975 = vperm.xlu0 %6974, %v6837
    %v6976 = vpop.permute.xlu0 %6975
    %6979 = vset.pattern.permute.xlu0 0
    %6980 = vperm.xlu0 %6979, %v6838
    %v6981 = vpop.permute.xlu0 %6980
    %6984 = vset.pattern.permute.xlu0 0
    %6985 = vperm.xlu0 %6984, %v6839
    %v6986 = vpop.permute.xlu0 %6985
    %6989 = vset.pattern.permute.xlu0 0
    %6990 = vperm.xlu0 %6989, %v6840
    %v6991 = vpop.permute.xlu0 %6990
    %6994 = vset.pattern.permute.xlu0 0
    %6995 = vperm.xlu0 %6994, %v6841
    %v6996 = vpop.permute.xlu0 %6995
    %6999 = vset.pattern.permute.xlu0 0
    %7000 = vperm.xlu0 %6999, %v6842
    %v7001 = vpop.permute.xlu0 %7000
    %7004 = vset.pattern.permute.xlu0 0
    %7005 = vperm.xlu0 %7004, %v6843
    %v7006 = vpop.permute.xlu0 %7005
    %7009 = vset.pattern.permute.xlu0 0
    %7010 = vperm.xlu0 %7009, %v6844
    %v7011 = vpop.permute.xlu0 %7010
    %7014 = vset.pattern.permute.xlu0 0
    %7015 = vperm.xlu0 %7014, %v6845
    %v7016 = vpop.permute.xlu0 %7015
    %7019 = vset.pattern.permute.xlu0 0
    %7020 = vperm.xlu0 %7019, %v6846
    %v7021 = vpop.permute.xlu0 %7020
    %7024 = vset.pattern.permute.xlu0 0
    %7025 = vperm.xlu0 %7024, %v6847
    %v7026 = vpop.permute.xlu0 %7025
    %7029 = vset.pattern.permute.xlu0 0
    %7030 = vperm.xlu0 %7029, %v6848
    %v7031 = vpop.permute.xlu0 %7030
    %7034 = vset.pattern.permute.xlu0 0
    %7035 = vperm.xlu0 %7034, %v6849
    %v7036 = vpop.permute.xlu0 %7035
    %7039 = vset.pattern.permute.xlu0 0
    %7040 = vperm.xlu0 %7039, %v6850
    %v7041 = vpop.permute.xlu0 %7040
    %7044 = vset.pattern.permute.xlu0 0
    %7045 = vperm.xlu0 %7044, %v6851
    %v7046 = vpop.permute.xlu0 %7045
    %7049 = vset.pattern.permute.xlu0 0
    %7050 = vperm.xlu0 %7049, %v6852
    %v7051 = vpop.permute.xlu0 %7050
    %v7053 = vmul.f32 %v6856, %v5794
    %v7054 = vmul.f32 %v6861, %v5795
    %v7055 = vmul.f32 %v6866, %v5796
    %v7056 = vmul.f32 %v6871, %v5797
    %v7057 = vmul.f32 %v6876, %v5798
    %v7058 = vmul.f32 %v6881, %v5799
    %v7059 = vmul.f32 %v6886, %v5800
    %v7060 = vmul.f32 %v6891, %v5801
    %v7061 = vmul.f32 %v6896, %v5802
    %v7062 = vmul.f32 %v6901, %v5803
    %v7063 = vmul.f32 %v6906, %v5804
    %v7064 = vmul.f32 %v6911, %v5805
    %v7065 = vmul.f32 %v6916, %v5806
    %v7066 = vmul.f32 %v6921, %v5807
    %v7067 = vmul.f32 %v6926, %v5808
    %v7068 = vmul.f32 %v6931, %v5809
    %v7069 = vmul.f32 %v6936, %v5810
    %v7070 = vmul.f32 %v6941, %v5811
    %v7071 = vmul.f32 %v6946, %v5812
    %v7072 = vmul.f32 %v6951, %v5813
    %v7073 = vmul.f32 %v6956, %v5814
    %v7074 = vmul.f32 %v6961, %v5815
    %v7075 = vmul.f32 %v6966, %v5816
    %v7076 = vmul.f32 %v6971, %v5817
    %v7077 = vmul.f32 %v6976, %v5818
    %v7078 = vmul.f32 %v6981, %v5819
    %v7079 = vmul.f32 %v6986, %v5820
    %v7080 = vmul.f32 %v6991, %v5821
    %v7081 = vmul.f32 %v6996, %v5822
    %v7082 = vmul.f32 %v7001, %v5823
    %v7083 = vmul.f32 %v7006, %v5824
    %v7084 = vmul.f32 %v7011, %v5825
    %v7085 = vmul.f32 %v7016, %v5826
    %v7086 = vmul.f32 %v7021, %v5827
    %v7087 = vmul.f32 %v7026, %v5828
    %v7088 = vmul.f32 %v7031, %v5829
    %v7089 = vmul.f32 %v7036, %v5830
    %v7090 = vmul.f32 %v7041, %v5831
    %v7091 = vmul.f32 %v7046, %v5832
    %v7092 = vmul.f32 %v7051, %v5833
    %vm7093 = vcmask 261120
    %v7094 = vsel %vm7093, %v7053, 0.0
    %v7095 = vsel %vm7093, %v7055, 0.0
    %v7096 = vadd.f32 %v7094, %v7095
    %v7097 = vsel %vm7093, %v7057, 0.0
    %v7098 = vadd.f32 %v7096, %v7097
    %v7099 = vsel %vm7093, %v7059, 0.0
    %v7100 = vadd.f32 %v7098, %v7099
    %v7101 = vsel %vm7093, %v7061, 0.0
    %v7102 = vadd.f32 %v7100, %v7101
    %v7103 = vsel %vm7093, %v7063, 0.0
    %v7104 = vadd.f32 %v7102, %v7103
    %v7105 = vsel %vm7093, %v7065, 0.0
    %v7106 = vadd.f32 %v7104, %v7105
    %v7107 = vsel %vm7093, %v7067, 0.0
    %v7108 = vadd.f32 %v7106, %v7107
    %v7109 = vsel %vm7093, %v7069, 0.0
    %v7110 = vadd.f32 %v7108, %v7109
    %v7111 = vsel %vm7093, %v7071, 0.0
    %v7112 = vadd.f32 %v7110, %v7111
    %v7113 = vsel %vm7093, %v7073, 0.0
    %v7114 = vadd.f32 %v7112, %v7113
    %v7115 = vsel %vm7093, %v7075, 0.0
    %v7116 = vadd.f32 %v7114, %v7115
    %v7117 = vsel %vm7093, %v7077, 0.0
    %v7118 = vadd.f32 %v7116, %v7117
    %v7119 = vsel %vm7093, %v7079, 0.0
    %v7120 = vadd.f32 %v7118, %v7119
    %v7121 = vsel %vm7093, %v7081, 0.0
    %v7122 = vadd.f32 %v7120, %v7121
    %v7123 = vsel %vm7093, %v7083, 0.0
    %v7124 = vadd.f32 %v7122, %v7123
    %v7125 = vsel %vm7093, %v7085, 0.0
    %v7126 = vadd.f32 %v7124, %v7125
    %v7127 = vsel %vm7093, %v7087, 0.0
    %v7128 = vadd.f32 %v7126, %v7127
    %v7129 = vsel %vm7093, %v7089, 0.0
    %v7130 = vadd.f32 %v7128, %v7129
    %v7131 = vsel %vm7093, %v7091, 0.0
    %v7132 = vadd.f32 %v7130, %v7131
    %v7133 = vsel %vm7093, %v7054, 0.0
    %v7134 = vsel %vm7093, %v7056, 0.0
    %v7135 = vadd.f32 %v7133, %v7134
    %v7136 = vsel %vm7093, %v7058, 0.0
    %v7137 = vadd.f32 %v7135, %v7136
    %v7138 = vsel %vm7093, %v7060, 0.0
    %v7139 = vadd.f32 %v7137, %v7138
    %v7140 = vsel %vm7093, %v7062, 0.0
    %v7141 = vadd.f32 %v7139, %v7140
    %v7142 = vsel %vm7093, %v7064, 0.0
    %v7143 = vadd.f32 %v7141, %v7142
    %v7144 = vsel %vm7093, %v7066, 0.0
    %v7145 = vadd.f32 %v7143, %v7144
    %v7146 = vsel %vm7093, %v7068, 0.0
    %v7147 = vadd.f32 %v7145, %v7146
    %v7148 = vsel %vm7093, %v7070, 0.0
    %v7149 = vadd.f32 %v7147, %v7148
    %v7150 = vsel %vm7093, %v7072, 0.0
    %v7151 = vadd.f32 %v7149, %v7150
    %v7152 = vsel %vm7093, %v7074, 0.0
    %v7153 = vadd.f32 %v7151, %v7152
    %v7154 = vsel %vm7093, %v7076, 0.0
    %v7155 = vadd.f32 %v7153, %v7154
    %v7156 = vsel %vm7093, %v7078, 0.0
    %v7157 = vadd.f32 %v7155, %v7156
    %v7158 = vsel %vm7093, %v7080, 0.0
    %v7159 = vadd.f32 %v7157, %v7158
    %v7160 = vsel %vm7093, %v7082, 0.0
    %v7161 = vadd.f32 %v7159, %v7160
    %v7162 = vsel %vm7093, %v7084, 0.0
    %v7163 = vadd.f32 %v7161, %v7162
    %v7164 = vsel %vm7093, %v7086, 0.0
    %v7165 = vadd.f32 %v7163, %v7164
    %v7166 = vsel %vm7093, %v7088, 0.0
    %v7167 = vadd.f32 %v7165, %v7166
    %v7168 = vsel %vm7093, %v7090, 0.0
    %v7169 = vadd.f32 %v7167, %v7168
    %v7170 = vsel %vm7093, %v7092, 0.0
    %v7171 = vadd.f32 %v7169, %v7170
    %7172 = vset.pattern.permute.xlu0 1
    %7173 = vperm.xlu0 %7172, %v6813
    %v7174 = vpop.permute.xlu0 %7173
    %7176 = vset.pattern.permute.xlu0 1
    %7177 = vperm.xlu0 %7176, %v6814
    %v7178 = vpop.permute.xlu0 %7177
    %7180 = vset.pattern.permute.xlu0 1
    %7181 = vperm.xlu0 %7180, %v6815
    %v7182 = vpop.permute.xlu0 %7181
    %7184 = vset.pattern.permute.xlu0 1
    %7185 = vperm.xlu0 %7184, %v6816
    %v7186 = vpop.permute.xlu0 %7185
    %7188 = vset.pattern.permute.xlu0 1
    %7189 = vperm.xlu0 %7188, %v6817
    %v7190 = vpop.permute.xlu0 %7189
    %7192 = vset.pattern.permute.xlu0 1
    %7193 = vperm.xlu0 %7192, %v6818
    %v7194 = vpop.permute.xlu0 %7193
    %7196 = vset.pattern.permute.xlu0 1
    %7197 = vperm.xlu0 %7196, %v6819
    %v7198 = vpop.permute.xlu0 %7197
    %7200 = vset.pattern.permute.xlu0 1
    %7201 = vperm.xlu0 %7200, %v6820
    %v7202 = vpop.permute.xlu0 %7201
    %7204 = vset.pattern.permute.xlu0 1
    %7205 = vperm.xlu0 %7204, %v6821
    %v7206 = vpop.permute.xlu0 %7205
    %7208 = vset.pattern.permute.xlu0 1
    %7209 = vperm.xlu0 %7208, %v6822
    %v7210 = vpop.permute.xlu0 %7209
    %7212 = vset.pattern.permute.xlu0 1
    %7213 = vperm.xlu0 %7212, %v6823
    %v7214 = vpop.permute.xlu0 %7213
    %7216 = vset.pattern.permute.xlu0 1
    %7217 = vperm.xlu0 %7216, %v6824
    %v7218 = vpop.permute.xlu0 %7217
    %7220 = vset.pattern.permute.xlu0 1
    %7221 = vperm.xlu0 %7220, %v6825
    %v7222 = vpop.permute.xlu0 %7221
    %7224 = vset.pattern.permute.xlu0 1
    %7225 = vperm.xlu0 %7224, %v6826
    %v7226 = vpop.permute.xlu0 %7225
    %7228 = vset.pattern.permute.xlu0 1
    %7229 = vperm.xlu0 %7228, %v6827
    %v7230 = vpop.permute.xlu0 %7229
    %7232 = vset.pattern.permute.xlu0 1
    %7233 = vperm.xlu0 %7232, %v6828
    %v7234 = vpop.permute.xlu0 %7233
    %7236 = vset.pattern.permute.xlu0 1
    %7237 = vperm.xlu0 %7236, %v6829
    %v7238 = vpop.permute.xlu0 %7237
    %7240 = vset.pattern.permute.xlu0 1
    %7241 = vperm.xlu0 %7240, %v6830
    %v7242 = vpop.permute.xlu0 %7241
    %7244 = vset.pattern.permute.xlu0 1
    %7245 = vperm.xlu0 %7244, %v6831
    %v7246 = vpop.permute.xlu0 %7245
    %7248 = vset.pattern.permute.xlu0 1
    %7249 = vperm.xlu0 %7248, %v6832
    %v7250 = vpop.permute.xlu0 %7249
    %7252 = vset.pattern.permute.xlu0 1
    %7253 = vperm.xlu0 %7252, %v6833
    %v7254 = vpop.permute.xlu0 %7253
    %7256 = vset.pattern.permute.xlu0 1
    %7257 = vperm.xlu0 %7256, %v6834
    %v7258 = vpop.permute.xlu0 %7257
    %7260 = vset.pattern.permute.xlu0 1
    %7261 = vperm.xlu0 %7260, %v6835
    %v7262 = vpop.permute.xlu0 %7261
    %7264 = vset.pattern.permute.xlu0 1
    %7265 = vperm.xlu0 %7264, %v6836
    %v7266 = vpop.permute.xlu0 %7265
    %7268 = vset.pattern.permute.xlu0 1
    %7269 = vperm.xlu0 %7268, %v6837
    %v7270 = vpop.permute.xlu0 %7269
    %7272 = vset.pattern.permute.xlu0 1
    %7273 = vperm.xlu0 %7272, %v6838
    %v7274 = vpop.permute.xlu0 %7273
    %7276 = vset.pattern.permute.xlu0 1
    %7277 = vperm.xlu0 %7276, %v6839
    %v7278 = vpop.permute.xlu0 %7277
    %7280 = vset.pattern.permute.xlu0 1
    %7281 = vperm.xlu0 %7280, %v6840
    %v7282 = vpop.permute.xlu0 %7281
    %7284 = vset.pattern.permute.xlu0 1
    %7285 = vperm.xlu0 %7284, %v6841
    %v7286 = vpop.permute.xlu0 %7285
    %7288 = vset.pattern.permute.xlu0 1
    %7289 = vperm.xlu0 %7288, %v6842
    %v7290 = vpop.permute.xlu0 %7289
    %7292 = vset.pattern.permute.xlu0 1
    %7293 = vperm.xlu0 %7292, %v6843
    %v7294 = vpop.permute.xlu0 %7293
    %7296 = vset.pattern.permute.xlu0 1
    %7297 = vperm.xlu0 %7296, %v6844
    %v7298 = vpop.permute.xlu0 %7297
    %7300 = vset.pattern.permute.xlu0 1
    %7301 = vperm.xlu0 %7300, %v6845
    %v7302 = vpop.permute.xlu0 %7301
    %7304 = vset.pattern.permute.xlu0 1
    %7305 = vperm.xlu0 %7304, %v6846
    %v7306 = vpop.permute.xlu0 %7305
    %7308 = vset.pattern.permute.xlu0 1
    %7309 = vperm.xlu0 %7308, %v6847
    %v7310 = vpop.permute.xlu0 %7309
    %7312 = vset.pattern.permute.xlu0 1
    %7313 = vperm.xlu0 %7312, %v6848
    %v7314 = vpop.permute.xlu0 %7313
    %7316 = vset.pattern.permute.xlu0 1
    %7317 = vperm.xlu0 %7316, %v6849
    %v7318 = vpop.permute.xlu0 %7317
    %7320 = vset.pattern.permute.xlu0 1
    %7321 = vperm.xlu0 %7320, %v6850
    %v7322 = vpop.permute.xlu0 %7321
    %7324 = vset.pattern.permute.xlu0 1
    %7325 = vperm.xlu0 %7324, %v6851
    %v7326 = vpop.permute.xlu0 %7325
    %7328 = vset.pattern.permute.xlu0 1
    %7329 = vperm.xlu0 %7328, %v6852
    %v7330 = vpop.permute.xlu0 %7329
    %v7332 = vmul.f32 %v7174, %v5794
    %v7333 = vmul.f32 %v7178, %v5795
    %v7334 = vmul.f32 %v7182, %v5796
    %v7335 = vmul.f32 %v7186, %v5797
    %v7336 = vmul.f32 %v7190, %v5798
    %v7337 = vmul.f32 %v7194, %v5799
    %v7338 = vmul.f32 %v7198, %v5800
    %v7339 = vmul.f32 %v7202, %v5801
    %v7340 = vmul.f32 %v7206, %v5802
    %v7341 = vmul.f32 %v7210, %v5803
    %v7342 = vmul.f32 %v7214, %v5804
    %v7343 = vmul.f32 %v7218, %v5805
    %v7344 = vmul.f32 %v7222, %v5806
    %v7345 = vmul.f32 %v7226, %v5807
    %v7346 = vmul.f32 %v7230, %v5808
    %v7347 = vmul.f32 %v7234, %v5809
    %v7348 = vmul.f32 %v7238, %v5810
    %v7349 = vmul.f32 %v7242, %v5811
    %v7350 = vmul.f32 %v7246, %v5812
    %v7351 = vmul.f32 %v7250, %v5813
    %v7352 = vmul.f32 %v7254, %v5814
    %v7353 = vmul.f32 %v7258, %v5815
    %v7354 = vmul.f32 %v7262, %v5816
    %v7355 = vmul.f32 %v7266, %v5817
    %v7356 = vmul.f32 %v7270, %v5818
    %v7357 = vmul.f32 %v7274, %v5819
    %v7358 = vmul.f32 %v7278, %v5820
    %v7359 = vmul.f32 %v7282, %v5821
    %v7360 = vmul.f32 %v7286, %v5822
    %v7361 = vmul.f32 %v7290, %v5823
    %v7362 = vmul.f32 %v7294, %v5824
    %v7363 = vmul.f32 %v7298, %v5825
    %v7364 = vmul.f32 %v7302, %v5826
    %v7365 = vmul.f32 %v7306, %v5827
    %v7366 = vmul.f32 %v7310, %v5828
    %v7367 = vmul.f32 %v7314, %v5829
    %v7368 = vmul.f32 %v7318, %v5830
    %v7369 = vmul.f32 %v7322, %v5831
    %v7370 = vmul.f32 %v7326, %v5832
    %v7371 = vmul.f32 %v7330, %v5833
    %vm7372 = vcmask 523520
    %v7373 = vsel %vm7372, %v7332, 0.0
    %v7374 = vsel %vm7372, %v7334, 0.0
    %v7375 = vadd.f32 %v7373, %v7374
    %v7376 = vsel %vm7372, %v7336, 0.0
    %v7377 = vadd.f32 %v7375, %v7376
    %v7378 = vsel %vm7372, %v7338, 0.0
    %v7379 = vadd.f32 %v7377, %v7378
    %v7380 = vsel %vm7372, %v7340, 0.0
    %v7381 = vadd.f32 %v7379, %v7380
    %v7382 = vsel %vm7372, %v7342, 0.0
    %v7383 = vadd.f32 %v7381, %v7382
    %v7384 = vsel %vm7372, %v7344, 0.0
    %v7385 = vadd.f32 %v7383, %v7384
    %v7386 = vsel %vm7372, %v7346, 0.0
    %v7387 = vadd.f32 %v7385, %v7386
    %v7388 = vsel %vm7372, %v7348, 0.0
    %v7389 = vadd.f32 %v7387, %v7388
    %v7390 = vsel %vm7372, %v7350, 0.0
    %v7391 = vadd.f32 %v7389, %v7390
    %v7392 = vsel %vm7372, %v7352, 0.0
    %v7393 = vadd.f32 %v7391, %v7392
    %v7394 = vsel %vm7372, %v7354, 0.0
    %v7395 = vadd.f32 %v7393, %v7394
    %v7396 = vsel %vm7372, %v7356, 0.0
    %v7397 = vadd.f32 %v7395, %v7396
    %v7398 = vsel %vm7372, %v7358, 0.0
    %v7399 = vadd.f32 %v7397, %v7398
    %v7400 = vsel %vm7372, %v7360, 0.0
    %v7401 = vadd.f32 %v7399, %v7400
    %v7402 = vsel %vm7372, %v7362, 0.0
    %v7403 = vadd.f32 %v7401, %v7402
    %v7404 = vsel %vm7372, %v7364, 0.0
    %v7405 = vadd.f32 %v7403, %v7404
    %v7406 = vsel %vm7372, %v7366, 0.0
    %v7407 = vadd.f32 %v7405, %v7406
    %v7408 = vsel %vm7372, %v7368, 0.0
    %v7409 = vadd.f32 %v7407, %v7408
    %v7410 = vsel %vm7372, %v7370, 0.0
    %v7411 = vadd.f32 %v7409, %v7410
    %v7412 = vsel %vm7372, %v7333, 0.0
    %v7413 = vsel %vm7372, %v7335, 0.0
    %v7414 = vadd.f32 %v7412, %v7413
    %v7415 = vsel %vm7372, %v7337, 0.0
    %v7416 = vadd.f32 %v7414, %v7415
    %v7417 = vsel %vm7372, %v7339, 0.0
    %v7418 = vadd.f32 %v7416, %v7417
    %v7419 = vsel %vm7372, %v7341, 0.0
    %v7420 = vadd.f32 %v7418, %v7419
    %v7421 = vsel %vm7372, %v7343, 0.0
    %v7422 = vadd.f32 %v7420, %v7421
    %v7423 = vsel %vm7372, %v7345, 0.0
    %v7424 = vadd.f32 %v7422, %v7423
    %v7425 = vsel %vm7372, %v7347, 0.0
    %v7426 = vadd.f32 %v7424, %v7425
    %v7427 = vsel %vm7372, %v7349, 0.0
    %v7428 = vadd.f32 %v7426, %v7427
    %v7429 = vsel %vm7372, %v7351, 0.0
    %v7430 = vadd.f32 %v7428, %v7429
    %v7431 = vsel %vm7372, %v7353, 0.0
    %v7432 = vadd.f32 %v7430, %v7431
    %v7433 = vsel %vm7372, %v7355, 0.0
    %v7434 = vadd.f32 %v7432, %v7433
    %v7435 = vsel %vm7372, %v7357, 0.0
    %v7436 = vadd.f32 %v7434, %v7435
    %v7437 = vsel %vm7372, %v7359, 0.0
    %v7438 = vadd.f32 %v7436, %v7437
    %v7439 = vsel %vm7372, %v7361, 0.0
    %v7440 = vadd.f32 %v7438, %v7439
    %v7441 = vsel %vm7372, %v7363, 0.0
    %v7442 = vadd.f32 %v7440, %v7441
    %v7443 = vsel %vm7372, %v7365, 0.0
    %v7444 = vadd.f32 %v7442, %v7443
    %v7445 = vsel %vm7372, %v7367, 0.0
    %v7446 = vadd.f32 %v7444, %v7445
    %v7447 = vsel %vm7372, %v7369, 0.0
    %v7448 = vadd.f32 %v7446, %v7447
    %v7449 = vsel %vm7372, %v7371, 0.0
    %v7450 = vadd.f32 %v7448, %v7449
    %v7451 = vsel %vm7093, %v7132, %v7411
    %v7452 = vsel %vm7093, %v7171, %v7450
    %v7453 = vld [vmem:[%s7 + $0x4] sm:$0x1]
    %v7454 = vld [vmem:[%s7 + $0x6] sm:$0x1]
    %v7455 = vld [vmem:[%s6] sm:$0xff]
    %v7456 = vld [vmem:[%s6 + $0x8] sm:$0xff]
    %v7457 = vld [vmem:[%s6 + $0x10] sm:$0xff]
    %v7458 = vld [vmem:[%s6 + $0x18] sm:$0xff]
    %v7459 = vld [vmem:[%s6 + $0x20] sm:$0xff]
    %v7460 = vld [vmem:[%s6 + $0x28] sm:$0xff]
    %v7461 = vld [vmem:[%s6 + $0x30] sm:$0xff]
    %v7462 = vld [vmem:[%s6 + $0x38] sm:$0xff]
    %v7463 = vlaneseq
    %v7464 = vshrl.u32 %v7463, 7
    %v7465 = vsub.s32 0, %v7464
    %v7466 = vrot.slane %v7453, %v7465
    %v7468 = vsel %vm540, %v7451, 0
    %v7471 = vsel %vm540, %v7452, 0
    %7473 = vmatprep.subr.mxu0 0.0
    %7474 = vmatpush1.msra.mxu0 %v7455
    %7475 = vmatprep.subr.mxu0 0.0
    %7476 = vmatpush1.msra.mxu0 %v7456
    %7477 = vmatprep.subr.mxu0 0.0
    %7478 = vmatpush1.msra.mxu0 %v7457
    %7479 = vmatprep.subr.mxu0 0.0
    %7480 = vmatpush1.msra.mxu0 %v7458
    %7481 = vmatprep.subr.mxu0 0.0
    %7482 = vmatpush1.msra.mxu0 %v7459
    %7483 = vmatprep.subr.mxu0 0.0
    %7484 = vmatpush1.msra.mxu0 %v7460
    %7485 = vmatprep.subr.mxu0 0.0
    %7486 = vmatpush1.msra.mxu0 %v7461
    %7487 = vmatprep.subr.mxu0 0.0
    %7488 = vmatpush1.msra.mxu0 %v7462
    %7489 = vmatprep.subr.mxu0 0.0
    %7490 = vmatpush1.msra.mxu0 0.0
    %7491 = vmatprep.subr.mxu0 0.0
    %7492 = vmatpush1.msra.mxu0 0.0
    %7493 = vmatprep.subr.mxu0 0.0
    %7494 = vmatpush1.msra.mxu0 0.0
    %7495 = vmatprep.subr.mxu0 0.0
    %7496 = vmatpush1.msra.mxu0 0.0
    %7497 = vmatprep.subr.mxu0 0.0
    %7498 = vmatpush1.msra.mxu0 0.0
    %7499 = vmatprep.subr.mxu0 0.0
    %7500 = vmatpush1.msra.mxu0 0.0
    %7501 = vmatprep.subr.mxu0 0.0
    %7502 = vmatpush1.msra.mxu0 0.0
    %7503 = vmatprep.subr.mxu0 0.0
    %7504 = vmatpush1.msra.mxu0 0.0
    %7505 = vmatprep.subr.mxu0 0.0
    %7506 = vmatpush1.msra.mxu0 0.0
    %7507 = vmatprep.subr.mxu0 0.0
    %7508 = vmatpush1.msra.mxu0 0.0
    %7509 = vmatprep.subr.mxu0 0.0
    %7510 = vmatpush1.msra.mxu0 0.0
    %7511 = vmatprep.subr.mxu0 0.0
    %7512 = vmatpush1.msra.mxu0 0.0
    %7513 = vmatprep.subr.mxu0 0.0
    %7514 = vmatpush1.msra.mxu0 0.0
    %7515 = vmatprep.subr.mxu0 0.0
    %7516 = vmatpush1.msra.mxu0 0.0
    %7517 = vmatprep.subr.mxu0 0.0
    %7518 = vmatpush1.msra.mxu0 0.0
    %7519 = vmatprep.subr.mxu0 0.0
    %7520 = vmatpush1.msra.mxu0 0.0
    %7521 = vmatprep.subr.mxu0 0.0
    %7522 = vmatpush1.msra.mxu0 0.0
    %7523 = vmatprep.subr.mxu0 0.0
    %7524 = vmatpush1.msra.mxu0 0.0
    %7525 = vmatprep.subr.mxu0 0.0
    %7526 = vmatpush1.msra.mxu0 0.0
    %7527 = vmatprep.subr.mxu0 0.0
    %7528 = vmatpush1.msra.mxu0 0.0
    %7529 = vmatprep.subr.mxu0 0.0
    %7530 = vmatpush1.msra.mxu0 0.0
    %7531 = vmatprep.subr.mxu0 0.0
    %7532 = vmatpush1.msra.mxu0 0.0
    %7533 = vmatprep.subr.mxu0 0.0
    %7534 = vmatpush1.msra.mxu0 0.0
    %7535 = vmatprep.subr.mxu0 0.0
    %7536 = vmatpush1.msra.mxu0 0.0
    %7537 = vmatprep.mubr.f32.mxu0 0.0
    %7538 = vmatmul.mubr.f32.gmra.mrb[0].mxu0 %v7468
    %v7539 = vpop.f32.mrb[0].mxu0
    %v7540 = vadd.f32 %v7466, %v7539
    %v7541 = vpop.f32.mrb[0].mxu0
    %7542 = vmatprep.mubr.f32.mxu0 0.0
    %7543 = vmatmul.mubr.f32.gmra.mrb[0].mxu0 %v7471
    %v7544 = vpop.f32.mrb[0].mxu0
    %v7545 = vadd.f32 %v7466, %v7544
    %v7546 = vpop.f32.mrb[0].mxu0
    %7547 = vdwg.mxu0
    %v7548 = vmax.f32 %v7540, 0.0
    %v7549 = vmax.f32 %v7545, 0.0
    %v7550 = vld [vmem:[%s6 + $0x40] sm:$0x1]
    %7552 = vset.pattern.permute.xlu0 0
    %7553 = vperm.xlu0 %7552, %v7454
    %v7554 = vpop.permute.xlu0 %7553
    %v7557 = vunpack.c.l.s4 269488144
    %v7558 = vunpack.c.0.s8 %v7557
    %v7559 = vlaneseq
    %v7560 = vshrl.u32 %v7559, 7
    %v7561 = vsub.s32 %v7558, %v7560
    %v7562 = vrot.slane %v7554, %v7561
    %vm7563 = vcmask 64512
    %v7565 = vsel %vm7563, %v7550, 0
    %v7568 = vsel %vm7563, %v7548, 0
    %v7571 = vsel %vm7563, %v7549, 0
    %7573 = vmatprep.subr.mxu0 0.0
    %7574 = vmatpush1.xpose.msra.mxu0 %v7568
    %7575 = vmatprep.subr.mxu0 0.0
    %7576 = vmatpush1.xpose.msra.mxu0 %v7571
    %7577 = vmatprep.subr.mxu0 0.0
    %7578 = vmatpush1.xpose.msra.mxu0 0.0
    %7579 = vmatprep.subr.mxu0 0.0
    %7580 = vmatpush1.xpose.msra.mxu0 0.0
    %7581 = vmatprep.subr.mxu0 0.0
    %7582 = vmatpush1.xpose.msra.mxu0 0.0
    %7583 = vmatprep.subr.mxu0 0.0
    %7584 = vmatpush1.xpose.msra.mxu0 0.0
    %7585 = vmatprep.subr.mxu0 0.0
    %7586 = vmatpush1.xpose.msra.mxu0 0.0
    %7587 = vmatprep.subr.mxu0 0.0
    %7588 = vmatpush1.xpose.msra.mxu0 0.0
    %7589 = vmatprep.subr.mxu0 0.0
    %7590 = vmatpush1.xpose.msra.mxu0 0.0
    %7591 = vmatprep.subr.mxu0 0.0
    %7592 = vmatpush1.xpose.msra.mxu0 0.0
    %7593 = vmatprep.subr.mxu0 0.0
    %7594 = vmatpush1.xpose.msra.mxu0 0.0
    %7595 = vmatprep.subr.mxu0 0.0
    %7596 = vmatpush1.xpose.msra.mxu0 0.0
    %7597 = vmatprep.subr.mxu0 0.0
    %7598 = vmatpush1.xpose.msra.mxu0 0.0
    %7599 = vmatprep.subr.mxu0 0.0
    %7600 = vmatpush1.xpose.msra.mxu0 0.0
    %7601 = vmatprep.subr.mxu0 0.0
    %7602 = vmatpush1.xpose.msra.mxu0 0.0
    %7603 = vmatprep.subr.mxu0 0.0
    %7604 = vmatpush1.xpose.msra.mxu0 0.0
    %7605 = vmatprep.subr.mxu0 0.0
    %7606 = vmatpush1.xpose.msra.mxu0 0.0
    %7607 = vmatprep.subr.mxu0 0.0
    %7608 = vmatpush1.xpose.msra.mxu0 0.0
    %7609 = vmatprep.subr.mxu0 0.0
    %7610 = vmatpush1.xpose.msra.mxu0 0.0
    %7611 = vmatprep.subr.mxu0 0.0
    %7612 = vmatpush1.xpose.msra.mxu0 0.0
    %7613 = vmatprep.subr.mxu0 0.0
    %7614 = vmatpush1.xpose.msra.mxu0 0.0
    %7615 = vmatprep.subr.mxu0 0.0
    %7616 = vmatpush1.xpose.msra.mxu0 0.0
    %7617 = vmatprep.subr.mxu0 0.0
    %7618 = vmatpush1.xpose.msra.mxu0 0.0
    %7619 = vmatprep.subr.mxu0 0.0
    %7620 = vmatpush1.xpose.msra.mxu0 0.0
    %7621 = vmatprep.subr.mxu0 0.0
    %7622 = vmatpush1.xpose.msra.mxu0 0.0
    %7623 = vmatprep.subr.mxu0 0.0
    %7624 = vmatpush1.xpose.msra.mxu0 0.0
    %7625 = vmatprep.subr.mxu0 0.0
    %7626 = vmatpush1.xpose.msra.mxu0 0.0
    %7627 = vmatprep.subr.mxu0 0.0
    %7628 = vmatpush1.xpose.msra.mxu0 0.0
    %7629 = vmatprep.subr.mxu0 0.0
    %7630 = vmatpush1.xpose.msra.mxu0 0.0
    %7631 = vmatprep.subr.mxu0 0.0
    %7632 = vmatpush1.xpose.msra.mxu0 0.0
    %7633 = vmatprep.subr.mxu0 0.0
    %7634 = vmatpush1.xpose.msra.mxu0 0.0
    %7635 = vmatprep.subr.mxu0 0.0
    %7636 = vmatpush1.xpose.msra.mxu0 0.0
    %7637 = vmatprep.mubr.f32.mxu0 0.0
    %7638 = vmatmul.mubr.f32.gmra.mrb[0].mxu0 %v7565
    %v7639 = vpop.f32.mrb[0].mxu0
    %v7640 = vadd.f32 %v7562, %v7639
    %v7641 = vpop.f32.mrb[0].mxu0
    %7642 = vdwg.mxu0
    %vm7643 = vcmask 122880
    %7644 = vst.msk [vmem:[#allocation4] sm:$0x1] %vm7643, %v7640
    // Predicated region
    $region34: #{tpu_custom_call.1} parent=1 // pred_check
      _
    $region35: #{tpu_custom_call.1} parent=1 // pred_check_branch
      %7646 = sbr.rel (0) target = $region37
    $region36: #{tpu_custom_call.1} parent=1 // pred_region
      %s7648 = ssub.s32 16, 16
      %7649 = vsyncadd [#allocation5], %s7648
      %s7651 = sshll.u32 [#allocation4], 4
      %s7652 = int_to_ptr.vmem [resolvable:$true] %s7651
      %7654 = dma.vmem_to_hbm [thread:$0]  %s7652, 16, %s8, [#allocation5]
    $region37: #{tpu_custom_call.1} parent=1 // pred_fallthru
      _
    // Predicated region
    $region38: #{tpu_custom_call.1} parent=1 // pred_check
      _
    $region39: #{tpu_custom_call.1} parent=1 // pred_check_branch
      %7656 = sbr.rel (0) target = $region41
    $region40: #{tpu_custom_call.1} parent=1 // pred_region
      %7657 = dma.done [#allocation5], 16
    $region41: #{tpu_custom_call.1} parent=1 // pred_fallthru
      _
    %7658 = vsyncpa [#allocation5], 1

</llo_original>
